<compile_context>
chip_gen: v6e
topology: v6e:2x2x1
jax: 0.10.0
libtpu: 0.0.40
codegen_flags: <defaults>
</compile_context>

<pallas_src>
import functools

import jax
import jax.numpy as jnp
from jax import lax
from jax.experimental import pallas as pl
from jax.experimental.pallas import tpu as pltpu


def _round_up(x, m):
    return (x + m - 1) // m * m


def _pick_time_chunk(seq_len, max_chunk=16):
    """Largest divisor of seq_len that is <= max_chunk (so no ragged tail)."""
    best = 1
    for c in range(1, min(seq_len, max_chunk) + 1):
        if seq_len % c == 0:
            best = c
    return best


def _make_lstm_kernel(num_layers, seq_len, t_c, b_blk, h_pad, d_pad, unroll):
    four_h = 4 * h_pad
    n_chunks = seq_len // t_c

    def kernel(x_ref, *rest):
        # rest = [w_ih_0, w_hh_0, b_0, ..., w_ih_{L-1}, w_hh_{L-1}, b_{L-1},
        #         h_out_ref, c_out_ref, gates_buf, seq_buf]
        weight_refs = rest[: 3 * num_layers]
        h_out_ref = rest[3 * num_layers]
        c_out_ref = rest[3 * num_layers + 1]
        gates_buf = rest[3 * num_layers + 2]   # (2*T_c, B_blk, 4*H_pad) f32
        seq_buf = rest[3 * num_layers + 3]     # (T,   B_blk, H_pad)   bf16

        for layer in range(num_layers):
            w_ih_ref = weight_refs[3 * layer]      # (in_pad, 4*H_pad) bf16
            w_hh_ref = weight_refs[3 * layer + 1]  # (H_pad, 4*H_pad)  bf16
            b_ref = weight_refs[3 * layer + 2]     # (1, 4*H_pad)      f32
            in_pad = d_pad if layer == 0 else h_pad
            write_seq = layer < num_layers - 1

            # ---- Input-to-hidden gates for one time chunk (big MXU matmul) ----
            def compute_gates(t_start, slot_start, _layer=layer,
                              _w_ih_ref=w_ih_ref, _b_ref=b_ref, _in_pad=in_pad):
                if _layer == 0:
                    xs = x_ref[pl.ds(t_start, t_c)].astype(jnp.bfloat16)
                else:
                    xs = seq_buf[pl.ds(t_start, t_c)]          # already bf16
                xf = xs.reshape(t_c * b_blk, _in_pad)
                g = jnp.dot(xf, _w_ih_ref[...],
                            preferred_element_type=jnp.float32) + _b_ref[...]
                gates_buf[pl.ds(slot_start, t_c)] = g.reshape(t_c, b_blk, four_h)

            # Prime the 2-deep pipeline with chunk 0.
            compute_gates(0, 0)

            # ---- Serial recurrence, one time chunk at a time ----
            def chunk_body(k, carry, _compute_gates=compute_gates,
                           _w_hh_ref=w_hh_ref, _write_seq=write_seq):
                h, c = carry
                slot = k % 2
                slot_start = slot * t_c

                # Prefetch next chunk's gates into the other slot; the MXU
                # matmul overlaps the latency-bound recurrence below.
                if n_chunks > 1:
                    @pl.when(k + 1 < n_chunks)
                    def _():
                        _compute_gates(pl.multiple_of((k + 1) * t_c, t_c),
                                       (1 - slot) * t_c)

                def step(tt, hc):
                    h_i, c_i = hc
                    g = gates_buf[slot_start + tt] + jnp.dot(
                        h_i.astype(jnp.bfloat16), _w_hh_ref[...],
                        preferred_element_type=jnp.float32)
                    # Gate blocks padded to H_pad (multiple of 128) -> all
                    # slices are lane-aligned (no cross-lane shuffles).
                    i_g = jax.nn.sigmoid(g[:, 0 * h_pad:1 * h_pad])
                    f_g = jax.nn.sigmoid(g[:, 1 * h_pad:2 * h_pad])
                    g_g = jnp.tanh(g[:, 2 * h_pad:3 * h_pad])
                    o_g = jax.nn.sigmoid(g[:, 3 * h_pad:4 * h_pad])
                    c_n = f_g * c_i + i_g * g_g
                    h_n = o_g * jnp.tanh(c_n)
                    if _write_seq:
                        seq_buf[k * t_c + tt] = h_n.astype(jnp.bfloat16)
                    return (h_n, c_n)

                return lax.fori_loop(0, t_c, step, (h, c), unroll=unroll)

            h0 = jnp.zeros((b_blk, h_pad), jnp.float32)
            c0 = jnp.zeros((b_blk, h_pad), jnp.float32)
            h_f, c_f = lax.fori_loop(0, n_chunks, chunk_body, (h0, c0))

            if layer == num_layers - 1:
                h_out_ref[...] = h_f
                c_out_ref[...] = c_f

    return kernel


def init_lstm_params(key, pose_dim, h_dim, num_layers, dtype=jnp.float32):
    """Deterministic PyTorch-style uniform(-1/sqrt(H), 1/sqrt(H)) init."""
    params = []
    bound = 1.0 / jnp.sqrt(jnp.array(h_dim, dtype))
    for layer in range(num_layers):
        in_dim = pose_dim if layer == 0 else h_dim
        key, k1, k2, k3, k4 = jax.random.split(key, 5)
        w_ih = jax.random.uniform(k1, (4 * h_dim, in_dim), dtype, -bound, bound)
        w_hh = jax.random.uniform(k2, (4 * h_dim, h_dim), dtype, -bound, bound)
        b_ih = jax.random.uniform(k3, (4 * h_dim,), dtype, -bound, bound)
        b_hh = jax.random.uniform(k4, (4 * h_dim,), dtype, -bound, bound)
        params.append((w_ih, w_hh, b_ih, b_hh))
    return params


def lstm_encoder_forward(x, params, h_dim, num_layers):
    """Mirrors LstmEncoder.forward: returns (last_frame, (h_n[-1:], c_n[-1:]))."""
    batch, seq_len, pose_dim = x.shape

    # Pad to TPU-friendly tiles: batch -> multiple of 8 (sublanes),
    # feature/hidden dims -> multiples of 128 (lanes).
    b_pad = _round_up(max(batch, 8), 8)
    if b_pad >= 16:
        b_pad = _round_up(b_pad, 16)
        n_bblk = 2          # shard padded batch across both TensorCores (v7x)
    else:
        n_bblk = 1
    b_blk = b_pad // n_bblk
    h_pad = _round_up(h_dim, 128)
    d_pad = _round_up(pose_dim, 128)

    t_c = _pick_time_chunk(seq_len)
    unroll = True if t_c <= 8 else 4

    # Time-major, padded input for the kernel: (T, B_pad, D_pad) f32 (cast to
    # bf16 inside the kernel right before the MXU matmul).
    x_tm = jnp.transpose(x.astype(jnp.float32), (1, 0, 2))
    x_tm = jnp.pad(x_tm, ((0, 0), (0, b_pad - batch), (0, d_pad - pose_dim)))

    def pack_w(w, in_dim, in_pad):
        # (4*h_dim, in_dim) -> (in_pad, 4*h_pad) bf16, per-gate blocks padded.
        w_t = jnp.transpose(w).astype(jnp.float32)           # (in_dim, 4*h_dim)
        w_t = jnp.pad(w_t, ((0, in_pad - in_dim), (0, 0)))    # zero-pad reduce dim
        blocks = [
            jnp.pad(w_t[:, g * h_dim:(g + 1) * h_dim], ((0, 0), (0, h_pad - h_dim)))
            for g in range(4)
        ]
        return jnp.concatenate(blocks, axis=1).astype(jnp.bfloat16)

    def pack_b(b_ih, b_hh):
        b = (b_ih + b_hh).astype(jnp.float32)
        blocks = [
            jnp.pad(b[g * h_dim:(g + 1) * h_dim], (0, h_pad - h_dim))
            for g in range(4)
        ]
        return jnp.concatenate(blocks).reshape(1, 4 * h_pad)

    kernel_inputs = [x_tm]
    in_specs = [pl.BlockSpec((seq_len, b_blk, d_pad), lambda i: (0, i, 0))]
    for layer, (w_ih, w_hh, b_ih, b_hh) in enumerate(params):
        in_dim = pose_dim if layer == 0 else h_dim
        in_pad = d_pad if layer == 0 else h_pad
        w_ih_p = pack_w(w_ih, in_dim, in_pad)    # (in_pad, 4*H_pad) bf16
        w_hh_p = pack_w(w_hh, h_dim, h_pad)      # (H_pad, 4*H_pad)  bf16
        b_p = pack_b(b_ih, b_hh)                 # (1, 4*H_pad)      f32
        kernel_inputs += [w_ih_p, w_hh_p, b_p]
        in_specs += [
            pl.BlockSpec(w_ih_p.shape, lambda i: (0, 0)),
            pl.BlockSpec(w_hh_p.shape, lambda i: (0, 0)),
            pl.BlockSpec(b_p.shape, lambda i: (0, 0)),
        ]

    # Generation-aware VMEM budget (headroom kept, no hard 64 MiB clamp).
    try:
        vmem_cap = int(pltpu.get_tpu_info().vmem_capacity_bytes)
    except Exception:
        vmem_cap = 64 * 1024 * 1024  # safe lower bound on all generations
    weight_bytes = sum(a.size * a.dtype.itemsize for a in kernel_inputs[1:])
    x_blk_bytes = seq_len * b_blk * d_pad * 4
    out_bytes = 2 * b_blk * h_pad * 4
    scratch_bytes = (2 * t_c * b_blk * 4 * h_pad) * 4 + (seq_len * b_blk * h_pad) * 2
    need = 2 * (x_blk_bytes + weight_bytes + out_bytes) + scratch_bytes + (4 << 20)
    vmem_limit = int(min(vmem_cap, max(need, 16 << 20)))

    kernel = _make_lstm_kernel(num_layers, seq_len, t_c, b_blk, h_pad, d_pad, unroll)

    h_pad_out, c_pad_out = pl.pallas_call(
        kernel,
        grid=(n_bblk,),
        out_shape=(
            jax.ShapeDtypeStruct((b_pad, h_pad), jnp.float32),
            jax.ShapeDtypeStruct((b_pad, h_pad), jnp.float32),
        ),
        in_specs=in_specs,
        out_specs=(
            pl.BlockSpec((b_blk, h_pad), lambda i: (i, 0)),
            pl.BlockSpec((b_blk, h_pad), lambda i: (i, 0)),
        ),
        scratch_shapes=[
            pltpu.VMEM((2 * t_c, b_blk, 4 * h_pad), jnp.float32),  # gates (2-deep)
            pltpu.VMEM((seq_len, b_blk, h_pad), jnp.bfloat16),     # layer outputs
        ],
        compiler_params=pltpu.CompilerParams(
            dimension_semantics=("parallel",),
            vmem_limit_bytes=vmem_limit),
    )(*kernel_inputs)

    h_last = h_pad_out[:batch, :h_dim]
    c_last = c_pad_out[:batch, :h_dim]

    last_frame = x[:, -1, :]
    state_tuple = (h_last[None, :, :], c_last[None, :, :])
    return last_frame, state_tuple


def _reference_lstm(x, params, h_dim, num_layers):
    """Pure-JAX f32 reference of the same multi-layer LSTM (for validation)."""
    batch, seq_len, _ = x.shape
    layer_in = x.astype(jnp.float32)
    h_last = c_last = None
    for layer in range(num_layers):
        w_ih, w_hh, b_ih, b_hh = params[layer]
        h = jnp.zeros((batch, h_dim), jnp.float32)
        c = jnp.zeros((batch, h_dim), jnp.float32)
        outs = []
        for t in range(seq_len):
            x_t = layer_in[:, t, :]
            gates = x_t @ w_ih.T + h @ w_hh.T + b_ih + b_hh
            i_g = jax.nn.sigmoid(gates[:, 0 * h_dim:1 * h_dim])
            f_g = jax.nn.sigmoid(gates[:, 1 * h_dim:2 * h_dim])
            g_g = jnp.tanh(gates[:, 2 * h_dim:3 * h_dim])
            o_g = jax.nn.sigmoid(gates[:, 3 * h_dim:4 * h_dim])
            c = f_g * c + i_g * g_g
            h = o_g * jnp.tanh(c)
            outs.append(h)
        layer_in = jnp.stack(outs, axis=1)
        h_last, c_last = h, c
    return h_last, c_last


if __name__ == "__main__":
    # Small shapes consistent with LstmEncoder.forward(x: (batch, seq, pose_dim))
    batch, seq_len, pose_dim = 2, 8, 16
    h_dim, num_layers = 32, 3

    key = jax.random.PRNGKey(0)
    key, kx = jax.random.split(key)
    x = jax.random.normal(kx, (batch, seq_len, pose_dim), jnp.float32)

    params = init_lstm_params(key, pose_dim, h_dim, num_layers)

    fwd = jax.jit(functools.partial(
        lstm_encoder_forward, h_dim=h_dim, num_layers=num_layers))
    last_frame, (h_n, c_n) = fwd(x, params)
    jax.block_until_ready((last_frame, h_n, c_n))

    # Validate against the pure-JAX f32 reference (kernel matmuls are bf16
    # with f32 accumulate, hence the relaxed tolerance).
    h_ref, c_ref = _reference_lstm(x, params, h_dim, num_layers)
    assert last_frame.shape == (batch, pose_dim)
    assert h_n.shape == (1, batch, h_dim) and c_n.shape == (1, batch, h_dim)
    assert jnp.allclose(last_frame, x[:, -1, :])
    assert jnp.allclose(h_n[0], h_ref, atol=5e-2, rtol=5e-2)
    assert jnp.allclose(c_n[0], c_ref, atol=5e-2, rtol=5e-2)

    print("KERNEL_OK")
</pallas_src>

<mosaic_0001>
module attributes {stable_mosaic.version = 11 : i64} {
  func.func @kernel(%arg0: i32, %arg1: memref<8x8x128xf32, #tpu.memory_space<vmem>>, %arg2: memref<128x512xbf16, #tpu.memory_space<vmem>>, %arg3: memref<128x512xbf16, #tpu.memory_space<vmem>>, %arg4: memref<1x512xf32, #tpu.memory_space<vmem>>, %arg5: memref<128x512xbf16, #tpu.memory_space<vmem>>, %arg6: memref<128x512xbf16, #tpu.memory_space<vmem>>, %arg7: memref<1x512xf32, #tpu.memory_space<vmem>>, %arg8: memref<128x512xbf16, #tpu.memory_space<vmem>>, %arg9: memref<128x512xbf16, #tpu.memory_space<vmem>>, %arg10: memref<1x512xf32, #tpu.memory_space<vmem>>, %arg11: memref<8x128xf32, #tpu.memory_space<vmem>>, %arg12: memref<8x128xf32, #tpu.memory_space<vmem>>, %arg13: memref<16x8x512xf32, #tpu.memory_space<vmem>>, %arg14: memref<8x8x128xbf16, #tpu.memory_space<vmem>>) attributes {dimension_semantics = [#tpu.dimension_semantics<parallel>], iteration_bounds = array<i64: 1>, scalar_prefetch = 0 : i64, scratch_operands = 2 : i64, tpu.core_type = #tpu.core_type<tc>, window_params = [{transform_indices = @transform_0, window_bounds = array<i64: 8, 8, 128>}, {pipeline_mode = #tpu.pipeline_mode<synchronous>, transform_indices = @transform_1, window_bounds = array<i64: 128, 512>}, {pipeline_mode = #tpu.pipeline_mode<synchronous>, transform_indices = @transform_2, window_bounds = array<i64: 128, 512>}, {pipeline_mode = #tpu.pipeline_mode<synchronous>, transform_indices = @transform_3, window_bounds = array<i64: 1, 512>}, {pipeline_mode = #tpu.pipeline_mode<synchronous>, transform_indices = @transform_4, window_bounds = array<i64: 128, 512>}, {pipeline_mode = #tpu.pipeline_mode<synchronous>, transform_indices = @transform_5, window_bounds = array<i64: 128, 512>}, {pipeline_mode = #tpu.pipeline_mode<synchronous>, transform_indices = @transform_6, window_bounds = array<i64: 1, 512>}, {pipeline_mode = #tpu.pipeline_mode<synchronous>, transform_indices = @transform_7, window_bounds = array<i64: 128, 512>}, {pipeline_mode = #tpu.pipeline_mode<synchronous>, transform_indices = @transform_8, window_bounds = array<i64: 128, 512>}, {pipeline_mode = #tpu.pipeline_mode<synchronous>, transform_indices = @transform_9, window_bounds = array<i64: 1, 512>}, {transform_indices = @transform_10, window_bounds = array<i64: 8, 128>}, {transform_indices = @transform_11, window_bounds = array<i64: 8, 128>}]} {
    %c0 = arith.constant 0 : index
    %c0_0 = arith.constant 0 : index
    %c0_1 = arith.constant 0 : index
    %0 = vector.load %arg1[%c0, %c0_0, %c0_1] : memref<8x8x128xf32, #tpu.memory_space<vmem>>, vector<8x8x128xf32>
    %1 = arith.truncf %0 : vector<8x8x128xf32> to vector<8x8x128xbf16>
    %2 = vector.shape_cast %1 : vector<8x8x128xbf16> to vector<64x128xbf16>
    %c0_2 = arith.constant 0 : index
    %c0_3 = arith.constant 0 : index
    %3 = vector.load %arg2[%c0_2, %c0_3] : memref<128x512xbf16, #tpu.memory_space<vmem>>, vector<128x512xbf16>
    %cst = arith.constant dense<0.000000e+00> : vector<64x512xf32>
    %4 = tpu.matmul %2, %3, %cst {dimension_numbers = #tpu.dot_dimension_numbers<[1], [0], [0], [1], [0, 0, 1, 1], [], []>} : vector<64x128xbf16>, vector<128x512xbf16>, vector<64x512xf32> -> vector<64x512xf32>
    %c0_4 = arith.constant 0 : index
    %c0_5 = arith.constant 0 : index
    %5 = vector.load %arg4[%c0_4, %c0_5] : memref<1x512xf32, #tpu.memory_space<vmem>>, vector<1x512xf32>
    %6 = vector.broadcast %5 : vector<1x512xf32> to vector<64x512xf32>
    %7 = arith.addf %4, %6 : vector<64x512xf32>
    %8 = vector.shape_cast %7 : vector<64x512xf32> to vector<8x8x512xf32>
    %c0_6 = arith.constant 0 : index
    %c0_7 = arith.constant 0 : index
    %c0_8 = arith.constant 0 : index
    %9 = vector.load %arg13[%c0_6, %c0_7, %c0_8] : memref<16x8x512xf32, #tpu.memory_space<vmem>>, vector<8x8x512xf32>
    tpu.vector_store %arg13[%c0_6, %c0_7, %c0_8], %8 {strides = array<i32>} : memref<16x8x512xf32, #tpu.memory_space<vmem>>, vector<8x8x512xf32>,
    %cst_9 = arith.constant 0.000000e+00 : f32
    %10 = vector.broadcast %cst_9 : f32 to vector<8x128xf32>
    %cst_10 = arith.constant 0.000000e+00 : f32
    %11 = vector.broadcast %cst_10 : f32 to vector<8x128xf32>
    %c0_i32 = arith.constant 0 : i32
    %c2_i32 = arith.constant 2 : i32
    %c0_i32_11 = arith.constant 0 : i32
    %12 = arith.cmpi eq, %c2_i32, %c0_i32_11 : i32
    %c1_i32 = arith.constant 1 : i32
    %13 = arith.select %12, %c1_i32, %c2_i32 : i32
    %14 = arith.remsi %c0_i32, %13 : i32
    %c0_i32_12 = arith.constant 0 : i32
    %15 = arith.cmpi ne, %14, %c0_i32_12 : i32
    %c0_i32_13 = arith.constant 0 : i32
    %16 = arith.cmpi slt, %14, %c0_i32_13 : i32
    %c0_i32_14 = arith.constant 0 : i32
    %17 = arith.cmpi slt, %13, %c0_i32_14 : i32
    %18 = arith.xori %16, %17 : i1
    %19 = arith.andi %18, %15 : i1
    %20 = arith.addi %14, %13 : i32
    %21 = arith.select %19, %20, %14 : i32
    %c8_i32 = arith.constant 8 : i32
    %22 = arith.muli %21, %c8_i32 : i32
    %c0_i32_15 = arith.constant 0 : i32
    %23 = arith.addi %22, %c0_i32_15 : i32
    %24 = arith.index_cast %23 : i32 to index
    %c0_16 = arith.constant 0 : index
    %c0_17 = arith.constant 0 : index
    %25 = vector.load %arg13[%24, %c0_16, %c0_17] : memref<16x8x512xf32, #tpu.memory_space<vmem>>, vector<1x8x512xf32>
    %26 = vector.shape_cast %25 : vector<1x8x512xf32> to vector<8x512xf32>
    %27 = arith.truncf %10 : vector<8x128xf32> to vector<8x128xbf16>
    %c0_18 = arith.constant 0 : index
    %c0_19 = arith.constant 0 : index
    %28 = vector.load %arg3[%c0_18, %c0_19] : memref<128x512xbf16, #tpu.memory_space<vmem>>, vector<128x512xbf16>
    %cst_20 = arith.constant dense<0.000000e+00> : vector<8x512xf32>
    %29 = tpu.matmul %27, %28, %cst_20 {dimension_numbers = #tpu.dot_dimension_numbers<[1], [0], [0], [1], [0, 0, 1, 1], [], []>} : vector<8x128xbf16>, vector<128x512xbf16>, vector<8x512xf32> -> vector<8x512xf32>
    %30 = arith.addf %26, %29 : vector<8x512xf32>
    %31 = vector.extract_strided_slice %30 {offsets = [0, 0], sizes = [8, 128], strides = [1, 1]} : vector<8x512xf32> to vector<8x128xf32>
    %32 = arith.negf %31 : vector<8x128xf32>
    %33 = math.exp %32 : vector<8x128xf32>
    %cst_21 = arith.constant 1.000000e+00 : f32
    %34 = vector.broadcast %cst_21 : f32 to vector<8x128xf32>
    %35 = arith.addf %34, %33 : vector<8x128xf32>
    %36 = arith.divf %34, %35 : vector<8x128xf32>
    %37 = vector.extract_strided_slice %30 {offsets = [0, 128], sizes = [8, 128], strides = [1, 1]} : vector<8x512xf32> to vector<8x128xf32>
    %38 = arith.negf %37 : vector<8x128xf32>
    %39 = math.exp %38 : vector<8x128xf32>
    %cst_22 = arith.constant 1.000000e+00 : f32
    %40 = vector.broadcast %cst_22 : f32 to vector<8x128xf32>
    %41 = arith.addf %40, %39 : vector<8x128xf32>
    %42 = arith.divf %40, %41 : vector<8x128xf32>
    %43 = vector.extract_strided_slice %30 {offsets = [0, 256], sizes = [8, 128], strides = [1, 1]} : vector<8x512xf32> to vector<8x128xf32>
    %44 = math.tanh %43 : vector<8x128xf32>
    %45 = vector.extract_strided_slice %30 {offsets = [0, 384], sizes = [8, 128], strides = [1, 1]} : vector<8x512xf32> to vector<8x128xf32>
    %46 = arith.negf %45 : vector<8x128xf32>
    %47 = math.exp %46 : vector<8x128xf32>
    %cst_23 = arith.constant 1.000000e+00 : f32
    %48 = vector.broadcast %cst_23 : f32 to vector<8x128xf32>
    %49 = arith.addf %48, %47 : vector<8x128xf32>
    %50 = arith.divf %48, %49 : vector<8x128xf32>
    %51 = arith.mulf %42, %11 : vector<8x128xf32>
    %52 = arith.mulf %36, %44 : vector<8x128xf32>
    %53 = arith.addf %51, %52 : vector<8x128xf32>
    %54 = math.tanh %53 : vector<8x128xf32>
    %55 = arith.mulf %50, %54 : vector<8x128xf32>
    %56 = arith.truncf %55 : vector<8x128xf32> to vector<8x128xbf16>
    %c8_i32_24 = arith.constant 8 : i32
    %57 = arith.muli %c0_i32, %c8_i32_24 : i32
    %58 = arith.addi %57, %c0_i32_15 : i32
    %59 = arith.index_cast %58 : i32 to index
    %c0_25 = arith.constant 0 : index
    %c0_26 = arith.constant 0 : index
    %60 = vector.load %arg14[%59, %c0_25, %c0_26] : memref<8x8x128xbf16, #tpu.memory_space<vmem>>, vector<1x8x128xbf16>
    %61 = vector.shape_cast %60 : vector<1x8x128xbf16> to vector<8x128xbf16>
    %62 = vector.shape_cast %56 : vector<8x128xbf16> to vector<1x8x128xbf16>
    tpu.vector_store %arg14[%59, %c0_25, %c0_26], %62 {strides = array<i32>} : memref<8x8x128xbf16, #tpu.memory_space<vmem>>, vector<1x8x128xbf16>,
    %c1_i32_27 = arith.constant 1 : i32
    %63 = arith.addi %22, %c1_i32_27 : i32
    %64 = arith.index_cast %63 : i32 to index
    %c0_28 = arith.constant 0 : index
    %c0_29 = arith.constant 0 : index
    %65 = vector.load %arg13[%64, %c0_28, %c0_29] : memref<16x8x512xf32, #tpu.memory_space<vmem>>, vector<1x8x512xf32>
    %66 = vector.shape_cast %65 : vector<1x8x512xf32> to vector<8x512xf32>
    %67 = arith.truncf %55 : vector<8x128xf32> to vector<8x128xbf16>
    %c0_30 = arith.constant 0 : index
    %c0_31 = arith.constant 0 : index
    %68 = vector.load %arg3[%c0_30, %c0_31] : memref<128x512xbf16, #tpu.memory_space<vmem>>, vector<128x512xbf16>
    %cst_32 = arith.constant dense<0.000000e+00> : vector<8x512xf32>
    %69 = tpu.matmul %67, %68, %cst_32 {dimension_numbers = #tpu.dot_dimension_numbers<[1], [0], [0], [1], [0, 0, 1, 1], [], []>} : vector<8x128xbf16>, vector<128x512xbf16>, vector<8x512xf32> -> vector<8x512xf32>
    %70 = arith.addf %66, %69 : vector<8x512xf32>
    %71 = vector.extract_strided_slice %70 {offsets = [0, 0], sizes = [8, 128], strides = [1, 1]} : vector<8x512xf32> to vector<8x128xf32>
    %72 = arith.negf %71 : vector<8x128xf32>
    %73 = math.exp %72 : vector<8x128xf32>
    %cst_33 = arith.constant 1.000000e+00 : f32
    %74 = vector.broadcast %cst_33 : f32 to vector<8x128xf32>
    %75 = arith.addf %74, %73 : vector<8x128xf32>
    %76 = arith.divf %74, %75 : vector<8x128xf32>
    %77 = vector.extract_strided_slice %70 {offsets = [0, 128], sizes = [8, 128], strides = [1, 1]} : vector<8x512xf32> to vector<8x128xf32>
    %78 = arith.negf %77 : vector<8x128xf32>
    %79 = math.exp %78 : vector<8x128xf32>
    %cst_34 = arith.constant 1.000000e+00 : f32
    %80 = vector.broadcast %cst_34 : f32 to vector<8x128xf32>
    %81 = arith.addf %80, %79 : vector<8x128xf32>
    %82 = arith.divf %80, %81 : vector<8x128xf32>
    %83 = vector.extract_strided_slice %70 {offsets = [0, 256], sizes = [8, 128], strides = [1, 1]} : vector<8x512xf32> to vector<8x128xf32>
    %84 = math.tanh %83 : vector<8x128xf32>
    %85 = vector.extract_strided_slice %70 {offsets = [0, 384], sizes = [8, 128], strides = [1, 1]} : vector<8x512xf32> to vector<8x128xf32>
    %86 = arith.negf %85 : vector<8x128xf32>
    %87 = math.exp %86 : vector<8x128xf32>
    %cst_35 = arith.constant 1.000000e+00 : f32
    %88 = vector.broadcast %cst_35 : f32 to vector<8x128xf32>
    %89 = arith.addf %88, %87 : vector<8x128xf32>
    %90 = arith.divf %88, %89 : vector<8x128xf32>
    %91 = arith.mulf %82, %53 : vector<8x128xf32>
    %92 = arith.mulf %76, %84 : vector<8x128xf32>
    %93 = arith.addf %91, %92 : vector<8x128xf32>
    %94 = math.tanh %93 : vector<8x128xf32>
    %95 = arith.mulf %90, %94 : vector<8x128xf32>
    %96 = arith.truncf %95 : vector<8x128xf32> to vector<8x128xbf16>
    %c8_i32_36 = arith.constant 8 : i32
    %97 = arith.muli %c0_i32, %c8_i32_36 : i32
    %98 = arith.addi %97, %c1_i32_27 : i32
    %99 = arith.index_cast %98 : i32 to index
    %c0_37 = arith.constant 0 : index
    %c0_38 = arith.constant 0 : index
    %100 = vector.load %arg14[%99, %c0_37, %c0_38] : memref<8x8x128xbf16, #tpu.memory_space<vmem>>, vector<1x8x128xbf16>
    %101 = vector.shape_cast %100 : vector<1x8x128xbf16> to vector<8x128xbf16>
    %102 = vector.shape_cast %96 : vector<8x128xbf16> to vector<1x8x128xbf16>
    tpu.vector_store %arg14[%99, %c0_37, %c0_38], %102 {strides = array<i32>} : memref<8x8x128xbf16, #tpu.memory_space<vmem>>, vector<1x8x128xbf16>,
    %c2_i32_39 = arith.constant 2 : i32
    %103 = arith.addi %22, %c2_i32_39 : i32
    %104 = arith.index_cast %103 : i32 to index
    %c0_40 = arith.constant 0 : index
    %c0_41 = arith.constant 0 : index
    %105 = vector.load %arg13[%104, %c0_40, %c0_41] : memref<16x8x512xf32, #tpu.memory_space<vmem>>, vector<1x8x512xf32>
    %106 = vector.shape_cast %105 : vector<1x8x512xf32> to vector<8x512xf32>
    %107 = arith.truncf %95 : vector<8x128xf32> to vector<8x128xbf16>
    %c0_42 = arith.constant 0 : index
    %c0_43 = arith.constant 0 : index
    %108 = vector.load %arg3[%c0_42, %c0_43] : memref<128x512xbf16, #tpu.memory_space<vmem>>, vector<128x512xbf16>
    %cst_44 = arith.constant dense<0.000000e+00> : vector<8x512xf32>
    %109 = tpu.matmul %107, %108, %cst_44 {dimension_numbers = #tpu.dot_dimension_numbers<[1], [0], [0], [1], [0, 0, 1, 1], [], []>} : vector<8x128xbf16>, vector<128x512xbf16>, vector<8x512xf32> -> vector<8x512xf32>
    %110 = arith.addf %106, %109 : vector<8x512xf32>
    %111 = vector.extract_strided_slice %110 {offsets = [0, 0], sizes = [8, 128], strides = [1, 1]} : vector<8x512xf32> to vector<8x128xf32>
    %112 = arith.negf %111 : vector<8x128xf32>
    %113 = math.exp %112 : vector<8x128xf32>
    %cst_45 = arith.constant 1.000000e+00 : f32
    %114 = vector.broadcast %cst_45 : f32 to vector<8x128xf32>
    %115 = arith.addf %114, %113 : vector<8x128xf32>
    %116 = arith.divf %114, %115 : vector<8x128xf32>
    %117 = vector.extract_strided_slice %110 {offsets = [0, 128], sizes = [8, 128], strides = [1, 1]} : vector<8x512xf32> to vector<8x128xf32>
    %118 = arith.negf %117 : vector<8x128xf32>
    %119 = math.exp %118 : vector<8x128xf32>
    %cst_46 = arith.constant 1.000000e+00 : f32
    %120 = vector.broadcast %cst_46 : f32 to vector<8x128xf32>
    %121 = arith.addf %120, %119 : vector<8x128xf32>
    %122 = arith.divf %120, %121 : vector<8x128xf32>
    %123 = vector.extract_strided_slice %110 {offsets = [0, 256], sizes = [8, 128], strides = [1, 1]} : vector<8x512xf32> to vector<8x128xf32>
    %124 = math.tanh %123 : vector<8x128xf32>
    %125 = vector.extract_strided_slice %110 {offsets = [0, 384], sizes = [8, 128], strides = [1, 1]} : vector<8x512xf32> to vector<8x128xf32>
    %126 = arith.negf %125 : vector<8x128xf32>
    %127 = math.exp %126 : vector<8x128xf32>
    %cst_47 = arith.constant 1.000000e+00 : f32
    %128 = vector.broadcast %cst_47 : f32 to vector<8x128xf32>
    %129 = arith.addf %128, %127 : vector<8x128xf32>
    %130 = arith.divf %128, %129 : vector<8x128xf32>
    %131 = arith.mulf %122, %93 : vector<8x128xf32>
    %132 = arith.mulf %116, %124 : vector<8x128xf32>
    %133 = arith.addf %131, %132 : vector<8x128xf32>
    %134 = math.tanh %133 : vector<8x128xf32>
    %135 = arith.mulf %130, %134 : vector<8x128xf32>
    %136 = arith.truncf %135 : vector<8x128xf32> to vector<8x128xbf16>
    %c8_i32_48 = arith.constant 8 : i32
    %137 = arith.muli %c0_i32, %c8_i32_48 : i32
    %138 = arith.addi %137, %c2_i32_39 : i32
    %139 = arith.index_cast %138 : i32 to index
    %c0_49 = arith.constant 0 : index
    %c0_50 = arith.constant 0 : index
    %140 = vector.load %arg14[%139, %c0_49, %c0_50] : memref<8x8x128xbf16, #tpu.memory_space<vmem>>, vector<1x8x128xbf16>
    %141 = vector.shape_cast %140 : vector<1x8x128xbf16> to vector<8x128xbf16>
    %142 = vector.shape_cast %136 : vector<8x128xbf16> to vector<1x8x128xbf16>
    tpu.vector_store %arg14[%139, %c0_49, %c0_50], %142 {strides = array<i32>} : memref<8x8x128xbf16, #tpu.memory_space<vmem>>, vector<1x8x128xbf16>,
    %c3_i32 = arith.constant 3 : i32
    %143 = arith.addi %22, %c3_i32 : i32
    %144 = arith.index_cast %143 : i32 to index
    %c0_51 = arith.constant 0 : index
    %c0_52 = arith.constant 0 : index
    %145 = vector.load %arg13[%144, %c0_51, %c0_52] : memref<16x8x512xf32, #tpu.memory_space<vmem>>, vector<1x8x512xf32>
    %146 = vector.shape_cast %145 : vector<1x8x512xf32> to vector<8x512xf32>
    %147 = arith.truncf %135 : vector<8x128xf32> to vector<8x128xbf16>
    %c0_53 = arith.constant 0 : index
    %c0_54 = arith.constant 0 : index
    %148 = vector.load %arg3[%c0_53, %c0_54] : memref<128x512xbf16, #tpu.memory_space<vmem>>, vector<128x512xbf16>
    %cst_55 = arith.constant dense<0.000000e+00> : vector<8x512xf32>
    %149 = tpu.matmul %147, %148, %cst_55 {dimension_numbers = #tpu.dot_dimension_numbers<[1], [0], [0], [1], [0, 0, 1, 1], [], []>} : vector<8x128xbf16>, vector<128x512xbf16>, vector<8x512xf32> -> vector<8x512xf32>
    %150 = arith.addf %146, %149 : vector<8x512xf32>
    %151 = vector.extract_strided_slice %150 {offsets = [0, 0], sizes = [8, 128], strides = [1, 1]} : vector<8x512xf32> to vector<8x128xf32>
    %152 = arith.negf %151 : vector<8x128xf32>
    %153 = math.exp %152 : vector<8x128xf32>
    %cst_56 = arith.constant 1.000000e+00 : f32
    %154 = vector.broadcast %cst_56 : f32 to vector<8x128xf32>
    %155 = arith.addf %154, %153 : vector<8x128xf32>
    %156 = arith.divf %154, %155 : vector<8x128xf32>
    %157 = vector.extract_strided_slice %150 {offsets = [0, 128], sizes = [8, 128], strides = [1, 1]} : vector<8x512xf32> to vector<8x128xf32>
    %158 = arith.negf %157 : vector<8x128xf32>
    %159 = math.exp %158 : vector<8x128xf32>
    %cst_57 = arith.constant 1.000000e+00 : f32
    %160 = vector.broadcast %cst_57 : f32 to vector<8x128xf32>
    %161 = arith.addf %160, %159 : vector<8x128xf32>
    %162 = arith.divf %160, %161 : vector<8x128xf32>
    %163 = vector.extract_strided_slice %150 {offsets = [0, 256], sizes = [8, 128], strides = [1, 1]} : vector<8x512xf32> to vector<8x128xf32>
    %164 = math.tanh %163 : vector<8x128xf32>
    %165 = vector.extract_strided_slice %150 {offsets = [0, 384], sizes = [8, 128], strides = [1, 1]} : vector<8x512xf32> to vector<8x128xf32>
    %166 = arith.negf %165 : vector<8x128xf32>
    %167 = math.exp %166 : vector<8x128xf32>
    %cst_58 = arith.constant 1.000000e+00 : f32
    %168 = vector.broadcast %cst_58 : f32 to vector<8x128xf32>
    %169 = arith.addf %168, %167 : vector<8x128xf32>
    %170 = arith.divf %168, %169 : vector<8x128xf32>
    %171 = arith.mulf %162, %133 : vector<8x128xf32>
    %172 = arith.mulf %156, %164 : vector<8x128xf32>
    %173 = arith.addf %171, %172 : vector<8x128xf32>
    %174 = math.tanh %173 : vector<8x128xf32>
    %175 = arith.mulf %170, %174 : vector<8x128xf32>
    %176 = arith.truncf %175 : vector<8x128xf32> to vector<8x128xbf16>
    %c8_i32_59 = arith.constant 8 : i32
    %177 = arith.muli %c0_i32, %c8_i32_59 : i32
    %178 = arith.addi %177, %c3_i32 : i32
    %179 = arith.index_cast %178 : i32 to index
    %c0_60 = arith.constant 0 : index
    %c0_61 = arith.constant 0 : index
    %180 = vector.load %arg14[%179, %c0_60, %c0_61] : memref<8x8x128xbf16, #tpu.memory_space<vmem>>, vector<1x8x128xbf16>
    %181 = vector.shape_cast %180 : vector<1x8x128xbf16> to vector<8x128xbf16>
    %182 = vector.shape_cast %176 : vector<8x128xbf16> to vector<1x8x128xbf16>
    tpu.vector_store %arg14[%179, %c0_60, %c0_61], %182 {strides = array<i32>} : memref<8x8x128xbf16, #tpu.memory_space<vmem>>, vector<1x8x128xbf16>,
    %c4_i32 = arith.constant 4 : i32
    %183 = arith.addi %22, %c4_i32 : i32
    %184 = arith.index_cast %183 : i32 to index
    %c0_62 = arith.constant 0 : index
    %c0_63 = arith.constant 0 : index
    %185 = vector.load %arg13[%184, %c0_62, %c0_63] : memref<16x8x512xf32, #tpu.memory_space<vmem>>, vector<1x8x512xf32>
    %186 = vector.shape_cast %185 : vector<1x8x512xf32> to vector<8x512xf32>
    %187 = arith.truncf %175 : vector<8x128xf32> to vector<8x128xbf16>
    %c0_64 = arith.constant 0 : index
    %c0_65 = arith.constant 0 : index
    %188 = vector.load %arg3[%c0_64, %c0_65] : memref<128x512xbf16, #tpu.memory_space<vmem>>, vector<128x512xbf16>
    %cst_66 = arith.constant dense<0.000000e+00> : vector<8x512xf32>
    %189 = tpu.matmul %187, %188, %cst_66 {dimension_numbers = #tpu.dot_dimension_numbers<[1], [0], [0], [1], [0, 0, 1, 1], [], []>} : vector<8x128xbf16>, vector<128x512xbf16>, vector<8x512xf32> -> vector<8x512xf32>
    %190 = arith.addf %186, %189 : vector<8x512xf32>
    %191 = vector.extract_strided_slice %190 {offsets = [0, 0], sizes = [8, 128], strides = [1, 1]} : vector<8x512xf32> to vector<8x128xf32>
    %192 = arith.negf %191 : vector<8x128xf32>
    %193 = math.exp %192 : vector<8x128xf32>
    %cst_67 = arith.constant 1.000000e+00 : f32
    %194 = vector.broadcast %cst_67 : f32 to vector<8x128xf32>
    %195 = arith.addf %194, %193 : vector<8x128xf32>
    %196 = arith.divf %194, %195 : vector<8x128xf32>
    %197 = vector.extract_strided_slice %190 {offsets = [0, 128], sizes = [8, 128], strides = [1, 1]} : vector<8x512xf32> to vector<8x128xf32>
    %198 = arith.negf %197 : vector<8x128xf32>
    %199 = math.exp %198 : vector<8x128xf32>
    %cst_68 = arith.constant 1.000000e+00 : f32
    %200 = vector.broadcast %cst_68 : f32 to vector<8x128xf32>
    %201 = arith.addf %200, %199 : vector<8x128xf32>
    %202 = arith.divf %200, %201 : vector<8x128xf32>
    %203 = vector.extract_strided_slice %190 {offsets = [0, 256], sizes = [8, 128], strides = [1, 1]} : vector<8x512xf32> to vector<8x128xf32>
    %204 = math.tanh %203 : vector<8x128xf32>
    %205 = vector.extract_strided_slice %190 {offsets = [0, 384], sizes = [8, 128], strides = [1, 1]} : vector<8x512xf32> to vector<8x128xf32>
    %206 = arith.negf %205 : vector<8x128xf32>
    %207 = math.exp %206 : vector<8x128xf32>
    %cst_69 = arith.constant 1.000000e+00 : f32
    %208 = vector.broadcast %cst_69 : f32 to vector<8x128xf32>
    %209 = arith.addf %208, %207 : vector<8x128xf32>
    %210 = arith.divf %208, %209 : vector<8x128xf32>
    %211 = arith.mulf %202, %173 : vector<8x128xf32>
    %212 = arith.mulf %196, %204 : vector<8x128xf32>
    %213 = arith.addf %211, %212 : vector<8x128xf32>
    %214 = math.tanh %213 : vector<8x128xf32>
    %215 = arith.mulf %210, %214 : vector<8x128xf32>
    %216 = arith.truncf %215 : vector<8x128xf32> to vector<8x128xbf16>
    %c8_i32_70 = arith.constant 8 : i32
    %217 = arith.muli %c0_i32, %c8_i32_70 : i32
    %218 = arith.addi %217, %c4_i32 : i32
    %219 = arith.index_cast %218 : i32 to index
    %c0_71 = arith.constant 0 : index
    %c0_72 = arith.constant 0 : index
    %220 = vector.load %arg14[%219, %c0_71, %c0_72] : memref<8x8x128xbf16, #tpu.memory_space<vmem>>, vector<1x8x128xbf16>
    %221 = vector.shape_cast %220 : vector<1x8x128xbf16> to vector<8x128xbf16>
    %222 = vector.shape_cast %216 : vector<8x128xbf16> to vector<1x8x128xbf16>
    tpu.vector_store %arg14[%219, %c0_71, %c0_72], %222 {strides = array<i32>} : memref<8x8x128xbf16, #tpu.memory_space<vmem>>, vector<1x8x128xbf16>,
    %c5_i32 = arith.constant 5 : i32
    %223 = arith.addi %22, %c5_i32 : i32
    %224 = arith.index_cast %223 : i32 to index
    %c0_73 = arith.constant 0 : index
    %c0_74 = arith.constant 0 : index
    %225 = vector.load %arg13[%224, %c0_73, %c0_74] : memref<16x8x512xf32, #tpu.memory_space<vmem>>, vector<1x8x512xf32>
    %226 = vector.shape_cast %225 : vector<1x8x512xf32> to vector<8x512xf32>
    %227 = arith.truncf %215 : vector<8x128xf32> to vector<8x128xbf16>
    %c0_75 = arith.constant 0 : index
    %c0_76 = arith.constant 0 : index
    %228 = vector.load %arg3[%c0_75, %c0_76] : memref<128x512xbf16, #tpu.memory_space<vmem>>, vector<128x512xbf16>
    %cst_77 = arith.constant dense<0.000000e+00> : vector<8x512xf32>
    %229 = tpu.matmul %227, %228, %cst_77 {dimension_numbers = #tpu.dot_dimension_numbers<[1], [0], [0], [1], [0, 0, 1, 1], [], []>} : vector<8x128xbf16>, vector<128x512xbf16>, vector<8x512xf32> -> vector<8x512xf32>
    %230 = arith.addf %226, %229 : vector<8x512xf32>
    %231 = vector.extract_strided_slice %230 {offsets = [0, 0], sizes = [8, 128], strides = [1, 1]} : vector<8x512xf32> to vector<8x128xf32>
    %232 = arith.negf %231 : vector<8x128xf32>
    %233 = math.exp %232 : vector<8x128xf32>
    %cst_78 = arith.constant 1.000000e+00 : f32
    %234 = vector.broadcast %cst_78 : f32 to vector<8x128xf32>
    %235 = arith.addf %234, %233 : vector<8x128xf32>
    %236 = arith.divf %234, %235 : vector<8x128xf32>
    %237 = vector.extract_strided_slice %230 {offsets = [0, 128], sizes = [8, 128], strides = [1, 1]} : vector<8x512xf32> to vector<8x128xf32>
    %238 = arith.negf %237 : vector<8x128xf32>
    %239 = math.exp %238 : vector<8x128xf32>
    %cst_79 = arith.constant 1.000000e+00 : f32
    %240 = vector.broadcast %cst_79 : f32 to vector<8x128xf32>
    %241 = arith.addf %240, %239 : vector<8x128xf32>
    %242 = arith.divf %240, %241 : vector<8x128xf32>
    %243 = vector.extract_strided_slice %230 {offsets = [0, 256], sizes = [8, 128], strides = [1, 1]} : vector<8x512xf32> to vector<8x128xf32>
    %244 = math.tanh %243 : vector<8x128xf32>
    %245 = vector.extract_strided_slice %230 {offsets = [0, 384], sizes = [8, 128], strides = [1, 1]} : vector<8x512xf32> to vector<8x128xf32>
    %246 = arith.negf %245 : vector<8x128xf32>
    %247 = math.exp %246 : vector<8x128xf32>
    %cst_80 = arith.constant 1.000000e+00 : f32
    %248 = vector.broadcast %cst_80 : f32 to vector<8x128xf32>
    %249 = arith.addf %248, %247 : vector<8x128xf32>
    %250 = arith.divf %248, %249 : vector<8x128xf32>
    %251 = arith.mulf %242, %213 : vector<8x128xf32>
    %252 = arith.mulf %236, %244 : vector<8x128xf32>
    %253 = arith.addf %251, %252 : vector<8x128xf32>
    %254 = math.tanh %253 : vector<8x128xf32>
    %255 = arith.mulf %250, %254 : vector<8x128xf32>
    %256 = arith.truncf %255 : vector<8x128xf32> to vector<8x128xbf16>
    %c8_i32_81 = arith.constant 8 : i32
    %257 = arith.muli %c0_i32, %c8_i32_81 : i32
    %258 = arith.addi %257, %c5_i32 : i32
    %259 = arith.index_cast %258 : i32 to index
    %c0_82 = arith.constant 0 : index
    %c0_83 = arith.constant 0 : index
    %260 = vector.load %arg14[%259, %c0_82, %c0_83] : memref<8x8x128xbf16, #tpu.memory_space<vmem>>, vector<1x8x128xbf16>
    %261 = vector.shape_cast %260 : vector<1x8x128xbf16> to vector<8x128xbf16>
    %262 = vector.shape_cast %256 : vector<8x128xbf16> to vector<1x8x128xbf16>
    tpu.vector_store %arg14[%259, %c0_82, %c0_83], %262 {strides = array<i32>} : memref<8x8x128xbf16, #tpu.memory_space<vmem>>, vector<1x8x128xbf16>,
    %c6_i32 = arith.constant 6 : i32
    %263 = arith.addi %22, %c6_i32 : i32
    %264 = arith.index_cast %263 : i32 to index
    %c0_84 = arith.constant 0 : index
    %c0_85 = arith.constant 0 : index
    %265 = vector.load %arg13[%264, %c0_84, %c0_85] : memref<16x8x512xf32, #tpu.memory_space<vmem>>, vector<1x8x512xf32>
    %266 = vector.shape_cast %265 : vector<1x8x512xf32> to vector<8x512xf32>
    %267 = arith.truncf %255 : vector<8x128xf32> to vector<8x128xbf16>
    %c0_86 = arith.constant 0 : index
    %c0_87 = arith.constant 0 : index
    %268 = vector.load %arg3[%c0_86, %c0_87] : memref<128x512xbf16, #tpu.memory_space<vmem>>, vector<128x512xbf16>
    %cst_88 = arith.constant dense<0.000000e+00> : vector<8x512xf32>
    %269 = tpu.matmul %267, %268, %cst_88 {dimension_numbers = #tpu.dot_dimension_numbers<[1], [0], [0], [1], [0, 0, 1, 1], [], []>} : vector<8x128xbf16>, vector<128x512xbf16>, vector<8x512xf32> -> vector<8x512xf32>
    %270 = arith.addf %266, %269 : vector<8x512xf32>
    %271 = vector.extract_strided_slice %270 {offsets = [0, 0], sizes = [8, 128], strides = [1, 1]} : vector<8x512xf32> to vector<8x128xf32>
    %272 = arith.negf %271 : vector<8x128xf32>
    %273 = math.exp %272 : vector<8x128xf32>
    %cst_89 = arith.constant 1.000000e+00 : f32
    %274 = vector.broadcast %cst_89 : f32 to vector<8x128xf32>
    %275 = arith.addf %274, %273 : vector<8x128xf32>
    %276 = arith.divf %274, %275 : vector<8x128xf32>
    %277 = vector.extract_strided_slice %270 {offsets = [0, 128], sizes = [8, 128], strides = [1, 1]} : vector<8x512xf32> to vector<8x128xf32>
    %278 = arith.negf %277 : vector<8x128xf32>
    %279 = math.exp %278 : vector<8x128xf32>
    %cst_90 = arith.constant 1.000000e+00 : f32
    %280 = vector.broadcast %cst_90 : f32 to vector<8x128xf32>
    %281 = arith.addf %280, %279 : vector<8x128xf32>
    %282 = arith.divf %280, %281 : vector<8x128xf32>
    %283 = vector.extract_strided_slice %270 {offsets = [0, 256], sizes = [8, 128], strides = [1, 1]} : vector<8x512xf32> to vector<8x128xf32>
    %284 = math.tanh %283 : vector<8x128xf32>
    %285 = vector.extract_strided_slice %270 {offsets = [0, 384], sizes = [8, 128], strides = [1, 1]} : vector<8x512xf32> to vector<8x128xf32>
    %286 = arith.negf %285 : vector<8x128xf32>
    %287 = math.exp %286 : vector<8x128xf32>
    %cst_91 = arith.constant 1.000000e+00 : f32
    %288 = vector.broadcast %cst_91 : f32 to vector<8x128xf32>
    %289 = arith.addf %288, %287 : vector<8x128xf32>
    %290 = arith.divf %288, %289 : vector<8x128xf32>
    %291 = arith.mulf %282, %253 : vector<8x128xf32>
    %292 = arith.mulf %276, %284 : vector<8x128xf32>
    %293 = arith.addf %291, %292 : vector<8x128xf32>
    %294 = math.tanh %293 : vector<8x128xf32>
    %295 = arith.mulf %290, %294 : vector<8x128xf32>
    %296 = arith.truncf %295 : vector<8x128xf32> to vector<8x128xbf16>
    %c8_i32_92 = arith.constant 8 : i32
    %297 = arith.muli %c0_i32, %c8_i32_92 : i32
    %298 = arith.addi %297, %c6_i32 : i32
    %299 = arith.index_cast %298 : i32 to index
    %c0_93 = arith.constant 0 : index
    %c0_94 = arith.constant 0 : index
    %300 = vector.load %arg14[%299, %c0_93, %c0_94] : memref<8x8x128xbf16, #tpu.memory_space<vmem>>, vector<1x8x128xbf16>
    %301 = vector.shape_cast %300 : vector<1x8x128xbf16> to vector<8x128xbf16>
    %302 = vector.shape_cast %296 : vector<8x128xbf16> to vector<1x8x128xbf16>
    tpu.vector_store %arg14[%299, %c0_93, %c0_94], %302 {strides = array<i32>} : memref<8x8x128xbf16, #tpu.memory_space<vmem>>, vector<1x8x128xbf16>,
    %c7_i32 = arith.constant 7 : i32
    %303 = arith.addi %22, %c7_i32 : i32
    %304 = arith.index_cast %303 : i32 to index
    %c0_95 = arith.constant 0 : index
    %c0_96 = arith.constant 0 : index
    %305 = vector.load %arg13[%304, %c0_95, %c0_96] : memref<16x8x512xf32, #tpu.memory_space<vmem>>, vector<1x8x512xf32>
    %306 = vector.shape_cast %305 : vector<1x8x512xf32> to vector<8x512xf32>
    %307 = arith.truncf %295 : vector<8x128xf32> to vector<8x128xbf16>
    %c0_97 = arith.constant 0 : index
    %c0_98 = arith.constant 0 : index
    %308 = vector.load %arg3[%c0_97, %c0_98] : memref<128x512xbf16, #tpu.memory_space<vmem>>, vector<128x512xbf16>
    %cst_99 = arith.constant dense<0.000000e+00> : vector<8x512xf32>
    %309 = tpu.matmul %307, %308, %cst_99 {dimension_numbers = #tpu.dot_dimension_numbers<[1], [0], [0], [1], [0, 0, 1, 1], [], []>} : vector<8x128xbf16>, vector<128x512xbf16>, vector<8x512xf32> -> vector<8x512xf32>
    %310 = arith.addf %306, %309 : vector<8x512xf32>
    %311 = vector.extract_strided_slice %310 {offsets = [0, 0], sizes = [8, 128], strides = [1, 1]} : vector<8x512xf32> to vector<8x128xf32>
    %312 = arith.negf %311 : vector<8x128xf32>
    %313 = math.exp %312 : vector<8x128xf32>
    %cst_100 = arith.constant 1.000000e+00 : f32
    %314 = vector.broadcast %cst_100 : f32 to vector<8x128xf32>
    %315 = arith.addf %314, %313 : vector<8x128xf32>
    %316 = arith.divf %314, %315 : vector<8x128xf32>
    %317 = vector.extract_strided_slice %310 {offsets = [0, 128], sizes = [8, 128], strides = [1, 1]} : vector<8x512xf32> to vector<8x128xf32>
    %318 = arith.negf %317 : vector<8x128xf32>
    %319 = math.exp %318 : vector<8x128xf32>
    %cst_101 = arith.constant 1.000000e+00 : f32
    %320 = vector.broadcast %cst_101 : f32 to vector<8x128xf32>
    %321 = arith.addf %320, %319 : vector<8x128xf32>
    %322 = arith.divf %320, %321 : vector<8x128xf32>
    %323 = vector.extract_strided_slice %310 {offsets = [0, 256], sizes = [8, 128], strides = [1, 1]} : vector<8x512xf32> to vector<8x128xf32>
    %324 = math.tanh %323 : vector<8x128xf32>
    %325 = vector.extract_strided_slice %310 {offsets = [0, 384], sizes = [8, 128], strides = [1, 1]} : vector<8x512xf32> to vector<8x128xf32>
    %326 = arith.negf %325 : vector<8x128xf32>
    %327 = math.exp %326 : vector<8x128xf32>
    %cst_102 = arith.constant 1.000000e+00 : f32
    %328 = vector.broadcast %cst_102 : f32 to vector<8x128xf32>
    %329 = arith.addf %328, %327 : vector<8x128xf32>
    %330 = arith.divf %328, %329 : vector<8x128xf32>
    %331 = arith.mulf %322, %293 : vector<8x128xf32>
    %332 = arith.mulf %316, %324 : vector<8x128xf32>
    %333 = arith.addf %331, %332 : vector<8x128xf32>
    %334 = math.tanh %333 : vector<8x128xf32>
    %335 = arith.mulf %330, %334 : vector<8x128xf32>
    %336 = arith.truncf %335 : vector<8x128xf32> to vector<8x128xbf16>
    %c8_i32_103 = arith.constant 8 : i32
    %337 = arith.muli %c0_i32, %c8_i32_103 : i32
    %338 = arith.addi %337, %c7_i32 : i32
    %339 = arith.index_cast %338 : i32 to index
    %c0_104 = arith.constant 0 : index
    %c0_105 = arith.constant 0 : index
    %340 = vector.load %arg14[%339, %c0_104, %c0_105] : memref<8x8x128xbf16, #tpu.memory_space<vmem>>, vector<1x8x128xbf16>
    %341 = vector.shape_cast %340 : vector<1x8x128xbf16> to vector<8x128xbf16>
    %342 = vector.shape_cast %336 : vector<8x128xbf16> to vector<1x8x128xbf16>
    tpu.vector_store %arg14[%339, %c0_104, %c0_105], %342 {strides = array<i32>} : memref<8x8x128xbf16, #tpu.memory_space<vmem>>, vector<1x8x128xbf16>,
    %c8_i32_106 = arith.constant 8 : i32
    %c1_i32_107 = arith.constant 1 : i32
    %c0_108 = arith.constant 0 : index
    %c0_109 = arith.constant 0 : index
    %c0_110 = arith.constant 0 : index
    %343 = vector.load %arg14[%c0_108, %c0_109, %c0_110] : memref<8x8x128xbf16, #tpu.memory_space<vmem>>, vector<8x8x128xbf16>
    %344 = vector.shape_cast %343 : vector<8x8x128xbf16> to vector<64x128xbf16>
    %c0_111 = arith.constant 0 : index
    %c0_112 = arith.constant 0 : index
    %345 = vector.load %arg5[%c0_111, %c0_112] : memref<128x512xbf16, #tpu.memory_space<vmem>>, vector<128x512xbf16>
    %cst_113 = arith.constant dense<0.000000e+00> : vector<64x512xf32>
    %346 = tpu.matmul %344, %345, %cst_113 {dimension_numbers = #tpu.dot_dimension_numbers<[1], [0], [0], [1], [0, 0, 1, 1], [], []>} : vector<64x128xbf16>, vector<128x512xbf16>, vector<64x512xf32> -> vector<64x512xf32>
    %c0_114 = arith.constant 0 : index
    %c0_115 = arith.constant 0 : index
    %347 = vector.load %arg7[%c0_114, %c0_115] : memref<1x512xf32, #tpu.memory_space<vmem>>, vector<1x512xf32>
    %348 = vector.broadcast %347 : vector<1x512xf32> to vector<64x512xf32>
    %349 = arith.addf %346, %348 : vector<64x512xf32>
    %350 = vector.shape_cast %349 : vector<64x512xf32> to vector<8x8x512xf32>
    %c0_116 = arith.constant 0 : index
    %c0_117 = arith.constant 0 : index
    %c0_118 = arith.constant 0 : index
    %351 = vector.load %arg13[%c0_116, %c0_117, %c0_118] : memref<16x8x512xf32, #tpu.memory_space<vmem>>, vector<8x8x512xf32>
    tpu.vector_store %arg13[%c0_116, %c0_117, %c0_118], %350 {strides = array<i32>} : memref<16x8x512xf32, #tpu.memory_space<vmem>>, vector<8x8x512xf32>,
    %cst_119 = arith.constant 0.000000e+00 : f32
    %352 = vector.broadcast %cst_119 : f32 to vector<8x128xf32>
    %cst_120 = arith.constant 0.000000e+00 : f32
    %353 = vector.broadcast %cst_120 : f32 to vector<8x128xf32>
    %c0_i32_121 = arith.constant 0 : i32
    %c2_i32_122 = arith.constant 2 : i32
    %c0_i32_123 = arith.constant 0 : i32
    %354 = arith.cmpi eq, %c2_i32_122, %c0_i32_123 : i32
    %c1_i32_124 = arith.constant 1 : i32
    %355 = arith.select %354, %c1_i32_124, %c2_i32_122 : i32
    %356 = arith.remsi %c0_i32_121, %355 : i32
    %c0_i32_125 = arith.constant 0 : i32
    %357 = arith.cmpi ne, %356, %c0_i32_125 : i32
    %c0_i32_126 = arith.constant 0 : i32
    %358 = arith.cmpi slt, %356, %c0_i32_126 : i32
    %c0_i32_127 = arith.constant 0 : i32
    %359 = arith.cmpi slt, %355, %c0_i32_127 : i32
    %360 = arith.xori %358, %359 : i1
    %361 = arith.andi %360, %357 : i1
    %362 = arith.addi %356, %355 : i32
    %363 = arith.select %361, %362, %356 : i32
    %c8_i32_128 = arith.constant 8 : i32
    %364 = arith.muli %363, %c8_i32_128 : i32
    %c0_i32_129 = arith.constant 0 : i32
    %365 = arith.addi %364, %c0_i32_129 : i32
    %366 = arith.index_cast %365 : i32 to index
    %c0_130 = arith.constant 0 : index
    %c0_131 = arith.constant 0 : index
    %367 = vector.load %arg13[%366, %c0_130, %c0_131] : memref<16x8x512xf32, #tpu.memory_space<vmem>>, vector<1x8x512xf32>
    %368 = vector.shape_cast %367 : vector<1x8x512xf32> to vector<8x512xf32>
    %369 = arith.truncf %352 : vector<8x128xf32> to vector<8x128xbf16>
    %c0_132 = arith.constant 0 : index
    %c0_133 = arith.constant 0 : index
    %370 = vector.load %arg6[%c0_132, %c0_133] : memref<128x512xbf16, #tpu.memory_space<vmem>>, vector<128x512xbf16>
    %cst_134 = arith.constant dense<0.000000e+00> : vector<8x512xf32>
    %371 = tpu.matmul %369, %370, %cst_134 {dimension_numbers = #tpu.dot_dimension_numbers<[1], [0], [0], [1], [0, 0, 1, 1], [], []>} : vector<8x128xbf16>, vector<128x512xbf16>, vector<8x512xf32> -> vector<8x512xf32>
    %372 = arith.addf %368, %371 : vector<8x512xf32>
    %373 = vector.extract_strided_slice %372 {offsets = [0, 0], sizes = [8, 128], strides = [1, 1]} : vector<8x512xf32> to vector<8x128xf32>
    %374 = arith.negf %373 : vector<8x128xf32>
    %375 = math.exp %374 : vector<8x128xf32>
    %cst_135 = arith.constant 1.000000e+00 : f32
    %376 = vector.broadcast %cst_135 : f32 to vector<8x128xf32>
    %377 = arith.addf %376, %375 : vector<8x128xf32>
    %378 = arith.divf %376, %377 : vector<8x128xf32>
    %379 = vector.extract_strided_slice %372 {offsets = [0, 128], sizes = [8, 128], strides = [1, 1]} : vector<8x512xf32> to vector<8x128xf32>
    %380 = arith.negf %379 : vector<8x128xf32>
    %381 = math.exp %380 : vector<8x128xf32>
    %cst_136 = arith.constant 1.000000e+00 : f32
    %382 = vector.broadcast %cst_136 : f32 to vector<8x128xf32>
    %383 = arith.addf %382, %381 : vector<8x128xf32>
    %384 = arith.divf %382, %383 : vector<8x128xf32>
    %385 = vector.extract_strided_slice %372 {offsets = [0, 256], sizes = [8, 128], strides = [1, 1]} : vector<8x512xf32> to vector<8x128xf32>
    %386 = math.tanh %385 : vector<8x128xf32>
    %387 = vector.extract_strided_slice %372 {offsets = [0, 384], sizes = [8, 128], strides = [1, 1]} : vector<8x512xf32> to vector<8x128xf32>
    %388 = arith.negf %387 : vector<8x128xf32>
    %389 = math.exp %388 : vector<8x128xf32>
    %cst_137 = arith.constant 1.000000e+00 : f32
    %390 = vector.broadcast %cst_137 : f32 to vector<8x128xf32>
    %391 = arith.addf %390, %389 : vector<8x128xf32>
    %392 = arith.divf %390, %391 : vector<8x128xf32>
    %393 = arith.mulf %384, %353 : vector<8x128xf32>
    %394 = arith.mulf %378, %386 : vector<8x128xf32>
    %395 = arith.addf %393, %394 : vector<8x128xf32>
    %396 = math.tanh %395 : vector<8x128xf32>
    %397 = arith.mulf %392, %396 : vector<8x128xf32>
    %398 = arith.truncf %397 : vector<8x128xf32> to vector<8x128xbf16>
    %c8_i32_138 = arith.constant 8 : i32
    %399 = arith.muli %c0_i32_121, %c8_i32_138 : i32
    %400 = arith.addi %399, %c0_i32_129 : i32
    %401 = arith.index_cast %400 : i32 to index
    %c0_139 = arith.constant 0 : index
    %c0_140 = arith.constant 0 : index
    %402 = vector.load %arg14[%401, %c0_139, %c0_140] : memref<8x8x128xbf16, #tpu.memory_space<vmem>>, vector<1x8x128xbf16>
    %403 = vector.shape_cast %402 : vector<1x8x128xbf16> to vector<8x128xbf16>
    %404 = vector.shape_cast %398 : vector<8x128xbf16> to vector<1x8x128xbf16>
    tpu.vector_store %arg14[%401, %c0_139, %c0_140], %404 {strides = array<i32>} : memref<8x8x128xbf16, #tpu.memory_space<vmem>>, vector<1x8x128xbf16>,
    %c1_i32_141 = arith.constant 1 : i32
    %405 = arith.addi %364, %c1_i32_141 : i32
    %406 = arith.index_cast %405 : i32 to index
    %c0_142 = arith.constant 0 : index
    %c0_143 = arith.constant 0 : index
    %407 = vector.load %arg13[%406, %c0_142, %c0_143] : memref<16x8x512xf32, #tpu.memory_space<vmem>>, vector<1x8x512xf32>
    %408 = vector.shape_cast %407 : vector<1x8x512xf32> to vector<8x512xf32>
    %409 = arith.truncf %397 : vector<8x128xf32> to vector<8x128xbf16>
    %c0_144 = arith.constant 0 : index
    %c0_145 = arith.constant 0 : index
    %410 = vector.load %arg6[%c0_144, %c0_145] : memref<128x512xbf16, #tpu.memory_space<vmem>>, vector<128x512xbf16>
    %cst_146 = arith.constant dense<0.000000e+00> : vector<8x512xf32>
    %411 = tpu.matmul %409, %410, %cst_146 {dimension_numbers = #tpu.dot_dimension_numbers<[1], [0], [0], [1], [0, 0, 1, 1], [], []>} : vector<8x128xbf16>, vector<128x512xbf16>, vector<8x512xf32> -> vector<8x512xf32>
    %412 = arith.addf %408, %411 : vector<8x512xf32>
    %413 = vector.extract_strided_slice %412 {offsets = [0, 0], sizes = [8, 128], strides = [1, 1]} : vector<8x512xf32> to vector<8x128xf32>
    %414 = arith.negf %413 : vector<8x128xf32>
    %415 = math.exp %414 : vector<8x128xf32>
    %cst_147 = arith.constant 1.000000e+00 : f32
    %416 = vector.broadcast %cst_147 : f32 to vector<8x128xf32>
    %417 = arith.addf %416, %415 : vector<8x128xf32>
    %418 = arith.divf %416, %417 : vector<8x128xf32>
    %419 = vector.extract_strided_slice %412 {offsets = [0, 128], sizes = [8, 128], strides = [1, 1]} : vector<8x512xf32> to vector<8x128xf32>
    %420 = arith.negf %419 : vector<8x128xf32>
    %421 = math.exp %420 : vector<8x128xf32>
    %cst_148 = arith.constant 1.000000e+00 : f32
    %422 = vector.broadcast %cst_148 : f32 to vector<8x128xf32>
    %423 = arith.addf %422, %421 : vector<8x128xf32>
    %424 = arith.divf %422, %423 : vector<8x128xf32>
    %425 = vector.extract_strided_slice %412 {offsets = [0, 256], sizes = [8, 128], strides = [1, 1]} : vector<8x512xf32> to vector<8x128xf32>
    %426 = math.tanh %425 : vector<8x128xf32>
    %427 = vector.extract_strided_slice %412 {offsets = [0, 384], sizes = [8, 128], strides = [1, 1]} : vector<8x512xf32> to vector<8x128xf32>
    %428 = arith.negf %427 : vector<8x128xf32>
    %429 = math.exp %428 : vector<8x128xf32>
    %cst_149 = arith.constant 1.000000e+00 : f32
    %430 = vector.broadcast %cst_149 : f32 to vector<8x128xf32>
    %431 = arith.addf %430, %429 : vector<8x128xf32>
    %432 = arith.divf %430, %431 : vector<8x128xf32>
    %433 = arith.mulf %424, %395 : vector<8x128xf32>
    %434 = arith.mulf %418, %426 : vector<8x128xf32>
    %435 = arith.addf %433, %434 : vector<8x128xf32>
    %436 = math.tanh %435 : vector<8x128xf32>
    %437 = arith.mulf %432, %436 : vector<8x128xf32>
    %438 = arith.truncf %437 : vector<8x128xf32> to vector<8x128xbf16>
    %c8_i32_150 = arith.constant 8 : i32
    %439 = arith.muli %c0_i32_121, %c8_i32_150 : i32
    %440 = arith.addi %439, %c1_i32_141 : i32
    %441 = arith.index_cast %440 : i32 to index
    %c0_151 = arith.constant 0 : index
    %c0_152 = arith.constant 0 : index
    %442 = vector.load %arg14[%441, %c0_151, %c0_152] : memref<8x8x128xbf16, #tpu.memory_space<vmem>>, vector<1x8x128xbf16>
    %443 = vector.shape_cast %442 : vector<1x8x128xbf16> to vector<8x128xbf16>
    %444 = vector.shape_cast %438 : vector<8x128xbf16> to vector<1x8x128xbf16>
    tpu.vector_store %arg14[%441, %c0_151, %c0_152], %444 {strides = array<i32>} : memref<8x8x128xbf16, #tpu.memory_space<vmem>>, vector<1x8x128xbf16>,
    %c2_i32_153 = arith.constant 2 : i32
    %445 = arith.addi %364, %c2_i32_153 : i32
    %446 = arith.index_cast %445 : i32 to index
    %c0_154 = arith.constant 0 : index
    %c0_155 = arith.constant 0 : index
    %447 = vector.load %arg13[%446, %c0_154, %c0_155] : memref<16x8x512xf32, #tpu.memory_space<vmem>>, vector<1x8x512xf32>
    %448 = vector.shape_cast %447 : vector<1x8x512xf32> to vector<8x512xf32>
    %449 = arith.truncf %437 : vector<8x128xf32> to vector<8x128xbf16>
    %c0_156 = arith.constant 0 : index
    %c0_157 = arith.constant 0 : index
    %450 = vector.load %arg6[%c0_156, %c0_157] : memref<128x512xbf16, #tpu.memory_space<vmem>>, vector<128x512xbf16>
    %cst_158 = arith.constant dense<0.000000e+00> : vector<8x512xf32>
    %451 = tpu.matmul %449, %450, %cst_158 {dimension_numbers = #tpu.dot_dimension_numbers<[1], [0], [0], [1], [0, 0, 1, 1], [], []>} : vector<8x128xbf16>, vector<128x512xbf16>, vector<8x512xf32> -> vector<8x512xf32>
    %452 = arith.addf %448, %451 : vector<8x512xf32>
    %453 = vector.extract_strided_slice %452 {offsets = [0, 0], sizes = [8, 128], strides = [1, 1]} : vector<8x512xf32> to vector<8x128xf32>
    %454 = arith.negf %453 : vector<8x128xf32>
    %455 = math.exp %454 : vector<8x128xf32>
    %cst_159 = arith.constant 1.000000e+00 : f32
    %456 = vector.broadcast %cst_159 : f32 to vector<8x128xf32>
    %457 = arith.addf %456, %455 : vector<8x128xf32>
    %458 = arith.divf %456, %457 : vector<8x128xf32>
    %459 = vector.extract_strided_slice %452 {offsets = [0, 128], sizes = [8, 128], strides = [1, 1]} : vector<8x512xf32> to vector<8x128xf32>
    %460 = arith.negf %459 : vector<8x128xf32>
    %461 = math.exp %460 : vector<8x128xf32>
    %cst_160 = arith.constant 1.000000e+00 : f32
    %462 = vector.broadcast %cst_160 : f32 to vector<8x128xf32>
    %463 = arith.addf %462, %461 : vector<8x128xf32>
    %464 = arith.divf %462, %463 : vector<8x128xf32>
    %465 = vector.extract_strided_slice %452 {offsets = [0, 256], sizes = [8, 128], strides = [1, 1]} : vector<8x512xf32> to vector<8x128xf32>
    %466 = math.tanh %465 : vector<8x128xf32>
    %467 = vector.extract_strided_slice %452 {offsets = [0, 384], sizes = [8, 128], strides = [1, 1]} : vector<8x512xf32> to vector<8x128xf32>
    %468 = arith.negf %467 : vector<8x128xf32>
    %469 = math.exp %468 : vector<8x128xf32>
    %cst_161 = arith.constant 1.000000e+00 : f32
    %470 = vector.broadcast %cst_161 : f32 to vector<8x128xf32>
    %471 = arith.addf %470, %469 : vector<8x128xf32>
    %472 = arith.divf %470, %471 : vector<8x128xf32>
    %473 = arith.mulf %464, %435 : vector<8x128xf32>
    %474 = arith.mulf %458, %466 : vector<8x128xf32>
    %475 = arith.addf %473, %474 : vector<8x128xf32>
    %476 = math.tanh %475 : vector<8x128xf32>
    %477 = arith.mulf %472, %476 : vector<8x128xf32>
    %478 = arith.truncf %477 : vector<8x128xf32> to vector<8x128xbf16>
    %c8_i32_162 = arith.constant 8 : i32
    %479 = arith.muli %c0_i32_121, %c8_i32_162 : i32
    %480 = arith.addi %479, %c2_i32_153 : i32
    %481 = arith.index_cast %480 : i32 to index
    %c0_163 = arith.constant 0 : index
    %c0_164 = arith.constant 0 : index
    %482 = vector.load %arg14[%481, %c0_163, %c0_164] : memref<8x8x128xbf16, #tpu.memory_space<vmem>>, vector<1x8x128xbf16>
    %483 = vector.shape_cast %482 : vector<1x8x128xbf16> to vector<8x128xbf16>
    %484 = vector.shape_cast %478 : vector<8x128xbf16> to vector<1x8x128xbf16>
    tpu.vector_store %arg14[%481, %c0_163, %c0_164], %484 {strides = array<i32>} : memref<8x8x128xbf16, #tpu.memory_space<vmem>>, vector<1x8x128xbf16>,
    %c3_i32_165 = arith.constant 3 : i32
    %485 = arith.addi %364, %c3_i32_165 : i32
    %486 = arith.index_cast %485 : i32 to index
    %c0_166 = arith.constant 0 : index
    %c0_167 = arith.constant 0 : index
    %487 = vector.load %arg13[%486, %c0_166, %c0_167] : memref<16x8x512xf32, #tpu.memory_space<vmem>>, vector<1x8x512xf32>
    %488 = vector.shape_cast %487 : vector<1x8x512xf32> to vector<8x512xf32>
    %489 = arith.truncf %477 : vector<8x128xf32> to vector<8x128xbf16>
    %c0_168 = arith.constant 0 : index
    %c0_169 = arith.constant 0 : index
    %490 = vector.load %arg6[%c0_168, %c0_169] : memref<128x512xbf16, #tpu.memory_space<vmem>>, vector<128x512xbf16>
    %cst_170 = arith.constant dense<0.000000e+00> : vector<8x512xf32>
    %491 = tpu.matmul %489, %490, %cst_170 {dimension_numbers = #tpu.dot_dimension_numbers<[1], [0], [0], [1], [0, 0, 1, 1], [], []>} : vector<8x128xbf16>, vector<128x512xbf16>, vector<8x512xf32> -> vector<8x512xf32>
    %492 = arith.addf %488, %491 : vector<8x512xf32>
    %493 = vector.extract_strided_slice %492 {offsets = [0, 0], sizes = [8, 128], strides = [1, 1]} : vector<8x512xf32> to vector<8x128xf32>
    %494 = arith.negf %493 : vector<8x128xf32>
    %495 = math.exp %494 : vector<8x128xf32>
    %cst_171 = arith.constant 1.000000e+00 : f32
    %496 = vector.broadcast %cst_171 : f32 to vector<8x128xf32>
    %497 = arith.addf %496, %495 : vector<8x128xf32>
    %498 = arith.divf %496, %497 : vector<8x128xf32>
    %499 = vector.extract_strided_slice %492 {offsets = [0, 128], sizes = [8, 128], strides = [1, 1]} : vector<8x512xf32> to vector<8x128xf32>
    %500 = arith.negf %499 : vector<8x128xf32>
    %501 = math.exp %500 : vector<8x128xf32>
    %cst_172 = arith.constant 1.000000e+00 : f32
    %502 = vector.broadcast %cst_172 : f32 to vector<8x128xf32>
    %503 = arith.addf %502, %501 : vector<8x128xf32>
    %504 = arith.divf %502, %503 : vector<8x128xf32>
    %505 = vector.extract_strided_slice %492 {offsets = [0, 256], sizes = [8, 128], strides = [1, 1]} : vector<8x512xf32> to vector<8x128xf32>
    %506 = math.tanh %505 : vector<8x128xf32>
    %507 = vector.extract_strided_slice %492 {offsets = [0, 384], sizes = [8, 128], strides = [1, 1]} : vector<8x512xf32> to vector<8x128xf32>
    %508 = arith.negf %507 : vector<8x128xf32>
    %509 = math.exp %508 : vector<8x128xf32>
    %cst_173 = arith.constant 1.000000e+00 : f32
    %510 = vector.broadcast %cst_173 : f32 to vector<8x128xf32>
    %511 = arith.addf %510, %509 : vector<8x128xf32>
    %512 = arith.divf %510, %511 : vector<8x128xf32>
    %513 = arith.mulf %504, %475 : vector<8x128xf32>
    %514 = arith.mulf %498, %506 : vector<8x128xf32>
    %515 = arith.addf %513, %514 : vector<8x128xf32>
    %516 = math.tanh %515 : vector<8x128xf32>
    %517 = arith.mulf %512, %516 : vector<8x128xf32>
    %518 = arith.truncf %517 : vector<8x128xf32> to vector<8x128xbf16>
    %c8_i32_174 = arith.constant 8 : i32
    %519 = arith.muli %c0_i32_121, %c8_i32_174 : i32
    %520 = arith.addi %519, %c3_i32_165 : i32
    %521 = arith.index_cast %520 : i32 to index
    %c0_175 = arith.constant 0 : index
    %c0_176 = arith.constant 0 : index
    %522 = vector.load %arg14[%521, %c0_175, %c0_176] : memref<8x8x128xbf16, #tpu.memory_space<vmem>>, vector<1x8x128xbf16>
    %523 = vector.shape_cast %522 : vector<1x8x128xbf16> to vector<8x128xbf16>
    %524 = vector.shape_cast %518 : vector<8x128xbf16> to vector<1x8x128xbf16>
    tpu.vector_store %arg14[%521, %c0_175, %c0_176], %524 {strides = array<i32>} : memref<8x8x128xbf16, #tpu.memory_space<vmem>>, vector<1x8x128xbf16>,
    %c4_i32_177 = arith.constant 4 : i32
    %525 = arith.addi %364, %c4_i32_177 : i32
    %526 = arith.index_cast %525 : i32 to index
    %c0_178 = arith.constant 0 : index
    %c0_179 = arith.constant 0 : index
    %527 = vector.load %arg13[%526, %c0_178, %c0_179] : memref<16x8x512xf32, #tpu.memory_space<vmem>>, vector<1x8x512xf32>
    %528 = vector.shape_cast %527 : vector<1x8x512xf32> to vector<8x512xf32>
    %529 = arith.truncf %517 : vector<8x128xf32> to vector<8x128xbf16>
    %c0_180 = arith.constant 0 : index
    %c0_181 = arith.constant 0 : index
    %530 = vector.load %arg6[%c0_180, %c0_181] : memref<128x512xbf16, #tpu.memory_space<vmem>>, vector<128x512xbf16>
    %cst_182 = arith.constant dense<0.000000e+00> : vector<8x512xf32>
    %531 = tpu.matmul %529, %530, %cst_182 {dimension_numbers = #tpu.dot_dimension_numbers<[1], [0], [0], [1], [0, 0, 1, 1], [], []>} : vector<8x128xbf16>, vector<128x512xbf16>, vector<8x512xf32> -> vector<8x512xf32>
    %532 = arith.addf %528, %531 : vector<8x512xf32>
    %533 = vector.extract_strided_slice %532 {offsets = [0, 0], sizes = [8, 128], strides = [1, 1]} : vector<8x512xf32> to vector<8x128xf32>
    %534 = arith.negf %533 : vector<8x128xf32>
    %535 = math.exp %534 : vector<8x128xf32>
    %cst_183 = arith.constant 1.000000e+00 : f32
    %536 = vector.broadcast %cst_183 : f32 to vector<8x128xf32>
    %537 = arith.addf %536, %535 : vector<8x128xf32>
    %538 = arith.divf %536, %537 : vector<8x128xf32>
    %539 = vector.extract_strided_slice %532 {offsets = [0, 128], sizes = [8, 128], strides = [1, 1]} : vector<8x512xf32> to vector<8x128xf32>
    %540 = arith.negf %539 : vector<8x128xf32>
    %541 = math.exp %540 : vector<8x128xf32>
    %cst_184 = arith.constant 1.000000e+00 : f32
    %542 = vector.broadcast %cst_184 : f32 to vector<8x128xf32>
    %543 = arith.addf %542, %541 : vector<8x128xf32>
    %544 = arith.divf %542, %543 : vector<8x128xf32>
    %545 = vector.extract_strided_slice %532 {offsets = [0, 256], sizes = [8, 128], strides = [1, 1]} : vector<8x512xf32> to vector<8x128xf32>
    %546 = math.tanh %545 : vector<8x128xf32>
    %547 = vector.extract_strided_slice %532 {offsets = [0, 384], sizes = [8, 128], strides = [1, 1]} : vector<8x512xf32> to vector<8x128xf32>
    %548 = arith.negf %547 : vector<8x128xf32>
    %549 = math.exp %548 : vector<8x128xf32>
    %cst_185 = arith.constant 1.000000e+00 : f32
    %550 = vector.broadcast %cst_185 : f32 to vector<8x128xf32>
    %551 = arith.addf %550, %549 : vector<8x128xf32>
    %552 = arith.divf %550, %551 : vector<8x128xf32>
    %553 = arith.mulf %544, %515 : vector<8x128xf32>
    %554 = arith.mulf %538, %546 : vector<8x128xf32>
    %555 = arith.addf %553, %554 : vector<8x128xf32>
    %556 = math.tanh %555 : vector<8x128xf32>
    %557 = arith.mulf %552, %556 : vector<8x128xf32>
    %558 = arith.truncf %557 : vector<8x128xf32> to vector<8x128xbf16>
    %c8_i32_186 = arith.constant 8 : i32
    %559 = arith.muli %c0_i32_121, %c8_i32_186 : i32
    %560 = arith.addi %559, %c4_i32_177 : i32
    %561 = arith.index_cast %560 : i32 to index
    %c0_187 = arith.constant 0 : index
    %c0_188 = arith.constant 0 : index
    %562 = vector.load %arg14[%561, %c0_187, %c0_188] : memref<8x8x128xbf16, #tpu.memory_space<vmem>>, vector<1x8x128xbf16>
    %563 = vector.shape_cast %562 : vector<1x8x128xbf16> to vector<8x128xbf16>
    %564 = vector.shape_cast %558 : vector<8x128xbf16> to vector<1x8x128xbf16>
    tpu.vector_store %arg14[%561, %c0_187, %c0_188], %564 {strides = array<i32>} : memref<8x8x128xbf16, #tpu.memory_space<vmem>>, vector<1x8x128xbf16>,
    %c5_i32_189 = arith.constant 5 : i32
    %565 = arith.addi %364, %c5_i32_189 : i32
    %566 = arith.index_cast %565 : i32 to index
    %c0_190 = arith.constant 0 : index
    %c0_191 = arith.constant 0 : index
    %567 = vector.load %arg13[%566, %c0_190, %c0_191] : memref<16x8x512xf32, #tpu.memory_space<vmem>>, vector<1x8x512xf32>
    %568 = vector.shape_cast %567 : vector<1x8x512xf32> to vector<8x512xf32>
    %569 = arith.truncf %557 : vector<8x128xf32> to vector<8x128xbf16>
    %c0_192 = arith.constant 0 : index
    %c0_193 = arith.constant 0 : index
    %570 = vector.load %arg6[%c0_192, %c0_193] : memref<128x512xbf16, #tpu.memory_space<vmem>>, vector<128x512xbf16>
    %cst_194 = arith.constant dense<0.000000e+00> : vector<8x512xf32>
    %571 = tpu.matmul %569, %570, %cst_194 {dimension_numbers = #tpu.dot_dimension_numbers<[1], [0], [0], [1], [0, 0, 1, 1], [], []>} : vector<8x128xbf16>, vector<128x512xbf16>, vector<8x512xf32> -> vector<8x512xf32>
    %572 = arith.addf %568, %571 : vector<8x512xf32>
    %573 = vector.extract_strided_slice %572 {offsets = [0, 0], sizes = [8, 128], strides = [1, 1]} : vector<8x512xf32> to vector<8x128xf32>
    %574 = arith.negf %573 : vector<8x128xf32>
    %575 = math.exp %574 : vector<8x128xf32>
    %cst_195 = arith.constant 1.000000e+00 : f32
    %576 = vector.broadcast %cst_195 : f32 to vector<8x128xf32>
    %577 = arith.addf %576, %575 : vector<8x128xf32>
    %578 = arith.divf %576, %577 : vector<8x128xf32>
    %579 = vector.extract_strided_slice %572 {offsets = [0, 128], sizes = [8, 128], strides = [1, 1]} : vector<8x512xf32> to vector<8x128xf32>
    %580 = arith.negf %579 : vector<8x128xf32>
    %581 = math.exp %580 : vector<8x128xf32>
    %cst_196 = arith.constant 1.000000e+00 : f32
    %582 = vector.broadcast %cst_196 : f32 to vector<8x128xf32>
    %583 = arith.addf %582, %581 : vector<8x128xf32>
    %584 = arith.divf %582, %583 : vector<8x128xf32>
    %585 = vector.extract_strided_slice %572 {offsets = [0, 256], sizes = [8, 128], strides = [1, 1]} : vector<8x512xf32> to vector<8x128xf32>
    %586 = math.tanh %585 : vector<8x128xf32>
    %587 = vector.extract_strided_slice %572 {offsets = [0, 384], sizes = [8, 128], strides = [1, 1]} : vector<8x512xf32> to vector<8x128xf32>
    %588 = arith.negf %587 : vector<8x128xf32>
    %589 = math.exp %588 : vector<8x128xf32>
    %cst_197 = arith.constant 1.000000e+00 : f32
    %590 = vector.broadcast %cst_197 : f32 to vector<8x128xf32>
    %591 = arith.addf %590, %589 : vector<8x128xf32>
    %592 = arith.divf %590, %591 : vector<8x128xf32>
    %593 = arith.mulf %584, %555 : vector<8x128xf32>
    %594 = arith.mulf %578, %586 : vector<8x128xf32>
    %595 = arith.addf %593, %594 : vector<8x128xf32>
    %596 = math.tanh %595 : vector<8x128xf32>
    %597 = arith.mulf %592, %596 : vector<8x128xf32>
    %598 = arith.truncf %597 : vector<8x128xf32> to vector<8x128xbf16>
    %c8_i32_198 = arith.constant 8 : i32
    %599 = arith.muli %c0_i32_121, %c8_i32_198 : i32
    %600 = arith.addi %599, %c5_i32_189 : i32
    %601 = arith.index_cast %600 : i32 to index
    %c0_199 = arith.constant 0 : index
    %c0_200 = arith.constant 0 : index
    %602 = vector.load %arg14[%601, %c0_199, %c0_200] : memref<8x8x128xbf16, #tpu.memory_space<vmem>>, vector<1x8x128xbf16>
    %603 = vector.shape_cast %602 : vector<1x8x128xbf16> to vector<8x128xbf16>
    %604 = vector.shape_cast %598 : vector<8x128xbf16> to vector<1x8x128xbf16>
    tpu.vector_store %arg14[%601, %c0_199, %c0_200], %604 {strides = array<i32>} : memref<8x8x128xbf16, #tpu.memory_space<vmem>>, vector<1x8x128xbf16>,
    %c6_i32_201 = arith.constant 6 : i32
    %605 = arith.addi %364, %c6_i32_201 : i32
    %606 = arith.index_cast %605 : i32 to index
    %c0_202 = arith.constant 0 : index
    %c0_203 = arith.constant 0 : index
    %607 = vector.load %arg13[%606, %c0_202, %c0_203] : memref<16x8x512xf32, #tpu.memory_space<vmem>>, vector<1x8x512xf32>
    %608 = vector.shape_cast %607 : vector<1x8x512xf32> to vector<8x512xf32>
    %609 = arith.truncf %597 : vector<8x128xf32> to vector<8x128xbf16>
    %c0_204 = arith.constant 0 : index
    %c0_205 = arith.constant 0 : index
    %610 = vector.load %arg6[%c0_204, %c0_205] : memref<128x512xbf16, #tpu.memory_space<vmem>>, vector<128x512xbf16>
    %cst_206 = arith.constant dense<0.000000e+00> : vector<8x512xf32>
    %611 = tpu.matmul %609, %610, %cst_206 {dimension_numbers = #tpu.dot_dimension_numbers<[1], [0], [0], [1], [0, 0, 1, 1], [], []>} : vector<8x128xbf16>, vector<128x512xbf16>, vector<8x512xf32> -> vector<8x512xf32>
    %612 = arith.addf %608, %611 : vector<8x512xf32>
    %613 = vector.extract_strided_slice %612 {offsets = [0, 0], sizes = [8, 128], strides = [1, 1]} : vector<8x512xf32> to vector<8x128xf32>
    %614 = arith.negf %613 : vector<8x128xf32>
    %615 = math.exp %614 : vector<8x128xf32>
    %cst_207 = arith.constant 1.000000e+00 : f32
    %616 = vector.broadcast %cst_207 : f32 to vector<8x128xf32>
    %617 = arith.addf %616, %615 : vector<8x128xf32>
    %618 = arith.divf %616, %617 : vector<8x128xf32>
    %619 = vector.extract_strided_slice %612 {offsets = [0, 128], sizes = [8, 128], strides = [1, 1]} : vector<8x512xf32> to vector<8x128xf32>
    %620 = arith.negf %619 : vector<8x128xf32>
    %621 = math.exp %620 : vector<8x128xf32>
    %cst_208 = arith.constant 1.000000e+00 : f32
    %622 = vector.broadcast %cst_208 : f32 to vector<8x128xf32>
    %623 = arith.addf %622, %621 : vector<8x128xf32>
    %624 = arith.divf %622, %623 : vector<8x128xf32>
    %625 = vector.extract_strided_slice %612 {offsets = [0, 256], sizes = [8, 128], strides = [1, 1]} : vector<8x512xf32> to vector<8x128xf32>
    %626 = math.tanh %625 : vector<8x128xf32>
    %627 = vector.extract_strided_slice %612 {offsets = [0, 384], sizes = [8, 128], strides = [1, 1]} : vector<8x512xf32> to vector<8x128xf32>
    %628 = arith.negf %627 : vector<8x128xf32>
    %629 = math.exp %628 : vector<8x128xf32>
    %cst_209 = arith.constant 1.000000e+00 : f32
    %630 = vector.broadcast %cst_209 : f32 to vector<8x128xf32>
    %631 = arith.addf %630, %629 : vector<8x128xf32>
    %632 = arith.divf %630, %631 : vector<8x128xf32>
    %633 = arith.mulf %624, %595 : vector<8x128xf32>
    %634 = arith.mulf %618, %626 : vector<8x128xf32>
    %635 = arith.addf %633, %634 : vector<8x128xf32>
    %636 = math.tanh %635 : vector<8x128xf32>
    %637 = arith.mulf %632, %636 : vector<8x128xf32>
    %638 = arith.truncf %637 : vector<8x128xf32> to vector<8x128xbf16>
    %c8_i32_210 = arith.constant 8 : i32
    %639 = arith.muli %c0_i32_121, %c8_i32_210 : i32
    %640 = arith.addi %639, %c6_i32_201 : i32
    %641 = arith.index_cast %640 : i32 to index
    %c0_211 = arith.constant 0 : index
    %c0_212 = arith.constant 0 : index
    %642 = vector.load %arg14[%641, %c0_211, %c0_212] : memref<8x8x128xbf16, #tpu.memory_space<vmem>>, vector<1x8x128xbf16>
    %643 = vector.shape_cast %642 : vector<1x8x128xbf16> to vector<8x128xbf16>
    %644 = vector.shape_cast %638 : vector<8x128xbf16> to vector<1x8x128xbf16>
    tpu.vector_store %arg14[%641, %c0_211, %c0_212], %644 {strides = array<i32>} : memref<8x8x128xbf16, #tpu.memory_space<vmem>>, vector<1x8x128xbf16>,
    %c7_i32_213 = arith.constant 7 : i32
    %645 = arith.addi %364, %c7_i32_213 : i32
    %646 = arith.index_cast %645 : i32 to index
    %c0_214 = arith.constant 0 : index
    %c0_215 = arith.constant 0 : index
    %647 = vector.load %arg13[%646, %c0_214, %c0_215] : memref<16x8x512xf32, #tpu.memory_space<vmem>>, vector<1x8x512xf32>
    %648 = vector.shape_cast %647 : vector<1x8x512xf32> to vector<8x512xf32>
    %649 = arith.truncf %637 : vector<8x128xf32> to vector<8x128xbf16>
    %c0_216 = arith.constant 0 : index
    %c0_217 = arith.constant 0 : index
    %650 = vector.load %arg6[%c0_216, %c0_217] : memref<128x512xbf16, #tpu.memory_space<vmem>>, vector<128x512xbf16>
    %cst_218 = arith.constant dense<0.000000e+00> : vector<8x512xf32>
    %651 = tpu.matmul %649, %650, %cst_218 {dimension_numbers = #tpu.dot_dimension_numbers<[1], [0], [0], [1], [0, 0, 1, 1], [], []>} : vector<8x128xbf16>, vector<128x512xbf16>, vector<8x512xf32> -> vector<8x512xf32>
    %652 = arith.addf %648, %651 : vector<8x512xf32>
    %653 = vector.extract_strided_slice %652 {offsets = [0, 0], sizes = [8, 128], strides = [1, 1]} : vector<8x512xf32> to vector<8x128xf32>
    %654 = arith.negf %653 : vector<8x128xf32>
    %655 = math.exp %654 : vector<8x128xf32>
    %cst_219 = arith.constant 1.000000e+00 : f32
    %656 = vector.broadcast %cst_219 : f32 to vector<8x128xf32>
    %657 = arith.addf %656, %655 : vector<8x128xf32>
    %658 = arith.divf %656, %657 : vector<8x128xf32>
    %659 = vector.extract_strided_slice %652 {offsets = [0, 128], sizes = [8, 128], strides = [1, 1]} : vector<8x512xf32> to vector<8x128xf32>
    %660 = arith.negf %659 : vector<8x128xf32>
    %661 = math.exp %660 : vector<8x128xf32>
    %cst_220 = arith.constant 1.000000e+00 : f32
    %662 = vector.broadcast %cst_220 : f32 to vector<8x128xf32>
    %663 = arith.addf %662, %661 : vector<8x128xf32>
    %664 = arith.divf %662, %663 : vector<8x128xf32>
    %665 = vector.extract_strided_slice %652 {offsets = [0, 256], sizes = [8, 128], strides = [1, 1]} : vector<8x512xf32> to vector<8x128xf32>
    %666 = math.tanh %665 : vector<8x128xf32>
    %667 = vector.extract_strided_slice %652 {offsets = [0, 384], sizes = [8, 128], strides = [1, 1]} : vector<8x512xf32> to vector<8x128xf32>
    %668 = arith.negf %667 : vector<8x128xf32>
    %669 = math.exp %668 : vector<8x128xf32>
    %cst_221 = arith.constant 1.000000e+00 : f32
    %670 = vector.broadcast %cst_221 : f32 to vector<8x128xf32>
    %671 = arith.addf %670, %669 : vector<8x128xf32>
    %672 = arith.divf %670, %671 : vector<8x128xf32>
    %673 = arith.mulf %664, %635 : vector<8x128xf32>
    %674 = arith.mulf %658, %666 : vector<8x128xf32>
    %675 = arith.addf %673, %674 : vector<8x128xf32>
    %676 = math.tanh %675 : vector<8x128xf32>
    %677 = arith.mulf %672, %676 : vector<8x128xf32>
    %678 = arith.truncf %677 : vector<8x128xf32> to vector<8x128xbf16>
    %c8_i32_222 = arith.constant 8 : i32
    %679 = arith.muli %c0_i32_121, %c8_i32_222 : i32
    %680 = arith.addi %679, %c7_i32_213 : i32
    %681 = arith.index_cast %680 : i32 to index
    %c0_223 = arith.constant 0 : index
    %c0_224 = arith.constant 0 : index
    %682 = vector.load %arg14[%681, %c0_223, %c0_224] : memref<8x8x128xbf16, #tpu.memory_space<vmem>>, vector<1x8x128xbf16>
    %683 = vector.shape_cast %682 : vector<1x8x128xbf16> to vector<8x128xbf16>
    %684 = vector.shape_cast %678 : vector<8x128xbf16> to vector<1x8x128xbf16>
    tpu.vector_store %arg14[%681, %c0_223, %c0_224], %684 {strides = array<i32>} : memref<8x8x128xbf16, #tpu.memory_space<vmem>>, vector<1x8x128xbf16>,
    %c8_i32_225 = arith.constant 8 : i32
    %c1_i32_226 = arith.constant 1 : i32
    %c0_227 = arith.constant 0 : index
    %c0_228 = arith.constant 0 : index
    %c0_229 = arith.constant 0 : index
    %685 = vector.load %arg14[%c0_227, %c0_228, %c0_229] : memref<8x8x128xbf16, #tpu.memory_space<vmem>>, vector<8x8x128xbf16>
    %686 = vector.shape_cast %685 : vector<8x8x128xbf16> to vector<64x128xbf16>
    %c0_230 = arith.constant 0 : index
    %c0_231 = arith.constant 0 : index
    %687 = vector.load %arg8[%c0_230, %c0_231] : memref<128x512xbf16, #tpu.memory_space<vmem>>, vector<128x512xbf16>
    %cst_232 = arith.constant dense<0.000000e+00> : vector<64x512xf32>
    %688 = tpu.matmul %686, %687, %cst_232 {dimension_numbers = #tpu.dot_dimension_numbers<[1], [0], [0], [1], [0, 0, 1, 1], [], []>} : vector<64x128xbf16>, vector<128x512xbf16>, vector<64x512xf32> -> vector<64x512xf32>
    %c0_233 = arith.constant 0 : index
    %c0_234 = arith.constant 0 : index
    %689 = vector.load %arg10[%c0_233, %c0_234] : memref<1x512xf32, #tpu.memory_space<vmem>>, vector<1x512xf32>
    %690 = vector.broadcast %689 : vector<1x512xf32> to vector<64x512xf32>
    %691 = arith.addf %688, %690 : vector<64x512xf32>
    %692 = vector.shape_cast %691 : vector<64x512xf32> to vector<8x8x512xf32>
    %c0_235 = arith.constant 0 : index
    %c0_236 = arith.constant 0 : index
    %c0_237 = arith.constant 0 : index
    %693 = vector.load %arg13[%c0_235, %c0_236, %c0_237] : memref<16x8x512xf32, #tpu.memory_space<vmem>>, vector<8x8x512xf32>
    tpu.vector_store %arg13[%c0_235, %c0_236, %c0_237], %692 {strides = array<i32>} : memref<16x8x512xf32, #tpu.memory_space<vmem>>, vector<8x8x512xf32>,
    %cst_238 = arith.constant 0.000000e+00 : f32
    %694 = vector.broadcast %cst_238 : f32 to vector<8x128xf32>
    %cst_239 = arith.constant 0.000000e+00 : f32
    %695 = vector.broadcast %cst_239 : f32 to vector<8x128xf32>
    %c0_i32_240 = arith.constant 0 : i32
    %c2_i32_241 = arith.constant 2 : i32
    %c0_i32_242 = arith.constant 0 : i32
    %696 = arith.cmpi eq, %c2_i32_241, %c0_i32_242 : i32
    %c1_i32_243 = arith.constant 1 : i32
    %697 = arith.select %696, %c1_i32_243, %c2_i32_241 : i32
    %698 = arith.remsi %c0_i32_240, %697 : i32
    %c0_i32_244 = arith.constant 0 : i32
    %699 = arith.cmpi ne, %698, %c0_i32_244 : i32
    %c0_i32_245 = arith.constant 0 : i32
    %700 = arith.cmpi slt, %698, %c0_i32_245 : i32
    %c0_i32_246 = arith.constant 0 : i32
    %701 = arith.cmpi slt, %697, %c0_i32_246 : i32
    %702 = arith.xori %700, %701 : i1
    %703 = arith.andi %702, %699 : i1
    %704 = arith.addi %698, %697 : i32
    %705 = arith.select %703, %704, %698 : i32
    %c8_i32_247 = arith.constant 8 : i32
    %706 = arith.muli %705, %c8_i32_247 : i32
    %c0_i32_248 = arith.constant 0 : i32
    %707 = arith.addi %706, %c0_i32_248 : i32
    %708 = arith.index_cast %707 : i32 to index
    %c0_249 = arith.constant 0 : index
    %c0_250 = arith.constant 0 : index
    %709 = vector.load %arg13[%708, %c0_249, %c0_250] : memref<16x8x512xf32, #tpu.memory_space<vmem>>, vector<1x8x512xf32>
    %710 = vector.shape_cast %709 : vector<1x8x512xf32> to vector<8x512xf32>
    %711 = arith.truncf %694 : vector<8x128xf32> to vector<8x128xbf16>
    %c0_251 = arith.constant 0 : index
    %c0_252 = arith.constant 0 : index
    %712 = vector.load %arg9[%c0_251, %c0_252] : memref<128x512xbf16, #tpu.memory_space<vmem>>, vector<128x512xbf16>
    %cst_253 = arith.constant dense<0.000000e+00> : vector<8x512xf32>
    %713 = tpu.matmul %711, %712, %cst_253 {dimension_numbers = #tpu.dot_dimension_numbers<[1], [0], [0], [1], [0, 0, 1, 1], [], []>} : vector<8x128xbf16>, vector<128x512xbf16>, vector<8x512xf32> -> vector<8x512xf32>
    %714 = arith.addf %710, %713 : vector<8x512xf32>
    %715 = vector.extract_strided_slice %714 {offsets = [0, 0], sizes = [8, 128], strides = [1, 1]} : vector<8x512xf32> to vector<8x128xf32>
    %716 = arith.negf %715 : vector<8x128xf32>
    %717 = math.exp %716 : vector<8x128xf32>
    %cst_254 = arith.constant 1.000000e+00 : f32
    %718 = vector.broadcast %cst_254 : f32 to vector<8x128xf32>
    %719 = arith.addf %718, %717 : vector<8x128xf32>
    %720 = arith.divf %718, %719 : vector<8x128xf32>
    %721 = vector.extract_strided_slice %714 {offsets = [0, 128], sizes = [8, 128], strides = [1, 1]} : vector<8x512xf32> to vector<8x128xf32>
    %722 = arith.negf %721 : vector<8x128xf32>
    %723 = math.exp %722 : vector<8x128xf32>
    %cst_255 = arith.constant 1.000000e+00 : f32
    %724 = vector.broadcast %cst_255 : f32 to vector<8x128xf32>
    %725 = arith.addf %724, %723 : vector<8x128xf32>
    %726 = arith.divf %724, %725 : vector<8x128xf32>
    %727 = vector.extract_strided_slice %714 {offsets = [0, 256], sizes = [8, 128], strides = [1, 1]} : vector<8x512xf32> to vector<8x128xf32>
    %728 = math.tanh %727 : vector<8x128xf32>
    %729 = vector.extract_strided_slice %714 {offsets = [0, 384], sizes = [8, 128], strides = [1, 1]} : vector<8x512xf32> to vector<8x128xf32>
    %730 = arith.negf %729 : vector<8x128xf32>
    %731 = math.exp %730 : vector<8x128xf32>
    %cst_256 = arith.constant 1.000000e+00 : f32
    %732 = vector.broadcast %cst_256 : f32 to vector<8x128xf32>
    %733 = arith.addf %732, %731 : vector<8x128xf32>
    %734 = arith.divf %732, %733 : vector<8x128xf32>
    %735 = arith.mulf %726, %695 : vector<8x128xf32>
    %736 = arith.mulf %720, %728 : vector<8x128xf32>
    %737 = arith.addf %735, %736 : vector<8x128xf32>
    %738 = math.tanh %737 : vector<8x128xf32>
    %739 = arith.mulf %734, %738 : vector<8x128xf32>
    %c1_i32_257 = arith.constant 1 : i32
    %740 = arith.addi %706, %c1_i32_257 : i32
    %741 = arith.index_cast %740 : i32 to index
    %c0_258 = arith.constant 0 : index
    %c0_259 = arith.constant 0 : index
    %742 = vector.load %arg13[%741, %c0_258, %c0_259] : memref<16x8x512xf32, #tpu.memory_space<vmem>>, vector<1x8x512xf32>
    %743 = vector.shape_cast %742 : vector<1x8x512xf32> to vector<8x512xf32>
    %744 = arith.truncf %739 : vector<8x128xf32> to vector<8x128xbf16>
    %c0_260 = arith.constant 0 : index
    %c0_261 = arith.constant 0 : index
    %745 = vector.load %arg9[%c0_260, %c0_261] : memref<128x512xbf16, #tpu.memory_space<vmem>>, vector<128x512xbf16>
    %cst_262 = arith.constant dense<0.000000e+00> : vector<8x512xf32>
    %746 = tpu.matmul %744, %745, %cst_262 {dimension_numbers = #tpu.dot_dimension_numbers<[1], [0], [0], [1], [0, 0, 1, 1], [], []>} : vector<8x128xbf16>, vector<128x512xbf16>, vector<8x512xf32> -> vector<8x512xf32>
    %747 = arith.addf %743, %746 : vector<8x512xf32>
    %748 = vector.extract_strided_slice %747 {offsets = [0, 0], sizes = [8, 128], strides = [1, 1]} : vector<8x512xf32> to vector<8x128xf32>
    %749 = arith.negf %748 : vector<8x128xf32>
    %750 = math.exp %749 : vector<8x128xf32>
    %cst_263 = arith.constant 1.000000e+00 : f32
    %751 = vector.broadcast %cst_263 : f32 to vector<8x128xf32>
    %752 = arith.addf %751, %750 : vector<8x128xf32>
    %753 = arith.divf %751, %752 : vector<8x128xf32>
    %754 = vector.extract_strided_slice %747 {offsets = [0, 128], sizes = [8, 128], strides = [1, 1]} : vector<8x512xf32> to vector<8x128xf32>
    %755 = arith.negf %754 : vector<8x128xf32>
    %756 = math.exp %755 : vector<8x128xf32>
    %cst_264 = arith.constant 1.000000e+00 : f32
    %757 = vector.broadcast %cst_264 : f32 to vector<8x128xf32>
    %758 = arith.addf %757, %756 : vector<8x128xf32>
    %759 = arith.divf %757, %758 : vector<8x128xf32>
    %760 = vector.extract_strided_slice %747 {offsets = [0, 256], sizes = [8, 128], strides = [1, 1]} : vector<8x512xf32> to vector<8x128xf32>
    %761 = math.tanh %760 : vector<8x128xf32>
    %762 = vector.extract_strided_slice %747 {offsets = [0, 384], sizes = [8, 128], strides = [1, 1]} : vector<8x512xf32> to vector<8x128xf32>
    %763 = arith.negf %762 : vector<8x128xf32>
    %764 = math.exp %763 : vector<8x128xf32>
    %cst_265 = arith.constant 1.000000e+00 : f32
    %765 = vector.broadcast %cst_265 : f32 to vector<8x128xf32>
    %766 = arith.addf %765, %764 : vector<8x128xf32>
    %767 = arith.divf %765, %766 : vector<8x128xf32>
    %768 = arith.mulf %759, %737 : vector<8x128xf32>
    %769 = arith.mulf %753, %761 : vector<8x128xf32>
    %770 = arith.addf %768, %769 : vector<8x128xf32>
    %771 = math.tanh %770 : vector<8x128xf32>
    %772 = arith.mulf %767, %771 : vector<8x128xf32>
    %c2_i32_266 = arith.constant 2 : i32
    %773 = arith.addi %706, %c2_i32_266 : i32
    %774 = arith.index_cast %773 : i32 to index
    %c0_267 = arith.constant 0 : index
    %c0_268 = arith.constant 0 : index
    %775 = vector.load %arg13[%774, %c0_267, %c0_268] : memref<16x8x512xf32, #tpu.memory_space<vmem>>, vector<1x8x512xf32>
    %776 = vector.shape_cast %775 : vector<1x8x512xf32> to vector<8x512xf32>
    %777 = arith.truncf %772 : vector<8x128xf32> to vector<8x128xbf16>
    %c0_269 = arith.constant 0 : index
    %c0_270 = arith.constant 0 : index
    %778 = vector.load %arg9[%c0_269, %c0_270] : memref<128x512xbf16, #tpu.memory_space<vmem>>, vector<128x512xbf16>
    %cst_271 = arith.constant dense<0.000000e+00> : vector<8x512xf32>
    %779 = tpu.matmul %777, %778, %cst_271 {dimension_numbers = #tpu.dot_dimension_numbers<[1], [0], [0], [1], [0, 0, 1, 1], [], []>} : vector<8x128xbf16>, vector<128x512xbf16>, vector<8x512xf32> -> vector<8x512xf32>
    %780 = arith.addf %776, %779 : vector<8x512xf32>
    %781 = vector.extract_strided_slice %780 {offsets = [0, 0], sizes = [8, 128], strides = [1, 1]} : vector<8x512xf32> to vector<8x128xf32>
    %782 = arith.negf %781 : vector<8x128xf32>
    %783 = math.exp %782 : vector<8x128xf32>
    %cst_272 = arith.constant 1.000000e+00 : f32
    %784 = vector.broadcast %cst_272 : f32 to vector<8x128xf32>
    %785 = arith.addf %784, %783 : vector<8x128xf32>
    %786 = arith.divf %784, %785 : vector<8x128xf32>
    %787 = vector.extract_strided_slice %780 {offsets = [0, 128], sizes = [8, 128], strides = [1, 1]} : vector<8x512xf32> to vector<8x128xf32>
    %788 = arith.negf %787 : vector<8x128xf32>
    %789 = math.exp %788 : vector<8x128xf32>
    %cst_273 = arith.constant 1.000000e+00 : f32
    %790 = vector.broadcast %cst_273 : f32 to vector<8x128xf32>
    %791 = arith.addf %790, %789 : vector<8x128xf32>
    %792 = arith.divf %790, %791 : vector<8x128xf32>
    %793 = vector.extract_strided_slice %780 {offsets = [0, 256], sizes = [8, 128], strides = [1, 1]} : vector<8x512xf32> to vector<8x128xf32>
    %794 = math.tanh %793 : vector<8x128xf32>
    %795 = vector.extract_strided_slice %780 {offsets = [0, 384], sizes = [8, 128], strides = [1, 1]} : vector<8x512xf32> to vector<8x128xf32>
    %796 = arith.negf %795 : vector<8x128xf32>
    %797 = math.exp %796 : vector<8x128xf32>
    %cst_274 = arith.constant 1.000000e+00 : f32
    %798 = vector.broadcast %cst_274 : f32 to vector<8x128xf32>
    %799 = arith.addf %798, %797 : vector<8x128xf32>
    %800 = arith.divf %798, %799 : vector<8x128xf32>
    %801 = arith.mulf %792, %770 : vector<8x128xf32>
    %802 = arith.mulf %786, %794 : vector<8x128xf32>
    %803 = arith.addf %801, %802 : vector<8x128xf32>
    %804 = math.tanh %803 : vector<8x128xf32>
    %805 = arith.mulf %800, %804 : vector<8x128xf32>
    %c3_i32_275 = arith.constant 3 : i32
    %806 = arith.addi %706, %c3_i32_275 : i32
    %807 = arith.index_cast %806 : i32 to index
    %c0_276 = arith.constant 0 : index
    %c0_277 = arith.constant 0 : index
    %808 = vector.load %arg13[%807, %c0_276, %c0_277] : memref<16x8x512xf32, #tpu.memory_space<vmem>>, vector<1x8x512xf32>
    %809 = vector.shape_cast %808 : vector<1x8x512xf32> to vector<8x512xf32>
    %810 = arith.truncf %805 : vector<8x128xf32> to vector<8x128xbf16>
    %c0_278 = arith.constant 0 : index
    %c0_279 = arith.constant 0 : index
    %811 = vector.load %arg9[%c0_278, %c0_279] : memref<128x512xbf16, #tpu.memory_space<vmem>>, vector<128x512xbf16>
    %cst_280 = arith.constant dense<0.000000e+00> : vector<8x512xf32>
    %812 = tpu.matmul %810, %811, %cst_280 {dimension_numbers = #tpu.dot_dimension_numbers<[1], [0], [0], [1], [0, 0, 1, 1], [], []>} : vector<8x128xbf16>, vector<128x512xbf16>, vector<8x512xf32> -> vector<8x512xf32>
    %813 = arith.addf %809, %812 : vector<8x512xf32>
    %814 = vector.extract_strided_slice %813 {offsets = [0, 0], sizes = [8, 128], strides = [1, 1]} : vector<8x512xf32> to vector<8x128xf32>
    %815 = arith.negf %814 : vector<8x128xf32>
    %816 = math.exp %815 : vector<8x128xf32>
    %cst_281 = arith.constant 1.000000e+00 : f32
    %817 = vector.broadcast %cst_281 : f32 to vector<8x128xf32>
    %818 = arith.addf %817, %816 : vector<8x128xf32>
    %819 = arith.divf %817, %818 : vector<8x128xf32>
    %820 = vector.extract_strided_slice %813 {offsets = [0, 128], sizes = [8, 128], strides = [1, 1]} : vector<8x512xf32> to vector<8x128xf32>
    %821 = arith.negf %820 : vector<8x128xf32>
    %822 = math.exp %821 : vector<8x128xf32>
    %cst_282 = arith.constant 1.000000e+00 : f32
    %823 = vector.broadcast %cst_282 : f32 to vector<8x128xf32>
    %824 = arith.addf %823, %822 : vector<8x128xf32>
    %825 = arith.divf %823, %824 : vector<8x128xf32>
    %826 = vector.extract_strided_slice %813 {offsets = [0, 256], sizes = [8, 128], strides = [1, 1]} : vector<8x512xf32> to vector<8x128xf32>
    %827 = math.tanh %826 : vector<8x128xf32>
    %828 = vector.extract_strided_slice %813 {offsets = [0, 384], sizes = [8, 128], strides = [1, 1]} : vector<8x512xf32> to vector<8x128xf32>
    %829 = arith.negf %828 : vector<8x128xf32>
    %830 = math.exp %829 : vector<8x128xf32>
    %cst_283 = arith.constant 1.000000e+00 : f32
    %831 = vector.broadcast %cst_283 : f32 to vector<8x128xf32>
    %832 = arith.addf %831, %830 : vector<8x128xf32>
    %833 = arith.divf %831, %832 : vector<8x128xf32>
    %834 = arith.mulf %825, %803 : vector<8x128xf32>
    %835 = arith.mulf %819, %827 : vector<8x128xf32>
    %836 = arith.addf %834, %835 : vector<8x128xf32>
    %837 = math.tanh %836 : vector<8x128xf32>
    %838 = arith.mulf %833, %837 : vector<8x128xf32>
    %c4_i32_284 = arith.constant 4 : i32
    %839 = arith.addi %706, %c4_i32_284 : i32
    %840 = arith.index_cast %839 : i32 to index
    %c0_285 = arith.constant 0 : index
    %c0_286 = arith.constant 0 : index
    %841 = vector.load %arg13[%840, %c0_285, %c0_286] : memref<16x8x512xf32, #tpu.memory_space<vmem>>, vector<1x8x512xf32>
    %842 = vector.shape_cast %841 : vector<1x8x512xf32> to vector<8x512xf32>
    %843 = arith.truncf %838 : vector<8x128xf32> to vector<8x128xbf16>
    %c0_287 = arith.constant 0 : index
    %c0_288 = arith.constant 0 : index
    %844 = vector.load %arg9[%c0_287, %c0_288] : memref<128x512xbf16, #tpu.memory_space<vmem>>, vector<128x512xbf16>
    %cst_289 = arith.constant dense<0.000000e+00> : vector<8x512xf32>
    %845 = tpu.matmul %843, %844, %cst_289 {dimension_numbers = #tpu.dot_dimension_numbers<[1], [0], [0], [1], [0, 0, 1, 1], [], []>} : vector<8x128xbf16>, vector<128x512xbf16>, vector<8x512xf32> -> vector<8x512xf32>
    %846 = arith.addf %842, %845 : vector<8x512xf32>
    %847 = vector.extract_strided_slice %846 {offsets = [0, 0], sizes = [8, 128], strides = [1, 1]} : vector<8x512xf32> to vector<8x128xf32>
    %848 = arith.negf %847 : vector<8x128xf32>
    %849 = math.exp %848 : vector<8x128xf32>
    %cst_290 = arith.constant 1.000000e+00 : f32
    %850 = vector.broadcast %cst_290 : f32 to vector<8x128xf32>
    %851 = arith.addf %850, %849 : vector<8x128xf32>
    %852 = arith.divf %850, %851 : vector<8x128xf32>
    %853 = vector.extract_strided_slice %846 {offsets = [0, 128], sizes = [8, 128], strides = [1, 1]} : vector<8x512xf32> to vector<8x128xf32>
    %854 = arith.negf %853 : vector<8x128xf32>
    %855 = math.exp %854 : vector<8x128xf32>
    %cst_291 = arith.constant 1.000000e+00 : f32
    %856 = vector.broadcast %cst_291 : f32 to vector<8x128xf32>
    %857 = arith.addf %856, %855 : vector<8x128xf32>
    %858 = arith.divf %856, %857 : vector<8x128xf32>
    %859 = vector.extract_strided_slice %846 {offsets = [0, 256], sizes = [8, 128], strides = [1, 1]} : vector<8x512xf32> to vector<8x128xf32>
    %860 = math.tanh %859 : vector<8x128xf32>
    %861 = vector.extract_strided_slice %846 {offsets = [0, 384], sizes = [8, 128], strides = [1, 1]} : vector<8x512xf32> to vector<8x128xf32>
    %862 = arith.negf %861 : vector<8x128xf32>
    %863 = math.exp %862 : vector<8x128xf32>
    %cst_292 = arith.constant 1.000000e+00 : f32
    %864 = vector.broadcast %cst_292 : f32 to vector<8x128xf32>
    %865 = arith.addf %864, %863 : vector<8x128xf32>
    %866 = arith.divf %864, %865 : vector<8x128xf32>
    %867 = arith.mulf %858, %836 : vector<8x128xf32>
    %868 = arith.mulf %852, %860 : vector<8x128xf32>
    %869 = arith.addf %867, %868 : vector<8x128xf32>
    %870 = math.tanh %869 : vector<8x128xf32>
    %871 = arith.mulf %866, %870 : vector<8x128xf32>
    %c5_i32_293 = arith.constant 5 : i32
    %872 = arith.addi %706, %c5_i32_293 : i32
    %873 = arith.index_cast %872 : i32 to index
    %c0_294 = arith.constant 0 : index
    %c0_295 = arith.constant 0 : index
    %874 = vector.load %arg13[%873, %c0_294, %c0_295] : memref<16x8x512xf32, #tpu.memory_space<vmem>>, vector<1x8x512xf32>
    %875 = vector.shape_cast %874 : vector<1x8x512xf32> to vector<8x512xf32>
    %876 = arith.truncf %871 : vector<8x128xf32> to vector<8x128xbf16>
    %c0_296 = arith.constant 0 : index
    %c0_297 = arith.constant 0 : index
    %877 = vector.load %arg9[%c0_296, %c0_297] : memref<128x512xbf16, #tpu.memory_space<vmem>>, vector<128x512xbf16>
    %cst_298 = arith.constant dense<0.000000e+00> : vector<8x512xf32>
    %878 = tpu.matmul %876, %877, %cst_298 {dimension_numbers = #tpu.dot_dimension_numbers<[1], [0], [0], [1], [0, 0, 1, 1], [], []>} : vector<8x128xbf16>, vector<128x512xbf16>, vector<8x512xf32> -> vector<8x512xf32>
    %879 = arith.addf %875, %878 : vector<8x512xf32>
    %880 = vector.extract_strided_slice %879 {offsets = [0, 0], sizes = [8, 128], strides = [1, 1]} : vector<8x512xf32> to vector<8x128xf32>
    %881 = arith.negf %880 : vector<8x128xf32>
    %882 = math.exp %881 : vector<8x128xf32>
    %cst_299 = arith.constant 1.000000e+00 : f32
    %883 = vector.broadcast %cst_299 : f32 to vector<8x128xf32>
    %884 = arith.addf %883, %882 : vector<8x128xf32>
    %885 = arith.divf %883, %884 : vector<8x128xf32>
    %886 = vector.extract_strided_slice %879 {offsets = [0, 128], sizes = [8, 128], strides = [1, 1]} : vector<8x512xf32> to vector<8x128xf32>
    %887 = arith.negf %886 : vector<8x128xf32>
    %888 = math.exp %887 : vector<8x128xf32>
    %cst_300 = arith.constant 1.000000e+00 : f32
    %889 = vector.broadcast %cst_300 : f32 to vector<8x128xf32>
    %890 = arith.addf %889, %888 : vector<8x128xf32>
    %891 = arith.divf %889, %890 : vector<8x128xf32>
    %892 = vector.extract_strided_slice %879 {offsets = [0, 256], sizes = [8, 128], strides = [1, 1]} : vector<8x512xf32> to vector<8x128xf32>
    %893 = math.tanh %892 : vector<8x128xf32>
    %894 = vector.extract_strided_slice %879 {offsets = [0, 384], sizes = [8, 128], strides = [1, 1]} : vector<8x512xf32> to vector<8x128xf32>
    %895 = arith.negf %894 : vector<8x128xf32>
    %896 = math.exp %895 : vector<8x128xf32>
    %cst_301 = arith.constant 1.000000e+00 : f32
    %897 = vector.broadcast %cst_301 : f32 to vector<8x128xf32>
    %898 = arith.addf %897, %896 : vector<8x128xf32>
    %899 = arith.divf %897, %898 : vector<8x128xf32>
    %900 = arith.mulf %891, %869 : vector<8x128xf32>
    %901 = arith.mulf %885, %893 : vector<8x128xf32>
    %902 = arith.addf %900, %901 : vector<8x128xf32>
    %903 = math.tanh %902 : vector<8x128xf32>
    %904 = arith.mulf %899, %903 : vector<8x128xf32>
    %c6_i32_302 = arith.constant 6 : i32
    %905 = arith.addi %706, %c6_i32_302 : i32
    %906 = arith.index_cast %905 : i32 to index
    %c0_303 = arith.constant 0 : index
    %c0_304 = arith.constant 0 : index
    %907 = vector.load %arg13[%906, %c0_303, %c0_304] : memref<16x8x512xf32, #tpu.memory_space<vmem>>, vector<1x8x512xf32>
    %908 = vector.shape_cast %907 : vector<1x8x512xf32> to vector<8x512xf32>
    %909 = arith.truncf %904 : vector<8x128xf32> to vector<8x128xbf16>
    %c0_305 = arith.constant 0 : index
    %c0_306 = arith.constant 0 : index
    %910 = vector.load %arg9[%c0_305, %c0_306] : memref<128x512xbf16, #tpu.memory_space<vmem>>, vector<128x512xbf16>
    %cst_307 = arith.constant dense<0.000000e+00> : vector<8x512xf32>
    %911 = tpu.matmul %909, %910, %cst_307 {dimension_numbers = #tpu.dot_dimension_numbers<[1], [0], [0], [1], [0, 0, 1, 1], [], []>} : vector<8x128xbf16>, vector<128x512xbf16>, vector<8x512xf32> -> vector<8x512xf32>
    %912 = arith.addf %908, %911 : vector<8x512xf32>
    %913 = vector.extract_strided_slice %912 {offsets = [0, 0], sizes = [8, 128], strides = [1, 1]} : vector<8x512xf32> to vector<8x128xf32>
    %914 = arith.negf %913 : vector<8x128xf32>
    %915 = math.exp %914 : vector<8x128xf32>
    %cst_308 = arith.constant 1.000000e+00 : f32
    %916 = vector.broadcast %cst_308 : f32 to vector<8x128xf32>
    %917 = arith.addf %916, %915 : vector<8x128xf32>
    %918 = arith.divf %916, %917 : vector<8x128xf32>
    %919 = vector.extract_strided_slice %912 {offsets = [0, 128], sizes = [8, 128], strides = [1, 1]} : vector<8x512xf32> to vector<8x128xf32>
    %920 = arith.negf %919 : vector<8x128xf32>
    %921 = math.exp %920 : vector<8x128xf32>
    %cst_309 = arith.constant 1.000000e+00 : f32
    %922 = vector.broadcast %cst_309 : f32 to vector<8x128xf32>
    %923 = arith.addf %922, %921 : vector<8x128xf32>
    %924 = arith.divf %922, %923 : vector<8x128xf32>
    %925 = vector.extract_strided_slice %912 {offsets = [0, 256], sizes = [8, 128], strides = [1, 1]} : vector<8x512xf32> to vector<8x128xf32>
    %926 = math.tanh %925 : vector<8x128xf32>
    %927 = vector.extract_strided_slice %912 {offsets = [0, 384], sizes = [8, 128], strides = [1, 1]} : vector<8x512xf32> to vector<8x128xf32>
    %928 = arith.negf %927 : vector<8x128xf32>
    %929 = math.exp %928 : vector<8x128xf32>
    %cst_310 = arith.constant 1.000000e+00 : f32
    %930 = vector.broadcast %cst_310 : f32 to vector<8x128xf32>
    %931 = arith.addf %930, %929 : vector<8x128xf32>
    %932 = arith.divf %930, %931 : vector<8x128xf32>
    %933 = arith.mulf %924, %902 : vector<8x128xf32>
    %934 = arith.mulf %918, %926 : vector<8x128xf32>
    %935 = arith.addf %933, %934 : vector<8x128xf32>
    %936 = math.tanh %935 : vector<8x128xf32>
    %937 = arith.mulf %932, %936 : vector<8x128xf32>
    %c7_i32_311 = arith.constant 7 : i32
    %938 = arith.addi %706, %c7_i32_311 : i32
    %939 = arith.index_cast %938 : i32 to index
    %c0_312 = arith.constant 0 : index
    %c0_313 = arith.constant 0 : index
    %940 = vector.load %arg13[%939, %c0_312, %c0_313] : memref<16x8x512xf32, #tpu.memory_space<vmem>>, vector<1x8x512xf32>
    %941 = vector.shape_cast %940 : vector<1x8x512xf32> to vector<8x512xf32>
    %942 = arith.truncf %937 : vector<8x128xf32> to vector<8x128xbf16>
    %c0_314 = arith.constant 0 : index
    %c0_315 = arith.constant 0 : index
    %943 = vector.load %arg9[%c0_314, %c0_315] : memref<128x512xbf16, #tpu.memory_space<vmem>>, vector<128x512xbf16>
    %cst_316 = arith.constant dense<0.000000e+00> : vector<8x512xf32>
    %944 = tpu.matmul %942, %943, %cst_316 {dimension_numbers = #tpu.dot_dimension_numbers<[1], [0], [0], [1], [0, 0, 1, 1], [], []>} : vector<8x128xbf16>, vector<128x512xbf16>, vector<8x512xf32> -> vector<8x512xf32>
    %945 = arith.addf %941, %944 : vector<8x512xf32>
    %946 = vector.extract_strided_slice %945 {offsets = [0, 0], sizes = [8, 128], strides = [1, 1]} : vector<8x512xf32> to vector<8x128xf32>
    %947 = arith.negf %946 : vector<8x128xf32>
    %948 = math.exp %947 : vector<8x128xf32>
    %cst_317 = arith.constant 1.000000e+00 : f32
    %949 = vector.broadcast %cst_317 : f32 to vector<8x128xf32>
    %950 = arith.addf %949, %948 : vector<8x128xf32>
    %951 = arith.divf %949, %950 : vector<8x128xf32>
    %952 = vector.extract_strided_slice %945 {offsets = [0, 128], sizes = [8, 128], strides = [1, 1]} : vector<8x512xf32> to vector<8x128xf32>
    %953 = arith.negf %952 : vector<8x128xf32>
    %954 = math.exp %953 : vector<8x128xf32>
    %cst_318 = arith.constant 1.000000e+00 : f32
    %955 = vector.broadcast %cst_318 : f32 to vector<8x128xf32>
    %956 = arith.addf %955, %954 : vector<8x128xf32>
    %957 = arith.divf %955, %956 : vector<8x128xf32>
    %958 = vector.extract_strided_slice %945 {offsets = [0, 256], sizes = [8, 128], strides = [1, 1]} : vector<8x512xf32> to vector<8x128xf32>
    %959 = math.tanh %958 : vector<8x128xf32>
    %960 = vector.extract_strided_slice %945 {offsets = [0, 384], sizes = [8, 128], strides = [1, 1]} : vector<8x512xf32> to vector<8x128xf32>
    %961 = arith.negf %960 : vector<8x128xf32>
    %962 = math.exp %961 : vector<8x128xf32>
    %cst_319 = arith.constant 1.000000e+00 : f32
    %963 = vector.broadcast %cst_319 : f32 to vector<8x128xf32>
    %964 = arith.addf %963, %962 : vector<8x128xf32>
    %965 = arith.divf %963, %964 : vector<8x128xf32>
    %966 = arith.mulf %957, %935 : vector<8x128xf32>
    %967 = arith.mulf %951, %959 : vector<8x128xf32>
    %968 = arith.addf %966, %967 : vector<8x128xf32>
    %969 = math.tanh %968 : vector<8x128xf32>
    %970 = arith.mulf %965, %969 : vector<8x128xf32>
    %c8_i32_320 = arith.constant 8 : i32
    %c1_i32_321 = arith.constant 1 : i32
    %c0_322 = arith.constant 0 : index
    %c0_323 = arith.constant 0 : index
    %971 = vector.load %arg11[%c0_322, %c0_323] : memref<8x128xf32, #tpu.memory_space<vmem>>, vector<8x128xf32>
    tpu.vector_store %arg11[%c0_322, %c0_323], %970 {strides = array<i32>} : memref<8x128xf32, #tpu.memory_space<vmem>>, vector<8x128xf32>,
    %c0_324 = arith.constant 0 : index
    %c0_325 = arith.constant 0 : index
    %972 = vector.load %arg12[%c0_324, %c0_325] : memref<8x128xf32, #tpu.memory_space<vmem>>, vector<8x128xf32>
    tpu.vector_store %arg12[%c0_324, %c0_325], %968 {strides = array<i32>} : memref<8x128xf32, #tpu.memory_space<vmem>>, vector<8x128xf32>,
    return
  }
  func.func @transform_0(%arg0: i32) -> (i32, i32, i32) {
    %c0_i32 = arith.constant 0 : i32
    %c0_i32_0 = arith.constant 0 : i32
    %c0_i32_1 = arith.constant 0 : i32
    return %c0_i32, %arg0, %c0_i32_0 : i32, i32, i32
  }
  func.func @transform_1(%arg0: i32) -> (i32, i32) {
    %c0_i32 = arith.constant 0 : i32
    %c0_i32_0 = arith.constant 0 : i32
    %c0_i32_1 = arith.constant 0 : i32
    return %c0_i32, %c0_i32_0 : i32, i32
  }
  func.func @transform_2(%arg0: i32) -> (i32, i32) {
    %c0_i32 = arith.constant 0 : i32
    %c0_i32_0 = arith.constant 0 : i32
    %c0_i32_1 = arith.constant 0 : i32
    return %c0_i32, %c0_i32_0 : i32, i32
  }
  func.func @transform_3(%arg0: i32) -> (i32, i32) {
    %c0_i32 = arith.constant 0 : i32
    %c0_i32_0 = arith.constant 0 : i32
    %c0_i32_1 = arith.constant 0 : i32
    return %c0_i32, %c0_i32_0 : i32, i32
  }
  func.func @transform_4(%arg0: i32) -> (i32, i32) {
    %c0_i32 = arith.constant 0 : i32
    %c0_i32_0 = arith.constant 0 : i32
    %c0_i32_1 = arith.constant 0 : i32
    return %c0_i32, %c0_i32_0 : i32, i32
  }
  func.func @transform_5(%arg0: i32) -> (i32, i32) {
    %c0_i32 = arith.constant 0 : i32
    %c0_i32_0 = arith.constant 0 : i32
    %c0_i32_1 = arith.constant 0 : i32
    return %c0_i32, %c0_i32_0 : i32, i32
  }
  func.func @transform_6(%arg0: i32) -> (i32, i32) {
    %c0_i32 = arith.constant 0 : i32
    %c0_i32_0 = arith.constant 0 : i32
    %c0_i32_1 = arith.constant 0 : i32
    return %c0_i32, %c0_i32_0 : i32, i32
  }
  func.func @transform_7(%arg0: i32) -> (i32, i32) {
    %c0_i32 = arith.constant 0 : i32
    %c0_i32_0 = arith.constant 0 : i32
    %c0_i32_1 = arith.constant 0 : i32
    return %c0_i32, %c0_i32_0 : i32, i32
  }
  func.func @transform_8(%arg0: i32) -> (i32, i32) {
    %c0_i32 = arith.constant 0 : i32
    %c0_i32_0 = arith.constant 0 : i32
    %c0_i32_1 = arith.constant 0 : i32
    return %c0_i32, %c0_i32_0 : i32, i32
  }
  func.func @transform_9(%arg0: i32) -> (i32, i32) {
    %c0_i32 = arith.constant 0 : i32
    %c0_i32_0 = arith.constant 0 : i32
    %c0_i32_1 = arith.constant 0 : i32
    return %c0_i32, %c0_i32_0 : i32, i32
  }
  func.func @transform_10(%arg0: i32) -> (i32, i32) {
    %c0_i32 = arith.constant 0 : i32
    %c0_i32_0 = arith.constant 0 : i32
    return %arg0, %c0_i32 : i32, i32
  }
  func.func @transform_11(%arg0: i32) -> (i32, i32) {
    %c0_i32 = arith.constant 0 : i32
    %c0_i32_0 = arith.constant 0 : i32
    return %arg0, %c0_i32 : i32, i32
  }
}

</mosaic_0001>

<llo_original>
// kernel: lstm_encoder_forward.1
$region0: #{lstm_encoder_forward.1}
  #allocation0 [shape = 'u32[]', space=smem, size = 0x4, offset = 0x4, fixed_abs, tag = 'smem constant byte address 0x4 - core index']
  #allocation1 [shape = 'u32[144,128]{1,0:T(1,128)}', space=vmem, size = 0x12000, scoped, tag = 'internal scratch']
  #allocation2 [shape = 'f32[16,8,512]{2,1,0:T(8,128)}', space=vmem, size = 0x40000, scoped, tag = 'scratch operand']
  #allocation3 [shape = 'bf16[8,8,128]{2,1,0:T(8,128)(2,1)}', space=vmem, size = 0x4000, scoped, tag = 'scratch operand']
  %s0 = inlined_call_operand.vmem [shape: f32[8,8,128], index: 0, kind: input, shape index: {}]
  %s1 = inlined_call_operand.vmem [shape: bf16[128,512], index: 1, kind: input, shape index: {}]
  %s2 = inlined_call_operand.vmem [shape: bf16[128,512], index: 2, kind: input, shape index: {}]
  %s3 = inlined_call_operand.vmem [shape: f32[1,512], index: 3, kind: input, shape index: {}]
  %s4 = inlined_call_operand.vmem [shape: bf16[128,512], index: 4, kind: input, shape index: {}]
  %s5 = inlined_call_operand.vmem [shape: bf16[128,512], index: 5, kind: input, shape index: {}]
  %s6 = inlined_call_operand.vmem [shape: f32[1,512], index: 6, kind: input, shape index: {}]
  %s7 = inlined_call_operand.vmem [shape: bf16[128,512], index: 7, kind: input, shape index: {}]
  %s8 = inlined_call_operand.vmem [shape: bf16[128,512], index: 8, kind: input, shape index: {}]
  %s9 = inlined_call_operand.vmem [shape: f32[1,512], index: 9, kind: input, shape index: {}]
  %s10 = inlined_call_operand.vmem [shape: f32[8,128], index: 10, kind: output, shape index: {0}]
  %s11 = inlined_call_operand.vmem [shape: f32[8,128], index: 11, kind: output, shape index: {1}]
  %12 = xla_tuple %s10, %s11
  %s13 = sld [smem:[#allocation0]]
  $region58: #{lstm_encoder_forward.1} parent=0
    _
  %s15 = ssub.s32 1, %s13
  %s16 = scalar_select 0, %s15, %s13
  // Predicated region
  $region2: #{lstm_encoder_forward.1} parent=0 // pred_check
    _
  $region3: #{lstm_encoder_forward.1} parent=0 // pred_check_branch
    %18 = sbr.rel (0) target = $region5
  $region4: #{lstm_encoder_forward.1} parent=0 // pred_region
    _
  $region5: #{lstm_encoder_forward.1} parent=0 // pred_fallthru
    _
  // Predicated region
  $region6: #{lstm_encoder_forward.1} parent=0 // pred_check
    _
  $region7: #{lstm_encoder_forward.1} parent=0 // pred_check_branch
    %20 = sbr.rel (0) target = $region9
  $region8: #{lstm_encoder_forward.1} parent=0 // pred_region
    _
  $region9: #{lstm_encoder_forward.1} parent=0 // pred_fallthru
    _
  // Predicated region
  $region10: #{lstm_encoder_forward.1} parent=0 // pred_check
    _
  $region11: #{lstm_encoder_forward.1} parent=0 // pred_check_branch
    %22 = sbr.rel (0) target = $region13
  $region12: #{lstm_encoder_forward.1} parent=0 // pred_region
    _
  $region13: #{lstm_encoder_forward.1} parent=0 // pred_fallthru
    _
  // Predicated region
  $region14: #{lstm_encoder_forward.1} parent=0 // pred_check
    _
  $region15: #{lstm_encoder_forward.1} parent=0 // pred_check_branch
    %24 = sbr.rel (0) target = $region17
  $region16: #{lstm_encoder_forward.1} parent=0 // pred_region
    _
  $region17: #{lstm_encoder_forward.1} parent=0 // pred_fallthru
    _
  // Predicated region
  $region18: #{lstm_encoder_forward.1} parent=0 // pred_check
    _
  $region19: #{lstm_encoder_forward.1} parent=0 // pred_check_branch
    %26 = sbr.rel (0) target = $region21
  $region20: #{lstm_encoder_forward.1} parent=0 // pred_region
    _
  $region21: #{lstm_encoder_forward.1} parent=0 // pred_fallthru
    _
  // Predicated region
  $region22: #{lstm_encoder_forward.1} parent=0 // pred_check
    _
  $region23: #{lstm_encoder_forward.1} parent=0 // pred_check_branch
    %28 = sbr.rel (0) target = $region25
  $region24: #{lstm_encoder_forward.1} parent=0 // pred_region
    _
  $region25: #{lstm_encoder_forward.1} parent=0 // pred_fallthru
    _
  // Predicated region
  $region26: #{lstm_encoder_forward.1} parent=0 // pred_check
    _
  $region27: #{lstm_encoder_forward.1} parent=0 // pred_check_branch
    %30 = sbr.rel (0) target = $region29
  $region28: #{lstm_encoder_forward.1} parent=0 // pred_region
    _
  $region29: #{lstm_encoder_forward.1} parent=0 // pred_fallthru
    _
  // Predicated region
  $region30: #{lstm_encoder_forward.1} parent=0 // pred_check
    _
  $region31: #{lstm_encoder_forward.1} parent=0 // pred_check_branch
    %32 = sbr.rel (0) target = $region33
  $region32: #{lstm_encoder_forward.1} parent=0 // pred_region
    _
  $region33: #{lstm_encoder_forward.1} parent=0 // pred_fallthru
    _
  // Predicated region
  $region34: #{lstm_encoder_forward.1} parent=0 // pred_check
    _
  $region35: #{lstm_encoder_forward.1} parent=0 // pred_check_branch
    %34 = sbr.rel (0) target = $region37
  $region36: #{lstm_encoder_forward.1} parent=0 // pred_region
    _
  $region37: #{lstm_encoder_forward.1} parent=0 // pred_fallthru
    _
  // Predicated region
  $region38: #{lstm_encoder_forward.1} parent=0 // pred_check
    _
  $region39: #{lstm_encoder_forward.1} parent=0 // pred_check_branch
    %36 = sbr.rel (0) target = $region41
  $region40: #{lstm_encoder_forward.1} parent=0 // pred_region
    _
  $region41: #{lstm_encoder_forward.1} parent=0 // pred_fallthru
    _
  %v38 = vld [vmem:[%s0] sm:$0xff]
  %v39 = vld [vmem:[%s0 + $0x8] sm:$0xff]
  %v40 = vld [vmem:[%s0 + $0x10] sm:$0xff]
  %v41 = vld [vmem:[%s0 + $0x18] sm:$0xff]
  %v42 = vld [vmem:[%s0 + $0x20] sm:$0xff]
  %v43 = vld [vmem:[%s0 + $0x28] sm:$0xff]
  %v44 = vld [vmem:[%s0 + $0x30] sm:$0xff]
  %v45 = vld [vmem:[%s0 + $0x38] sm:$0xff]
  %v46 = vpack.c.bf16 %v38, %v38
  %v47 = vpack.c.bf16 %v39, %v39
  %v48 = vpack.c.bf16 %v40, %v40
  %v49 = vpack.c.bf16 %v41, %v41
  %v50 = vpack.c.bf16 %v42, %v42
  %v51 = vpack.c.bf16 %v43, %v43
  %v52 = vpack.c.bf16 %v44, %v44
  %v53 = vpack.c.bf16 %v45, %v45
  %v54 = vld [vmem:[%s1] sm:$0xff]
  %v55 = vld [vmem:[%s1 + $0x8] sm:$0xff]
  %v56 = vld [vmem:[%s1 + $0x10] sm:$0xff]
  %v57 = vld [vmem:[%s1 + $0x18] sm:$0xff]
  %v58 = vld [vmem:[%s1 + $0x20] sm:$0xff]
  %v59 = vld [vmem:[%s1 + $0x28] sm:$0xff]
  %v60 = vld [vmem:[%s1 + $0x30] sm:$0xff]
  %v61 = vld [vmem:[%s1 + $0x38] sm:$0xff]
  %v62 = vld [vmem:[%s1 + $0x40] sm:$0xff]
  %v63 = vld [vmem:[%s1 + $0x48] sm:$0xff]
  %v64 = vld [vmem:[%s1 + $0x50] sm:$0xff]
  %v65 = vld [vmem:[%s1 + $0x58] sm:$0xff]
  %v66 = vld [vmem:[%s1 + $0x60] sm:$0xff]
  %v67 = vld [vmem:[%s1 + $0x68] sm:$0xff]
  %v68 = vld [vmem:[%s1 + $0x70] sm:$0xff]
  %v69 = vld [vmem:[%s1 + $0x78] sm:$0xff]
  %v70 = vld [vmem:[%s1 + $0x80] sm:$0xff]
  %v71 = vld [vmem:[%s1 + $0x88] sm:$0xff]
  %v72 = vld [vmem:[%s1 + $0x90] sm:$0xff]
  %v73 = vld [vmem:[%s1 + $0x98] sm:$0xff]
  %v74 = vld [vmem:[%s1 + $0xa0] sm:$0xff]
  %v75 = vld [vmem:[%s1 + $0xa8] sm:$0xff]
  %v76 = vld [vmem:[%s1 + $0xb0] sm:$0xff]
  %v77 = vld [vmem:[%s1 + $0xb8] sm:$0xff]
  %v78 = vld [vmem:[%s1 + $0xc0] sm:$0xff]
  %v79 = vld [vmem:[%s1 + $0xc8] sm:$0xff]
  %v80 = vld [vmem:[%s1 + $0xd0] sm:$0xff]
  %v81 = vld [vmem:[%s1 + $0xd8] sm:$0xff]
  %v82 = vld [vmem:[%s1 + $0xe0] sm:$0xff]
  %v83 = vld [vmem:[%s1 + $0xe8] sm:$0xff]
  %v84 = vld [vmem:[%s1 + $0xf0] sm:$0xff]
  %v85 = vld [vmem:[%s1 + $0xf8] sm:$0xff]
  %v86 = vld [vmem:[%s3] sm:$0xf]
  %v88 = vlaneseq
  %v89 = vshrl.u32 %v88, 7
  %v90 = vsub.s32 0, %v89
  %v91 = vrot.slane %v86, %v90
  %v92 = vlaneseq
  %v93 = vshrl.u32 %v92, 7
  %v94 = vsub.s32 1, %v93
  %v95 = vrot.slane %v86, %v94
  %v96 = vlaneseq
  %v97 = vshrl.u32 %v96, 7
  %v98 = vsub.s32 2, %v97
  %v99 = vrot.slane %v86, %v98
  %v100 = vlaneseq
  %v101 = vshrl.u32 %v100, 7
  %v102 = vsub.s32 3, %v101
  %v103 = vrot.slane %v86, %v102
  %v116 = vunpack.c.l.b16 %v46
  %v117 = vunpack.c.l.b16 %v47
  %v118 = vunpack.c.l.b16 %v48
  %v119 = vunpack.c.l.b16 %v49
  %v120 = vunpack.c.l.b16 %v50
  %v121 = vunpack.c.l.b16 %v51
  %v122 = vunpack.c.l.b16 %v52
  %v123 = vunpack.c.l.b16 %v53
  %v124 = vpack.c.b16 %v117, %v116
  %v125 = vpack.c.b16 %v119, %v118
  %v126 = vpack.c.b16 %v121, %v120
  %v127 = vpack.c.b16 %v123, %v122
  %v164 = vunpack.c.l.b16 %v54
  %v165 = vunpack.c.h.b16 %v54
  %v166 = vunpack.c.l.b16 %v55
  %v167 = vunpack.c.h.b16 %v55
  %v168 = vunpack.c.l.b16 %v56
  %v169 = vunpack.c.h.b16 %v56
  %v170 = vunpack.c.l.b16 %v57
  %v171 = vunpack.c.h.b16 %v57
  %v172 = vunpack.c.l.b16 %v58
  %v173 = vunpack.c.h.b16 %v58
  %v174 = vunpack.c.l.b16 %v59
  %v175 = vunpack.c.h.b16 %v59
  %v176 = vunpack.c.l.b16 %v60
  %v177 = vunpack.c.h.b16 %v60
  %v178 = vunpack.c.l.b16 %v61
  %v179 = vunpack.c.h.b16 %v61
  %v180 = vunpack.c.l.b16 %v62
  %v181 = vunpack.c.h.b16 %v62
  %v182 = vunpack.c.l.b16 %v63
  %v183 = vunpack.c.h.b16 %v63
  %v184 = vunpack.c.l.b16 %v64
  %v185 = vunpack.c.h.b16 %v64
  %v186 = vunpack.c.l.b16 %v65
  %v187 = vunpack.c.h.b16 %v65
  %v188 = vunpack.c.l.b16 %v66
  %v189 = vunpack.c.h.b16 %v66
  %v190 = vunpack.c.l.b16 %v67
  %v191 = vunpack.c.h.b16 %v67
  %v192 = vunpack.c.l.b16 %v68
  %v193 = vunpack.c.h.b16 %v68
  %v194 = vunpack.c.l.b16 %v69
  %v195 = vunpack.c.h.b16 %v69
  %v196 = vunpack.c.l.b16 %v70
  %v197 = vunpack.c.h.b16 %v70
  %v198 = vunpack.c.l.b16 %v71
  %v199 = vunpack.c.h.b16 %v71
  %v200 = vunpack.c.l.b16 %v72
  %v201 = vunpack.c.h.b16 %v72
  %v202 = vunpack.c.l.b16 %v73
  %v203 = vunpack.c.h.b16 %v73
  %v204 = vunpack.c.l.b16 %v74
  %v205 = vunpack.c.h.b16 %v74
  %v206 = vunpack.c.l.b16 %v75
  %v207 = vunpack.c.h.b16 %v75
  %v208 = vunpack.c.l.b16 %v76
  %v209 = vunpack.c.h.b16 %v76
  %v210 = vunpack.c.l.b16 %v77
  %v211 = vunpack.c.h.b16 %v77
  %v212 = vunpack.c.l.b16 %v78
  %v213 = vunpack.c.h.b16 %v78
  %v214 = vunpack.c.l.b16 %v79
  %v215 = vunpack.c.h.b16 %v79
  %v216 = vunpack.c.l.b16 %v80
  %v217 = vunpack.c.h.b16 %v80
  %v218 = vunpack.c.l.b16 %v81
  %v219 = vunpack.c.h.b16 %v81
  %v220 = vunpack.c.l.b16 %v82
  %v221 = vunpack.c.h.b16 %v82
  %v222 = vunpack.c.l.b16 %v83
  %v223 = vunpack.c.h.b16 %v83
  %v224 = vunpack.c.l.b16 %v84
  %v225 = vunpack.c.h.b16 %v84
  %v226 = vunpack.c.l.b16 %v85
  %v227 = vunpack.c.h.b16 %v85
  %v228 = vpack.c.b16 %v168, %v164
  %v229 = vpack.c.b16 %v169, %v165
  %v230 = vpack.c.b16 %v170, %v166
  %v231 = vpack.c.b16 %v171, %v167
  %v232 = vpack.c.b16 %v176, %v172
  %v233 = vpack.c.b16 %v177, %v173
  %v234 = vpack.c.b16 %v178, %v174
  %v235 = vpack.c.b16 %v179, %v175
  %v236 = vpack.c.b16 %v184, %v180
  %v237 = vpack.c.b16 %v185, %v181
  %v238 = vpack.c.b16 %v186, %v182
  %v239 = vpack.c.b16 %v187, %v183
  %v240 = vpack.c.b16 %v192, %v188
  %v241 = vpack.c.b16 %v193, %v189
  %v242 = vpack.c.b16 %v194, %v190
  %v243 = vpack.c.b16 %v195, %v191
  %v244 = vpack.c.b16 %v200, %v196
  %v245 = vpack.c.b16 %v201, %v197
  %v246 = vpack.c.b16 %v202, %v198
  %v247 = vpack.c.b16 %v203, %v199
  %v248 = vpack.c.b16 %v208, %v204
  %v249 = vpack.c.b16 %v209, %v205
  %v250 = vpack.c.b16 %v210, %v206
  %v251 = vpack.c.b16 %v211, %v207
  %v252 = vpack.c.b16 %v216, %v212
  %v253 = vpack.c.b16 %v217, %v213
  %v254 = vpack.c.b16 %v218, %v214
  %v255 = vpack.c.b16 %v219, %v215
  %v256 = vpack.c.b16 %v224, %v220
  %v257 = vpack.c.b16 %v225, %v221
  %v258 = vpack.c.b16 %v226, %v222
  %v259 = vpack.c.b16 %v227, %v223
  %292 = vmatprep.subr.bf16.mxu0 %v257
  %293 = vmatpush1.bf16.msra.mxu0 %v256
  %294 = vmatprep.subr.bf16.mxu0 %v253
  %295 = vmatpush1.bf16.msra.mxu0 %v252
  %296 = vmatprep.subr.bf16.mxu0 %v249
  %297 = vmatpush1.bf16.msra.mxu0 %v248
  %298 = vmatprep.subr.bf16.mxu0 %v245
  %299 = vmatpush1.bf16.msra.mxu0 %v244
  %300 = vmatprep.subr.bf16.mxu0 %v241
  %301 = vmatpush1.bf16.msra.mxu0 %v240
  %302 = vmatprep.subr.bf16.mxu0 %v237
  %303 = vmatpush1.bf16.msra.mxu0 %v236
  %304 = vmatprep.subr.bf16.mxu0 %v233
  %305 = vmatpush1.bf16.msra.mxu0 %v232
  %306 = vmatprep.subr.bf16.mxu0 %v229
  %307 = vmatpush1.bf16.msra.mxu0 %v228
  %308 = vmatprep.subr.bf16.mxu0 0
  %309 = vmatpush2.bf16.msra.mxu0 0
  %310 = vmatprep.subr.bf16.mxu0 0
  %311 = vmatpush2.bf16.msra.mxu0 0
  %312 = vmatprep.subr.bf16.mxu0 0
  %313 = vmatpush2.bf16.msra.mxu0 0
  %314 = vmatprep.subr.bf16.mxu0 0
  %315 = vmatpush2.bf16.msra.mxu0 0
  %316 = vmatprep.subr.bf16.mxu0 0
  %317 = vmatpush2.bf16.msra.mxu0 0
  %318 = vmatprep.subr.bf16.mxu0 0
  %319 = vmatpush2.bf16.msra.mxu0 0
  %320 = vmatprep.subr.bf16.mxu0 0
  %321 = vmatpush2.bf16.msra.mxu0 0
  %322 = vmatprep.subr.bf16.mxu0 0
  %323 = vmatpush2.bf16.msra.mxu0 0
  %324 = vmatprep.mubr.bf16.mxu0 0
  %325 = vmatmul.mubr.bf16.gmra.mxu0 %v124
  %v326 = vpop.f32.mrf.mxu0
  %v327 = vadd.f32 %v91, %v326
  %v328 = vpop.f32.mrf.mxu0
  %v329 = vadd.f32 %v95, %v328
  %v330 = vpop.f32.mrf.mxu0
  %v331 = vadd.f32 %v91, %v330
  %v332 = vpop.f32.mrf.mxu0
  %v333 = vadd.f32 %v95, %v332
  %334 = vmatprep.mubr.bf16.mxu0 0
  %335 = vmatmul.mubr.bf16.gmra.mxu0 %v125
  %v336 = vpop.f32.mrf.mxu0
  %v337 = vadd.f32 %v91, %v336
  %v338 = vpop.f32.mrf.mxu0
  %v339 = vadd.f32 %v95, %v338
  %v340 = vpop.f32.mrf.mxu0
  %v341 = vadd.f32 %v91, %v340
  %v342 = vpop.f32.mrf.mxu0
  %v343 = vadd.f32 %v95, %v342
  %344 = vmatprep.mubr.bf16.mxu0 0
  %345 = vmatmul.mubr.bf16.gmra.mxu0 %v126
  %v346 = vpop.f32.mrf.mxu0
  %v347 = vadd.f32 %v91, %v346
  %v348 = vpop.f32.mrf.mxu0
  %v349 = vadd.f32 %v95, %v348
  %v350 = vpop.f32.mrf.mxu0
  %v351 = vadd.f32 %v91, %v350
  %v352 = vpop.f32.mrf.mxu0
  %v353 = vadd.f32 %v95, %v352
  %354 = vmatprep.mubr.bf16.mxu0 0
  %355 = vmatmul.mubr.bf16.gmra.mxu0 %v127
  %v356 = vpop.f32.mrf.mxu0
  %v357 = vadd.f32 %v91, %v356
  %v358 = vpop.f32.mrf.mxu0
  %v359 = vadd.f32 %v95, %v358
  %v360 = vpop.f32.mrf.mxu0
  %v361 = vadd.f32 %v91, %v360
  %v362 = vpop.f32.mrf.mxu0
  %v363 = vadd.f32 %v95, %v362
  %364 = vdwg.mxu0
  %365 = vmatprep.subr.bf16.mxu0 %v259
  %366 = vmatpush1.bf16.msra.mxu0 %v258
  %367 = vmatprep.subr.bf16.mxu0 %v255
  %368 = vmatpush1.bf16.msra.mxu0 %v254
  %369 = vmatprep.subr.bf16.mxu0 %v251
  %370 = vmatpush1.bf16.msra.mxu0 %v250
  %371 = vmatprep.subr.bf16.mxu0 %v247
  %372 = vmatpush1.bf16.msra.mxu0 %v246
  %373 = vmatprep.subr.bf16.mxu0 %v243
  %374 = vmatpush1.bf16.msra.mxu0 %v242
  %375 = vmatprep.subr.bf16.mxu0 %v239
  %376 = vmatpush1.bf16.msra.mxu0 %v238
  %377 = vmatprep.subr.bf16.mxu0 %v235
  %378 = vmatpush1.bf16.msra.mxu0 %v234
  %379 = vmatprep.subr.bf16.mxu0 %v231
  %380 = vmatpush1.bf16.msra.mxu0 %v230
  %381 = vmatprep.subr.bf16.mxu0 0
  %382 = vmatpush2.bf16.msra.mxu0 0
  %383 = vmatprep.subr.bf16.mxu0 0
  %384 = vmatpush2.bf16.msra.mxu0 0
  %385 = vmatprep.subr.bf16.mxu0 0
  %386 = vmatpush2.bf16.msra.mxu0 0
  %387 = vmatprep.subr.bf16.mxu0 0
  %388 = vmatpush2.bf16.msra.mxu0 0
  %389 = vmatprep.subr.bf16.mxu0 0
  %390 = vmatpush2.bf16.msra.mxu0 0
  %391 = vmatprep.subr.bf16.mxu0 0
  %392 = vmatpush2.bf16.msra.mxu0 0
  %393 = vmatprep.subr.bf16.mxu0 0
  %394 = vmatpush2.bf16.msra.mxu0 0
  %395 = vmatprep.subr.bf16.mxu0 0
  %396 = vmatpush2.bf16.msra.mxu0 0
  %397 = vmatprep.mubr.bf16.mxu0 0
  %398 = vmatmul.mubr.bf16.gmra.mxu0 %v124
  %v399 = vpop.f32.mrf.mxu0
  %v400 = vadd.f32 %v99, %v399
  %v401 = vpop.f32.mrf.mxu0
  %v402 = vadd.f32 %v103, %v401
  %v403 = vpop.f32.mrf.mxu0
  %v404 = vadd.f32 %v99, %v403
  %v405 = vpop.f32.mrf.mxu0
  %v406 = vadd.f32 %v103, %v405
  %407 = vmatprep.mubr.bf16.mxu0 0
  %408 = vmatmul.mubr.bf16.gmra.mxu0 %v125
  %v409 = vpop.f32.mrf.mxu0
  %v410 = vadd.f32 %v99, %v409
  %v411 = vpop.f32.mrf.mxu0
  %v412 = vadd.f32 %v103, %v411
  %v413 = vpop.f32.mrf.mxu0
  %v414 = vadd.f32 %v99, %v413
  %v415 = vpop.f32.mrf.mxu0
  %v416 = vadd.f32 %v103, %v415
  %417 = vmatprep.mubr.bf16.mxu0 0
  %418 = vmatmul.mubr.bf16.gmra.mxu0 %v126
  %v419 = vpop.f32.mrf.mxu0
  %v420 = vadd.f32 %v99, %v419
  %v421 = vpop.f32.mrf.mxu0
  %v422 = vadd.f32 %v103, %v421
  %v423 = vpop.f32.mrf.mxu0
  %v424 = vadd.f32 %v99, %v423
  %v425 = vpop.f32.mrf.mxu0
  %v426 = vadd.f32 %v103, %v425
  %427 = vmatprep.mubr.bf16.mxu0 0
  %428 = vmatmul.mubr.bf16.gmra.mxu0 %v127
  %v429 = vpop.f32.mrf.mxu0
  %v430 = vadd.f32 %v99, %v429
  %v431 = vpop.f32.mrf.mxu0
  %v432 = vadd.f32 %v103, %v431
  %v433 = vpop.f32.mrf.mxu0
  %v434 = vadd.f32 %v99, %v433
  %v435 = vpop.f32.mrf.mxu0
  %v436 = vadd.f32 %v103, %v435
  %437 = vdwg.mxu0
  %438 = vst [vmem:[#allocation2] sm:$0xff] %v327
  %439 = vst [vmem:[#allocation2 + $0x8] sm:$0xff] %v329
  %440 = vst [vmem:[#allocation2 + $0x10] sm:$0xff] %v400
  %441 = vst [vmem:[#allocation2 + $0x18] sm:$0xff] %v402
  %442 = vst [vmem:[#allocation2 + $0x20] sm:$0xff] %v331
  %443 = vst [vmem:[#allocation2 + $0x28] sm:$0xff] %v333
  %444 = vst [vmem:[#allocation2 + $0x30] sm:$0xff] %v404
  %445 = vst [vmem:[#allocation2 + $0x38] sm:$0xff] %v406
  %446 = vst [vmem:[#allocation2 + $0x40] sm:$0xff] %v337
  %447 = vst [vmem:[#allocation2 + $0x48] sm:$0xff] %v339
  %448 = vst [vmem:[#allocation2 + $0x50] sm:$0xff] %v410
  %449 = vst [vmem:[#allocation2 + $0x58] sm:$0xff] %v412
  %450 = vst [vmem:[#allocation2 + $0x60] sm:$0xff] %v341
  %451 = vst [vmem:[#allocation2 + $0x68] sm:$0xff] %v343
  %452 = vst [vmem:[#allocation2 + $0x70] sm:$0xff] %v414
  %453 = vst [vmem:[#allocation2 + $0x78] sm:$0xff] %v416
  %454 = vst [vmem:[#allocation2 + $0x80] sm:$0xff] %v347
  %455 = vst [vmem:[#allocation2 + $0x88] sm:$0xff] %v349
  %456 = vst [vmem:[#allocation2 + $0x90] sm:$0xff] %v420
  %457 = vst [vmem:[#allocation2 + $0x98] sm:$0xff] %v422
  %458 = vst [vmem:[#allocation2 + $0xa0] sm:$0xff] %v351
  %459 = vst [vmem:[#allocation2 + $0xa8] sm:$0xff] %v353
  %460 = vst [vmem:[#allocation2 + $0xb0] sm:$0xff] %v424
  %461 = vst [vmem:[#allocation2 + $0xb8] sm:$0xff] %v426
  %462 = vst [vmem:[#allocation2 + $0xc0] sm:$0xff] %v357
  %463 = vst [vmem:[#allocation2 + $0xc8] sm:$0xff] %v359
  %464 = vst [vmem:[#allocation2 + $0xd0] sm:$0xff] %v430
  %465 = vst [vmem:[#allocation2 + $0xd8] sm:$0xff] %v432
  %466 = vst [vmem:[#allocation2 + $0xe0] sm:$0xff] %v361
  %467 = vst [vmem:[#allocation2 + $0xe8] sm:$0xff] %v363
  %468 = vst [vmem:[#allocation2 + $0xf0] sm:$0xff] %v434
  %469 = vst [vmem:[#allocation2 + $0xf8] sm:$0xff] %v436
  %v470 = vld [vmem:[#allocation2] sm:$0xff]
  %v471 = vld [vmem:[#allocation2 + $0x8] sm:$0xff]
  %v472 = vld [vmem:[#allocation2 + $0x10] sm:$0xff]
  %v473 = vld [vmem:[#allocation2 + $0x18] sm:$0xff]
  %v474 = vld [vmem:[%s2] sm:$0xff]
  %v475 = vld [vmem:[%s2 + $0x8] sm:$0xff]
  %v476 = vld [vmem:[%s2 + $0x10] sm:$0xff]
  %v477 = vld [vmem:[%s2 + $0x18] sm:$0xff]
  %v478 = vld [vmem:[%s2 + $0x20] sm:$0xff]
  %v479 = vld [vmem:[%s2 + $0x28] sm:$0xff]
  %v480 = vld [vmem:[%s2 + $0x30] sm:$0xff]
  %v481 = vld [vmem:[%s2 + $0x38] sm:$0xff]
  %v482 = vld [vmem:[%s2 + $0x40] sm:$0xff]
  %v483 = vld [vmem:[%s2 + $0x48] sm:$0xff]
  %v484 = vld [vmem:[%s2 + $0x50] sm:$0xff]
  %v485 = vld [vmem:[%s2 + $0x58] sm:$0xff]
  %v486 = vld [vmem:[%s2 + $0x60] sm:$0xff]
  %v487 = vld [vmem:[%s2 + $0x68] sm:$0xff]
  %v488 = vld [vmem:[%s2 + $0x70] sm:$0xff]
  %v489 = vld [vmem:[%s2 + $0x78] sm:$0xff]
  %v490 = vld [vmem:[%s2 + $0x80] sm:$0xff]
  %v491 = vld [vmem:[%s2 + $0x88] sm:$0xff]
  %v492 = vld [vmem:[%s2 + $0x90] sm:$0xff]
  %v493 = vld [vmem:[%s2 + $0x98] sm:$0xff]
  %v494 = vld [vmem:[%s2 + $0xa0] sm:$0xff]
  %v495 = vld [vmem:[%s2 + $0xa8] sm:$0xff]
  %v496 = vld [vmem:[%s2 + $0xb0] sm:$0xff]
  %v497 = vld [vmem:[%s2 + $0xb8] sm:$0xff]
  %v498 = vld [vmem:[%s2 + $0xc0] sm:$0xff]
  %v499 = vld [vmem:[%s2 + $0xc8] sm:$0xff]
  %v500 = vld [vmem:[%s2 + $0xd0] sm:$0xff]
  %v501 = vld [vmem:[%s2 + $0xd8] sm:$0xff]
  %v502 = vld [vmem:[%s2 + $0xe0] sm:$0xff]
  %v503 = vld [vmem:[%s2 + $0xe8] sm:$0xff]
  %v504 = vld [vmem:[%s2 + $0xf0] sm:$0xff]
  %v505 = vld [vmem:[%s2 + $0xf8] sm:$0xff]
  %v538 = vunpack.c.l.b16 %v474
  %v539 = vunpack.c.h.b16 %v474
  %v540 = vunpack.c.l.b16 %v475
  %v541 = vunpack.c.h.b16 %v475
  %v542 = vunpack.c.l.b16 %v476
  %v543 = vunpack.c.h.b16 %v476
  %v544 = vunpack.c.l.b16 %v477
  %v545 = vunpack.c.h.b16 %v477
  %v546 = vunpack.c.l.b16 %v478
  %v547 = vunpack.c.h.b16 %v478
  %v548 = vunpack.c.l.b16 %v479
  %v549 = vunpack.c.h.b16 %v479
  %v550 = vunpack.c.l.b16 %v480
  %v551 = vunpack.c.h.b16 %v480
  %v552 = vunpack.c.l.b16 %v481
  %v553 = vunpack.c.h.b16 %v481
  %v554 = vunpack.c.l.b16 %v482
  %v555 = vunpack.c.h.b16 %v482
  %v556 = vunpack.c.l.b16 %v483
  %v557 = vunpack.c.h.b16 %v483
  %v558 = vunpack.c.l.b16 %v484
  %v559 = vunpack.c.h.b16 %v484
  %v560 = vunpack.c.l.b16 %v485
  %v561 = vunpack.c.h.b16 %v485
  %v562 = vunpack.c.l.b16 %v486
  %v563 = vunpack.c.h.b16 %v486
  %v564 = vunpack.c.l.b16 %v487
  %v565 = vunpack.c.h.b16 %v487
  %v566 = vunpack.c.l.b16 %v488
  %v567 = vunpack.c.h.b16 %v488
  %v568 = vunpack.c.l.b16 %v489
  %v569 = vunpack.c.h.b16 %v489
  %v570 = vunpack.c.l.b16 %v490
  %v571 = vunpack.c.h.b16 %v490
  %v572 = vunpack.c.l.b16 %v491
  %v573 = vunpack.c.h.b16 %v491
  %v574 = vunpack.c.l.b16 %v492
  %v575 = vunpack.c.h.b16 %v492
  %v576 = vunpack.c.l.b16 %v493
  %v577 = vunpack.c.h.b16 %v493
  %v578 = vunpack.c.l.b16 %v494
  %v579 = vunpack.c.h.b16 %v494
  %v580 = vunpack.c.l.b16 %v495
  %v581 = vunpack.c.h.b16 %v495
  %v582 = vunpack.c.l.b16 %v496
  %v583 = vunpack.c.h.b16 %v496
  %v584 = vunpack.c.l.b16 %v497
  %v585 = vunpack.c.h.b16 %v497
  %v586 = vunpack.c.l.b16 %v498
  %v587 = vunpack.c.h.b16 %v498
  %v588 = vunpack.c.l.b16 %v499
  %v589 = vunpack.c.h.b16 %v499
  %v590 = vunpack.c.l.b16 %v500
  %v591 = vunpack.c.h.b16 %v500
  %v592 = vunpack.c.l.b16 %v501
  %v593 = vunpack.c.h.b16 %v501
  %v594 = vunpack.c.l.b16 %v502
  %v595 = vunpack.c.h.b16 %v502
  %v596 = vunpack.c.l.b16 %v503
  %v597 = vunpack.c.h.b16 %v503
  %v598 = vunpack.c.l.b16 %v504
  %v599 = vunpack.c.h.b16 %v504
  %v600 = vunpack.c.l.b16 %v505
  %v601 = vunpack.c.h.b16 %v505
  %v602 = vpack.c.b16 %v542, %v538
  %v603 = vpack.c.b16 %v543, %v539
  %v604 = vpack.c.b16 %v544, %v540
  %v605 = vpack.c.b16 %v545, %v541
  %v606 = vpack.c.b16 %v550, %v546
  %v607 = vpack.c.b16 %v551, %v547
  %v608 = vpack.c.b16 %v552, %v548
  %v609 = vpack.c.b16 %v553, %v549
  %v610 = vpack.c.b16 %v558, %v554
  %v611 = vpack.c.b16 %v559, %v555
  %v612 = vpack.c.b16 %v560, %v556
  %v613 = vpack.c.b16 %v561, %v557
  %v614 = vpack.c.b16 %v566, %v562
  %v615 = vpack.c.b16 %v567, %v563
  %v616 = vpack.c.b16 %v568, %v564
  %v617 = vpack.c.b16 %v569, %v565
  %v618 = vpack.c.b16 %v574, %v570
  %v619 = vpack.c.b16 %v575, %v571
  %v620 = vpack.c.b16 %v576, %v572
  %v621 = vpack.c.b16 %v577, %v573
  %v622 = vpack.c.b16 %v582, %v578
  %v623 = vpack.c.b16 %v583, %v579
  %v624 = vpack.c.b16 %v584, %v580
  %v625 = vpack.c.b16 %v585, %v581
  %v626 = vpack.c.b16 %v590, %v586
  %v627 = vpack.c.b16 %v591, %v587
  %v628 = vpack.c.b16 %v592, %v588
  %v629 = vpack.c.b16 %v593, %v589
  %v630 = vpack.c.b16 %v598, %v594
  %v631 = vpack.c.b16 %v599, %v595
  %v632 = vpack.c.b16 %v600, %v596
  %v633 = vpack.c.b16 %v601, %v597
  %666 = vmatprep.subr.bf16.mxu0 %v631
  %667 = vmatpush1.bf16.msra.mxu0 %v630
  %668 = vmatprep.subr.bf16.mxu0 %v627
  %669 = vmatpush1.bf16.msra.mxu0 %v626
  %670 = vmatprep.subr.bf16.mxu0 %v623
  %671 = vmatpush1.bf16.msra.mxu0 %v622
  %672 = vmatprep.subr.bf16.mxu0 %v619
  %673 = vmatpush1.bf16.msra.mxu0 %v618
  %674 = vmatprep.subr.bf16.mxu0 %v615
  %675 = vmatpush1.bf16.msra.mxu0 %v614
  %676 = vmatprep.subr.bf16.mxu0 %v611
  %677 = vmatpush1.bf16.msra.mxu0 %v610
  %678 = vmatprep.subr.bf16.mxu0 %v607
  %679 = vmatpush1.bf16.msra.mxu0 %v606
  %680 = vmatprep.subr.bf16.mxu0 %v603
  %681 = vmatpush1.bf16.msra.mxu0 %v602
  %682 = vmatprep.subr.bf16.mxu0 0
  %683 = vmatpush2.bf16.msra.mxu0 0
  %684 = vmatprep.subr.bf16.mxu0 0
  %685 = vmatpush2.bf16.msra.mxu0 0
  %686 = vmatprep.subr.bf16.mxu0 0
  %687 = vmatpush2.bf16.msra.mxu0 0
  %688 = vmatprep.subr.bf16.mxu0 0
  %689 = vmatpush2.bf16.msra.mxu0 0
  %690 = vmatprep.subr.bf16.mxu0 0
  %691 = vmatpush2.bf16.msra.mxu0 0
  %692 = vmatprep.subr.bf16.mxu0 0
  %693 = vmatpush2.bf16.msra.mxu0 0
  %694 = vmatprep.subr.bf16.mxu0 0
  %695 = vmatpush2.bf16.msra.mxu0 0
  %696 = vmatprep.subr.bf16.mxu0 0
  %697 = vmatpush2.bf16.msra.mxu0 0
  %698 = vmatprep.mubr.bf16.mxu0 0
  %699 = vmatmul.mubr.bf16.gmra.mxu0 0
  %v700 = vpop.f32.mrf.mxu0
  %v701 = vadd.f32 0.0, %v700
  %v702 = vpop.f32.mrf.mxu0
  %v703 = vadd.f32 0.0, %v702
  %v704 = vpop.f32.mrf.mxu0
  %v705 = vpop.f32.mrf.mxu0
  %706 = vdwg.mxu0
  %707 = vmatprep.subr.bf16.mxu0 %v633
  %708 = vmatpush1.bf16.msra.mxu0 %v632
  %709 = vmatprep.subr.bf16.mxu0 %v629
  %710 = vmatpush1.bf16.msra.mxu0 %v628
  %711 = vmatprep.subr.bf16.mxu0 %v625
  %712 = vmatpush1.bf16.msra.mxu0 %v624
  %713 = vmatprep.subr.bf16.mxu0 %v621
  %714 = vmatpush1.bf16.msra.mxu0 %v620
  %715 = vmatprep.subr.bf16.mxu0 %v617
  %716 = vmatpush1.bf16.msra.mxu0 %v616
  %717 = vmatprep.subr.bf16.mxu0 %v613
  %718 = vmatpush1.bf16.msra.mxu0 %v612
  %719 = vmatprep.subr.bf16.mxu0 %v609
  %720 = vmatpush1.bf16.msra.mxu0 %v608
  %721 = vmatprep.subr.bf16.mxu0 %v605
  %722 = vmatpush1.bf16.msra.mxu0 %v604
  %723 = vmatprep.subr.bf16.mxu0 0
  %724 = vmatpush2.bf16.msra.mxu0 0
  %725 = vmatprep.subr.bf16.mxu0 0
  %726 = vmatpush2.bf16.msra.mxu0 0
  %727 = vmatprep.subr.bf16.mxu0 0
  %728 = vmatpush2.bf16.msra.mxu0 0
  %729 = vmatprep.subr.bf16.mxu0 0
  %730 = vmatpush2.bf16.msra.mxu0 0
  %731 = vmatprep.subr.bf16.mxu0 0
  %732 = vmatpush2.bf16.msra.mxu0 0
  %733 = vmatprep.subr.bf16.mxu0 0
  %734 = vmatpush2.bf16.msra.mxu0 0
  %735 = vmatprep.subr.bf16.mxu0 0
  %736 = vmatpush2.bf16.msra.mxu0 0
  %737 = vmatprep.subr.bf16.mxu0 0
  %738 = vmatpush2.bf16.msra.mxu0 0
  %739 = vmatprep.mubr.bf16.mxu0 0
  %740 = vmatmul.mubr.bf16.gmra.mxu0 0
  %v741 = vpop.f32.mrf.mxu0
  %v742 = vadd.f32 0.0, %v741
  %v743 = vpop.f32.mrf.mxu0
  %v744 = vadd.f32 0.0, %v743
  %v745 = vpop.f32.mrf.mxu0
  %v746 = vpop.f32.mrf.mxu0
  %747 = vdwg.mxu0
  %v748 = vadd.f32 %v470, %v701
  %v749 = vadd.f32 %v471, %v703
  %v750 = vadd.f32 %v472, %v742
  %v751 = vadd.f32 %v473, %v744
  %v752 = vxor.u32 %v748, 2147483648
  %v753 = vmul.f32 %v752, 1.442695
  %v754 = vpow.pop %v753
  %v755 = vadd.f32 %v754, 1.0
  %v756 = vrcp.pop %v755
  %v757 = vmul.f32 1.0, %v756
  %v758 = vxor.u32 %v749, 2147483648
  %v759 = vmul.f32 %v758, 1.442695
  %v760 = vpow.pop %v759
  %v761 = vadd.f32 %v760, 1.0
  %v762 = vrcp.pop %v761
  %v763 = vmul.f32 1.0, %v762
  %v764 = vtanh.pop %v750
  %v765 = vxor.u32 %v751, 2147483648
  %v766 = vmul.f32 %v765, 1.442695
  %v767 = vpow.pop %v766
  %v768 = vadd.f32 %v767, 1.0
  %v769 = vrcp.pop %v768
  %v770 = vmul.f32 1.0, %v769
  %v771 = vmul.f32 %v763, 0.0
  %v772 = vmul.f32 %v757, %v764
  %v773 = vadd.f32 %v771, %v772
  %v774 = vtanh.pop %v773
  %v775 = vmul.f32 %v770, %v774
  %v776 = vpack.c.bf16 %v775, %v775
  %777 = vst [vmem:[#allocation3] sm:$0xf] %v776
  %s778 = scalar_lea.vmem [#allocation2], 32
  %v779 = vld [vmem:[%s778] sm:$0xff]
  %v780 = vld [vmem:[%s778 + $0x8] sm:$0xff]
  %v781 = vld [vmem:[%s778 + $0x10] sm:$0xff]
  %v782 = vld [vmem:[%s778 + $0x18] sm:$0xff]
  %v783 = vld [vmem:[%s2] sm:$0xff]
  %v784 = vld [vmem:[%s2 + $0x8] sm:$0xff]
  %v785 = vld [vmem:[%s2 + $0x10] sm:$0xff]
  %v786 = vld [vmem:[%s2 + $0x18] sm:$0xff]
  %v787 = vld [vmem:[%s2 + $0x20] sm:$0xff]
  %v788 = vld [vmem:[%s2 + $0x28] sm:$0xff]
  %v789 = vld [vmem:[%s2 + $0x30] sm:$0xff]
  %v790 = vld [vmem:[%s2 + $0x38] sm:$0xff]
  %v791 = vld [vmem:[%s2 + $0x40] sm:$0xff]
  %v792 = vld [vmem:[%s2 + $0x48] sm:$0xff]
  %v793 = vld [vmem:[%s2 + $0x50] sm:$0xff]
  %v794 = vld [vmem:[%s2 + $0x58] sm:$0xff]
  %v795 = vld [vmem:[%s2 + $0x60] sm:$0xff]
  %v796 = vld [vmem:[%s2 + $0x68] sm:$0xff]
  %v797 = vld [vmem:[%s2 + $0x70] sm:$0xff]
  %v798 = vld [vmem:[%s2 + $0x78] sm:$0xff]
  %v799 = vld [vmem:[%s2 + $0x80] sm:$0xff]
  %v800 = vld [vmem:[%s2 + $0x88] sm:$0xff]
  %v801 = vld [vmem:[%s2 + $0x90] sm:$0xff]
  %v802 = vld [vmem:[%s2 + $0x98] sm:$0xff]
  %v803 = vld [vmem:[%s2 + $0xa0] sm:$0xff]
  %v804 = vld [vmem:[%s2 + $0xa8] sm:$0xff]
  %v805 = vld [vmem:[%s2 + $0xb0] sm:$0xff]
  %v806 = vld [vmem:[%s2 + $0xb8] sm:$0xff]
  %v807 = vld [vmem:[%s2 + $0xc0] sm:$0xff]
  %v808 = vld [vmem:[%s2 + $0xc8] sm:$0xff]
  %v809 = vld [vmem:[%s2 + $0xd0] sm:$0xff]
  %v810 = vld [vmem:[%s2 + $0xd8] sm:$0xff]
  %v811 = vld [vmem:[%s2 + $0xe0] sm:$0xff]
  %v812 = vld [vmem:[%s2 + $0xe8] sm:$0xff]
  %v813 = vld [vmem:[%s2 + $0xf0] sm:$0xff]
  %v814 = vld [vmem:[%s2 + $0xf8] sm:$0xff]
  %v847 = vunpack.c.l.b16 %v783
  %v848 = vunpack.c.h.b16 %v783
  %v849 = vunpack.c.l.b16 %v784
  %v850 = vunpack.c.h.b16 %v784
  %v851 = vunpack.c.l.b16 %v785
  %v852 = vunpack.c.h.b16 %v785
  %v853 = vunpack.c.l.b16 %v786
  %v854 = vunpack.c.h.b16 %v786
  %v855 = vunpack.c.l.b16 %v787
  %v856 = vunpack.c.h.b16 %v787
  %v857 = vunpack.c.l.b16 %v788
  %v858 = vunpack.c.h.b16 %v788
  %v859 = vunpack.c.l.b16 %v789
  %v860 = vunpack.c.h.b16 %v789
  %v861 = vunpack.c.l.b16 %v790
  %v862 = vunpack.c.h.b16 %v790
  %v863 = vunpack.c.l.b16 %v791
  %v864 = vunpack.c.h.b16 %v791
  %v865 = vunpack.c.l.b16 %v792
  %v866 = vunpack.c.h.b16 %v792
  %v867 = vunpack.c.l.b16 %v793
  %v868 = vunpack.c.h.b16 %v793
  %v869 = vunpack.c.l.b16 %v794
  %v870 = vunpack.c.h.b16 %v794
  %v871 = vunpack.c.l.b16 %v795
  %v872 = vunpack.c.h.b16 %v795
  %v873 = vunpack.c.l.b16 %v796
  %v874 = vunpack.c.h.b16 %v796
  %v875 = vunpack.c.l.b16 %v797
  %v876 = vunpack.c.h.b16 %v797
  %v877 = vunpack.c.l.b16 %v798
  %v878 = vunpack.c.h.b16 %v798
  %v879 = vunpack.c.l.b16 %v799
  %v880 = vunpack.c.h.b16 %v799
  %v881 = vunpack.c.l.b16 %v800
  %v882 = vunpack.c.h.b16 %v800
  %v883 = vunpack.c.l.b16 %v801
  %v884 = vunpack.c.h.b16 %v801
  %v885 = vunpack.c.l.b16 %v802
  %v886 = vunpack.c.h.b16 %v802
  %v887 = vunpack.c.l.b16 %v803
  %v888 = vunpack.c.h.b16 %v803
  %v889 = vunpack.c.l.b16 %v804
  %v890 = vunpack.c.h.b16 %v804
  %v891 = vunpack.c.l.b16 %v805
  %v892 = vunpack.c.h.b16 %v805
  %v893 = vunpack.c.l.b16 %v806
  %v894 = vunpack.c.h.b16 %v806
  %v895 = vunpack.c.l.b16 %v807
  %v896 = vunpack.c.h.b16 %v807
  %v897 = vunpack.c.l.b16 %v808
  %v898 = vunpack.c.h.b16 %v808
  %v899 = vunpack.c.l.b16 %v809
  %v900 = vunpack.c.h.b16 %v809
  %v901 = vunpack.c.l.b16 %v810
  %v902 = vunpack.c.h.b16 %v810
  %v903 = vunpack.c.l.b16 %v811
  %v904 = vunpack.c.h.b16 %v811
  %v905 = vunpack.c.l.b16 %v812
  %v906 = vunpack.c.h.b16 %v812
  %v907 = vunpack.c.l.b16 %v813
  %v908 = vunpack.c.h.b16 %v813
  %v909 = vunpack.c.l.b16 %v814
  %v910 = vunpack.c.h.b16 %v814
  %v911 = vpack.c.b16 %v851, %v847
  %v912 = vpack.c.b16 %v852, %v848
  %v913 = vpack.c.b16 %v853, %v849
  %v914 = vpack.c.b16 %v854, %v850
  %v915 = vpack.c.b16 %v859, %v855
  %v916 = vpack.c.b16 %v860, %v856
  %v917 = vpack.c.b16 %v861, %v857
  %v918 = vpack.c.b16 %v862, %v858
  %v919 = vpack.c.b16 %v867, %v863
  %v920 = vpack.c.b16 %v868, %v864
  %v921 = vpack.c.b16 %v869, %v865
  %v922 = vpack.c.b16 %v870, %v866
  %v923 = vpack.c.b16 %v875, %v871
  %v924 = vpack.c.b16 %v876, %v872
  %v925 = vpack.c.b16 %v877, %v873
  %v926 = vpack.c.b16 %v878, %v874
  %v927 = vpack.c.b16 %v883, %v879
  %v928 = vpack.c.b16 %v884, %v880
  %v929 = vpack.c.b16 %v885, %v881
  %v930 = vpack.c.b16 %v886, %v882
  %v931 = vpack.c.b16 %v891, %v887
  %v932 = vpack.c.b16 %v892, %v888
  %v933 = vpack.c.b16 %v893, %v889
  %v934 = vpack.c.b16 %v894, %v890
  %v935 = vpack.c.b16 %v899, %v895
  %v936 = vpack.c.b16 %v900, %v896
  %v937 = vpack.c.b16 %v901, %v897
  %v938 = vpack.c.b16 %v902, %v898
  %v939 = vpack.c.b16 %v907, %v903
  %v940 = vpack.c.b16 %v908, %v904
  %v941 = vpack.c.b16 %v909, %v905
  %v942 = vpack.c.b16 %v910, %v906
  %975 = vmatprep.subr.bf16.mxu0 %v940
  %976 = vmatpush1.bf16.msra.mxu0 %v939
  %977 = vmatprep.subr.bf16.mxu0 %v936
  %978 = vmatpush1.bf16.msra.mxu0 %v935
  %979 = vmatprep.subr.bf16.mxu0 %v932
  %980 = vmatpush1.bf16.msra.mxu0 %v931
  %981 = vmatprep.subr.bf16.mxu0 %v928
  %982 = vmatpush1.bf16.msra.mxu0 %v927
  %983 = vmatprep.subr.bf16.mxu0 %v924
  %984 = vmatpush1.bf16.msra.mxu0 %v923
  %985 = vmatprep.subr.bf16.mxu0 %v920
  %986 = vmatpush1.bf16.msra.mxu0 %v919
  %987 = vmatprep.subr.bf16.mxu0 %v916
  %988 = vmatpush1.bf16.msra.mxu0 %v915
  %989 = vmatprep.subr.bf16.mxu0 %v912
  %990 = vmatpush1.bf16.msra.mxu0 %v911
  %991 = vmatprep.subr.bf16.mxu0 0
  %992 = vmatpush2.bf16.msra.mxu0 0
  %993 = vmatprep.subr.bf16.mxu0 0
  %994 = vmatpush2.bf16.msra.mxu0 0
  %995 = vmatprep.subr.bf16.mxu0 0
  %996 = vmatpush2.bf16.msra.mxu0 0
  %997 = vmatprep.subr.bf16.mxu0 0
  %998 = vmatpush2.bf16.msra.mxu0 0
  %999 = vmatprep.subr.bf16.mxu0 0
  %1000 = vmatpush2.bf16.msra.mxu0 0
  %1001 = vmatprep.subr.bf16.mxu0 0
  %1002 = vmatpush2.bf16.msra.mxu0 0
  %1003 = vmatprep.subr.bf16.mxu0 0
  %1004 = vmatpush2.bf16.msra.mxu0 0
  %1005 = vmatprep.subr.bf16.mxu0 0
  %1006 = vmatpush2.bf16.msra.mxu0 0
  %1007 = vmatprep.mubr.bf16.mxu0 0
  %1008 = vmatmul.mubr.bf16.gmra.mxu0 %v776
  %v1009 = vpop.f32.mrf.mxu0
  %v1010 = vadd.f32 0.0, %v1009
  %v1011 = vpop.f32.mrf.mxu0
  %v1012 = vadd.f32 0.0, %v1011
  %v1013 = vpop.f32.mrf.mxu0
  %v1014 = vpop.f32.mrf.mxu0
  %1015 = vdwg.mxu0
  %1016 = vmatprep.subr.bf16.mxu0 %v942
  %1017 = vmatpush1.bf16.msra.mxu0 %v941
  %1018 = vmatprep.subr.bf16.mxu0 %v938
  %1019 = vmatpush1.bf16.msra.mxu0 %v937
  %1020 = vmatprep.subr.bf16.mxu0 %v934
  %1021 = vmatpush1.bf16.msra.mxu0 %v933
  %1022 = vmatprep.subr.bf16.mxu0 %v930
  %1023 = vmatpush1.bf16.msra.mxu0 %v929
  %1024 = vmatprep.subr.bf16.mxu0 %v926
  %1025 = vmatpush1.bf16.msra.mxu0 %v925
  %1026 = vmatprep.subr.bf16.mxu0 %v922
  %1027 = vmatpush1.bf16.msra.mxu0 %v921
  %1028 = vmatprep.subr.bf16.mxu0 %v918
  %1029 = vmatpush1.bf16.msra.mxu0 %v917
  %1030 = vmatprep.subr.bf16.mxu0 %v914
  %1031 = vmatpush1.bf16.msra.mxu0 %v913
  %1032 = vmatprep.subr.bf16.mxu0 0
  %1033 = vmatpush2.bf16.msra.mxu0 0
  %1034 = vmatprep.subr.bf16.mxu0 0
  %1035 = vmatpush2.bf16.msra.mxu0 0
  %1036 = vmatprep.subr.bf16.mxu0 0
  %1037 = vmatpush2.bf16.msra.mxu0 0
  %1038 = vmatprep.subr.bf16.mxu0 0
  %1039 = vmatpush2.bf16.msra.mxu0 0
  %1040 = vmatprep.subr.bf16.mxu0 0
  %1041 = vmatpush2.bf16.msra.mxu0 0
  %1042 = vmatprep.subr.bf16.mxu0 0
  %1043 = vmatpush2.bf16.msra.mxu0 0
  %1044 = vmatprep.subr.bf16.mxu0 0
  %1045 = vmatpush2.bf16.msra.mxu0 0
  %1046 = vmatprep.subr.bf16.mxu0 0
  %1047 = vmatpush2.bf16.msra.mxu0 0
  %1048 = vmatprep.mubr.bf16.mxu0 0
  %1049 = vmatmul.mubr.bf16.gmra.mxu0 %v776
  %v1050 = vpop.f32.mrf.mxu0
  %v1051 = vadd.f32 0.0, %v1050
  %v1052 = vpop.f32.mrf.mxu0
  %v1053 = vadd.f32 0.0, %v1052
  %v1054 = vpop.f32.mrf.mxu0
  %v1055 = vpop.f32.mrf.mxu0
  %1056 = vdwg.mxu0
  %v1057 = vadd.f32 %v779, %v1010
  %v1058 = vadd.f32 %v780, %v1012
  %v1059 = vadd.f32 %v781, %v1051
  %v1060 = vadd.f32 %v782, %v1053
  %v1061 = vxor.u32 %v1057, 2147483648
  %v1062 = vmul.f32 %v1061, 1.442695
  %v1063 = vpow.pop %v1062
  %v1064 = vadd.f32 %v1063, 1.0
  %v1065 = vrcp.pop %v1064
  %v1066 = vmul.f32 1.0, %v1065
  %v1067 = vxor.u32 %v1058, 2147483648
  %v1068 = vmul.f32 %v1067, 1.442695
  %v1069 = vpow.pop %v1068
  %v1070 = vadd.f32 %v1069, 1.0
  %v1071 = vrcp.pop %v1070
  %v1072 = vmul.f32 1.0, %v1071
  %v1073 = vtanh.pop %v1059
  %v1074 = vxor.u32 %v1060, 2147483648
  %v1075 = vmul.f32 %v1074, 1.442695
  %v1076 = vpow.pop %v1075
  %v1077 = vadd.f32 %v1076, 1.0
  %v1078 = vrcp.pop %v1077
  %v1079 = vmul.f32 1.0, %v1078
  %v1080 = vmul.f32 %v1072, %v773
  %v1081 = vmul.f32 %v1066, %v1073
  %v1082 = vadd.f32 %v1080, %v1081
  %v1083 = vtanh.pop %v1082
  %v1084 = vmul.f32 %v1079, %v1083
  %v1085 = vpack.c.bf16 %v1084, %v1084
  %s1086 = scalar_lea.vmem [#allocation3], 4
  %1087 = vst [vmem:[%s1086] sm:$0xf] %v1085
  %s1088 = scalar_lea.vmem [#allocation2], 64
  %v1089 = vld [vmem:[%s1088] sm:$0xff]
  %v1090 = vld [vmem:[%s1088 + $0x8] sm:$0xff]
  %v1091 = vld [vmem:[%s1088 + $0x10] sm:$0xff]
  %v1092 = vld [vmem:[%s1088 + $0x18] sm:$0xff]
  %v1093 = vld [vmem:[%s2] sm:$0xff]
  %v1094 = vld [vmem:[%s2 + $0x8] sm:$0xff]
  %v1095 = vld [vmem:[%s2 + $0x10] sm:$0xff]
  %v1096 = vld [vmem:[%s2 + $0x18] sm:$0xff]
  %v1097 = vld [vmem:[%s2 + $0x20] sm:$0xff]
  %v1098 = vld [vmem:[%s2 + $0x28] sm:$0xff]
  %v1099 = vld [vmem:[%s2 + $0x30] sm:$0xff]
  %v1100 = vld [vmem:[%s2 + $0x38] sm:$0xff]
  %v1101 = vld [vmem:[%s2 + $0x40] sm:$0xff]
  %v1102 = vld [vmem:[%s2 + $0x48] sm:$0xff]
  %v1103 = vld [vmem:[%s2 + $0x50] sm:$0xff]
  %v1104 = vld [vmem:[%s2 + $0x58] sm:$0xff]
  %v1105 = vld [vmem:[%s2 + $0x60] sm:$0xff]
  %v1106 = vld [vmem:[%s2 + $0x68] sm:$0xff]
  %v1107 = vld [vmem:[%s2 + $0x70] sm:$0xff]
  %v1108 = vld [vmem:[%s2 + $0x78] sm:$0xff]
  %v1109 = vld [vmem:[%s2 + $0x80] sm:$0xff]
  %v1110 = vld [vmem:[%s2 + $0x88] sm:$0xff]
  %v1111 = vld [vmem:[%s2 + $0x90] sm:$0xff]
  %v1112 = vld [vmem:[%s2 + $0x98] sm:$0xff]
  %v1113 = vld [vmem:[%s2 + $0xa0] sm:$0xff]
  %v1114 = vld [vmem:[%s2 + $0xa8] sm:$0xff]
  %v1115 = vld [vmem:[%s2 + $0xb0] sm:$0xff]
  %v1116 = vld [vmem:[%s2 + $0xb8] sm:$0xff]
  %v1117 = vld [vmem:[%s2 + $0xc0] sm:$0xff]
  %v1118 = vld [vmem:[%s2 + $0xc8] sm:$0xff]
  %v1119 = vld [vmem:[%s2 + $0xd0] sm:$0xff]
  %v1120 = vld [vmem:[%s2 + $0xd8] sm:$0xff]
  %v1121 = vld [vmem:[%s2 + $0xe0] sm:$0xff]
  %v1122 = vld [vmem:[%s2 + $0xe8] sm:$0xff]
  %v1123 = vld [vmem:[%s2 + $0xf0] sm:$0xff]
  %v1124 = vld [vmem:[%s2 + $0xf8] sm:$0xff]
  %v1157 = vunpack.c.l.b16 %v1093
  %v1158 = vunpack.c.h.b16 %v1093
  %v1159 = vunpack.c.l.b16 %v1094
  %v1160 = vunpack.c.h.b16 %v1094
  %v1161 = vunpack.c.l.b16 %v1095
  %v1162 = vunpack.c.h.b16 %v1095
  %v1163 = vunpack.c.l.b16 %v1096
  %v1164 = vunpack.c.h.b16 %v1096
  %v1165 = vunpack.c.l.b16 %v1097
  %v1166 = vunpack.c.h.b16 %v1097
  %v1167 = vunpack.c.l.b16 %v1098
  %v1168 = vunpack.c.h.b16 %v1098
  %v1169 = vunpack.c.l.b16 %v1099
  %v1170 = vunpack.c.h.b16 %v1099
  %v1171 = vunpack.c.l.b16 %v1100
  %v1172 = vunpack.c.h.b16 %v1100
  %v1173 = vunpack.c.l.b16 %v1101
  %v1174 = vunpack.c.h.b16 %v1101
  %v1175 = vunpack.c.l.b16 %v1102
  %v1176 = vunpack.c.h.b16 %v1102
  %v1177 = vunpack.c.l.b16 %v1103
  %v1178 = vunpack.c.h.b16 %v1103
  %v1179 = vunpack.c.l.b16 %v1104
  %v1180 = vunpack.c.h.b16 %v1104
  %v1181 = vunpack.c.l.b16 %v1105
  %v1182 = vunpack.c.h.b16 %v1105
  %v1183 = vunpack.c.l.b16 %v1106
  %v1184 = vunpack.c.h.b16 %v1106
  %v1185 = vunpack.c.l.b16 %v1107
  %v1186 = vunpack.c.h.b16 %v1107
  %v1187 = vunpack.c.l.b16 %v1108
  %v1188 = vunpack.c.h.b16 %v1108
  %v1189 = vunpack.c.l.b16 %v1109
  %v1190 = vunpack.c.h.b16 %v1109
  %v1191 = vunpack.c.l.b16 %v1110
  %v1192 = vunpack.c.h.b16 %v1110
  %v1193 = vunpack.c.l.b16 %v1111
  %v1194 = vunpack.c.h.b16 %v1111
  %v1195 = vunpack.c.l.b16 %v1112
  %v1196 = vunpack.c.h.b16 %v1112
  %v1197 = vunpack.c.l.b16 %v1113
  %v1198 = vunpack.c.h.b16 %v1113
  %v1199 = vunpack.c.l.b16 %v1114
  %v1200 = vunpack.c.h.b16 %v1114
  %v1201 = vunpack.c.l.b16 %v1115
  %v1202 = vunpack.c.h.b16 %v1115
  %v1203 = vunpack.c.l.b16 %v1116
  %v1204 = vunpack.c.h.b16 %v1116
  %v1205 = vunpack.c.l.b16 %v1117
  %v1206 = vunpack.c.h.b16 %v1117
  %v1207 = vunpack.c.l.b16 %v1118
  %v1208 = vunpack.c.h.b16 %v1118
  %v1209 = vunpack.c.l.b16 %v1119
  %v1210 = vunpack.c.h.b16 %v1119
  %v1211 = vunpack.c.l.b16 %v1120
  %v1212 = vunpack.c.h.b16 %v1120
  %v1213 = vunpack.c.l.b16 %v1121
  %v1214 = vunpack.c.h.b16 %v1121
  %v1215 = vunpack.c.l.b16 %v1122
  %v1216 = vunpack.c.h.b16 %v1122
  %v1217 = vunpack.c.l.b16 %v1123
  %v1218 = vunpack.c.h.b16 %v1123
  %v1219 = vunpack.c.l.b16 %v1124
  %v1220 = vunpack.c.h.b16 %v1124
  %v1221 = vpack.c.b16 %v1161, %v1157
  %v1222 = vpack.c.b16 %v1162, %v1158
  %v1223 = vpack.c.b16 %v1163, %v1159
  %v1224 = vpack.c.b16 %v1164, %v1160
  %v1225 = vpack.c.b16 %v1169, %v1165
  %v1226 = vpack.c.b16 %v1170, %v1166
  %v1227 = vpack.c.b16 %v1171, %v1167
  %v1228 = vpack.c.b16 %v1172, %v1168
  %v1229 = vpack.c.b16 %v1177, %v1173
  %v1230 = vpack.c.b16 %v1178, %v1174
  %v1231 = vpack.c.b16 %v1179, %v1175
  %v1232 = vpack.c.b16 %v1180, %v1176
  %v1233 = vpack.c.b16 %v1185, %v1181
  %v1234 = vpack.c.b16 %v1186, %v1182
  %v1235 = vpack.c.b16 %v1187, %v1183
  %v1236 = vpack.c.b16 %v1188, %v1184
  %v1237 = vpack.c.b16 %v1193, %v1189
  %v1238 = vpack.c.b16 %v1194, %v1190
  %v1239 = vpack.c.b16 %v1195, %v1191
  %v1240 = vpack.c.b16 %v1196, %v1192
  %v1241 = vpack.c.b16 %v1201, %v1197
  %v1242 = vpack.c.b16 %v1202, %v1198
  %v1243 = vpack.c.b16 %v1203, %v1199
  %v1244 = vpack.c.b16 %v1204, %v1200
  %v1245 = vpack.c.b16 %v1209, %v1205
  %v1246 = vpack.c.b16 %v1210, %v1206
  %v1247 = vpack.c.b16 %v1211, %v1207
  %v1248 = vpack.c.b16 %v1212, %v1208
  %v1249 = vpack.c.b16 %v1217, %v1213
  %v1250 = vpack.c.b16 %v1218, %v1214
  %v1251 = vpack.c.b16 %v1219, %v1215
  %v1252 = vpack.c.b16 %v1220, %v1216
  %1285 = vmatprep.subr.bf16.mxu0 %v1250
  %1286 = vmatpush1.bf16.msra.mxu0 %v1249
  %1287 = vmatprep.subr.bf16.mxu0 %v1246
  %1288 = vmatpush1.bf16.msra.mxu0 %v1245
  %1289 = vmatprep.subr.bf16.mxu0 %v1242
  %1290 = vmatpush1.bf16.msra.mxu0 %v1241
  %1291 = vmatprep.subr.bf16.mxu0 %v1238
  %1292 = vmatpush1.bf16.msra.mxu0 %v1237
  %1293 = vmatprep.subr.bf16.mxu0 %v1234
  %1294 = vmatpush1.bf16.msra.mxu0 %v1233
  %1295 = vmatprep.subr.bf16.mxu0 %v1230
  %1296 = vmatpush1.bf16.msra.mxu0 %v1229
  %1297 = vmatprep.subr.bf16.mxu0 %v1226
  %1298 = vmatpush1.bf16.msra.mxu0 %v1225
  %1299 = vmatprep.subr.bf16.mxu0 %v1222
  %1300 = vmatpush1.bf16.msra.mxu0 %v1221
  %1301 = vmatprep.subr.bf16.mxu0 0
  %1302 = vmatpush2.bf16.msra.mxu0 0
  %1303 = vmatprep.subr.bf16.mxu0 0
  %1304 = vmatpush2.bf16.msra.mxu0 0
  %1305 = vmatprep.subr.bf16.mxu0 0
  %1306 = vmatpush2.bf16.msra.mxu0 0
  %1307 = vmatprep.subr.bf16.mxu0 0
  %1308 = vmatpush2.bf16.msra.mxu0 0
  %1309 = vmatprep.subr.bf16.mxu0 0
  %1310 = vmatpush2.bf16.msra.mxu0 0
  %1311 = vmatprep.subr.bf16.mxu0 0
  %1312 = vmatpush2.bf16.msra.mxu0 0
  %1313 = vmatprep.subr.bf16.mxu0 0
  %1314 = vmatpush2.bf16.msra.mxu0 0
  %1315 = vmatprep.subr.bf16.mxu0 0
  %1316 = vmatpush2.bf16.msra.mxu0 0
  %1317 = vmatprep.mubr.bf16.mxu0 0
  %1318 = vmatmul.mubr.bf16.gmra.mxu0 %v1085
  %v1319 = vpop.f32.mrf.mxu0
  %v1320 = vadd.f32 0.0, %v1319
  %v1321 = vpop.f32.mrf.mxu0
  %v1322 = vadd.f32 0.0, %v1321
  %v1323 = vpop.f32.mrf.mxu0
  %v1324 = vpop.f32.mrf.mxu0
  %1325 = vdwg.mxu0
  %1326 = vmatprep.subr.bf16.mxu0 %v1252
  %1327 = vmatpush1.bf16.msra.mxu0 %v1251
  %1328 = vmatprep.subr.bf16.mxu0 %v1248
  %1329 = vmatpush1.bf16.msra.mxu0 %v1247
  %1330 = vmatprep.subr.bf16.mxu0 %v1244
  %1331 = vmatpush1.bf16.msra.mxu0 %v1243
  %1332 = vmatprep.subr.bf16.mxu0 %v1240
  %1333 = vmatpush1.bf16.msra.mxu0 %v1239
  %1334 = vmatprep.subr.bf16.mxu0 %v1236
  %1335 = vmatpush1.bf16.msra.mxu0 %v1235
  %1336 = vmatprep.subr.bf16.mxu0 %v1232
  %1337 = vmatpush1.bf16.msra.mxu0 %v1231
  %1338 = vmatprep.subr.bf16.mxu0 %v1228
  %1339 = vmatpush1.bf16.msra.mxu0 %v1227
  %1340 = vmatprep.subr.bf16.mxu0 %v1224
  %1341 = vmatpush1.bf16.msra.mxu0 %v1223
  %1342 = vmatprep.subr.bf16.mxu0 0
  %1343 = vmatpush2.bf16.msra.mxu0 0
  %1344 = vmatprep.subr.bf16.mxu0 0
  %1345 = vmatpush2.bf16.msra.mxu0 0
  %1346 = vmatprep.subr.bf16.mxu0 0
  %1347 = vmatpush2.bf16.msra.mxu0 0
  %1348 = vmatprep.subr.bf16.mxu0 0
  %1349 = vmatpush2.bf16.msra.mxu0 0
  %1350 = vmatprep.subr.bf16.mxu0 0
  %1351 = vmatpush2.bf16.msra.mxu0 0
  %1352 = vmatprep.subr.bf16.mxu0 0
  %1353 = vmatpush2.bf16.msra.mxu0 0
  %1354 = vmatprep.subr.bf16.mxu0 0
  %1355 = vmatpush2.bf16.msra.mxu0 0
  %1356 = vmatprep.subr.bf16.mxu0 0
  %1357 = vmatpush2.bf16.msra.mxu0 0
  %1358 = vmatprep.mubr.bf16.mxu0 0
  %1359 = vmatmul.mubr.bf16.gmra.mxu0 %v1085
  %v1360 = vpop.f32.mrf.mxu0
  %v1361 = vadd.f32 0.0, %v1360
  %v1362 = vpop.f32.mrf.mxu0
  %v1363 = vadd.f32 0.0, %v1362
  %v1364 = vpop.f32.mrf.mxu0
  %v1365 = vpop.f32.mrf.mxu0
  %1366 = vdwg.mxu0
  %v1367 = vadd.f32 %v1089, %v1320
  %v1368 = vadd.f32 %v1090, %v1322
  %v1369 = vadd.f32 %v1091, %v1361
  %v1370 = vadd.f32 %v1092, %v1363
  %v1371 = vxor.u32 %v1367, 2147483648
  %v1372 = vmul.f32 %v1371, 1.442695
  %v1373 = vpow.pop %v1372
  %v1374 = vadd.f32 %v1373, 1.0
  %v1375 = vrcp.pop %v1374
  %v1376 = vmul.f32 1.0, %v1375
  %v1377 = vxor.u32 %v1368, 2147483648
  %v1378 = vmul.f32 %v1377, 1.442695
  %v1379 = vpow.pop %v1378
  %v1380 = vadd.f32 %v1379, 1.0
  %v1381 = vrcp.pop %v1380
  %v1382 = vmul.f32 1.0, %v1381
  %v1383 = vtanh.pop %v1369
  %v1384 = vxor.u32 %v1370, 2147483648
  %v1385 = vmul.f32 %v1384, 1.442695
  %v1386 = vpow.pop %v1385
  %v1387 = vadd.f32 %v1386, 1.0
  %v1388 = vrcp.pop %v1387
  %v1389 = vmul.f32 1.0, %v1388
  %v1390 = vmul.f32 %v1382, %v1082
  %v1391 = vmul.f32 %v1376, %v1383
  %v1392 = vadd.f32 %v1390, %v1391
  %v1393 = vtanh.pop %v1392
  %v1394 = vmul.f32 %v1389, %v1393
  %v1395 = vpack.c.bf16 %v1394, %v1394
  %s1396 = scalar_lea.vmem [#allocation3], 8
  %1397 = vst [vmem:[%s1396] sm:$0xf] %v1395
  %s1398 = scalar_lea.vmem [#allocation2], 96
  %v1399 = vld [vmem:[%s1398] sm:$0xff]
  %v1400 = vld [vmem:[%s1398 + $0x8] sm:$0xff]
  %v1401 = vld [vmem:[%s1398 + $0x10] sm:$0xff]
  %v1402 = vld [vmem:[%s1398 + $0x18] sm:$0xff]
  %v1403 = vld [vmem:[%s2] sm:$0xff]
  %v1404 = vld [vmem:[%s2 + $0x8] sm:$0xff]
  %v1405 = vld [vmem:[%s2 + $0x10] sm:$0xff]
  %v1406 = vld [vmem:[%s2 + $0x18] sm:$0xff]
  %v1407 = vld [vmem:[%s2 + $0x20] sm:$0xff]
  %v1408 = vld [vmem:[%s2 + $0x28] sm:$0xff]
  %v1409 = vld [vmem:[%s2 + $0x30] sm:$0xff]
  %v1410 = vld [vmem:[%s2 + $0x38] sm:$0xff]
  %v1411 = vld [vmem:[%s2 + $0x40] sm:$0xff]
  %v1412 = vld [vmem:[%s2 + $0x48] sm:$0xff]
  %v1413 = vld [vmem:[%s2 + $0x50] sm:$0xff]
  %v1414 = vld [vmem:[%s2 + $0x58] sm:$0xff]
  %v1415 = vld [vmem:[%s2 + $0x60] sm:$0xff]
  %v1416 = vld [vmem:[%s2 + $0x68] sm:$0xff]
  %v1417 = vld [vmem:[%s2 + $0x70] sm:$0xff]
  %v1418 = vld [vmem:[%s2 + $0x78] sm:$0xff]
  %v1419 = vld [vmem:[%s2 + $0x80] sm:$0xff]
  %v1420 = vld [vmem:[%s2 + $0x88] sm:$0xff]
  %v1421 = vld [vmem:[%s2 + $0x90] sm:$0xff]
  %v1422 = vld [vmem:[%s2 + $0x98] sm:$0xff]
  %v1423 = vld [vmem:[%s2 + $0xa0] sm:$0xff]
  %v1424 = vld [vmem:[%s2 + $0xa8] sm:$0xff]
  %v1425 = vld [vmem:[%s2 + $0xb0] sm:$0xff]
  %v1426 = vld [vmem:[%s2 + $0xb8] sm:$0xff]
  %v1427 = vld [vmem:[%s2 + $0xc0] sm:$0xff]
  %v1428 = vld [vmem:[%s2 + $0xc8] sm:$0xff]
  %v1429 = vld [vmem:[%s2 + $0xd0] sm:$0xff]
  %v1430 = vld [vmem:[%s2 + $0xd8] sm:$0xff]
  %v1431 = vld [vmem:[%s2 + $0xe0] sm:$0xff]
  %v1432 = vld [vmem:[%s2 + $0xe8] sm:$0xff]
  %v1433 = vld [vmem:[%s2 + $0xf0] sm:$0xff]
  %v1434 = vld [vmem:[%s2 + $0xf8] sm:$0xff]
  %v1467 = vunpack.c.l.b16 %v1403
  %v1468 = vunpack.c.h.b16 %v1403
  %v1469 = vunpack.c.l.b16 %v1404
  %v1470 = vunpack.c.h.b16 %v1404
  %v1471 = vunpack.c.l.b16 %v1405
  %v1472 = vunpack.c.h.b16 %v1405
  %v1473 = vunpack.c.l.b16 %v1406
  %v1474 = vunpack.c.h.b16 %v1406
  %v1475 = vunpack.c.l.b16 %v1407
  %v1476 = vunpack.c.h.b16 %v1407
  %v1477 = vunpack.c.l.b16 %v1408
  %v1478 = vunpack.c.h.b16 %v1408
  %v1479 = vunpack.c.l.b16 %v1409
  %v1480 = vunpack.c.h.b16 %v1409
  %v1481 = vunpack.c.l.b16 %v1410
  %v1482 = vunpack.c.h.b16 %v1410
  %v1483 = vunpack.c.l.b16 %v1411
  %v1484 = vunpack.c.h.b16 %v1411
  %v1485 = vunpack.c.l.b16 %v1412
  %v1486 = vunpack.c.h.b16 %v1412
  %v1487 = vunpack.c.l.b16 %v1413
  %v1488 = vunpack.c.h.b16 %v1413
  %v1489 = vunpack.c.l.b16 %v1414
  %v1490 = vunpack.c.h.b16 %v1414
  %v1491 = vunpack.c.l.b16 %v1415
  %v1492 = vunpack.c.h.b16 %v1415
  %v1493 = vunpack.c.l.b16 %v1416
  %v1494 = vunpack.c.h.b16 %v1416
  %v1495 = vunpack.c.l.b16 %v1417
  %v1496 = vunpack.c.h.b16 %v1417
  %v1497 = vunpack.c.l.b16 %v1418
  %v1498 = vunpack.c.h.b16 %v1418
  %v1499 = vunpack.c.l.b16 %v1419
  %v1500 = vunpack.c.h.b16 %v1419
  %v1501 = vunpack.c.l.b16 %v1420
  %v1502 = vunpack.c.h.b16 %v1420
  %v1503 = vunpack.c.l.b16 %v1421
  %v1504 = vunpack.c.h.b16 %v1421
  %v1505 = vunpack.c.l.b16 %v1422
  %v1506 = vunpack.c.h.b16 %v1422
  %v1507 = vunpack.c.l.b16 %v1423
  %v1508 = vunpack.c.h.b16 %v1423
  %v1509 = vunpack.c.l.b16 %v1424
  %v1510 = vunpack.c.h.b16 %v1424
  %v1511 = vunpack.c.l.b16 %v1425
  %v1512 = vunpack.c.h.b16 %v1425
  %v1513 = vunpack.c.l.b16 %v1426
  %v1514 = vunpack.c.h.b16 %v1426
  %v1515 = vunpack.c.l.b16 %v1427
  %v1516 = vunpack.c.h.b16 %v1427
  %v1517 = vunpack.c.l.b16 %v1428
  %v1518 = vunpack.c.h.b16 %v1428
  %v1519 = vunpack.c.l.b16 %v1429
  %v1520 = vunpack.c.h.b16 %v1429
  %v1521 = vunpack.c.l.b16 %v1430
  %v1522 = vunpack.c.h.b16 %v1430
  %v1523 = vunpack.c.l.b16 %v1431
  %v1524 = vunpack.c.h.b16 %v1431
  %v1525 = vunpack.c.l.b16 %v1432
  %v1526 = vunpack.c.h.b16 %v1432
  %v1527 = vunpack.c.l.b16 %v1433
  %v1528 = vunpack.c.h.b16 %v1433
  %v1529 = vunpack.c.l.b16 %v1434
  %v1530 = vunpack.c.h.b16 %v1434
  %v1531 = vpack.c.b16 %v1471, %v1467
  %v1532 = vpack.c.b16 %v1472, %v1468
  %v1533 = vpack.c.b16 %v1473, %v1469
  %v1534 = vpack.c.b16 %v1474, %v1470
  %v1535 = vpack.c.b16 %v1479, %v1475
  %v1536 = vpack.c.b16 %v1480, %v1476
  %v1537 = vpack.c.b16 %v1481, %v1477
  %v1538 = vpack.c.b16 %v1482, %v1478
  %v1539 = vpack.c.b16 %v1487, %v1483
  %v1540 = vpack.c.b16 %v1488, %v1484
  %v1541 = vpack.c.b16 %v1489, %v1485
  %v1542 = vpack.c.b16 %v1490, %v1486
  %v1543 = vpack.c.b16 %v1495, %v1491
  %v1544 = vpack.c.b16 %v1496, %v1492
  %v1545 = vpack.c.b16 %v1497, %v1493
  %v1546 = vpack.c.b16 %v1498, %v1494
  %v1547 = vpack.c.b16 %v1503, %v1499
  %v1548 = vpack.c.b16 %v1504, %v1500
  %v1549 = vpack.c.b16 %v1505, %v1501
  %v1550 = vpack.c.b16 %v1506, %v1502
  %v1551 = vpack.c.b16 %v1511, %v1507
  %v1552 = vpack.c.b16 %v1512, %v1508
  %v1553 = vpack.c.b16 %v1513, %v1509
  %v1554 = vpack.c.b16 %v1514, %v1510
  %v1555 = vpack.c.b16 %v1519, %v1515
  %v1556 = vpack.c.b16 %v1520, %v1516
  %v1557 = vpack.c.b16 %v1521, %v1517
  %v1558 = vpack.c.b16 %v1522, %v1518
  %v1559 = vpack.c.b16 %v1527, %v1523
  %v1560 = vpack.c.b16 %v1528, %v1524
  %v1561 = vpack.c.b16 %v1529, %v1525
  %v1562 = vpack.c.b16 %v1530, %v1526
  %1595 = vmatprep.subr.bf16.mxu0 %v1560
  %1596 = vmatpush1.bf16.msra.mxu0 %v1559
  %1597 = vmatprep.subr.bf16.mxu0 %v1556
  %1598 = vmatpush1.bf16.msra.mxu0 %v1555
  %1599 = vmatprep.subr.bf16.mxu0 %v1552
  %1600 = vmatpush1.bf16.msra.mxu0 %v1551
  %1601 = vmatprep.subr.bf16.mxu0 %v1548
  %1602 = vmatpush1.bf16.msra.mxu0 %v1547
  %1603 = vmatprep.subr.bf16.mxu0 %v1544
  %1604 = vmatpush1.bf16.msra.mxu0 %v1543
  %1605 = vmatprep.subr.bf16.mxu0 %v1540
  %1606 = vmatpush1.bf16.msra.mxu0 %v1539
  %1607 = vmatprep.subr.bf16.mxu0 %v1536
  %1608 = vmatpush1.bf16.msra.mxu0 %v1535
  %1609 = vmatprep.subr.bf16.mxu0 %v1532
  %1610 = vmatpush1.bf16.msra.mxu0 %v1531
  %1611 = vmatprep.subr.bf16.mxu0 0
  %1612 = vmatpush2.bf16.msra.mxu0 0
  %1613 = vmatprep.subr.bf16.mxu0 0
  %1614 = vmatpush2.bf16.msra.mxu0 0
  %1615 = vmatprep.subr.bf16.mxu0 0
  %1616 = vmatpush2.bf16.msra.mxu0 0
  %1617 = vmatprep.subr.bf16.mxu0 0
  %1618 = vmatpush2.bf16.msra.mxu0 0
  %1619 = vmatprep.subr.bf16.mxu0 0
  %1620 = vmatpush2.bf16.msra.mxu0 0
  %1621 = vmatprep.subr.bf16.mxu0 0
  %1622 = vmatpush2.bf16.msra.mxu0 0
  %1623 = vmatprep.subr.bf16.mxu0 0
  %1624 = vmatpush2.bf16.msra.mxu0 0
  %1625 = vmatprep.subr.bf16.mxu0 0
  %1626 = vmatpush2.bf16.msra.mxu0 0
  %1627 = vmatprep.mubr.bf16.mxu0 0
  %1628 = vmatmul.mubr.bf16.gmra.mxu0 %v1395
  %v1629 = vpop.f32.mrf.mxu0
  %v1630 = vadd.f32 0.0, %v1629
  %v1631 = vpop.f32.mrf.mxu0
  %v1632 = vadd.f32 0.0, %v1631
  %v1633 = vpop.f32.mrf.mxu0
  %v1634 = vpop.f32.mrf.mxu0
  %1635 = vdwg.mxu0
  %1636 = vmatprep.subr.bf16.mxu0 %v1562
  %1637 = vmatpush1.bf16.msra.mxu0 %v1561
  %1638 = vmatprep.subr.bf16.mxu0 %v1558
  %1639 = vmatpush1.bf16.msra.mxu0 %v1557
  %1640 = vmatprep.subr.bf16.mxu0 %v1554
  %1641 = vmatpush1.bf16.msra.mxu0 %v1553
  %1642 = vmatprep.subr.bf16.mxu0 %v1550
  %1643 = vmatpush1.bf16.msra.mxu0 %v1549
  %1644 = vmatprep.subr.bf16.mxu0 %v1546
  %1645 = vmatpush1.bf16.msra.mxu0 %v1545
  %1646 = vmatprep.subr.bf16.mxu0 %v1542
  %1647 = vmatpush1.bf16.msra.mxu0 %v1541
  %1648 = vmatprep.subr.bf16.mxu0 %v1538
  %1649 = vmatpush1.bf16.msra.mxu0 %v1537
  %1650 = vmatprep.subr.bf16.mxu0 %v1534
  %1651 = vmatpush1.bf16.msra.mxu0 %v1533
  %1652 = vmatprep.subr.bf16.mxu0 0
  %1653 = vmatpush2.bf16.msra.mxu0 0
  %1654 = vmatprep.subr.bf16.mxu0 0
  %1655 = vmatpush2.bf16.msra.mxu0 0
  %1656 = vmatprep.subr.bf16.mxu0 0
  %1657 = vmatpush2.bf16.msra.mxu0 0
  %1658 = vmatprep.subr.bf16.mxu0 0
  %1659 = vmatpush2.bf16.msra.mxu0 0
  %1660 = vmatprep.subr.bf16.mxu0 0
  %1661 = vmatpush2.bf16.msra.mxu0 0
  %1662 = vmatprep.subr.bf16.mxu0 0
  %1663 = vmatpush2.bf16.msra.mxu0 0
  %1664 = vmatprep.subr.bf16.mxu0 0
  %1665 = vmatpush2.bf16.msra.mxu0 0
  %1666 = vmatprep.subr.bf16.mxu0 0
  %1667 = vmatpush2.bf16.msra.mxu0 0
  %1668 = vmatprep.mubr.bf16.mxu0 0
  %1669 = vmatmul.mubr.bf16.gmra.mxu0 %v1395
  %v1670 = vpop.f32.mrf.mxu0
  %v1671 = vadd.f32 0.0, %v1670
  %v1672 = vpop.f32.mrf.mxu0
  %v1673 = vadd.f32 0.0, %v1672
  %v1674 = vpop.f32.mrf.mxu0
  %v1675 = vpop.f32.mrf.mxu0
  %1676 = vdwg.mxu0
  %v1677 = vadd.f32 %v1399, %v1630
  %v1678 = vadd.f32 %v1400, %v1632
  %v1679 = vadd.f32 %v1401, %v1671
  %v1680 = vadd.f32 %v1402, %v1673
  %v1681 = vxor.u32 %v1677, 2147483648
  %v1682 = vmul.f32 %v1681, 1.442695
  %v1683 = vpow.pop %v1682
  %v1684 = vadd.f32 %v1683, 1.0
  %v1685 = vrcp.pop %v1684
  %v1686 = vmul.f32 1.0, %v1685
  %v1687 = vxor.u32 %v1678, 2147483648
  %v1688 = vmul.f32 %v1687, 1.442695
  %v1689 = vpow.pop %v1688
  %v1690 = vadd.f32 %v1689, 1.0
  %v1691 = vrcp.pop %v1690
  %v1692 = vmul.f32 1.0, %v1691
  %v1693 = vtanh.pop %v1679
  %v1694 = vxor.u32 %v1680, 2147483648
  %v1695 = vmul.f32 %v1694, 1.442695
  %v1696 = vpow.pop %v1695
  %v1697 = vadd.f32 %v1696, 1.0
  %v1698 = vrcp.pop %v1697
  %v1699 = vmul.f32 1.0, %v1698
  %v1700 = vmul.f32 %v1692, %v1392
  %v1701 = vmul.f32 %v1686, %v1693
  %v1702 = vadd.f32 %v1700, %v1701
  %v1703 = vtanh.pop %v1702
  %v1704 = vmul.f32 %v1699, %v1703
  %v1705 = vpack.c.bf16 %v1704, %v1704
  %s1706 = scalar_lea.vmem [#allocation3], 12
  %1707 = vst [vmem:[%s1706] sm:$0xf] %v1705
  %s1708 = scalar_lea.vmem [#allocation2], 128
  %v1709 = vld [vmem:[%s1708] sm:$0xff]
  %v1710 = vld [vmem:[%s1708 + $0x8] sm:$0xff]
  %v1711 = vld [vmem:[%s1708 + $0x10] sm:$0xff]
  %v1712 = vld [vmem:[%s1708 + $0x18] sm:$0xff]
  %v1713 = vld [vmem:[%s2] sm:$0xff]
  %v1714 = vld [vmem:[%s2 + $0x8] sm:$0xff]
  %v1715 = vld [vmem:[%s2 + $0x10] sm:$0xff]
  %v1716 = vld [vmem:[%s2 + $0x18] sm:$0xff]
  %v1717 = vld [vmem:[%s2 + $0x20] sm:$0xff]
  %v1718 = vld [vmem:[%s2 + $0x28] sm:$0xff]
  %v1719 = vld [vmem:[%s2 + $0x30] sm:$0xff]
  %v1720 = vld [vmem:[%s2 + $0x38] sm:$0xff]
  %v1721 = vld [vmem:[%s2 + $0x40] sm:$0xff]
  %v1722 = vld [vmem:[%s2 + $0x48] sm:$0xff]
  %v1723 = vld [vmem:[%s2 + $0x50] sm:$0xff]
  %v1724 = vld [vmem:[%s2 + $0x58] sm:$0xff]
  %v1725 = vld [vmem:[%s2 + $0x60] sm:$0xff]
  %v1726 = vld [vmem:[%s2 + $0x68] sm:$0xff]
  %v1727 = vld [vmem:[%s2 + $0x70] sm:$0xff]
  %v1728 = vld [vmem:[%s2 + $0x78] sm:$0xff]
  %v1729 = vld [vmem:[%s2 + $0x80] sm:$0xff]
  %v1730 = vld [vmem:[%s2 + $0x88] sm:$0xff]
  %v1731 = vld [vmem:[%s2 + $0x90] sm:$0xff]
  %v1732 = vld [vmem:[%s2 + $0x98] sm:$0xff]
  %v1733 = vld [vmem:[%s2 + $0xa0] sm:$0xff]
  %v1734 = vld [vmem:[%s2 + $0xa8] sm:$0xff]
  %v1735 = vld [vmem:[%s2 + $0xb0] sm:$0xff]
  %v1736 = vld [vmem:[%s2 + $0xb8] sm:$0xff]
  %v1737 = vld [vmem:[%s2 + $0xc0] sm:$0xff]
  %v1738 = vld [vmem:[%s2 + $0xc8] sm:$0xff]
  %v1739 = vld [vmem:[%s2 + $0xd0] sm:$0xff]
  %v1740 = vld [vmem:[%s2 + $0xd8] sm:$0xff]
  %v1741 = vld [vmem:[%s2 + $0xe0] sm:$0xff]
  %v1742 = vld [vmem:[%s2 + $0xe8] sm:$0xff]
  %v1743 = vld [vmem:[%s2 + $0xf0] sm:$0xff]
  %v1744 = vld [vmem:[%s2 + $0xf8] sm:$0xff]
  %v1777 = vunpack.c.l.b16 %v1713
  %v1778 = vunpack.c.h.b16 %v1713
  %v1779 = vunpack.c.l.b16 %v1714
  %v1780 = vunpack.c.h.b16 %v1714
  %v1781 = vunpack.c.l.b16 %v1715
  %v1782 = vunpack.c.h.b16 %v1715
  %v1783 = vunpack.c.l.b16 %v1716
  %v1784 = vunpack.c.h.b16 %v1716
  %v1785 = vunpack.c.l.b16 %v1717
  %v1786 = vunpack.c.h.b16 %v1717
  %v1787 = vunpack.c.l.b16 %v1718
  %v1788 = vunpack.c.h.b16 %v1718
  %v1789 = vunpack.c.l.b16 %v1719
  %v1790 = vunpack.c.h.b16 %v1719
  %v1791 = vunpack.c.l.b16 %v1720
  %v1792 = vunpack.c.h.b16 %v1720
  %v1793 = vunpack.c.l.b16 %v1721
  %v1794 = vunpack.c.h.b16 %v1721
  %v1795 = vunpack.c.l.b16 %v1722
  %v1796 = vunpack.c.h.b16 %v1722
  %v1797 = vunpack.c.l.b16 %v1723
  %v1798 = vunpack.c.h.b16 %v1723
  %v1799 = vunpack.c.l.b16 %v1724
  %v1800 = vunpack.c.h.b16 %v1724
  %v1801 = vunpack.c.l.b16 %v1725
  %v1802 = vunpack.c.h.b16 %v1725
  %v1803 = vunpack.c.l.b16 %v1726
  %v1804 = vunpack.c.h.b16 %v1726
  %v1805 = vunpack.c.l.b16 %v1727
  %v1806 = vunpack.c.h.b16 %v1727
  %v1807 = vunpack.c.l.b16 %v1728
  %v1808 = vunpack.c.h.b16 %v1728
  %v1809 = vunpack.c.l.b16 %v1729
  %v1810 = vunpack.c.h.b16 %v1729
  %v1811 = vunpack.c.l.b16 %v1730
  %v1812 = vunpack.c.h.b16 %v1730
  %v1813 = vunpack.c.l.b16 %v1731
  %v1814 = vunpack.c.h.b16 %v1731
  %v1815 = vunpack.c.l.b16 %v1732
  %v1816 = vunpack.c.h.b16 %v1732
  %v1817 = vunpack.c.l.b16 %v1733
  %v1818 = vunpack.c.h.b16 %v1733
  %v1819 = vunpack.c.l.b16 %v1734
  %v1820 = vunpack.c.h.b16 %v1734
  %v1821 = vunpack.c.l.b16 %v1735
  %v1822 = vunpack.c.h.b16 %v1735
  %v1823 = vunpack.c.l.b16 %v1736
  %v1824 = vunpack.c.h.b16 %v1736
  %v1825 = vunpack.c.l.b16 %v1737
  %v1826 = vunpack.c.h.b16 %v1737
  %v1827 = vunpack.c.l.b16 %v1738
  %v1828 = vunpack.c.h.b16 %v1738
  %v1829 = vunpack.c.l.b16 %v1739
  %v1830 = vunpack.c.h.b16 %v1739
  %v1831 = vunpack.c.l.b16 %v1740
  %v1832 = vunpack.c.h.b16 %v1740
  %v1833 = vunpack.c.l.b16 %v1741
  %v1834 = vunpack.c.h.b16 %v1741
  %v1835 = vunpack.c.l.b16 %v1742
  %v1836 = vunpack.c.h.b16 %v1742
  %v1837 = vunpack.c.l.b16 %v1743
  %v1838 = vunpack.c.h.b16 %v1743
  %v1839 = vunpack.c.l.b16 %v1744
  %v1840 = vunpack.c.h.b16 %v1744
  %v1841 = vpack.c.b16 %v1781, %v1777
  %v1842 = vpack.c.b16 %v1782, %v1778
  %v1843 = vpack.c.b16 %v1783, %v1779
  %v1844 = vpack.c.b16 %v1784, %v1780
  %v1845 = vpack.c.b16 %v1789, %v1785
  %v1846 = vpack.c.b16 %v1790, %v1786
  %v1847 = vpack.c.b16 %v1791, %v1787
  %v1848 = vpack.c.b16 %v1792, %v1788
  %v1849 = vpack.c.b16 %v1797, %v1793
  %v1850 = vpack.c.b16 %v1798, %v1794
  %v1851 = vpack.c.b16 %v1799, %v1795
  %v1852 = vpack.c.b16 %v1800, %v1796
  %v1853 = vpack.c.b16 %v1805, %v1801
  %v1854 = vpack.c.b16 %v1806, %v1802
  %v1855 = vpack.c.b16 %v1807, %v1803
  %v1856 = vpack.c.b16 %v1808, %v1804
  %v1857 = vpack.c.b16 %v1813, %v1809
  %v1858 = vpack.c.b16 %v1814, %v1810
  %v1859 = vpack.c.b16 %v1815, %v1811
  %v1860 = vpack.c.b16 %v1816, %v1812
  %v1861 = vpack.c.b16 %v1821, %v1817
  %v1862 = vpack.c.b16 %v1822, %v1818
  %v1863 = vpack.c.b16 %v1823, %v1819
  %v1864 = vpack.c.b16 %v1824, %v1820
  %v1865 = vpack.c.b16 %v1829, %v1825
  %v1866 = vpack.c.b16 %v1830, %v1826
  %v1867 = vpack.c.b16 %v1831, %v1827
  %v1868 = vpack.c.b16 %v1832, %v1828
  %v1869 = vpack.c.b16 %v1837, %v1833
  %v1870 = vpack.c.b16 %v1838, %v1834
  %v1871 = vpack.c.b16 %v1839, %v1835
  %v1872 = vpack.c.b16 %v1840, %v1836
  %1905 = vmatprep.subr.bf16.mxu0 %v1870
  %1906 = vmatpush1.bf16.msra.mxu0 %v1869
  %1907 = vmatprep.subr.bf16.mxu0 %v1866
  %1908 = vmatpush1.bf16.msra.mxu0 %v1865
  %1909 = vmatprep.subr.bf16.mxu0 %v1862
  %1910 = vmatpush1.bf16.msra.mxu0 %v1861
  %1911 = vmatprep.subr.bf16.mxu0 %v1858
  %1912 = vmatpush1.bf16.msra.mxu0 %v1857
  %1913 = vmatprep.subr.bf16.mxu0 %v1854
  %1914 = vmatpush1.bf16.msra.mxu0 %v1853
  %1915 = vmatprep.subr.bf16.mxu0 %v1850
  %1916 = vmatpush1.bf16.msra.mxu0 %v1849
  %1917 = vmatprep.subr.bf16.mxu0 %v1846
  %1918 = vmatpush1.bf16.msra.mxu0 %v1845
  %1919 = vmatprep.subr.bf16.mxu0 %v1842
  %1920 = vmatpush1.bf16.msra.mxu0 %v1841
  %1921 = vmatprep.subr.bf16.mxu0 0
  %1922 = vmatpush2.bf16.msra.mxu0 0
  %1923 = vmatprep.subr.bf16.mxu0 0
  %1924 = vmatpush2.bf16.msra.mxu0 0
  %1925 = vmatprep.subr.bf16.mxu0 0
  %1926 = vmatpush2.bf16.msra.mxu0 0
  %1927 = vmatprep.subr.bf16.mxu0 0
  %1928 = vmatpush2.bf16.msra.mxu0 0
  %1929 = vmatprep.subr.bf16.mxu0 0
  %1930 = vmatpush2.bf16.msra.mxu0 0
  %1931 = vmatprep.subr.bf16.mxu0 0
  %1932 = vmatpush2.bf16.msra.mxu0 0
  %1933 = vmatprep.subr.bf16.mxu0 0
  %1934 = vmatpush2.bf16.msra.mxu0 0
  %1935 = vmatprep.subr.bf16.mxu0 0
  %1936 = vmatpush2.bf16.msra.mxu0 0
  %1937 = vmatprep.mubr.bf16.mxu0 0
  %1938 = vmatmul.mubr.bf16.gmra.mxu0 %v1705
  %v1939 = vpop.f32.mrf.mxu0
  %v1940 = vadd.f32 0.0, %v1939
  %v1941 = vpop.f32.mrf.mxu0
  %v1942 = vadd.f32 0.0, %v1941
  %v1943 = vpop.f32.mrf.mxu0
  %v1944 = vpop.f32.mrf.mxu0
  %1945 = vdwg.mxu0
  %1946 = vmatprep.subr.bf16.mxu0 %v1872
  %1947 = vmatpush1.bf16.msra.mxu0 %v1871
  %1948 = vmatprep.subr.bf16.mxu0 %v1868
  %1949 = vmatpush1.bf16.msra.mxu0 %v1867
  %1950 = vmatprep.subr.bf16.mxu0 %v1864
  %1951 = vmatpush1.bf16.msra.mxu0 %v1863
  %1952 = vmatprep.subr.bf16.mxu0 %v1860
  %1953 = vmatpush1.bf16.msra.mxu0 %v1859
  %1954 = vmatprep.subr.bf16.mxu0 %v1856
  %1955 = vmatpush1.bf16.msra.mxu0 %v1855
  %1956 = vmatprep.subr.bf16.mxu0 %v1852
  %1957 = vmatpush1.bf16.msra.mxu0 %v1851
  %1958 = vmatprep.subr.bf16.mxu0 %v1848
  %1959 = vmatpush1.bf16.msra.mxu0 %v1847
  %1960 = vmatprep.subr.bf16.mxu0 %v1844
  %1961 = vmatpush1.bf16.msra.mxu0 %v1843
  %1962 = vmatprep.subr.bf16.mxu0 0
  %1963 = vmatpush2.bf16.msra.mxu0 0
  %1964 = vmatprep.subr.bf16.mxu0 0
  %1965 = vmatpush2.bf16.msra.mxu0 0
  %1966 = vmatprep.subr.bf16.mxu0 0
  %1967 = vmatpush2.bf16.msra.mxu0 0
  %1968 = vmatprep.subr.bf16.mxu0 0
  %1969 = vmatpush2.bf16.msra.mxu0 0
  %1970 = vmatprep.subr.bf16.mxu0 0
  %1971 = vmatpush2.bf16.msra.mxu0 0
  %1972 = vmatprep.subr.bf16.mxu0 0
  %1973 = vmatpush2.bf16.msra.mxu0 0
  %1974 = vmatprep.subr.bf16.mxu0 0
  %1975 = vmatpush2.bf16.msra.mxu0 0
  %1976 = vmatprep.subr.bf16.mxu0 0
  %1977 = vmatpush2.bf16.msra.mxu0 0
  %1978 = vmatprep.mubr.bf16.mxu0 0
  %1979 = vmatmul.mubr.bf16.gmra.mxu0 %v1705
  %v1980 = vpop.f32.mrf.mxu0
  %v1981 = vadd.f32 0.0, %v1980
  %v1982 = vpop.f32.mrf.mxu0
  %v1983 = vadd.f32 0.0, %v1982
  %v1984 = vpop.f32.mrf.mxu0
  %v1985 = vpop.f32.mrf.mxu0
  %1986 = vdwg.mxu0
  %v1987 = vadd.f32 %v1709, %v1940
  %v1988 = vadd.f32 %v1710, %v1942
  %v1989 = vadd.f32 %v1711, %v1981
  %v1990 = vadd.f32 %v1712, %v1983
  %v1991 = vxor.u32 %v1987, 2147483648
  %v1992 = vmul.f32 %v1991, 1.442695
  %v1993 = vpow.pop %v1992
  %v1994 = vadd.f32 %v1993, 1.0
  %v1995 = vrcp.pop %v1994
  %v1996 = vmul.f32 1.0, %v1995
  %v1997 = vxor.u32 %v1988, 2147483648
  %v1998 = vmul.f32 %v1997, 1.442695
  %v1999 = vpow.pop %v1998
  %v2000 = vadd.f32 %v1999, 1.0
  %v2001 = vrcp.pop %v2000
  %v2002 = vmul.f32 1.0, %v2001
  %v2003 = vtanh.pop %v1989
  %v2004 = vxor.u32 %v1990, 2147483648
  %v2005 = vmul.f32 %v2004, 1.442695
  %v2006 = vpow.pop %v2005
  %v2007 = vadd.f32 %v2006, 1.0
  %v2008 = vrcp.pop %v2007
  %v2009 = vmul.f32 1.0, %v2008
  %v2010 = vmul.f32 %v2002, %v1702
  %v2011 = vmul.f32 %v1996, %v2003
  %v2012 = vadd.f32 %v2010, %v2011
  %v2013 = vtanh.pop %v2012
  %v2014 = vmul.f32 %v2009, %v2013
  %v2015 = vpack.c.bf16 %v2014, %v2014
  %s2016 = scalar_lea.vmem [#allocation3], 16
  %2017 = vst [vmem:[%s2016] sm:$0xf] %v2015
  %s2018 = scalar_lea.vmem [#allocation2], 160
  %v2019 = vld [vmem:[%s2018] sm:$0xff]
  %v2020 = vld [vmem:[%s2018 + $0x8] sm:$0xff]
  %v2021 = vld [vmem:[%s2018 + $0x10] sm:$0xff]
  %v2022 = vld [vmem:[%s2018 + $0x18] sm:$0xff]
  %v2023 = vld [vmem:[%s2] sm:$0xff]
  %v2024 = vld [vmem:[%s2 + $0x8] sm:$0xff]
  %v2025 = vld [vmem:[%s2 + $0x10] sm:$0xff]
  %v2026 = vld [vmem:[%s2 + $0x18] sm:$0xff]
  %v2027 = vld [vmem:[%s2 + $0x20] sm:$0xff]
  %v2028 = vld [vmem:[%s2 + $0x28] sm:$0xff]
  %v2029 = vld [vmem:[%s2 + $0x30] sm:$0xff]
  %v2030 = vld [vmem:[%s2 + $0x38] sm:$0xff]
  %v2031 = vld [vmem:[%s2 + $0x40] sm:$0xff]
  %v2032 = vld [vmem:[%s2 + $0x48] sm:$0xff]
  %v2033 = vld [vmem:[%s2 + $0x50] sm:$0xff]
  %v2034 = vld [vmem:[%s2 + $0x58] sm:$0xff]
  %v2035 = vld [vmem:[%s2 + $0x60] sm:$0xff]
  %v2036 = vld [vmem:[%s2 + $0x68] sm:$0xff]
  %v2037 = vld [vmem:[%s2 + $0x70] sm:$0xff]
  %v2038 = vld [vmem:[%s2 + $0x78] sm:$0xff]
  %v2039 = vld [vmem:[%s2 + $0x80] sm:$0xff]
  %v2040 = vld [vmem:[%s2 + $0x88] sm:$0xff]
  %v2041 = vld [vmem:[%s2 + $0x90] sm:$0xff]
  %v2042 = vld [vmem:[%s2 + $0x98] sm:$0xff]
  %v2043 = vld [vmem:[%s2 + $0xa0] sm:$0xff]
  %v2044 = vld [vmem:[%s2 + $0xa8] sm:$0xff]
  %v2045 = vld [vmem:[%s2 + $0xb0] sm:$0xff]
  %v2046 = vld [vmem:[%s2 + $0xb8] sm:$0xff]
  %v2047 = vld [vmem:[%s2 + $0xc0] sm:$0xff]
  %v2048 = vld [vmem:[%s2 + $0xc8] sm:$0xff]
  %v2049 = vld [vmem:[%s2 + $0xd0] sm:$0xff]
  %v2050 = vld [vmem:[%s2 + $0xd8] sm:$0xff]
  %v2051 = vld [vmem:[%s2 + $0xe0] sm:$0xff]
  %v2052 = vld [vmem:[%s2 + $0xe8] sm:$0xff]
  %v2053 = vld [vmem:[%s2 + $0xf0] sm:$0xff]
  %v2054 = vld [vmem:[%s2 + $0xf8] sm:$0xff]
  %v2087 = vunpack.c.l.b16 %v2023
  %v2088 = vunpack.c.h.b16 %v2023
  %v2089 = vunpack.c.l.b16 %v2024
  %v2090 = vunpack.c.h.b16 %v2024
  %v2091 = vunpack.c.l.b16 %v2025
  %v2092 = vunpack.c.h.b16 %v2025
  %v2093 = vunpack.c.l.b16 %v2026
  %v2094 = vunpack.c.h.b16 %v2026
  %v2095 = vunpack.c.l.b16 %v2027
  %v2096 = vunpack.c.h.b16 %v2027
  %v2097 = vunpack.c.l.b16 %v2028
  %v2098 = vunpack.c.h.b16 %v2028
  %v2099 = vunpack.c.l.b16 %v2029
  %v2100 = vunpack.c.h.b16 %v2029
  %v2101 = vunpack.c.l.b16 %v2030
  %v2102 = vunpack.c.h.b16 %v2030
  %v2103 = vunpack.c.l.b16 %v2031
  %v2104 = vunpack.c.h.b16 %v2031
  %v2105 = vunpack.c.l.b16 %v2032
  %v2106 = vunpack.c.h.b16 %v2032
  %v2107 = vunpack.c.l.b16 %v2033
  %v2108 = vunpack.c.h.b16 %v2033
  %v2109 = vunpack.c.l.b16 %v2034
  %v2110 = vunpack.c.h.b16 %v2034
  %v2111 = vunpack.c.l.b16 %v2035
  %v2112 = vunpack.c.h.b16 %v2035
  %v2113 = vunpack.c.l.b16 %v2036
  %v2114 = vunpack.c.h.b16 %v2036
  %v2115 = vunpack.c.l.b16 %v2037
  %v2116 = vunpack.c.h.b16 %v2037
  %v2117 = vunpack.c.l.b16 %v2038
  %v2118 = vunpack.c.h.b16 %v2038
  %v2119 = vunpack.c.l.b16 %v2039
  %v2120 = vunpack.c.h.b16 %v2039
  %v2121 = vunpack.c.l.b16 %v2040
  %v2122 = vunpack.c.h.b16 %v2040
  %v2123 = vunpack.c.l.b16 %v2041
  %v2124 = vunpack.c.h.b16 %v2041
  %v2125 = vunpack.c.l.b16 %v2042
  %v2126 = vunpack.c.h.b16 %v2042
  %v2127 = vunpack.c.l.b16 %v2043
  %v2128 = vunpack.c.h.b16 %v2043
  %v2129 = vunpack.c.l.b16 %v2044
  %v2130 = vunpack.c.h.b16 %v2044
  %v2131 = vunpack.c.l.b16 %v2045
  %v2132 = vunpack.c.h.b16 %v2045
  %v2133 = vunpack.c.l.b16 %v2046
  %v2134 = vunpack.c.h.b16 %v2046
  %v2135 = vunpack.c.l.b16 %v2047
  %v2136 = vunpack.c.h.b16 %v2047
  %v2137 = vunpack.c.l.b16 %v2048
  %v2138 = vunpack.c.h.b16 %v2048
  %v2139 = vunpack.c.l.b16 %v2049
  %v2140 = vunpack.c.h.b16 %v2049
  %v2141 = vunpack.c.l.b16 %v2050
  %v2142 = vunpack.c.h.b16 %v2050
  %v2143 = vunpack.c.l.b16 %v2051
  %v2144 = vunpack.c.h.b16 %v2051
  %v2145 = vunpack.c.l.b16 %v2052
  %v2146 = vunpack.c.h.b16 %v2052
  %v2147 = vunpack.c.l.b16 %v2053
  %v2148 = vunpack.c.h.b16 %v2053
  %v2149 = vunpack.c.l.b16 %v2054
  %v2150 = vunpack.c.h.b16 %v2054
  %v2151 = vpack.c.b16 %v2091, %v2087
  %v2152 = vpack.c.b16 %v2092, %v2088
  %v2153 = vpack.c.b16 %v2093, %v2089
  %v2154 = vpack.c.b16 %v2094, %v2090
  %v2155 = vpack.c.b16 %v2099, %v2095
  %v2156 = vpack.c.b16 %v2100, %v2096
  %v2157 = vpack.c.b16 %v2101, %v2097
  %v2158 = vpack.c.b16 %v2102, %v2098
  %v2159 = vpack.c.b16 %v2107, %v2103
  %v2160 = vpack.c.b16 %v2108, %v2104
  %v2161 = vpack.c.b16 %v2109, %v2105
  %v2162 = vpack.c.b16 %v2110, %v2106
  %v2163 = vpack.c.b16 %v2115, %v2111
  %v2164 = vpack.c.b16 %v2116, %v2112
  %v2165 = vpack.c.b16 %v2117, %v2113
  %v2166 = vpack.c.b16 %v2118, %v2114
  %v2167 = vpack.c.b16 %v2123, %v2119
  %v2168 = vpack.c.b16 %v2124, %v2120
  %v2169 = vpack.c.b16 %v2125, %v2121
  %v2170 = vpack.c.b16 %v2126, %v2122
  %v2171 = vpack.c.b16 %v2131, %v2127
  %v2172 = vpack.c.b16 %v2132, %v2128
  %v2173 = vpack.c.b16 %v2133, %v2129
  %v2174 = vpack.c.b16 %v2134, %v2130
  %v2175 = vpack.c.b16 %v2139, %v2135
  %v2176 = vpack.c.b16 %v2140, %v2136
  %v2177 = vpack.c.b16 %v2141, %v2137
  %v2178 = vpack.c.b16 %v2142, %v2138
  %v2179 = vpack.c.b16 %v2147, %v2143
  %v2180 = vpack.c.b16 %v2148, %v2144
  %v2181 = vpack.c.b16 %v2149, %v2145
  %v2182 = vpack.c.b16 %v2150, %v2146
  %2215 = vmatprep.subr.bf16.mxu0 %v2180
  %2216 = vmatpush1.bf16.msra.mxu0 %v2179
  %2217 = vmatprep.subr.bf16.mxu0 %v2176
  %2218 = vmatpush1.bf16.msra.mxu0 %v2175
  %2219 = vmatprep.subr.bf16.mxu0 %v2172
  %2220 = vmatpush1.bf16.msra.mxu0 %v2171
  %2221 = vmatprep.subr.bf16.mxu0 %v2168
  %2222 = vmatpush1.bf16.msra.mxu0 %v2167
  %2223 = vmatprep.subr.bf16.mxu0 %v2164
  %2224 = vmatpush1.bf16.msra.mxu0 %v2163
  %2225 = vmatprep.subr.bf16.mxu0 %v2160
  %2226 = vmatpush1.bf16.msra.mxu0 %v2159
  %2227 = vmatprep.subr.bf16.mxu0 %v2156
  %2228 = vmatpush1.bf16.msra.mxu0 %v2155
  %2229 = vmatprep.subr.bf16.mxu0 %v2152
  %2230 = vmatpush1.bf16.msra.mxu0 %v2151
  %2231 = vmatprep.subr.bf16.mxu0 0
  %2232 = vmatpush2.bf16.msra.mxu0 0
  %2233 = vmatprep.subr.bf16.mxu0 0
  %2234 = vmatpush2.bf16.msra.mxu0 0
  %2235 = vmatprep.subr.bf16.mxu0 0
  %2236 = vmatpush2.bf16.msra.mxu0 0
  %2237 = vmatprep.subr.bf16.mxu0 0
  %2238 = vmatpush2.bf16.msra.mxu0 0
  %2239 = vmatprep.subr.bf16.mxu0 0
  %2240 = vmatpush2.bf16.msra.mxu0 0
  %2241 = vmatprep.subr.bf16.mxu0 0
  %2242 = vmatpush2.bf16.msra.mxu0 0
  %2243 = vmatprep.subr.bf16.mxu0 0
  %2244 = vmatpush2.bf16.msra.mxu0 0
  %2245 = vmatprep.subr.bf16.mxu0 0
  %2246 = vmatpush2.bf16.msra.mxu0 0
  %2247 = vmatprep.mubr.bf16.mxu0 0
  %2248 = vmatmul.mubr.bf16.gmra.mxu0 %v2015
  %v2249 = vpop.f32.mrf.mxu0
  %v2250 = vadd.f32 0.0, %v2249
  %v2251 = vpop.f32.mrf.mxu0
  %v2252 = vadd.f32 0.0, %v2251
  %v2253 = vpop.f32.mrf.mxu0
  %v2254 = vpop.f32.mrf.mxu0
  %2255 = vdwg.mxu0
  %2256 = vmatprep.subr.bf16.mxu0 %v2182
  %2257 = vmatpush1.bf16.msra.mxu0 %v2181
  %2258 = vmatprep.subr.bf16.mxu0 %v2178
  %2259 = vmatpush1.bf16.msra.mxu0 %v2177
  %2260 = vmatprep.subr.bf16.mxu0 %v2174
  %2261 = vmatpush1.bf16.msra.mxu0 %v2173
  %2262 = vmatprep.subr.bf16.mxu0 %v2170
  %2263 = vmatpush1.bf16.msra.mxu0 %v2169
  %2264 = vmatprep.subr.bf16.mxu0 %v2166
  %2265 = vmatpush1.bf16.msra.mxu0 %v2165
  %2266 = vmatprep.subr.bf16.mxu0 %v2162
  %2267 = vmatpush1.bf16.msra.mxu0 %v2161
  %2268 = vmatprep.subr.bf16.mxu0 %v2158
  %2269 = vmatpush1.bf16.msra.mxu0 %v2157
  %2270 = vmatprep.subr.bf16.mxu0 %v2154
  %2271 = vmatpush1.bf16.msra.mxu0 %v2153
  %2272 = vmatprep.subr.bf16.mxu0 0
  %2273 = vmatpush2.bf16.msra.mxu0 0
  %2274 = vmatprep.subr.bf16.mxu0 0
  %2275 = vmatpush2.bf16.msra.mxu0 0
  %2276 = vmatprep.subr.bf16.mxu0 0
  %2277 = vmatpush2.bf16.msra.mxu0 0
  %2278 = vmatprep.subr.bf16.mxu0 0
  %2279 = vmatpush2.bf16.msra.mxu0 0
  %2280 = vmatprep.subr.bf16.mxu0 0
  %2281 = vmatpush2.bf16.msra.mxu0 0
  %2282 = vmatprep.subr.bf16.mxu0 0
  %2283 = vmatpush2.bf16.msra.mxu0 0
  %2284 = vmatprep.subr.bf16.mxu0 0
  %2285 = vmatpush2.bf16.msra.mxu0 0
  %2286 = vmatprep.subr.bf16.mxu0 0
  %2287 = vmatpush2.bf16.msra.mxu0 0
  %2288 = vmatprep.mubr.bf16.mxu0 0
  %2289 = vmatmul.mubr.bf16.gmra.mxu0 %v2015
  %v2290 = vpop.f32.mrf.mxu0
  %v2291 = vadd.f32 0.0, %v2290
  %v2292 = vpop.f32.mrf.mxu0
  %v2293 = vadd.f32 0.0, %v2292
  %v2294 = vpop.f32.mrf.mxu0
  %v2295 = vpop.f32.mrf.mxu0
  %2296 = vdwg.mxu0
  %v2297 = vadd.f32 %v2019, %v2250
  %v2298 = vadd.f32 %v2020, %v2252
  %v2299 = vadd.f32 %v2021, %v2291
  %v2300 = vadd.f32 %v2022, %v2293
  %v2301 = vxor.u32 %v2297, 2147483648
  %v2302 = vmul.f32 %v2301, 1.442695
  %v2303 = vpow.pop %v2302
  %v2304 = vadd.f32 %v2303, 1.0
  %v2305 = vrcp.pop %v2304
  %v2306 = vmul.f32 1.0, %v2305
  %v2307 = vxor.u32 %v2298, 2147483648
  %v2308 = vmul.f32 %v2307, 1.442695
  %v2309 = vpow.pop %v2308
  %v2310 = vadd.f32 %v2309, 1.0
  %v2311 = vrcp.pop %v2310
  %v2312 = vmul.f32 1.0, %v2311
  %v2313 = vtanh.pop %v2299
  %v2314 = vxor.u32 %v2300, 2147483648
  %v2315 = vmul.f32 %v2314, 1.442695
  %v2316 = vpow.pop %v2315
  %v2317 = vadd.f32 %v2316, 1.0
  %v2318 = vrcp.pop %v2317
  %v2319 = vmul.f32 1.0, %v2318
  %v2320 = vmul.f32 %v2312, %v2012
  %v2321 = vmul.f32 %v2306, %v2313
  %v2322 = vadd.f32 %v2320, %v2321
  %v2323 = vtanh.pop %v2322
  %v2324 = vmul.f32 %v2319, %v2323
  %v2325 = vpack.c.bf16 %v2324, %v2324
  %s2326 = scalar_lea.vmem [#allocation3], 20
  %2327 = vst [vmem:[%s2326] sm:$0xf] %v2325
  %s2328 = scalar_lea.vmem [#allocation2], 192
  %v2329 = vld [vmem:[%s2328] sm:$0xff]
  %v2330 = vld [vmem:[%s2328 + $0x8] sm:$0xff]
  %v2331 = vld [vmem:[%s2328 + $0x10] sm:$0xff]
  %v2332 = vld [vmem:[%s2328 + $0x18] sm:$0xff]
  %v2333 = vld [vmem:[%s2] sm:$0xff]
  %v2334 = vld [vmem:[%s2 + $0x8] sm:$0xff]
  %v2335 = vld [vmem:[%s2 + $0x10] sm:$0xff]
  %v2336 = vld [vmem:[%s2 + $0x18] sm:$0xff]
  %v2337 = vld [vmem:[%s2 + $0x20] sm:$0xff]
  %v2338 = vld [vmem:[%s2 + $0x28] sm:$0xff]
  %v2339 = vld [vmem:[%s2 + $0x30] sm:$0xff]
  %v2340 = vld [vmem:[%s2 + $0x38] sm:$0xff]
  %v2341 = vld [vmem:[%s2 + $0x40] sm:$0xff]
  %v2342 = vld [vmem:[%s2 + $0x48] sm:$0xff]
  %v2343 = vld [vmem:[%s2 + $0x50] sm:$0xff]
  %v2344 = vld [vmem:[%s2 + $0x58] sm:$0xff]
  %v2345 = vld [vmem:[%s2 + $0x60] sm:$0xff]
  %v2346 = vld [vmem:[%s2 + $0x68] sm:$0xff]
  %v2347 = vld [vmem:[%s2 + $0x70] sm:$0xff]
  %v2348 = vld [vmem:[%s2 + $0x78] sm:$0xff]
  %v2349 = vld [vmem:[%s2 + $0x80] sm:$0xff]
  %v2350 = vld [vmem:[%s2 + $0x88] sm:$0xff]
  %v2351 = vld [vmem:[%s2 + $0x90] sm:$0xff]
  %v2352 = vld [vmem:[%s2 + $0x98] sm:$0xff]
  %v2353 = vld [vmem:[%s2 + $0xa0] sm:$0xff]
  %v2354 = vld [vmem:[%s2 + $0xa8] sm:$0xff]
  %v2355 = vld [vmem:[%s2 + $0xb0] sm:$0xff]
  %v2356 = vld [vmem:[%s2 + $0xb8] sm:$0xff]
  %v2357 = vld [vmem:[%s2 + $0xc0] sm:$0xff]
  %v2358 = vld [vmem:[%s2 + $0xc8] sm:$0xff]
  %v2359 = vld [vmem:[%s2 + $0xd0] sm:$0xff]
  %v2360 = vld [vmem:[%s2 + $0xd8] sm:$0xff]
  %v2361 = vld [vmem:[%s2 + $0xe0] sm:$0xff]
  %v2362 = vld [vmem:[%s2 + $0xe8] sm:$0xff]
  %v2363 = vld [vmem:[%s2 + $0xf0] sm:$0xff]
  %v2364 = vld [vmem:[%s2 + $0xf8] sm:$0xff]
  %v2397 = vunpack.c.l.b16 %v2333
  %v2398 = vunpack.c.h.b16 %v2333
  %v2399 = vunpack.c.l.b16 %v2334
  %v2400 = vunpack.c.h.b16 %v2334
  %v2401 = vunpack.c.l.b16 %v2335
  %v2402 = vunpack.c.h.b16 %v2335
  %v2403 = vunpack.c.l.b16 %v2336
  %v2404 = vunpack.c.h.b16 %v2336
  %v2405 = vunpack.c.l.b16 %v2337
  %v2406 = vunpack.c.h.b16 %v2337
  %v2407 = vunpack.c.l.b16 %v2338
  %v2408 = vunpack.c.h.b16 %v2338
  %v2409 = vunpack.c.l.b16 %v2339
  %v2410 = vunpack.c.h.b16 %v2339
  %v2411 = vunpack.c.l.b16 %v2340
  %v2412 = vunpack.c.h.b16 %v2340
  %v2413 = vunpack.c.l.b16 %v2341
  %v2414 = vunpack.c.h.b16 %v2341
  %v2415 = vunpack.c.l.b16 %v2342
  %v2416 = vunpack.c.h.b16 %v2342
  %v2417 = vunpack.c.l.b16 %v2343
  %v2418 = vunpack.c.h.b16 %v2343
  %v2419 = vunpack.c.l.b16 %v2344
  %v2420 = vunpack.c.h.b16 %v2344
  %v2421 = vunpack.c.l.b16 %v2345
  %v2422 = vunpack.c.h.b16 %v2345
  %v2423 = vunpack.c.l.b16 %v2346
  %v2424 = vunpack.c.h.b16 %v2346
  %v2425 = vunpack.c.l.b16 %v2347
  %v2426 = vunpack.c.h.b16 %v2347
  %v2427 = vunpack.c.l.b16 %v2348
  %v2428 = vunpack.c.h.b16 %v2348
  %v2429 = vunpack.c.l.b16 %v2349
  %v2430 = vunpack.c.h.b16 %v2349
  %v2431 = vunpack.c.l.b16 %v2350
  %v2432 = vunpack.c.h.b16 %v2350
  %v2433 = vunpack.c.l.b16 %v2351
  %v2434 = vunpack.c.h.b16 %v2351
  %v2435 = vunpack.c.l.b16 %v2352
  %v2436 = vunpack.c.h.b16 %v2352
  %v2437 = vunpack.c.l.b16 %v2353
  %v2438 = vunpack.c.h.b16 %v2353
  %v2439 = vunpack.c.l.b16 %v2354
  %v2440 = vunpack.c.h.b16 %v2354
  %v2441 = vunpack.c.l.b16 %v2355
  %v2442 = vunpack.c.h.b16 %v2355
  %v2443 = vunpack.c.l.b16 %v2356
  %v2444 = vunpack.c.h.b16 %v2356
  %v2445 = vunpack.c.l.b16 %v2357
  %v2446 = vunpack.c.h.b16 %v2357
  %v2447 = vunpack.c.l.b16 %v2358
  %v2448 = vunpack.c.h.b16 %v2358
  %v2449 = vunpack.c.l.b16 %v2359
  %v2450 = vunpack.c.h.b16 %v2359
  %v2451 = vunpack.c.l.b16 %v2360
  %v2452 = vunpack.c.h.b16 %v2360
  %v2453 = vunpack.c.l.b16 %v2361
  %v2454 = vunpack.c.h.b16 %v2361
  %v2455 = vunpack.c.l.b16 %v2362
  %v2456 = vunpack.c.h.b16 %v2362
  %v2457 = vunpack.c.l.b16 %v2363
  %v2458 = vunpack.c.h.b16 %v2363
  %v2459 = vunpack.c.l.b16 %v2364
  %v2460 = vunpack.c.h.b16 %v2364
  %v2461 = vpack.c.b16 %v2401, %v2397
  %v2462 = vpack.c.b16 %v2402, %v2398
  %v2463 = vpack.c.b16 %v2403, %v2399
  %v2464 = vpack.c.b16 %v2404, %v2400
  %v2465 = vpack.c.b16 %v2409, %v2405
  %v2466 = vpack.c.b16 %v2410, %v2406
  %v2467 = vpack.c.b16 %v2411, %v2407
  %v2468 = vpack.c.b16 %v2412, %v2408
  %v2469 = vpack.c.b16 %v2417, %v2413
  %v2470 = vpack.c.b16 %v2418, %v2414
  %v2471 = vpack.c.b16 %v2419, %v2415
  %v2472 = vpack.c.b16 %v2420, %v2416
  %v2473 = vpack.c.b16 %v2425, %v2421
  %v2474 = vpack.c.b16 %v2426, %v2422
  %v2475 = vpack.c.b16 %v2427, %v2423
  %v2476 = vpack.c.b16 %v2428, %v2424
  %v2477 = vpack.c.b16 %v2433, %v2429
  %v2478 = vpack.c.b16 %v2434, %v2430
  %v2479 = vpack.c.b16 %v2435, %v2431
  %v2480 = vpack.c.b16 %v2436, %v2432
  %v2481 = vpack.c.b16 %v2441, %v2437
  %v2482 = vpack.c.b16 %v2442, %v2438
  %v2483 = vpack.c.b16 %v2443, %v2439
  %v2484 = vpack.c.b16 %v2444, %v2440
  %v2485 = vpack.c.b16 %v2449, %v2445
  %v2486 = vpack.c.b16 %v2450, %v2446
  %v2487 = vpack.c.b16 %v2451, %v2447
  %v2488 = vpack.c.b16 %v2452, %v2448
  %v2489 = vpack.c.b16 %v2457, %v2453
  %v2490 = vpack.c.b16 %v2458, %v2454
  %v2491 = vpack.c.b16 %v2459, %v2455
  %v2492 = vpack.c.b16 %v2460, %v2456
  %2525 = vmatprep.subr.bf16.mxu0 %v2490
  %2526 = vmatpush1.bf16.msra.mxu0 %v2489
  %2527 = vmatprep.subr.bf16.mxu0 %v2486
  %2528 = vmatpush1.bf16.msra.mxu0 %v2485
  %2529 = vmatprep.subr.bf16.mxu0 %v2482
  %2530 = vmatpush1.bf16.msra.mxu0 %v2481
  %2531 = vmatprep.subr.bf16.mxu0 %v2478
  %2532 = vmatpush1.bf16.msra.mxu0 %v2477
  %2533 = vmatprep.subr.bf16.mxu0 %v2474
  %2534 = vmatpush1.bf16.msra.mxu0 %v2473
  %2535 = vmatprep.subr.bf16.mxu0 %v2470
  %2536 = vmatpush1.bf16.msra.mxu0 %v2469
  %2537 = vmatprep.subr.bf16.mxu0 %v2466
  %2538 = vmatpush1.bf16.msra.mxu0 %v2465
  %2539 = vmatprep.subr.bf16.mxu0 %v2462
  %2540 = vmatpush1.bf16.msra.mxu0 %v2461
  %2541 = vmatprep.subr.bf16.mxu0 0
  %2542 = vmatpush2.bf16.msra.mxu0 0
  %2543 = vmatprep.subr.bf16.mxu0 0
  %2544 = vmatpush2.bf16.msra.mxu0 0
  %2545 = vmatprep.subr.bf16.mxu0 0
  %2546 = vmatpush2.bf16.msra.mxu0 0
  %2547 = vmatprep.subr.bf16.mxu0 0
  %2548 = vmatpush2.bf16.msra.mxu0 0
  %2549 = vmatprep.subr.bf16.mxu0 0
  %2550 = vmatpush2.bf16.msra.mxu0 0
  %2551 = vmatprep.subr.bf16.mxu0 0
  %2552 = vmatpush2.bf16.msra.mxu0 0
  %2553 = vmatprep.subr.bf16.mxu0 0
  %2554 = vmatpush2.bf16.msra.mxu0 0
  %2555 = vmatprep.subr.bf16.mxu0 0
  %2556 = vmatpush2.bf16.msra.mxu0 0
  %2557 = vmatprep.mubr.bf16.mxu0 0
  %2558 = vmatmul.mubr.bf16.gmra.mxu0 %v2325
  %v2559 = vpop.f32.mrf.mxu0
  %v2560 = vadd.f32 0.0, %v2559
  %v2561 = vpop.f32.mrf.mxu0
  %v2562 = vadd.f32 0.0, %v2561
  %v2563 = vpop.f32.mrf.mxu0
  %v2564 = vpop.f32.mrf.mxu0
  %2565 = vdwg.mxu0
  %2566 = vmatprep.subr.bf16.mxu0 %v2492
  %2567 = vmatpush1.bf16.msra.mxu0 %v2491
  %2568 = vmatprep.subr.bf16.mxu0 %v2488
  %2569 = vmatpush1.bf16.msra.mxu0 %v2487
  %2570 = vmatprep.subr.bf16.mxu0 %v2484
  %2571 = vmatpush1.bf16.msra.mxu0 %v2483
  %2572 = vmatprep.subr.bf16.mxu0 %v2480
  %2573 = vmatpush1.bf16.msra.mxu0 %v2479
  %2574 = vmatprep.subr.bf16.mxu0 %v2476
  %2575 = vmatpush1.bf16.msra.mxu0 %v2475
  %2576 = vmatprep.subr.bf16.mxu0 %v2472
  %2577 = vmatpush1.bf16.msra.mxu0 %v2471
  %2578 = vmatprep.subr.bf16.mxu0 %v2468
  %2579 = vmatpush1.bf16.msra.mxu0 %v2467
  %2580 = vmatprep.subr.bf16.mxu0 %v2464
  %2581 = vmatpush1.bf16.msra.mxu0 %v2463
  %2582 = vmatprep.subr.bf16.mxu0 0
  %2583 = vmatpush2.bf16.msra.mxu0 0
  %2584 = vmatprep.subr.bf16.mxu0 0
  %2585 = vmatpush2.bf16.msra.mxu0 0
  %2586 = vmatprep.subr.bf16.mxu0 0
  %2587 = vmatpush2.bf16.msra.mxu0 0
  %2588 = vmatprep.subr.bf16.mxu0 0
  %2589 = vmatpush2.bf16.msra.mxu0 0
  %2590 = vmatprep.subr.bf16.mxu0 0
  %2591 = vmatpush2.bf16.msra.mxu0 0
  %2592 = vmatprep.subr.bf16.mxu0 0
  %2593 = vmatpush2.bf16.msra.mxu0 0
  %2594 = vmatprep.subr.bf16.mxu0 0
  %2595 = vmatpush2.bf16.msra.mxu0 0
  %2596 = vmatprep.subr.bf16.mxu0 0
  %2597 = vmatpush2.bf16.msra.mxu0 0
  %2598 = vmatprep.mubr.bf16.mxu0 0
  %2599 = vmatmul.mubr.bf16.gmra.mxu0 %v2325
  %v2600 = vpop.f32.mrf.mxu0
  %v2601 = vadd.f32 0.0, %v2600
  %v2602 = vpop.f32.mrf.mxu0
  %v2603 = vadd.f32 0.0, %v2602
  %v2604 = vpop.f32.mrf.mxu0
  %v2605 = vpop.f32.mrf.mxu0
  %2606 = vdwg.mxu0
  %v2607 = vadd.f32 %v2329, %v2560
  %v2608 = vadd.f32 %v2330, %v2562
  %v2609 = vadd.f32 %v2331, %v2601
  %v2610 = vadd.f32 %v2332, %v2603
  %v2611 = vxor.u32 %v2607, 2147483648
  %v2612 = vmul.f32 %v2611, 1.442695
  %v2613 = vpow.pop %v2612
  %v2614 = vadd.f32 %v2613, 1.0
  %v2615 = vrcp.pop %v2614
  %v2616 = vmul.f32 1.0, %v2615
  %v2617 = vxor.u32 %v2608, 2147483648
  %v2618 = vmul.f32 %v2617, 1.442695
  %v2619 = vpow.pop %v2618
  %v2620 = vadd.f32 %v2619, 1.0
  %v2621 = vrcp.pop %v2620
  %v2622 = vmul.f32 1.0, %v2621
  %v2623 = vtanh.pop %v2609
  %v2624 = vxor.u32 %v2610, 2147483648
  %v2625 = vmul.f32 %v2624, 1.442695
  %v2626 = vpow.pop %v2625
  %v2627 = vadd.f32 %v2626, 1.0
  %v2628 = vrcp.pop %v2627
  %v2629 = vmul.f32 1.0, %v2628
  %v2630 = vmul.f32 %v2622, %v2322
  %v2631 = vmul.f32 %v2616, %v2623
  %v2632 = vadd.f32 %v2630, %v2631
  %v2633 = vtanh.pop %v2632
  %v2634 = vmul.f32 %v2629, %v2633
  %v2635 = vpack.c.bf16 %v2634, %v2634
  %s2636 = scalar_lea.vmem [#allocation3], 24
  %2637 = vst [vmem:[%s2636] sm:$0xf] %v2635
  %s2638 = scalar_lea.vmem [#allocation2], 224
  %v2639 = vld [vmem:[%s2638] sm:$0xff]
  %v2640 = vld [vmem:[%s2638 + $0x8] sm:$0xff]
  %v2641 = vld [vmem:[%s2638 + $0x10] sm:$0xff]
  %v2642 = vld [vmem:[%s2638 + $0x18] sm:$0xff]
  %v2643 = vld [vmem:[%s2] sm:$0xff]
  %v2644 = vld [vmem:[%s2 + $0x8] sm:$0xff]
  %v2645 = vld [vmem:[%s2 + $0x10] sm:$0xff]
  %v2646 = vld [vmem:[%s2 + $0x18] sm:$0xff]
  %v2647 = vld [vmem:[%s2 + $0x20] sm:$0xff]
  %v2648 = vld [vmem:[%s2 + $0x28] sm:$0xff]
  %v2649 = vld [vmem:[%s2 + $0x30] sm:$0xff]
  %v2650 = vld [vmem:[%s2 + $0x38] sm:$0xff]
  %v2651 = vld [vmem:[%s2 + $0x40] sm:$0xff]
  %v2652 = vld [vmem:[%s2 + $0x48] sm:$0xff]
  %v2653 = vld [vmem:[%s2 + $0x50] sm:$0xff]
  %v2654 = vld [vmem:[%s2 + $0x58] sm:$0xff]
  %v2655 = vld [vmem:[%s2 + $0x60] sm:$0xff]
  %v2656 = vld [vmem:[%s2 + $0x68] sm:$0xff]
  %v2657 = vld [vmem:[%s2 + $0x70] sm:$0xff]
  %v2658 = vld [vmem:[%s2 + $0x78] sm:$0xff]
  %v2659 = vld [vmem:[%s2 + $0x80] sm:$0xff]
  %v2660 = vld [vmem:[%s2 + $0x88] sm:$0xff]
  %v2661 = vld [vmem:[%s2 + $0x90] sm:$0xff]
  %v2662 = vld [vmem:[%s2 + $0x98] sm:$0xff]
  %v2663 = vld [vmem:[%s2 + $0xa0] sm:$0xff]
  %v2664 = vld [vmem:[%s2 + $0xa8] sm:$0xff]
  %v2665 = vld [vmem:[%s2 + $0xb0] sm:$0xff]
  %v2666 = vld [vmem:[%s2 + $0xb8] sm:$0xff]
  %v2667 = vld [vmem:[%s2 + $0xc0] sm:$0xff]
  %v2668 = vld [vmem:[%s2 + $0xc8] sm:$0xff]
  %v2669 = vld [vmem:[%s2 + $0xd0] sm:$0xff]
  %v2670 = vld [vmem:[%s2 + $0xd8] sm:$0xff]
  %v2671 = vld [vmem:[%s2 + $0xe0] sm:$0xff]
  %v2672 = vld [vmem:[%s2 + $0xe8] sm:$0xff]
  %v2673 = vld [vmem:[%s2 + $0xf0] sm:$0xff]
  %v2674 = vld [vmem:[%s2 + $0xf8] sm:$0xff]
  %v2707 = vunpack.c.l.b16 %v2643
  %v2708 = vunpack.c.h.b16 %v2643
  %v2709 = vunpack.c.l.b16 %v2644
  %v2710 = vunpack.c.h.b16 %v2644
  %v2711 = vunpack.c.l.b16 %v2645
  %v2712 = vunpack.c.h.b16 %v2645
  %v2713 = vunpack.c.l.b16 %v2646
  %v2714 = vunpack.c.h.b16 %v2646
  %v2715 = vunpack.c.l.b16 %v2647
  %v2716 = vunpack.c.h.b16 %v2647
  %v2717 = vunpack.c.l.b16 %v2648
  %v2718 = vunpack.c.h.b16 %v2648
  %v2719 = vunpack.c.l.b16 %v2649
  %v2720 = vunpack.c.h.b16 %v2649
  %v2721 = vunpack.c.l.b16 %v2650
  %v2722 = vunpack.c.h.b16 %v2650
  %v2723 = vunpack.c.l.b16 %v2651
  %v2724 = vunpack.c.h.b16 %v2651
  %v2725 = vunpack.c.l.b16 %v2652
  %v2726 = vunpack.c.h.b16 %v2652
  %v2727 = vunpack.c.l.b16 %v2653
  %v2728 = vunpack.c.h.b16 %v2653
  %v2729 = vunpack.c.l.b16 %v2654
  %v2730 = vunpack.c.h.b16 %v2654
  %v2731 = vunpack.c.l.b16 %v2655
  %v2732 = vunpack.c.h.b16 %v2655
  %v2733 = vunpack.c.l.b16 %v2656
  %v2734 = vunpack.c.h.b16 %v2656
  %v2735 = vunpack.c.l.b16 %v2657
  %v2736 = vunpack.c.h.b16 %v2657
  %v2737 = vunpack.c.l.b16 %v2658
  %v2738 = vunpack.c.h.b16 %v2658
  %v2739 = vunpack.c.l.b16 %v2659
  %v2740 = vunpack.c.h.b16 %v2659
  %v2741 = vunpack.c.l.b16 %v2660
  %v2742 = vunpack.c.h.b16 %v2660
  %v2743 = vunpack.c.l.b16 %v2661
  %v2744 = vunpack.c.h.b16 %v2661
  %v2745 = vunpack.c.l.b16 %v2662
  %v2746 = vunpack.c.h.b16 %v2662
  %v2747 = vunpack.c.l.b16 %v2663
  %v2748 = vunpack.c.h.b16 %v2663
  %v2749 = vunpack.c.l.b16 %v2664
  %v2750 = vunpack.c.h.b16 %v2664
  %v2751 = vunpack.c.l.b16 %v2665
  %v2752 = vunpack.c.h.b16 %v2665
  %v2753 = vunpack.c.l.b16 %v2666
  %v2754 = vunpack.c.h.b16 %v2666
  %v2755 = vunpack.c.l.b16 %v2667
  %v2756 = vunpack.c.h.b16 %v2667
  %v2757 = vunpack.c.l.b16 %v2668
  %v2758 = vunpack.c.h.b16 %v2668
  %v2759 = vunpack.c.l.b16 %v2669
  %v2760 = vunpack.c.h.b16 %v2669
  %v2761 = vunpack.c.l.b16 %v2670
  %v2762 = vunpack.c.h.b16 %v2670
  %v2763 = vunpack.c.l.b16 %v2671
  %v2764 = vunpack.c.h.b16 %v2671
  %v2765 = vunpack.c.l.b16 %v2672
  %v2766 = vunpack.c.h.b16 %v2672
  %v2767 = vunpack.c.l.b16 %v2673
  %v2768 = vunpack.c.h.b16 %v2673
  %v2769 = vunpack.c.l.b16 %v2674
  %v2770 = vunpack.c.h.b16 %v2674
  %v2771 = vpack.c.b16 %v2711, %v2707
  %v2772 = vpack.c.b16 %v2712, %v2708
  %v2773 = vpack.c.b16 %v2713, %v2709
  %v2774 = vpack.c.b16 %v2714, %v2710
  %v2775 = vpack.c.b16 %v2719, %v2715
  %v2776 = vpack.c.b16 %v2720, %v2716
  %v2777 = vpack.c.b16 %v2721, %v2717
  %v2778 = vpack.c.b16 %v2722, %v2718
  %v2779 = vpack.c.b16 %v2727, %v2723
  %v2780 = vpack.c.b16 %v2728, %v2724
  %v2781 = vpack.c.b16 %v2729, %v2725
  %v2782 = vpack.c.b16 %v2730, %v2726
  %v2783 = vpack.c.b16 %v2735, %v2731
  %v2784 = vpack.c.b16 %v2736, %v2732
  %v2785 = vpack.c.b16 %v2737, %v2733
  %v2786 = vpack.c.b16 %v2738, %v2734
  %v2787 = vpack.c.b16 %v2743, %v2739
  %v2788 = vpack.c.b16 %v2744, %v2740
  %v2789 = vpack.c.b16 %v2745, %v2741
  %v2790 = vpack.c.b16 %v2746, %v2742
  %v2791 = vpack.c.b16 %v2751, %v2747
  %v2792 = vpack.c.b16 %v2752, %v2748
  %v2793 = vpack.c.b16 %v2753, %v2749
  %v2794 = vpack.c.b16 %v2754, %v2750
  %v2795 = vpack.c.b16 %v2759, %v2755
  %v2796 = vpack.c.b16 %v2760, %v2756
  %v2797 = vpack.c.b16 %v2761, %v2757
  %v2798 = vpack.c.b16 %v2762, %v2758
  %v2799 = vpack.c.b16 %v2767, %v2763
  %v2800 = vpack.c.b16 %v2768, %v2764
  %v2801 = vpack.c.b16 %v2769, %v2765
  %v2802 = vpack.c.b16 %v2770, %v2766
  %2835 = vmatprep.subr.bf16.mxu0 %v2800
  %2836 = vmatpush1.bf16.msra.mxu0 %v2799
  %2837 = vmatprep.subr.bf16.mxu0 %v2796
  %2838 = vmatpush1.bf16.msra.mxu0 %v2795
  %2839 = vmatprep.subr.bf16.mxu0 %v2792
  %2840 = vmatpush1.bf16.msra.mxu0 %v2791
  %2841 = vmatprep.subr.bf16.mxu0 %v2788
  %2842 = vmatpush1.bf16.msra.mxu0 %v2787
  %2843 = vmatprep.subr.bf16.mxu0 %v2784
  %2844 = vmatpush1.bf16.msra.mxu0 %v2783
  %2845 = vmatprep.subr.bf16.mxu0 %v2780
  %2846 = vmatpush1.bf16.msra.mxu0 %v2779
  %2847 = vmatprep.subr.bf16.mxu0 %v2776
  %2848 = vmatpush1.bf16.msra.mxu0 %v2775
  %2849 = vmatprep.subr.bf16.mxu0 %v2772
  %2850 = vmatpush1.bf16.msra.mxu0 %v2771
  %2851 = vmatprep.subr.bf16.mxu0 0
  %2852 = vmatpush2.bf16.msra.mxu0 0
  %2853 = vmatprep.subr.bf16.mxu0 0
  %2854 = vmatpush2.bf16.msra.mxu0 0
  %2855 = vmatprep.subr.bf16.mxu0 0
  %2856 = vmatpush2.bf16.msra.mxu0 0
  %2857 = vmatprep.subr.bf16.mxu0 0
  %2858 = vmatpush2.bf16.msra.mxu0 0
  %2859 = vmatprep.subr.bf16.mxu0 0
  %2860 = vmatpush2.bf16.msra.mxu0 0
  %2861 = vmatprep.subr.bf16.mxu0 0
  %2862 = vmatpush2.bf16.msra.mxu0 0
  %2863 = vmatprep.subr.bf16.mxu0 0
  %2864 = vmatpush2.bf16.msra.mxu0 0
  %2865 = vmatprep.subr.bf16.mxu0 0
  %2866 = vmatpush2.bf16.msra.mxu0 0
  %2867 = vmatprep.mubr.bf16.mxu0 0
  %2868 = vmatmul.mubr.bf16.gmra.mxu0 %v2635
  %v2869 = vpop.f32.mrf.mxu0
  %v2870 = vadd.f32 0.0, %v2869
  %v2871 = vpop.f32.mrf.mxu0
  %v2872 = vadd.f32 0.0, %v2871
  %v2873 = vpop.f32.mrf.mxu0
  %v2874 = vpop.f32.mrf.mxu0
  %2875 = vdwg.mxu0
  %2876 = vmatprep.subr.bf16.mxu0 %v2802
  %2877 = vmatpush1.bf16.msra.mxu0 %v2801
  %2878 = vmatprep.subr.bf16.mxu0 %v2798
  %2879 = vmatpush1.bf16.msra.mxu0 %v2797
  %2880 = vmatprep.subr.bf16.mxu0 %v2794
  %2881 = vmatpush1.bf16.msra.mxu0 %v2793
  %2882 = vmatprep.subr.bf16.mxu0 %v2790
  %2883 = vmatpush1.bf16.msra.mxu0 %v2789
  %2884 = vmatprep.subr.bf16.mxu0 %v2786
  %2885 = vmatpush1.bf16.msra.mxu0 %v2785
  %2886 = vmatprep.subr.bf16.mxu0 %v2782
  %2887 = vmatpush1.bf16.msra.mxu0 %v2781
  %2888 = vmatprep.subr.bf16.mxu0 %v2778
  %2889 = vmatpush1.bf16.msra.mxu0 %v2777
  %2890 = vmatprep.subr.bf16.mxu0 %v2774
  %2891 = vmatpush1.bf16.msra.mxu0 %v2773
  %2892 = vmatprep.subr.bf16.mxu0 0
  %2893 = vmatpush2.bf16.msra.mxu0 0
  %2894 = vmatprep.subr.bf16.mxu0 0
  %2895 = vmatpush2.bf16.msra.mxu0 0
  %2896 = vmatprep.subr.bf16.mxu0 0
  %2897 = vmatpush2.bf16.msra.mxu0 0
  %2898 = vmatprep.subr.bf16.mxu0 0
  %2899 = vmatpush2.bf16.msra.mxu0 0
  %2900 = vmatprep.subr.bf16.mxu0 0
  %2901 = vmatpush2.bf16.msra.mxu0 0
  %2902 = vmatprep.subr.bf16.mxu0 0
  %2903 = vmatpush2.bf16.msra.mxu0 0
  %2904 = vmatprep.subr.bf16.mxu0 0
  %2905 = vmatpush2.bf16.msra.mxu0 0
  %2906 = vmatprep.subr.bf16.mxu0 0
  %2907 = vmatpush2.bf16.msra.mxu0 0
  %2908 = vmatprep.mubr.bf16.mxu0 0
  %2909 = vmatmul.mubr.bf16.gmra.mxu0 %v2635
  %v2910 = vpop.f32.mrf.mxu0
  %v2911 = vadd.f32 0.0, %v2910
  %v2912 = vpop.f32.mrf.mxu0
  %v2913 = vadd.f32 0.0, %v2912
  %v2914 = vpop.f32.mrf.mxu0
  %v2915 = vpop.f32.mrf.mxu0
  %2916 = vdwg.mxu0
  %v2917 = vadd.f32 %v2639, %v2870
  %v2918 = vadd.f32 %v2640, %v2872
  %v2919 = vadd.f32 %v2641, %v2911
  %v2920 = vadd.f32 %v2642, %v2913
  %v2921 = vxor.u32 %v2917, 2147483648
  %v2922 = vmul.f32 %v2921, 1.442695
  %v2923 = vpow.pop %v2922
  %v2924 = vadd.f32 %v2923, 1.0
  %v2925 = vrcp.pop %v2924
  %v2926 = vmul.f32 1.0, %v2925
  %v2927 = vxor.u32 %v2918, 2147483648
  %v2928 = vmul.f32 %v2927, 1.442695
  %v2929 = vpow.pop %v2928
  %v2930 = vadd.f32 %v2929, 1.0
  %v2931 = vrcp.pop %v2930
  %v2932 = vmul.f32 1.0, %v2931
  %v2933 = vtanh.pop %v2919
  %v2934 = vxor.u32 %v2920, 2147483648
  %v2935 = vmul.f32 %v2934, 1.442695
  %v2936 = vpow.pop %v2935
  %v2937 = vadd.f32 %v2936, 1.0
  %v2938 = vrcp.pop %v2937
  %v2939 = vmul.f32 1.0, %v2938
  %v2940 = vmul.f32 %v2932, %v2632
  %v2941 = vmul.f32 %v2926, %v2933
  %v2942 = vadd.f32 %v2940, %v2941
  %v2943 = vtanh.pop %v2942
  %v2944 = vmul.f32 %v2939, %v2943
  %v2945 = vpack.c.bf16 %v2944, %v2944
  %s2946 = scalar_lea.vmem [#allocation3], 28
  %2947 = vst [vmem:[%s2946] sm:$0xf] %v2945
  %v2948 = vld [vmem:[#allocation3] sm:$0xf]
  %v2949 = vld [vmem:[#allocation3 + $0x4] sm:$0xf]
  %v2950 = vld [vmem:[#allocation3 + $0x8] sm:$0xf]
  %v2951 = vld [vmem:[#allocation3 + $0xc] sm:$0xf]
  %v2952 = vld [vmem:[#allocation3 + $0x10] sm:$0xf]
  %v2953 = vld [vmem:[#allocation3 + $0x14] sm:$0xf]
  %v2954 = vld [vmem:[#allocation3 + $0x18] sm:$0xf]
  %v2955 = vld [vmem:[#allocation3 + $0x1c] sm:$0xf]
  %v2956 = vld [vmem:[%s4] sm:$0xff]
  %v2957 = vld [vmem:[%s4 + $0x8] sm:$0xff]
  %v2958 = vld [vmem:[%s4 + $0x10] sm:$0xff]
  %v2959 = vld [vmem:[%s4 + $0x18] sm:$0xff]
  %v2960 = vld [vmem:[%s4 + $0x20] sm:$0xff]
  %v2961 = vld [vmem:[%s4 + $0x28] sm:$0xff]
  %v2962 = vld [vmem:[%s4 + $0x30] sm:$0xff]
  %v2963 = vld [vmem:[%s4 + $0x38] sm:$0xff]
  %v2964 = vld [vmem:[%s4 + $0x40] sm:$0xff]
  %v2965 = vld [vmem:[%s4 + $0x48] sm:$0xff]
  %v2966 = vld [vmem:[%s4 + $0x50] sm:$0xff]
  %v2967 = vld [vmem:[%s4 + $0x58] sm:$0xff]
  %v2968 = vld [vmem:[%s4 + $0x60] sm:$0xff]
  %v2969 = vld [vmem:[%s4 + $0x68] sm:$0xff]
  %v2970 = vld [vmem:[%s4 + $0x70] sm:$0xff]
  %v2971 = vld [vmem:[%s4 + $0x78] sm:$0xff]
  %v2972 = vld [vmem:[%s4 + $0x80] sm:$0xff]
  %v2973 = vld [vmem:[%s4 + $0x88] sm:$0xff]
  %v2974 = vld [vmem:[%s4 + $0x90] sm:$0xff]
  %v2975 = vld [vmem:[%s4 + $0x98] sm:$0xff]
  %v2976 = vld [vmem:[%s4 + $0xa0] sm:$0xff]
  %v2977 = vld [vmem:[%s4 + $0xa8] sm:$0xff]
  %v2978 = vld [vmem:[%s4 + $0xb0] sm:$0xff]
  %v2979 = vld [vmem:[%s4 + $0xb8] sm:$0xff]
  %v2980 = vld [vmem:[%s4 + $0xc0] sm:$0xff]
  %v2981 = vld [vmem:[%s4 + $0xc8] sm:$0xff]
  %v2982 = vld [vmem:[%s4 + $0xd0] sm:$0xff]
  %v2983 = vld [vmem:[%s4 + $0xd8] sm:$0xff]
  %v2984 = vld [vmem:[%s4 + $0xe0] sm:$0xff]
  %v2985 = vld [vmem:[%s4 + $0xe8] sm:$0xff]
  %v2986 = vld [vmem:[%s4 + $0xf0] sm:$0xff]
  %v2987 = vld [vmem:[%s4 + $0xf8] sm:$0xff]
  %v2988 = vld [vmem:[%s6] sm:$0xf]
  %v2990 = vlaneseq
  %v2991 = vshrl.u32 %v2990, 7
  %v2992 = vsub.s32 0, %v2991
  %v2993 = vrot.slane %v2988, %v2992
  %v2994 = vlaneseq
  %v2995 = vshrl.u32 %v2994, 7
  %v2996 = vsub.s32 1, %v2995
  %v2997 = vrot.slane %v2988, %v2996
  %v2998 = vlaneseq
  %v2999 = vshrl.u32 %v2998, 7
  %v3000 = vsub.s32 2, %v2999
  %v3001 = vrot.slane %v2988, %v3000
  %v3002 = vlaneseq
  %v3003 = vshrl.u32 %v3002, 7
  %v3004 = vsub.s32 3, %v3003
  %v3005 = vrot.slane %v2988, %v3004
  %v3018 = vunpack.c.l.b16 %v2948
  %v3019 = vunpack.c.l.b16 %v2949
  %v3020 = vunpack.c.l.b16 %v2950
  %v3021 = vunpack.c.l.b16 %v2951
  %v3022 = vunpack.c.l.b16 %v2952
  %v3023 = vunpack.c.l.b16 %v2953
  %v3024 = vunpack.c.l.b16 %v2954
  %v3025 = vunpack.c.l.b16 %v2955
  %v3026 = vpack.c.b16 %v3019, %v3018
  %v3027 = vpack.c.b16 %v3021, %v3020
  %v3028 = vpack.c.b16 %v3023, %v3022
  %v3029 = vpack.c.b16 %v3025, %v3024
  %v3066 = vunpack.c.l.b16 %v2956
  %v3067 = vunpack.c.h.b16 %v2956
  %v3068 = vunpack.c.l.b16 %v2957
  %v3069 = vunpack.c.h.b16 %v2957
  %v3070 = vunpack.c.l.b16 %v2958
  %v3071 = vunpack.c.h.b16 %v2958
  %v3072 = vunpack.c.l.b16 %v2959
  %v3073 = vunpack.c.h.b16 %v2959
  %v3074 = vunpack.c.l.b16 %v2960
  %v3075 = vunpack.c.h.b16 %v2960
  %v3076 = vunpack.c.l.b16 %v2961
  %v3077 = vunpack.c.h.b16 %v2961
  %v3078 = vunpack.c.l.b16 %v2962
  %v3079 = vunpack.c.h.b16 %v2962
  %v3080 = vunpack.c.l.b16 %v2963
  %v3081 = vunpack.c.h.b16 %v2963
  %v3082 = vunpack.c.l.b16 %v2964
  %v3083 = vunpack.c.h.b16 %v2964
  %v3084 = vunpack.c.l.b16 %v2965
  %v3085 = vunpack.c.h.b16 %v2965
  %v3086 = vunpack.c.l.b16 %v2966
  %v3087 = vunpack.c.h.b16 %v2966
  %v3088 = vunpack.c.l.b16 %v2967
  %v3089 = vunpack.c.h.b16 %v2967
  %v3090 = vunpack.c.l.b16 %v2968
  %v3091 = vunpack.c.h.b16 %v2968
  %v3092 = vunpack.c.l.b16 %v2969
  %v3093 = vunpack.c.h.b16 %v2969
  %v3094 = vunpack.c.l.b16 %v2970
  %v3095 = vunpack.c.h.b16 %v2970
  %v3096 = vunpack.c.l.b16 %v2971
  %v3097 = vunpack.c.h.b16 %v2971
  %v3098 = vunpack.c.l.b16 %v2972
  %v3099 = vunpack.c.h.b16 %v2972
  %v3100 = vunpack.c.l.b16 %v2973
  %v3101 = vunpack.c.h.b16 %v2973
  %v3102 = vunpack.c.l.b16 %v2974
  %v3103 = vunpack.c.h.b16 %v2974
  %v3104 = vunpack.c.l.b16 %v2975
  %v3105 = vunpack.c.h.b16 %v2975
  %v3106 = vunpack.c.l.b16 %v2976
  %v3107 = vunpack.c.h.b16 %v2976
  %v3108 = vunpack.c.l.b16 %v2977
  %v3109 = vunpack.c.h.b16 %v2977
  %v3110 = vunpack.c.l.b16 %v2978
  %v3111 = vunpack.c.h.b16 %v2978
  %v3112 = vunpack.c.l.b16 %v2979
  %v3113 = vunpack.c.h.b16 %v2979
  %v3114 = vunpack.c.l.b16 %v2980
  %v3115 = vunpack.c.h.b16 %v2980
  %v3116 = vunpack.c.l.b16 %v2981
  %v3117 = vunpack.c.h.b16 %v2981
  %v3118 = vunpack.c.l.b16 %v2982
  %v3119 = vunpack.c.h.b16 %v2982
  %v3120 = vunpack.c.l.b16 %v2983
  %v3121 = vunpack.c.h.b16 %v2983
  %v3122 = vunpack.c.l.b16 %v2984
  %v3123 = vunpack.c.h.b16 %v2984
  %v3124 = vunpack.c.l.b16 %v2985
  %v3125 = vunpack.c.h.b16 %v2985
  %v3126 = vunpack.c.l.b16 %v2986
  %v3127 = vunpack.c.h.b16 %v2986
  %v3128 = vunpack.c.l.b16 %v2987
  %v3129 = vunpack.c.h.b16 %v2987
  %v3130 = vpack.c.b16 %v3070, %v3066
  %v3131 = vpack.c.b16 %v3071, %v3067
  %v3132 = vpack.c.b16 %v3072, %v3068
  %v3133 = vpack.c.b16 %v3073, %v3069
  %v3134 = vpack.c.b16 %v3078, %v3074
  %v3135 = vpack.c.b16 %v3079, %v3075
  %v3136 = vpack.c.b16 %v3080, %v3076
  %v3137 = vpack.c.b16 %v3081, %v3077
  %v3138 = vpack.c.b16 %v3086, %v3082
  %v3139 = vpack.c.b16 %v3087, %v3083
  %v3140 = vpack.c.b16 %v3088, %v3084
  %v3141 = vpack.c.b16 %v3089, %v3085
  %v3142 = vpack.c.b16 %v3094, %v3090
  %v3143 = vpack.c.b16 %v3095, %v3091
  %v3144 = vpack.c.b16 %v3096, %v3092
  %v3145 = vpack.c.b16 %v3097, %v3093
  %v3146 = vpack.c.b16 %v3102, %v3098
  %v3147 = vpack.c.b16 %v3103, %v3099
  %v3148 = vpack.c.b16 %v3104, %v3100
  %v3149 = vpack.c.b16 %v3105, %v3101
  %v3150 = vpack.c.b16 %v3110, %v3106
  %v3151 = vpack.c.b16 %v3111, %v3107
  %v3152 = vpack.c.b16 %v3112, %v3108
  %v3153 = vpack.c.b16 %v3113, %v3109
  %v3154 = vpack.c.b16 %v3118, %v3114
  %v3155 = vpack.c.b16 %v3119, %v3115
  %v3156 = vpack.c.b16 %v3120, %v3116
  %v3157 = vpack.c.b16 %v3121, %v3117
  %v3158 = vpack.c.b16 %v3126, %v3122
  %v3159 = vpack.c.b16 %v3127, %v3123
  %v3160 = vpack.c.b16 %v3128, %v3124
  %v3161 = vpack.c.b16 %v3129, %v3125
  %3194 = vmatprep.subr.bf16.mxu0 %v3159
  %3195 = vmatpush1.bf16.msra.mxu0 %v3158
  %3196 = vmatprep.subr.bf16.mxu0 %v3155
  %3197 = vmatpush1.bf16.msra.mxu0 %v3154
  %3198 = vmatprep.subr.bf16.mxu0 %v3151
  %3199 = vmatpush1.bf16.msra.mxu0 %v3150
  %3200 = vmatprep.subr.bf16.mxu0 %v3147
  %3201 = vmatpush1.bf16.msra.mxu0 %v3146
  %3202 = vmatprep.subr.bf16.mxu0 %v3143
  %3203 = vmatpush1.bf16.msra.mxu0 %v3142
  %3204 = vmatprep.subr.bf16.mxu0 %v3139
  %3205 = vmatpush1.bf16.msra.mxu0 %v3138
  %3206 = vmatprep.subr.bf16.mxu0 %v3135
  %3207 = vmatpush1.bf16.msra.mxu0 %v3134
  %3208 = vmatprep.subr.bf16.mxu0 %v3131
  %3209 = vmatpush1.bf16.msra.mxu0 %v3130
  %3210 = vmatprep.subr.bf16.mxu0 0
  %3211 = vmatpush2.bf16.msra.mxu0 0
  %3212 = vmatprep.subr.bf16.mxu0 0
  %3213 = vmatpush2.bf16.msra.mxu0 0
  %3214 = vmatprep.subr.bf16.mxu0 0
  %3215 = vmatpush2.bf16.msra.mxu0 0
  %3216 = vmatprep.subr.bf16.mxu0 0
  %3217 = vmatpush2.bf16.msra.mxu0 0
  %3218 = vmatprep.subr.bf16.mxu0 0
  %3219 = vmatpush2.bf16.msra.mxu0 0
  %3220 = vmatprep.subr.bf16.mxu0 0
  %3221 = vmatpush2.bf16.msra.mxu0 0
  %3222 = vmatprep.subr.bf16.mxu0 0
  %3223 = vmatpush2.bf16.msra.mxu0 0
  %3224 = vmatprep.subr.bf16.mxu0 0
  %3225 = vmatpush2.bf16.msra.mxu0 0
  %3226 = vmatprep.mubr.bf16.mxu0 0
  %3227 = vmatmul.mubr.bf16.gmra.mxu0 %v3026
  %v3228 = vpop.f32.mrf.mxu0
  %v3229 = vadd.f32 %v2993, %v3228
  %v3230 = vpop.f32.mrf.mxu0
  %v3231 = vadd.f32 %v2997, %v3230
  %v3232 = vpop.f32.mrf.mxu0
  %v3233 = vadd.f32 %v2993, %v3232
  %v3234 = vpop.f32.mrf.mxu0
  %v3235 = vadd.f32 %v2997, %v3234
  %3236 = vmatprep.mubr.bf16.mxu0 0
  %3237 = vmatmul.mubr.bf16.gmra.mxu0 %v3027
  %v3238 = vpop.f32.mrf.mxu0
  %v3239 = vadd.f32 %v2993, %v3238
  %v3240 = vpop.f32.mrf.mxu0
  %v3241 = vadd.f32 %v2997, %v3240
  %v3242 = vpop.f32.mrf.mxu0
  %v3243 = vadd.f32 %v2993, %v3242
  %v3244 = vpop.f32.mrf.mxu0
  %v3245 = vadd.f32 %v2997, %v3244
  %3246 = vmatprep.mubr.bf16.mxu0 0
  %3247 = vmatmul.mubr.bf16.gmra.mxu0 %v3028
  %v3248 = vpop.f32.mrf.mxu0
  %v3249 = vadd.f32 %v2993, %v3248
  %v3250 = vpop.f32.mrf.mxu0
  %v3251 = vadd.f32 %v2997, %v3250
  %v3252 = vpop.f32.mrf.mxu0
  %v3253 = vadd.f32 %v2993, %v3252
  %v3254 = vpop.f32.mrf.mxu0
  %v3255 = vadd.f32 %v2997, %v3254
  %3256 = vmatprep.mubr.bf16.mxu0 0
  %3257 = vmatmul.mubr.bf16.gmra.mxu0 %v3029
  %v3258 = vpop.f32.mrf.mxu0
  %v3259 = vadd.f32 %v2993, %v3258
  %v3260 = vpop.f32.mrf.mxu0
  %v3261 = vadd.f32 %v2997, %v3260
  %v3262 = vpop.f32.mrf.mxu0
  %v3263 = vadd.f32 %v2993, %v3262
  %v3264 = vpop.f32.mrf.mxu0
  %v3265 = vadd.f32 %v2997, %v3264
  %3266 = vdwg.mxu0
  %3267 = vmatprep.subr.bf16.mxu0 %v3161
  %3268 = vmatpush1.bf16.msra.mxu0 %v3160
  %3269 = vmatprep.subr.bf16.mxu0 %v3157
  %3270 = vmatpush1.bf16.msra.mxu0 %v3156
  %3271 = vmatprep.subr.bf16.mxu0 %v3153
  %3272 = vmatpush1.bf16.msra.mxu0 %v3152
  %3273 = vmatprep.subr.bf16.mxu0 %v3149
  %3274 = vmatpush1.bf16.msra.mxu0 %v3148
  %3275 = vmatprep.subr.bf16.mxu0 %v3145
  %3276 = vmatpush1.bf16.msra.mxu0 %v3144
  %3277 = vmatprep.subr.bf16.mxu0 %v3141
  %3278 = vmatpush1.bf16.msra.mxu0 %v3140
  %3279 = vmatprep.subr.bf16.mxu0 %v3137
  %3280 = vmatpush1.bf16.msra.mxu0 %v3136
  %3281 = vmatprep.subr.bf16.mxu0 %v3133
  %3282 = vmatpush1.bf16.msra.mxu0 %v3132
  %3283 = vmatprep.subr.bf16.mxu0 0
  %3284 = vmatpush2.bf16.msra.mxu0 0
  %3285 = vmatprep.subr.bf16.mxu0 0
  %3286 = vmatpush2.bf16.msra.mxu0 0
  %3287 = vmatprep.subr.bf16.mxu0 0
  %3288 = vmatpush2.bf16.msra.mxu0 0
  %3289 = vmatprep.subr.bf16.mxu0 0
  %3290 = vmatpush2.bf16.msra.mxu0 0
  %3291 = vmatprep.subr.bf16.mxu0 0
  %3292 = vmatpush2.bf16.msra.mxu0 0
  %3293 = vmatprep.subr.bf16.mxu0 0
  %3294 = vmatpush2.bf16.msra.mxu0 0
  %3295 = vmatprep.subr.bf16.mxu0 0
  %3296 = vmatpush2.bf16.msra.mxu0 0
  %3297 = vmatprep.subr.bf16.mxu0 0
  %3298 = vmatpush2.bf16.msra.mxu0 0
  %3299 = vmatprep.mubr.bf16.mxu0 0
  %3300 = vmatmul.mubr.bf16.gmra.mxu0 %v3026
  %v3301 = vpop.f32.mrf.mxu0
  %v3302 = vadd.f32 %v3001, %v3301
  %v3303 = vpop.f32.mrf.mxu0
  %v3304 = vadd.f32 %v3005, %v3303
  %v3305 = vpop.f32.mrf.mxu0
  %v3306 = vadd.f32 %v3001, %v3305
  %v3307 = vpop.f32.mrf.mxu0
  %v3308 = vadd.f32 %v3005, %v3307
  %3309 = vmatprep.mubr.bf16.mxu0 0
  %3310 = vmatmul.mubr.bf16.gmra.mxu0 %v3027
  %v3311 = vpop.f32.mrf.mxu0
  %v3312 = vadd.f32 %v3001, %v3311
  %v3313 = vpop.f32.mrf.mxu0
  %v3314 = vadd.f32 %v3005, %v3313
  %v3315 = vpop.f32.mrf.mxu0
  %v3316 = vadd.f32 %v3001, %v3315
  %v3317 = vpop.f32.mrf.mxu0
  %v3318 = vadd.f32 %v3005, %v3317
  %3319 = vmatprep.mubr.bf16.mxu0 0
  %3320 = vmatmul.mubr.bf16.gmra.mxu0 %v3028
  %v3321 = vpop.f32.mrf.mxu0
  %v3322 = vadd.f32 %v3001, %v3321
  %v3323 = vpop.f32.mrf.mxu0
  %v3324 = vadd.f32 %v3005, %v3323
  %v3325 = vpop.f32.mrf.mxu0
  %v3326 = vadd.f32 %v3001, %v3325
  %v3327 = vpop.f32.mrf.mxu0
  %v3328 = vadd.f32 %v3005, %v3327
  %3329 = vmatprep.mubr.bf16.mxu0 0
  %3330 = vmatmul.mubr.bf16.gmra.mxu0 %v3029
  %v3331 = vpop.f32.mrf.mxu0
  %v3332 = vadd.f32 %v3001, %v3331
  %v3333 = vpop.f32.mrf.mxu0
  %v3334 = vadd.f32 %v3005, %v3333
  %v3335 = vpop.f32.mrf.mxu0
  %v3336 = vadd.f32 %v3001, %v3335
  %v3337 = vpop.f32.mrf.mxu0
  %v3338 = vadd.f32 %v3005, %v3337
  %3339 = vdwg.mxu0
  %3340 = vst [vmem:[#allocation2] sm:$0xff] %v3229
  %3341 = vst [vmem:[#allocation2 + $0x8] sm:$0xff] %v3231
  %3342 = vst [vmem:[#allocation2 + $0x10] sm:$0xff] %v3302
  %3343 = vst [vmem:[#allocation2 + $0x18] sm:$0xff] %v3304
  %3344 = vst [vmem:[#allocation2 + $0x20] sm:$0xff] %v3233
  %3345 = vst [vmem:[#allocation2 + $0x28] sm:$0xff] %v3235
  %3346 = vst [vmem:[#allocation2 + $0x30] sm:$0xff] %v3306
  %3347 = vst [vmem:[#allocation2 + $0x38] sm:$0xff] %v3308
  %3348 = vst [vmem:[#allocation2 + $0x40] sm:$0xff] %v3239
  %3349 = vst [vmem:[#allocation2 + $0x48] sm:$0xff] %v3241
  %3350 = vst [vmem:[#allocation2 + $0x50] sm:$0xff] %v3312
  %3351 = vst [vmem:[#allocation2 + $0x58] sm:$0xff] %v3314
  %3352 = vst [vmem:[#allocation2 + $0x60] sm:$0xff] %v3243
  %3353 = vst [vmem:[#allocation2 + $0x68] sm:$0xff] %v3245
  %3354 = vst [vmem:[#allocation2 + $0x70] sm:$0xff] %v3316
  %3355 = vst [vmem:[#allocation2 + $0x78] sm:$0xff] %v3318
  %3356 = vst [vmem:[#allocation2 + $0x80] sm:$0xff] %v3249
  %3357 = vst [vmem:[#allocation2 + $0x88] sm:$0xff] %v3251
  %3358 = vst [vmem:[#allocation2 + $0x90] sm:$0xff] %v3322
  %3359 = vst [vmem:[#allocation2 + $0x98] sm:$0xff] %v3324
  %3360 = vst [vmem:[#allocation2 + $0xa0] sm:$0xff] %v3253
  %3361 = vst [vmem:[#allocation2 + $0xa8] sm:$0xff] %v3255
  %3362 = vst [vmem:[#allocation2 + $0xb0] sm:$0xff] %v3326
  %3363 = vst [vmem:[#allocation2 + $0xb8] sm:$0xff] %v3328
  %3364 = vst [vmem:[#allocation2 + $0xc0] sm:$0xff] %v3259
  %3365 = vst [vmem:[#allocation2 + $0xc8] sm:$0xff] %v3261
  %3366 = vst [vmem:[#allocation2 + $0xd0] sm:$0xff] %v3332
  %3367 = vst [vmem:[#allocation2 + $0xd8] sm:$0xff] %v3334
  %3368 = vst [vmem:[#allocation2 + $0xe0] sm:$0xff] %v3263
  %3369 = vst [vmem:[#allocation2 + $0xe8] sm:$0xff] %v3265
  %3370 = vst [vmem:[#allocation2 + $0xf0] sm:$0xff] %v3336
  %3371 = vst [vmem:[#allocation2 + $0xf8] sm:$0xff] %v3338
  %v3372 = vld [vmem:[#allocation2] sm:$0xff]
  %v3373 = vld [vmem:[#allocation2 + $0x8] sm:$0xff]
  %v3374 = vld [vmem:[#allocation2 + $0x10] sm:$0xff]
  %v3375 = vld [vmem:[#allocation2 + $0x18] sm:$0xff]
  %v3376 = vld [vmem:[%s5] sm:$0xff]
  %v3377 = vld [vmem:[%s5 + $0x8] sm:$0xff]
  %v3378 = vld [vmem:[%s5 + $0x10] sm:$0xff]
  %v3379 = vld [vmem:[%s5 + $0x18] sm:$0xff]
  %v3380 = vld [vmem:[%s5 + $0x20] sm:$0xff]
  %v3381 = vld [vmem:[%s5 + $0x28] sm:$0xff]
  %v3382 = vld [vmem:[%s5 + $0x30] sm:$0xff]
  %v3383 = vld [vmem:[%s5 + $0x38] sm:$0xff]
  %v3384 = vld [vmem:[%s5 + $0x40] sm:$0xff]
  %v3385 = vld [vmem:[%s5 + $0x48] sm:$0xff]
  %v3386 = vld [vmem:[%s5 + $0x50] sm:$0xff]
  %v3387 = vld [vmem:[%s5 + $0x58] sm:$0xff]
  %v3388 = vld [vmem:[%s5 + $0x60] sm:$0xff]
  %v3389 = vld [vmem:[%s5 + $0x68] sm:$0xff]
  %v3390 = vld [vmem:[%s5 + $0x70] sm:$0xff]
  %v3391 = vld [vmem:[%s5 + $0x78] sm:$0xff]
  %v3392 = vld [vmem:[%s5 + $0x80] sm:$0xff]
  %v3393 = vld [vmem:[%s5 + $0x88] sm:$0xff]
  %v3394 = vld [vmem:[%s5 + $0x90] sm:$0xff]
  %v3395 = vld [vmem:[%s5 + $0x98] sm:$0xff]
  %v3396 = vld [vmem:[%s5 + $0xa0] sm:$0xff]
  %v3397 = vld [vmem:[%s5 + $0xa8] sm:$0xff]
  %v3398 = vld [vmem:[%s5 + $0xb0] sm:$0xff]
  %v3399 = vld [vmem:[%s5 + $0xb8] sm:$0xff]
  %v3400 = vld [vmem:[%s5 + $0xc0] sm:$0xff]
  %v3401 = vld [vmem:[%s5 + $0xc8] sm:$0xff]
  %v3402 = vld [vmem:[%s5 + $0xd0] sm:$0xff]
  %v3403 = vld [vmem:[%s5 + $0xd8] sm:$0xff]
  %v3404 = vld [vmem:[%s5 + $0xe0] sm:$0xff]
  %v3405 = vld [vmem:[%s5 + $0xe8] sm:$0xff]
  %v3406 = vld [vmem:[%s5 + $0xf0] sm:$0xff]
  %v3407 = vld [vmem:[%s5 + $0xf8] sm:$0xff]
  %v3440 = vunpack.c.l.b16 %v3376
  %v3441 = vunpack.c.h.b16 %v3376
  %v3442 = vunpack.c.l.b16 %v3377
  %v3443 = vunpack.c.h.b16 %v3377
  %v3444 = vunpack.c.l.b16 %v3378
  %v3445 = vunpack.c.h.b16 %v3378
  %v3446 = vunpack.c.l.b16 %v3379
  %v3447 = vunpack.c.h.b16 %v3379
  %v3448 = vunpack.c.l.b16 %v3380
  %v3449 = vunpack.c.h.b16 %v3380
  %v3450 = vunpack.c.l.b16 %v3381
  %v3451 = vunpack.c.h.b16 %v3381
  %v3452 = vunpack.c.l.b16 %v3382
  %v3453 = vunpack.c.h.b16 %v3382
  %v3454 = vunpack.c.l.b16 %v3383
  %v3455 = vunpack.c.h.b16 %v3383
  %v3456 = vunpack.c.l.b16 %v3384
  %v3457 = vunpack.c.h.b16 %v3384
  %v3458 = vunpack.c.l.b16 %v3385
  %v3459 = vunpack.c.h.b16 %v3385
  %v3460 = vunpack.c.l.b16 %v3386
  %v3461 = vunpack.c.h.b16 %v3386
  %v3462 = vunpack.c.l.b16 %v3387
  %v3463 = vunpack.c.h.b16 %v3387
  %v3464 = vunpack.c.l.b16 %v3388
  %v3465 = vunpack.c.h.b16 %v3388
  %v3466 = vunpack.c.l.b16 %v3389
  %v3467 = vunpack.c.h.b16 %v3389
  %v3468 = vunpack.c.l.b16 %v3390
  %v3469 = vunpack.c.h.b16 %v3390
  %v3470 = vunpack.c.l.b16 %v3391
  %v3471 = vunpack.c.h.b16 %v3391
  %v3472 = vunpack.c.l.b16 %v3392
  %v3473 = vunpack.c.h.b16 %v3392
  %v3474 = vunpack.c.l.b16 %v3393
  %v3475 = vunpack.c.h.b16 %v3393
  %v3476 = vunpack.c.l.b16 %v3394
  %v3477 = vunpack.c.h.b16 %v3394
  %v3478 = vunpack.c.l.b16 %v3395
  %v3479 = vunpack.c.h.b16 %v3395
  %v3480 = vunpack.c.l.b16 %v3396
  %v3481 = vunpack.c.h.b16 %v3396
  %v3482 = vunpack.c.l.b16 %v3397
  %v3483 = vunpack.c.h.b16 %v3397
  %v3484 = vunpack.c.l.b16 %v3398
  %v3485 = vunpack.c.h.b16 %v3398
  %v3486 = vunpack.c.l.b16 %v3399
  %v3487 = vunpack.c.h.b16 %v3399
  %v3488 = vunpack.c.l.b16 %v3400
  %v3489 = vunpack.c.h.b16 %v3400
  %v3490 = vunpack.c.l.b16 %v3401
  %v3491 = vunpack.c.h.b16 %v3401
  %v3492 = vunpack.c.l.b16 %v3402
  %v3493 = vunpack.c.h.b16 %v3402
  %v3494 = vunpack.c.l.b16 %v3403
  %v3495 = vunpack.c.h.b16 %v3403
  %v3496 = vunpack.c.l.b16 %v3404
  %v3497 = vunpack.c.h.b16 %v3404
  %v3498 = vunpack.c.l.b16 %v3405
  %v3499 = vunpack.c.h.b16 %v3405
  %v3500 = vunpack.c.l.b16 %v3406
  %v3501 = vunpack.c.h.b16 %v3406
  %v3502 = vunpack.c.l.b16 %v3407
  %v3503 = vunpack.c.h.b16 %v3407
  %v3504 = vpack.c.b16 %v3444, %v3440
  %v3505 = vpack.c.b16 %v3445, %v3441
  %v3506 = vpack.c.b16 %v3446, %v3442
  %v3507 = vpack.c.b16 %v3447, %v3443
  %v3508 = vpack.c.b16 %v3452, %v3448
  %v3509 = vpack.c.b16 %v3453, %v3449
  %v3510 = vpack.c.b16 %v3454, %v3450
  %v3511 = vpack.c.b16 %v3455, %v3451
  %v3512 = vpack.c.b16 %v3460, %v3456
  %v3513 = vpack.c.b16 %v3461, %v3457
  %v3514 = vpack.c.b16 %v3462, %v3458
  %v3515 = vpack.c.b16 %v3463, %v3459
  %v3516 = vpack.c.b16 %v3468, %v3464
  %v3517 = vpack.c.b16 %v3469, %v3465
  %v3518 = vpack.c.b16 %v3470, %v3466
  %v3519 = vpack.c.b16 %v3471, %v3467
  %v3520 = vpack.c.b16 %v3476, %v3472
  %v3521 = vpack.c.b16 %v3477, %v3473
  %v3522 = vpack.c.b16 %v3478, %v3474
  %v3523 = vpack.c.b16 %v3479, %v3475
  %v3524 = vpack.c.b16 %v3484, %v3480
  %v3525 = vpack.c.b16 %v3485, %v3481
  %v3526 = vpack.c.b16 %v3486, %v3482
  %v3527 = vpack.c.b16 %v3487, %v3483
  %v3528 = vpack.c.b16 %v3492, %v3488
  %v3529 = vpack.c.b16 %v3493, %v3489
  %v3530 = vpack.c.b16 %v3494, %v3490
  %v3531 = vpack.c.b16 %v3495, %v3491
  %v3532 = vpack.c.b16 %v3500, %v3496
  %v3533 = vpack.c.b16 %v3501, %v3497
  %v3534 = vpack.c.b16 %v3502, %v3498
  %v3535 = vpack.c.b16 %v3503, %v3499
  %3568 = vmatprep.subr.bf16.mxu0 %v3533
  %3569 = vmatpush1.bf16.msra.mxu0 %v3532
  %3570 = vmatprep.subr.bf16.mxu0 %v3529
  %3571 = vmatpush1.bf16.msra.mxu0 %v3528
  %3572 = vmatprep.subr.bf16.mxu0 %v3525
  %3573 = vmatpush1.bf16.msra.mxu0 %v3524
  %3574 = vmatprep.subr.bf16.mxu0 %v3521
  %3575 = vmatpush1.bf16.msra.mxu0 %v3520
  %3576 = vmatprep.subr.bf16.mxu0 %v3517
  %3577 = vmatpush1.bf16.msra.mxu0 %v3516
  %3578 = vmatprep.subr.bf16.mxu0 %v3513
  %3579 = vmatpush1.bf16.msra.mxu0 %v3512
  %3580 = vmatprep.subr.bf16.mxu0 %v3509
  %3581 = vmatpush1.bf16.msra.mxu0 %v3508
  %3582 = vmatprep.subr.bf16.mxu0 %v3505
  %3583 = vmatpush1.bf16.msra.mxu0 %v3504
  %3584 = vmatprep.subr.bf16.mxu0 0
  %3585 = vmatpush2.bf16.msra.mxu0 0
  %3586 = vmatprep.subr.bf16.mxu0 0
  %3587 = vmatpush2.bf16.msra.mxu0 0
  %3588 = vmatprep.subr.bf16.mxu0 0
  %3589 = vmatpush2.bf16.msra.mxu0 0
  %3590 = vmatprep.subr.bf16.mxu0 0
  %3591 = vmatpush2.bf16.msra.mxu0 0
  %3592 = vmatprep.subr.bf16.mxu0 0
  %3593 = vmatpush2.bf16.msra.mxu0 0
  %3594 = vmatprep.subr.bf16.mxu0 0
  %3595 = vmatpush2.bf16.msra.mxu0 0
  %3596 = vmatprep.subr.bf16.mxu0 0
  %3597 = vmatpush2.bf16.msra.mxu0 0
  %3598 = vmatprep.subr.bf16.mxu0 0
  %3599 = vmatpush2.bf16.msra.mxu0 0
  %3600 = vmatprep.mubr.bf16.mxu0 0
  %3601 = vmatmul.mubr.bf16.gmra.mxu0 0
  %v3602 = vpop.f32.mrf.mxu0
  %v3603 = vadd.f32 0.0, %v3602
  %v3604 = vpop.f32.mrf.mxu0
  %v3605 = vadd.f32 0.0, %v3604
  %v3606 = vpop.f32.mrf.mxu0
  %v3607 = vpop.f32.mrf.mxu0
  %3608 = vdwg.mxu0
  %3609 = vmatprep.subr.bf16.mxu0 %v3535
  %3610 = vmatpush1.bf16.msra.mxu0 %v3534
  %3611 = vmatprep.subr.bf16.mxu0 %v3531
  %3612 = vmatpush1.bf16.msra.mxu0 %v3530
  %3613 = vmatprep.subr.bf16.mxu0 %v3527
  %3614 = vmatpush1.bf16.msra.mxu0 %v3526
  %3615 = vmatprep.subr.bf16.mxu0 %v3523
  %3616 = vmatpush1.bf16.msra.mxu0 %v3522
  %3617 = vmatprep.subr.bf16.mxu0 %v3519
  %3618 = vmatpush1.bf16.msra.mxu0 %v3518
  %3619 = vmatprep.subr.bf16.mxu0 %v3515
  %3620 = vmatpush1.bf16.msra.mxu0 %v3514
  %3621 = vmatprep.subr.bf16.mxu0 %v3511
  %3622 = vmatpush1.bf16.msra.mxu0 %v3510
  %3623 = vmatprep.subr.bf16.mxu0 %v3507
  %3624 = vmatpush1.bf16.msra.mxu0 %v3506
  %3625 = vmatprep.subr.bf16.mxu0 0
  %3626 = vmatpush2.bf16.msra.mxu0 0
  %3627 = vmatprep.subr.bf16.mxu0 0
  %3628 = vmatpush2.bf16.msra.mxu0 0
  %3629 = vmatprep.subr.bf16.mxu0 0
  %3630 = vmatpush2.bf16.msra.mxu0 0
  %3631 = vmatprep.subr.bf16.mxu0 0
  %3632 = vmatpush2.bf16.msra.mxu0 0
  %3633 = vmatprep.subr.bf16.mxu0 0
  %3634 = vmatpush2.bf16.msra.mxu0 0
  %3635 = vmatprep.subr.bf16.mxu0 0
  %3636 = vmatpush2.bf16.msra.mxu0 0
  %3637 = vmatprep.subr.bf16.mxu0 0
  %3638 = vmatpush2.bf16.msra.mxu0 0
  %3639 = vmatprep.subr.bf16.mxu0 0
  %3640 = vmatpush2.bf16.msra.mxu0 0
  %3641 = vmatprep.mubr.bf16.mxu0 0
  %3642 = vmatmul.mubr.bf16.gmra.mxu0 0
  %v3643 = vpop.f32.mrf.mxu0
  %v3644 = vadd.f32 0.0, %v3643
  %v3645 = vpop.f32.mrf.mxu0
  %v3646 = vadd.f32 0.0, %v3645
  %v3647 = vpop.f32.mrf.mxu0
  %v3648 = vpop.f32.mrf.mxu0
  %3649 = vdwg.mxu0
  %v3650 = vadd.f32 %v3372, %v3603
  %v3651 = vadd.f32 %v3373, %v3605
  %v3652 = vadd.f32 %v3374, %v3644
  %v3653 = vadd.f32 %v3375, %v3646
  %v3654 = vxor.u32 %v3650, 2147483648
  %v3655 = vmul.f32 %v3654, 1.442695
  %v3656 = vpow.pop %v3655
  %v3657 = vadd.f32 %v3656, 1.0
  %v3658 = vrcp.pop %v3657
  %v3659 = vmul.f32 1.0, %v3658
  %v3660 = vxor.u32 %v3651, 2147483648
  %v3661 = vmul.f32 %v3660, 1.442695
  %v3662 = vpow.pop %v3661
  %v3663 = vadd.f32 %v3662, 1.0
  %v3664 = vrcp.pop %v3663
  %v3665 = vmul.f32 1.0, %v3664
  %v3666 = vtanh.pop %v3652
  %v3667 = vxor.u32 %v3653, 2147483648
  %v3668 = vmul.f32 %v3667, 1.442695
  %v3669 = vpow.pop %v3668
  %v3670 = vadd.f32 %v3669, 1.0
  %v3671 = vrcp.pop %v3670
  %v3672 = vmul.f32 1.0, %v3671
  %v3673 = vmul.f32 %v3665, 0.0
  %v3674 = vmul.f32 %v3659, %v3666
  %v3675 = vadd.f32 %v3673, %v3674
  %v3676 = vtanh.pop %v3675
  %v3677 = vmul.f32 %v3672, %v3676
  %v3678 = vpack.c.bf16 %v3677, %v3677
  %3679 = vst [vmem:[#allocation3] sm:$0xf] %v3678
  %v3680 = vld [vmem:[%s778] sm:$0xff]
  %v3681 = vld [vmem:[%s778 + $0x8] sm:$0xff]
  %v3682 = vld [vmem:[%s778 + $0x10] sm:$0xff]
  %v3683 = vld [vmem:[%s778 + $0x18] sm:$0xff]
  %v3684 = vld [vmem:[%s5] sm:$0xff]
  %v3685 = vld [vmem:[%s5 + $0x8] sm:$0xff]
  %v3686 = vld [vmem:[%s5 + $0x10] sm:$0xff]
  %v3687 = vld [vmem:[%s5 + $0x18] sm:$0xff]
  %v3688 = vld [vmem:[%s5 + $0x20] sm:$0xff]
  %v3689 = vld [vmem:[%s5 + $0x28] sm:$0xff]
  %v3690 = vld [vmem:[%s5 + $0x30] sm:$0xff]
  %v3691 = vld [vmem:[%s5 + $0x38] sm:$0xff]
  %v3692 = vld [vmem:[%s5 + $0x40] sm:$0xff]
  %v3693 = vld [vmem:[%s5 + $0x48] sm:$0xff]
  %v3694 = vld [vmem:[%s5 + $0x50] sm:$0xff]
  %v3695 = vld [vmem:[%s5 + $0x58] sm:$0xff]
  %v3696 = vld [vmem:[%s5 + $0x60] sm:$0xff]
  %v3697 = vld [vmem:[%s5 + $0x68] sm:$0xff]
  %v3698 = vld [vmem:[%s5 + $0x70] sm:$0xff]
  %v3699 = vld [vmem:[%s5 + $0x78] sm:$0xff]
  %v3700 = vld [vmem:[%s5 + $0x80] sm:$0xff]
  %v3701 = vld [vmem:[%s5 + $0x88] sm:$0xff]
  %v3702 = vld [vmem:[%s5 + $0x90] sm:$0xff]
  %v3703 = vld [vmem:[%s5 + $0x98] sm:$0xff]
  %v3704 = vld [vmem:[%s5 + $0xa0] sm:$0xff]
  %v3705 = vld [vmem:[%s5 + $0xa8] sm:$0xff]
  %v3706 = vld [vmem:[%s5 + $0xb0] sm:$0xff]
  %v3707 = vld [vmem:[%s5 + $0xb8] sm:$0xff]
  %v3708 = vld [vmem:[%s5 + $0xc0] sm:$0xff]
  %v3709 = vld [vmem:[%s5 + $0xc8] sm:$0xff]
  %v3710 = vld [vmem:[%s5 + $0xd0] sm:$0xff]
  %v3711 = vld [vmem:[%s5 + $0xd8] sm:$0xff]
  %v3712 = vld [vmem:[%s5 + $0xe0] sm:$0xff]
  %v3713 = vld [vmem:[%s5 + $0xe8] sm:$0xff]
  %v3714 = vld [vmem:[%s5 + $0xf0] sm:$0xff]
  %v3715 = vld [vmem:[%s5 + $0xf8] sm:$0xff]
  %v3748 = vunpack.c.l.b16 %v3684
  %v3749 = vunpack.c.h.b16 %v3684
  %v3750 = vunpack.c.l.b16 %v3685
  %v3751 = vunpack.c.h.b16 %v3685
  %v3752 = vunpack.c.l.b16 %v3686
  %v3753 = vunpack.c.h.b16 %v3686
  %v3754 = vunpack.c.l.b16 %v3687
  %v3755 = vunpack.c.h.b16 %v3687
  %v3756 = vunpack.c.l.b16 %v3688
  %v3757 = vunpack.c.h.b16 %v3688
  %v3758 = vunpack.c.l.b16 %v3689
  %v3759 = vunpack.c.h.b16 %v3689
  %v3760 = vunpack.c.l.b16 %v3690
  %v3761 = vunpack.c.h.b16 %v3690
  %v3762 = vunpack.c.l.b16 %v3691
  %v3763 = vunpack.c.h.b16 %v3691
  %v3764 = vunpack.c.l.b16 %v3692
  %v3765 = vunpack.c.h.b16 %v3692
  %v3766 = vunpack.c.l.b16 %v3693
  %v3767 = vunpack.c.h.b16 %v3693
  %v3768 = vunpack.c.l.b16 %v3694
  %v3769 = vunpack.c.h.b16 %v3694
  %v3770 = vunpack.c.l.b16 %v3695
  %v3771 = vunpack.c.h.b16 %v3695
  %v3772 = vunpack.c.l.b16 %v3696
  %v3773 = vunpack.c.h.b16 %v3696
  %v3774 = vunpack.c.l.b16 %v3697
  %v3775 = vunpack.c.h.b16 %v3697
  %v3776 = vunpack.c.l.b16 %v3698
  %v3777 = vunpack.c.h.b16 %v3698
  %v3778 = vunpack.c.l.b16 %v3699
  %v3779 = vunpack.c.h.b16 %v3699
  %v3780 = vunpack.c.l.b16 %v3700
  %v3781 = vunpack.c.h.b16 %v3700
  %v3782 = vunpack.c.l.b16 %v3701
  %v3783 = vunpack.c.h.b16 %v3701
  %v3784 = vunpack.c.l.b16 %v3702
  %v3785 = vunpack.c.h.b16 %v3702
  %v3786 = vunpack.c.l.b16 %v3703
  %v3787 = vunpack.c.h.b16 %v3703
  %v3788 = vunpack.c.l.b16 %v3704
  %v3789 = vunpack.c.h.b16 %v3704
  %v3790 = vunpack.c.l.b16 %v3705
  %v3791 = vunpack.c.h.b16 %v3705
  %v3792 = vunpack.c.l.b16 %v3706
  %v3793 = vunpack.c.h.b16 %v3706
  %v3794 = vunpack.c.l.b16 %v3707
  %v3795 = vunpack.c.h.b16 %v3707
  %v3796 = vunpack.c.l.b16 %v3708
  %v3797 = vunpack.c.h.b16 %v3708
  %v3798 = vunpack.c.l.b16 %v3709
  %v3799 = vunpack.c.h.b16 %v3709
  %v3800 = vunpack.c.l.b16 %v3710
  %v3801 = vunpack.c.h.b16 %v3710
  %v3802 = vunpack.c.l.b16 %v3711
  %v3803 = vunpack.c.h.b16 %v3711
  %v3804 = vunpack.c.l.b16 %v3712
  %v3805 = vunpack.c.h.b16 %v3712
  %v3806 = vunpack.c.l.b16 %v3713
  %v3807 = vunpack.c.h.b16 %v3713
  %v3808 = vunpack.c.l.b16 %v3714
  %v3809 = vunpack.c.h.b16 %v3714
  %v3810 = vunpack.c.l.b16 %v3715
  %v3811 = vunpack.c.h.b16 %v3715
  %v3812 = vpack.c.b16 %v3752, %v3748
  %v3813 = vpack.c.b16 %v3753, %v3749
  %v3814 = vpack.c.b16 %v3754, %v3750
  %v3815 = vpack.c.b16 %v3755, %v3751
  %v3816 = vpack.c.b16 %v3760, %v3756
  %v3817 = vpack.c.b16 %v3761, %v3757
  %v3818 = vpack.c.b16 %v3762, %v3758
  %v3819 = vpack.c.b16 %v3763, %v3759
  %v3820 = vpack.c.b16 %v3768, %v3764
  %v3821 = vpack.c.b16 %v3769, %v3765
  %v3822 = vpack.c.b16 %v3770, %v3766
  %v3823 = vpack.c.b16 %v3771, %v3767
  %v3824 = vpack.c.b16 %v3776, %v3772
  %v3825 = vpack.c.b16 %v3777, %v3773
  %v3826 = vpack.c.b16 %v3778, %v3774
  %v3827 = vpack.c.b16 %v3779, %v3775
  %v3828 = vpack.c.b16 %v3784, %v3780
  %v3829 = vpack.c.b16 %v3785, %v3781
  %v3830 = vpack.c.b16 %v3786, %v3782
  %v3831 = vpack.c.b16 %v3787, %v3783
  %v3832 = vpack.c.b16 %v3792, %v3788
  %v3833 = vpack.c.b16 %v3793, %v3789
  %v3834 = vpack.c.b16 %v3794, %v3790
  %v3835 = vpack.c.b16 %v3795, %v3791
  %v3836 = vpack.c.b16 %v3800, %v3796
  %v3837 = vpack.c.b16 %v3801, %v3797
  %v3838 = vpack.c.b16 %v3802, %v3798
  %v3839 = vpack.c.b16 %v3803, %v3799
  %v3840 = vpack.c.b16 %v3808, %v3804
  %v3841 = vpack.c.b16 %v3809, %v3805
  %v3842 = vpack.c.b16 %v3810, %v3806
  %v3843 = vpack.c.b16 %v3811, %v3807
  %3876 = vmatprep.subr.bf16.mxu0 %v3841
  %3877 = vmatpush1.bf16.msra.mxu0 %v3840
  %3878 = vmatprep.subr.bf16.mxu0 %v3837
  %3879 = vmatpush1.bf16.msra.mxu0 %v3836
  %3880 = vmatprep.subr.bf16.mxu0 %v3833
  %3881 = vmatpush1.bf16.msra.mxu0 %v3832
  %3882 = vmatprep.subr.bf16.mxu0 %v3829
  %3883 = vmatpush1.bf16.msra.mxu0 %v3828
  %3884 = vmatprep.subr.bf16.mxu0 %v3825
  %3885 = vmatpush1.bf16.msra.mxu0 %v3824
  %3886 = vmatprep.subr.bf16.mxu0 %v3821
  %3887 = vmatpush1.bf16.msra.mxu0 %v3820
  %3888 = vmatprep.subr.bf16.mxu0 %v3817
  %3889 = vmatpush1.bf16.msra.mxu0 %v3816
  %3890 = vmatprep.subr.bf16.mxu0 %v3813
  %3891 = vmatpush1.bf16.msra.mxu0 %v3812
  %3892 = vmatprep.subr.bf16.mxu0 0
  %3893 = vmatpush2.bf16.msra.mxu0 0
  %3894 = vmatprep.subr.bf16.mxu0 0
  %3895 = vmatpush2.bf16.msra.mxu0 0
  %3896 = vmatprep.subr.bf16.mxu0 0
  %3897 = vmatpush2.bf16.msra.mxu0 0
  %3898 = vmatprep.subr.bf16.mxu0 0
  %3899 = vmatpush2.bf16.msra.mxu0 0
  %3900 = vmatprep.subr.bf16.mxu0 0
  %3901 = vmatpush2.bf16.msra.mxu0 0
  %3902 = vmatprep.subr.bf16.mxu0 0
  %3903 = vmatpush2.bf16.msra.mxu0 0
  %3904 = vmatprep.subr.bf16.mxu0 0
  %3905 = vmatpush2.bf16.msra.mxu0 0
  %3906 = vmatprep.subr.bf16.mxu0 0
  %3907 = vmatpush2.bf16.msra.mxu0 0
  %3908 = vmatprep.mubr.bf16.mxu0 0
  %3909 = vmatmul.mubr.bf16.gmra.mxu0 %v3678
  %v3910 = vpop.f32.mrf.mxu0
  %v3911 = vadd.f32 0.0, %v3910
  %v3912 = vpop.f32.mrf.mxu0
  %v3913 = vadd.f32 0.0, %v3912
  %v3914 = vpop.f32.mrf.mxu0
  %v3915 = vpop.f32.mrf.mxu0
  %3916 = vdwg.mxu0
  %3917 = vmatprep.subr.bf16.mxu0 %v3843
  %3918 = vmatpush1.bf16.msra.mxu0 %v3842
  %3919 = vmatprep.subr.bf16.mxu0 %v3839
  %3920 = vmatpush1.bf16.msra.mxu0 %v3838
  %3921 = vmatprep.subr.bf16.mxu0 %v3835
  %3922 = vmatpush1.bf16.msra.mxu0 %v3834
  %3923 = vmatprep.subr.bf16.mxu0 %v3831
  %3924 = vmatpush1.bf16.msra.mxu0 %v3830
  %3925 = vmatprep.subr.bf16.mxu0 %v3827
  %3926 = vmatpush1.bf16.msra.mxu0 %v3826
  %3927 = vmatprep.subr.bf16.mxu0 %v3823
  %3928 = vmatpush1.bf16.msra.mxu0 %v3822
  %3929 = vmatprep.subr.bf16.mxu0 %v3819
  %3930 = vmatpush1.bf16.msra.mxu0 %v3818
  %3931 = vmatprep.subr.bf16.mxu0 %v3815
  %3932 = vmatpush1.bf16.msra.mxu0 %v3814
  %3933 = vmatprep.subr.bf16.mxu0 0
  %3934 = vmatpush2.bf16.msra.mxu0 0
  %3935 = vmatprep.subr.bf16.mxu0 0
  %3936 = vmatpush2.bf16.msra.mxu0 0
  %3937 = vmatprep.subr.bf16.mxu0 0
  %3938 = vmatpush2.bf16.msra.mxu0 0
  %3939 = vmatprep.subr.bf16.mxu0 0
  %3940 = vmatpush2.bf16.msra.mxu0 0
  %3941 = vmatprep.subr.bf16.mxu0 0
  %3942 = vmatpush2.bf16.msra.mxu0 0
  %3943 = vmatprep.subr.bf16.mxu0 0
  %3944 = vmatpush2.bf16.msra.mxu0 0
  %3945 = vmatprep.subr.bf16.mxu0 0
  %3946 = vmatpush2.bf16.msra.mxu0 0
  %3947 = vmatprep.subr.bf16.mxu0 0
  %3948 = vmatpush2.bf16.msra.mxu0 0
  %3949 = vmatprep.mubr.bf16.mxu0 0
  %3950 = vmatmul.mubr.bf16.gmra.mxu0 %v3678
  %v3951 = vpop.f32.mrf.mxu0
  %v3952 = vadd.f32 0.0, %v3951
  %v3953 = vpop.f32.mrf.mxu0
  %v3954 = vadd.f32 0.0, %v3953
  %v3955 = vpop.f32.mrf.mxu0
  %v3956 = vpop.f32.mrf.mxu0
  %3957 = vdwg.mxu0
  %v3958 = vadd.f32 %v3680, %v3911
  %v3959 = vadd.f32 %v3681, %v3913
  %v3960 = vadd.f32 %v3682, %v3952
  %v3961 = vadd.f32 %v3683, %v3954
  %v3962 = vxor.u32 %v3958, 2147483648
  %v3963 = vmul.f32 %v3962, 1.442695
  %v3964 = vpow.pop %v3963
  %v3965 = vadd.f32 %v3964, 1.0
  %v3966 = vrcp.pop %v3965
  %v3967 = vmul.f32 1.0, %v3966
  %v3968 = vxor.u32 %v3959, 2147483648
  %v3969 = vmul.f32 %v3968, 1.442695
  %v3970 = vpow.pop %v3969
  %v3971 = vadd.f32 %v3970, 1.0
  %v3972 = vrcp.pop %v3971
  %v3973 = vmul.f32 1.0, %v3972
  %v3974 = vtanh.pop %v3960
  %v3975 = vxor.u32 %v3961, 2147483648
  %v3976 = vmul.f32 %v3975, 1.442695
  %v3977 = vpow.pop %v3976
  %v3978 = vadd.f32 %v3977, 1.0
  %v3979 = vrcp.pop %v3978
  %v3980 = vmul.f32 1.0, %v3979
  %v3981 = vmul.f32 %v3973, %v3675
  %v3982 = vmul.f32 %v3967, %v3974
  %v3983 = vadd.f32 %v3981, %v3982
  %v3984 = vtanh.pop %v3983
  %v3985 = vmul.f32 %v3980, %v3984
  %v3986 = vpack.c.bf16 %v3985, %v3985
  %3987 = vst [vmem:[%s1086] sm:$0xf] %v3986
  %v3988 = vld [vmem:[%s1088] sm:$0xff]
  %v3989 = vld [vmem:[%s1088 + $0x8] sm:$0xff]
  %v3990 = vld [vmem:[%s1088 + $0x10] sm:$0xff]
  %v3991 = vld [vmem:[%s1088 + $0x18] sm:$0xff]
  %v3992 = vld [vmem:[%s5] sm:$0xff]
  %v3993 = vld [vmem:[%s5 + $0x8] sm:$0xff]
  %v3994 = vld [vmem:[%s5 + $0x10] sm:$0xff]
  %v3995 = vld [vmem:[%s5 + $0x18] sm:$0xff]
  %v3996 = vld [vmem:[%s5 + $0x20] sm:$0xff]
  %v3997 = vld [vmem:[%s5 + $0x28] sm:$0xff]
  %v3998 = vld [vmem:[%s5 + $0x30] sm:$0xff]
  %v3999 = vld [vmem:[%s5 + $0x38] sm:$0xff]
  %v4000 = vld [vmem:[%s5 + $0x40] sm:$0xff]
  %v4001 = vld [vmem:[%s5 + $0x48] sm:$0xff]
  %v4002 = vld [vmem:[%s5 + $0x50] sm:$0xff]
  %v4003 = vld [vmem:[%s5 + $0x58] sm:$0xff]
  %v4004 = vld [vmem:[%s5 + $0x60] sm:$0xff]
  %v4005 = vld [vmem:[%s5 + $0x68] sm:$0xff]
  %v4006 = vld [vmem:[%s5 + $0x70] sm:$0xff]
  %v4007 = vld [vmem:[%s5 + $0x78] sm:$0xff]
  %v4008 = vld [vmem:[%s5 + $0x80] sm:$0xff]
  %v4009 = vld [vmem:[%s5 + $0x88] sm:$0xff]
  %v4010 = vld [vmem:[%s5 + $0x90] sm:$0xff]
  %v4011 = vld [vmem:[%s5 + $0x98] sm:$0xff]
  %v4012 = vld [vmem:[%s5 + $0xa0] sm:$0xff]
  %v4013 = vld [vmem:[%s5 + $0xa8] sm:$0xff]
  %v4014 = vld [vmem:[%s5 + $0xb0] sm:$0xff]
  %v4015 = vld [vmem:[%s5 + $0xb8] sm:$0xff]
  %v4016 = vld [vmem:[%s5 + $0xc0] sm:$0xff]
  %v4017 = vld [vmem:[%s5 + $0xc8] sm:$0xff]
  %v4018 = vld [vmem:[%s5 + $0xd0] sm:$0xff]
  %v4019 = vld [vmem:[%s5 + $0xd8] sm:$0xff]
  %v4020 = vld [vmem:[%s5 + $0xe0] sm:$0xff]
  %v4021 = vld [vmem:[%s5 + $0xe8] sm:$0xff]
  %v4022 = vld [vmem:[%s5 + $0xf0] sm:$0xff]
  %v4023 = vld [vmem:[%s5 + $0xf8] sm:$0xff]
  %v4056 = vunpack.c.l.b16 %v3992
  %v4057 = vunpack.c.h.b16 %v3992
  %v4058 = vunpack.c.l.b16 %v3993
  %v4059 = vunpack.c.h.b16 %v3993
  %v4060 = vunpack.c.l.b16 %v3994
  %v4061 = vunpack.c.h.b16 %v3994
  %v4062 = vunpack.c.l.b16 %v3995
  %v4063 = vunpack.c.h.b16 %v3995
  %v4064 = vunpack.c.l.b16 %v3996
  %v4065 = vunpack.c.h.b16 %v3996
  %v4066 = vunpack.c.l.b16 %v3997
  %v4067 = vunpack.c.h.b16 %v3997
  %v4068 = vunpack.c.l.b16 %v3998
  %v4069 = vunpack.c.h.b16 %v3998
  %v4070 = vunpack.c.l.b16 %v3999
  %v4071 = vunpack.c.h.b16 %v3999
  %v4072 = vunpack.c.l.b16 %v4000
  %v4073 = vunpack.c.h.b16 %v4000
  %v4074 = vunpack.c.l.b16 %v4001
  %v4075 = vunpack.c.h.b16 %v4001
  %v4076 = vunpack.c.l.b16 %v4002
  %v4077 = vunpack.c.h.b16 %v4002
  %v4078 = vunpack.c.l.b16 %v4003
  %v4079 = vunpack.c.h.b16 %v4003
  %v4080 = vunpack.c.l.b16 %v4004
  %v4081 = vunpack.c.h.b16 %v4004
  %v4082 = vunpack.c.l.b16 %v4005
  %v4083 = vunpack.c.h.b16 %v4005
  %v4084 = vunpack.c.l.b16 %v4006
  %v4085 = vunpack.c.h.b16 %v4006
  %v4086 = vunpack.c.l.b16 %v4007
  %v4087 = vunpack.c.h.b16 %v4007
  %v4088 = vunpack.c.l.b16 %v4008
  %v4089 = vunpack.c.h.b16 %v4008
  %v4090 = vunpack.c.l.b16 %v4009
  %v4091 = vunpack.c.h.b16 %v4009
  %v4092 = vunpack.c.l.b16 %v4010
  %v4093 = vunpack.c.h.b16 %v4010
  %v4094 = vunpack.c.l.b16 %v4011
  %v4095 = vunpack.c.h.b16 %v4011
  %v4096 = vunpack.c.l.b16 %v4012
  %v4097 = vunpack.c.h.b16 %v4012
  %v4098 = vunpack.c.l.b16 %v4013
  %v4099 = vunpack.c.h.b16 %v4013
  %v4100 = vunpack.c.l.b16 %v4014
  %v4101 = vunpack.c.h.b16 %v4014
  %v4102 = vunpack.c.l.b16 %v4015
  %v4103 = vunpack.c.h.b16 %v4015
  %v4104 = vunpack.c.l.b16 %v4016
  %v4105 = vunpack.c.h.b16 %v4016
  %v4106 = vunpack.c.l.b16 %v4017
  %v4107 = vunpack.c.h.b16 %v4017
  %v4108 = vunpack.c.l.b16 %v4018
  %v4109 = vunpack.c.h.b16 %v4018
  %v4110 = vunpack.c.l.b16 %v4019
  %v4111 = vunpack.c.h.b16 %v4019
  %v4112 = vunpack.c.l.b16 %v4020
  %v4113 = vunpack.c.h.b16 %v4020
  %v4114 = vunpack.c.l.b16 %v4021
  %v4115 = vunpack.c.h.b16 %v4021
  %v4116 = vunpack.c.l.b16 %v4022
  %v4117 = vunpack.c.h.b16 %v4022
  %v4118 = vunpack.c.l.b16 %v4023
  %v4119 = vunpack.c.h.b16 %v4023
  %v4120 = vpack.c.b16 %v4060, %v4056
  %v4121 = vpack.c.b16 %v4061, %v4057
  %v4122 = vpack.c.b16 %v4062, %v4058
  %v4123 = vpack.c.b16 %v4063, %v4059
  %v4124 = vpack.c.b16 %v4068, %v4064
  %v4125 = vpack.c.b16 %v4069, %v4065
  %v4126 = vpack.c.b16 %v4070, %v4066
  %v4127 = vpack.c.b16 %v4071, %v4067
  %v4128 = vpack.c.b16 %v4076, %v4072
  %v4129 = vpack.c.b16 %v4077, %v4073
  %v4130 = vpack.c.b16 %v4078, %v4074
  %v4131 = vpack.c.b16 %v4079, %v4075
  %v4132 = vpack.c.b16 %v4084, %v4080
  %v4133 = vpack.c.b16 %v4085, %v4081
  %v4134 = vpack.c.b16 %v4086, %v4082
  %v4135 = vpack.c.b16 %v4087, %v4083
  %v4136 = vpack.c.b16 %v4092, %v4088
  %v4137 = vpack.c.b16 %v4093, %v4089
  %v4138 = vpack.c.b16 %v4094, %v4090
  %v4139 = vpack.c.b16 %v4095, %v4091
  %v4140 = vpack.c.b16 %v4100, %v4096
  %v4141 = vpack.c.b16 %v4101, %v4097
  %v4142 = vpack.c.b16 %v4102, %v4098
  %v4143 = vpack.c.b16 %v4103, %v4099
  %v4144 = vpack.c.b16 %v4108, %v4104
  %v4145 = vpack.c.b16 %v4109, %v4105
  %v4146 = vpack.c.b16 %v4110, %v4106
  %v4147 = vpack.c.b16 %v4111, %v4107
  %v4148 = vpack.c.b16 %v4116, %v4112
  %v4149 = vpack.c.b16 %v4117, %v4113
  %v4150 = vpack.c.b16 %v4118, %v4114
  %v4151 = vpack.c.b16 %v4119, %v4115
  %4184 = vmatprep.subr.bf16.mxu0 %v4149
  %4185 = vmatpush1.bf16.msra.mxu0 %v4148
  %4186 = vmatprep.subr.bf16.mxu0 %v4145
  %4187 = vmatpush1.bf16.msra.mxu0 %v4144
  %4188 = vmatprep.subr.bf16.mxu0 %v4141
  %4189 = vmatpush1.bf16.msra.mxu0 %v4140
  %4190 = vmatprep.subr.bf16.mxu0 %v4137
  %4191 = vmatpush1.bf16.msra.mxu0 %v4136
  %4192 = vmatprep.subr.bf16.mxu0 %v4133
  %4193 = vmatpush1.bf16.msra.mxu0 %v4132
  %4194 = vmatprep.subr.bf16.mxu0 %v4129
  %4195 = vmatpush1.bf16.msra.mxu0 %v4128
  %4196 = vmatprep.subr.bf16.mxu0 %v4125
  %4197 = vmatpush1.bf16.msra.mxu0 %v4124
  %4198 = vmatprep.subr.bf16.mxu0 %v4121
  %4199 = vmatpush1.bf16.msra.mxu0 %v4120
  %4200 = vmatprep.subr.bf16.mxu0 0
  %4201 = vmatpush2.bf16.msra.mxu0 0
  %4202 = vmatprep.subr.bf16.mxu0 0
  %4203 = vmatpush2.bf16.msra.mxu0 0
  %4204 = vmatprep.subr.bf16.mxu0 0
  %4205 = vmatpush2.bf16.msra.mxu0 0
  %4206 = vmatprep.subr.bf16.mxu0 0
  %4207 = vmatpush2.bf16.msra.mxu0 0
  %4208 = vmatprep.subr.bf16.mxu0 0
  %4209 = vmatpush2.bf16.msra.mxu0 0
  %4210 = vmatprep.subr.bf16.mxu0 0
  %4211 = vmatpush2.bf16.msra.mxu0 0
  %4212 = vmatprep.subr.bf16.mxu0 0
  %4213 = vmatpush2.bf16.msra.mxu0 0
  %4214 = vmatprep.subr.bf16.mxu0 0
  %4215 = vmatpush2.bf16.msra.mxu0 0
  %4216 = vmatprep.mubr.bf16.mxu0 0
  %4217 = vmatmul.mubr.bf16.gmra.mxu0 %v3986
  %v4218 = vpop.f32.mrf.mxu0
  %v4219 = vadd.f32 0.0, %v4218
  %v4220 = vpop.f32.mrf.mxu0
  %v4221 = vadd.f32 0.0, %v4220
  %v4222 = vpop.f32.mrf.mxu0
  %v4223 = vpop.f32.mrf.mxu0
  %4224 = vdwg.mxu0
  %4225 = vmatprep.subr.bf16.mxu0 %v4151
  %4226 = vmatpush1.bf16.msra.mxu0 %v4150
  %4227 = vmatprep.subr.bf16.mxu0 %v4147
  %4228 = vmatpush1.bf16.msra.mxu0 %v4146
  %4229 = vmatprep.subr.bf16.mxu0 %v4143
  %4230 = vmatpush1.bf16.msra.mxu0 %v4142
  %4231 = vmatprep.subr.bf16.mxu0 %v4139
  %4232 = vmatpush1.bf16.msra.mxu0 %v4138
  %4233 = vmatprep.subr.bf16.mxu0 %v4135
  %4234 = vmatpush1.bf16.msra.mxu0 %v4134
  %4235 = vmatprep.subr.bf16.mxu0 %v4131
  %4236 = vmatpush1.bf16.msra.mxu0 %v4130
  %4237 = vmatprep.subr.bf16.mxu0 %v4127
  %4238 = vmatpush1.bf16.msra.mxu0 %v4126
  %4239 = vmatprep.subr.bf16.mxu0 %v4123
  %4240 = vmatpush1.bf16.msra.mxu0 %v4122
  %4241 = vmatprep.subr.bf16.mxu0 0
  %4242 = vmatpush2.bf16.msra.mxu0 0
  %4243 = vmatprep.subr.bf16.mxu0 0
  %4244 = vmatpush2.bf16.msra.mxu0 0
  %4245 = vmatprep.subr.bf16.mxu0 0
  %4246 = vmatpush2.bf16.msra.mxu0 0
  %4247 = vmatprep.subr.bf16.mxu0 0
  %4248 = vmatpush2.bf16.msra.mxu0 0
  %4249 = vmatprep.subr.bf16.mxu0 0
  %4250 = vmatpush2.bf16.msra.mxu0 0
  %4251 = vmatprep.subr.bf16.mxu0 0
  %4252 = vmatpush2.bf16.msra.mxu0 0
  %4253 = vmatprep.subr.bf16.mxu0 0
  %4254 = vmatpush2.bf16.msra.mxu0 0
  %4255 = vmatprep.subr.bf16.mxu0 0
  %4256 = vmatpush2.bf16.msra.mxu0 0
  %4257 = vmatprep.mubr.bf16.mxu0 0
  %4258 = vmatmul.mubr.bf16.gmra.mxu0 %v3986
  %v4259 = vpop.f32.mrf.mxu0
  %v4260 = vadd.f32 0.0, %v4259
  %v4261 = vpop.f32.mrf.mxu0
  %v4262 = vadd.f32 0.0, %v4261
  %v4263 = vpop.f32.mrf.mxu0
  %v4264 = vpop.f32.mrf.mxu0
  %4265 = vdwg.mxu0
  %v4266 = vadd.f32 %v3988, %v4219
  %v4267 = vadd.f32 %v3989, %v4221
  %v4268 = vadd.f32 %v3990, %v4260
  %v4269 = vadd.f32 %v3991, %v4262
  %v4270 = vxor.u32 %v4266, 2147483648
  %v4271 = vmul.f32 %v4270, 1.442695
  %v4272 = vpow.pop %v4271
  %v4273 = vadd.f32 %v4272, 1.0
  %v4274 = vrcp.pop %v4273
  %v4275 = vmul.f32 1.0, %v4274
  %v4276 = vxor.u32 %v4267, 2147483648
  %v4277 = vmul.f32 %v4276, 1.442695
  %v4278 = vpow.pop %v4277
  %v4279 = vadd.f32 %v4278, 1.0
  %v4280 = vrcp.pop %v4279
  %v4281 = vmul.f32 1.0, %v4280
  %v4282 = vtanh.pop %v4268
  %v4283 = vxor.u32 %v4269, 2147483648
  %v4284 = vmul.f32 %v4283, 1.442695
  %v4285 = vpow.pop %v4284
  %v4286 = vadd.f32 %v4285, 1.0
  %v4287 = vrcp.pop %v4286
  %v4288 = vmul.f32 1.0, %v4287
  %v4289 = vmul.f32 %v4281, %v3983
  %v4290 = vmul.f32 %v4275, %v4282
  %v4291 = vadd.f32 %v4289, %v4290
  %v4292 = vtanh.pop %v4291
  %v4293 = vmul.f32 %v4288, %v4292
  %v4294 = vpack.c.bf16 %v4293, %v4293
  %4295 = vst [vmem:[%s1396] sm:$0xf] %v4294
  %v4296 = vld [vmem:[%s1398] sm:$0xff]
  %v4297 = vld [vmem:[%s1398 + $0x8] sm:$0xff]
  %v4298 = vld [vmem:[%s1398 + $0x10] sm:$0xff]
  %v4299 = vld [vmem:[%s1398 + $0x18] sm:$0xff]
  %v4300 = vld [vmem:[%s5] sm:$0xff]
  %v4301 = vld [vmem:[%s5 + $0x8] sm:$0xff]
  %v4302 = vld [vmem:[%s5 + $0x10] sm:$0xff]
  %v4303 = vld [vmem:[%s5 + $0x18] sm:$0xff]
  %v4304 = vld [vmem:[%s5 + $0x20] sm:$0xff]
  %v4305 = vld [vmem:[%s5 + $0x28] sm:$0xff]
  %v4306 = vld [vmem:[%s5 + $0x30] sm:$0xff]
  %v4307 = vld [vmem:[%s5 + $0x38] sm:$0xff]
  %v4308 = vld [vmem:[%s5 + $0x40] sm:$0xff]
  %v4309 = vld [vmem:[%s5 + $0x48] sm:$0xff]
  %v4310 = vld [vmem:[%s5 + $0x50] sm:$0xff]
  %v4311 = vld [vmem:[%s5 + $0x58] sm:$0xff]
  %v4312 = vld [vmem:[%s5 + $0x60] sm:$0xff]
  %v4313 = vld [vmem:[%s5 + $0x68] sm:$0xff]
  %v4314 = vld [vmem:[%s5 + $0x70] sm:$0xff]
  %v4315 = vld [vmem:[%s5 + $0x78] sm:$0xff]
  %v4316 = vld [vmem:[%s5 + $0x80] sm:$0xff]
  %v4317 = vld [vmem:[%s5 + $0x88] sm:$0xff]
  %v4318 = vld [vmem:[%s5 + $0x90] sm:$0xff]
  %v4319 = vld [vmem:[%s5 + $0x98] sm:$0xff]
  %v4320 = vld [vmem:[%s5 + $0xa0] sm:$0xff]
  %v4321 = vld [vmem:[%s5 + $0xa8] sm:$0xff]
  %v4322 = vld [vmem:[%s5 + $0xb0] sm:$0xff]
  %v4323 = vld [vmem:[%s5 + $0xb8] sm:$0xff]
  %v4324 = vld [vmem:[%s5 + $0xc0] sm:$0xff]
  %v4325 = vld [vmem:[%s5 + $0xc8] sm:$0xff]
  %v4326 = vld [vmem:[%s5 + $0xd0] sm:$0xff]
  %v4327 = vld [vmem:[%s5 + $0xd8] sm:$0xff]
  %v4328 = vld [vmem:[%s5 + $0xe0] sm:$0xff]
  %v4329 = vld [vmem:[%s5 + $0xe8] sm:$0xff]
  %v4330 = vld [vmem:[%s5 + $0xf0] sm:$0xff]
  %v4331 = vld [vmem:[%s5 + $0xf8] sm:$0xff]
  %v4364 = vunpack.c.l.b16 %v4300
  %v4365 = vunpack.c.h.b16 %v4300
  %v4366 = vunpack.c.l.b16 %v4301
  %v4367 = vunpack.c.h.b16 %v4301
  %v4368 = vunpack.c.l.b16 %v4302
  %v4369 = vunpack.c.h.b16 %v4302
  %v4370 = vunpack.c.l.b16 %v4303
  %v4371 = vunpack.c.h.b16 %v4303
  %v4372 = vunpack.c.l.b16 %v4304
  %v4373 = vunpack.c.h.b16 %v4304
  %v4374 = vunpack.c.l.b16 %v4305
  %v4375 = vunpack.c.h.b16 %v4305
  %v4376 = vunpack.c.l.b16 %v4306
  %v4377 = vunpack.c.h.b16 %v4306
  %v4378 = vunpack.c.l.b16 %v4307
  %v4379 = vunpack.c.h.b16 %v4307
  %v4380 = vunpack.c.l.b16 %v4308
  %v4381 = vunpack.c.h.b16 %v4308
  %v4382 = vunpack.c.l.b16 %v4309
  %v4383 = vunpack.c.h.b16 %v4309
  %v4384 = vunpack.c.l.b16 %v4310
  %v4385 = vunpack.c.h.b16 %v4310
  %v4386 = vunpack.c.l.b16 %v4311
  %v4387 = vunpack.c.h.b16 %v4311
  %v4388 = vunpack.c.l.b16 %v4312
  %v4389 = vunpack.c.h.b16 %v4312
  %v4390 = vunpack.c.l.b16 %v4313
  %v4391 = vunpack.c.h.b16 %v4313
  %v4392 = vunpack.c.l.b16 %v4314
  %v4393 = vunpack.c.h.b16 %v4314
  %v4394 = vunpack.c.l.b16 %v4315
  %v4395 = vunpack.c.h.b16 %v4315
  %v4396 = vunpack.c.l.b16 %v4316
  %v4397 = vunpack.c.h.b16 %v4316
  %v4398 = vunpack.c.l.b16 %v4317
  %v4399 = vunpack.c.h.b16 %v4317
  %v4400 = vunpack.c.l.b16 %v4318
  %v4401 = vunpack.c.h.b16 %v4318
  %v4402 = vunpack.c.l.b16 %v4319
  %v4403 = vunpack.c.h.b16 %v4319
  %v4404 = vunpack.c.l.b16 %v4320
  %v4405 = vunpack.c.h.b16 %v4320
  %v4406 = vunpack.c.l.b16 %v4321
  %v4407 = vunpack.c.h.b16 %v4321
  %v4408 = vunpack.c.l.b16 %v4322
  %v4409 = vunpack.c.h.b16 %v4322
  %v4410 = vunpack.c.l.b16 %v4323
  %v4411 = vunpack.c.h.b16 %v4323
  %v4412 = vunpack.c.l.b16 %v4324
  %v4413 = vunpack.c.h.b16 %v4324
  %v4414 = vunpack.c.l.b16 %v4325
  %v4415 = vunpack.c.h.b16 %v4325
  %v4416 = vunpack.c.l.b16 %v4326
  %v4417 = vunpack.c.h.b16 %v4326
  %v4418 = vunpack.c.l.b16 %v4327
  %v4419 = vunpack.c.h.b16 %v4327
  %v4420 = vunpack.c.l.b16 %v4328
  %v4421 = vunpack.c.h.b16 %v4328
  %v4422 = vunpack.c.l.b16 %v4329
  %v4423 = vunpack.c.h.b16 %v4329
  %v4424 = vunpack.c.l.b16 %v4330
  %v4425 = vunpack.c.h.b16 %v4330
  %v4426 = vunpack.c.l.b16 %v4331
  %v4427 = vunpack.c.h.b16 %v4331
  %v4428 = vpack.c.b16 %v4368, %v4364
  %v4429 = vpack.c.b16 %v4369, %v4365
  %v4430 = vpack.c.b16 %v4370, %v4366
  %v4431 = vpack.c.b16 %v4371, %v4367
  %v4432 = vpack.c.b16 %v4376, %v4372
  %v4433 = vpack.c.b16 %v4377, %v4373
  %v4434 = vpack.c.b16 %v4378, %v4374
  %v4435 = vpack.c.b16 %v4379, %v4375
  %v4436 = vpack.c.b16 %v4384, %v4380
  %v4437 = vpack.c.b16 %v4385, %v4381
  %v4438 = vpack.c.b16 %v4386, %v4382
  %v4439 = vpack.c.b16 %v4387, %v4383
  %v4440 = vpack.c.b16 %v4392, %v4388
  %v4441 = vpack.c.b16 %v4393, %v4389
  %v4442 = vpack.c.b16 %v4394, %v4390
  %v4443 = vpack.c.b16 %v4395, %v4391
  %v4444 = vpack.c.b16 %v4400, %v4396
  %v4445 = vpack.c.b16 %v4401, %v4397
  %v4446 = vpack.c.b16 %v4402, %v4398
  %v4447 = vpack.c.b16 %v4403, %v4399
  %v4448 = vpack.c.b16 %v4408, %v4404
  %v4449 = vpack.c.b16 %v4409, %v4405
  %v4450 = vpack.c.b16 %v4410, %v4406
  %v4451 = vpack.c.b16 %v4411, %v4407
  %v4452 = vpack.c.b16 %v4416, %v4412
  %v4453 = vpack.c.b16 %v4417, %v4413
  %v4454 = vpack.c.b16 %v4418, %v4414
  %v4455 = vpack.c.b16 %v4419, %v4415
  %v4456 = vpack.c.b16 %v4424, %v4420
  %v4457 = vpack.c.b16 %v4425, %v4421
  %v4458 = vpack.c.b16 %v4426, %v4422
  %v4459 = vpack.c.b16 %v4427, %v4423
  %4492 = vmatprep.subr.bf16.mxu0 %v4457
  %4493 = vmatpush1.bf16.msra.mxu0 %v4456
  %4494 = vmatprep.subr.bf16.mxu0 %v4453
  %4495 = vmatpush1.bf16.msra.mxu0 %v4452
  %4496 = vmatprep.subr.bf16.mxu0 %v4449
  %4497 = vmatpush1.bf16.msra.mxu0 %v4448
  %4498 = vmatprep.subr.bf16.mxu0 %v4445
  %4499 = vmatpush1.bf16.msra.mxu0 %v4444
  %4500 = vmatprep.subr.bf16.mxu0 %v4441
  %4501 = vmatpush1.bf16.msra.mxu0 %v4440
  %4502 = vmatprep.subr.bf16.mxu0 %v4437
  %4503 = vmatpush1.bf16.msra.mxu0 %v4436
  %4504 = vmatprep.subr.bf16.mxu0 %v4433
  %4505 = vmatpush1.bf16.msra.mxu0 %v4432
  %4506 = vmatprep.subr.bf16.mxu0 %v4429
  %4507 = vmatpush1.bf16.msra.mxu0 %v4428
  %4508 = vmatprep.subr.bf16.mxu0 0
  %4509 = vmatpush2.bf16.msra.mxu0 0
  %4510 = vmatprep.subr.bf16.mxu0 0
  %4511 = vmatpush2.bf16.msra.mxu0 0
  %4512 = vmatprep.subr.bf16.mxu0 0
  %4513 = vmatpush2.bf16.msra.mxu0 0
  %4514 = vmatprep.subr.bf16.mxu0 0
  %4515 = vmatpush2.bf16.msra.mxu0 0
  %4516 = vmatprep.subr.bf16.mxu0 0
  %4517 = vmatpush2.bf16.msra.mxu0 0
  %4518 = vmatprep.subr.bf16.mxu0 0
  %4519 = vmatpush2.bf16.msra.mxu0 0
  %4520 = vmatprep.subr.bf16.mxu0 0
  %4521 = vmatpush2.bf16.msra.mxu0 0
  %4522 = vmatprep.subr.bf16.mxu0 0
  %4523 = vmatpush2.bf16.msra.mxu0 0
  %4524 = vmatprep.mubr.bf16.mxu0 0
  %4525 = vmatmul.mubr.bf16.gmra.mxu0 %v4294
  %v4526 = vpop.f32.mrf.mxu0
  %v4527 = vadd.f32 0.0, %v4526
  %v4528 = vpop.f32.mrf.mxu0
  %v4529 = vadd.f32 0.0, %v4528
  %v4530 = vpop.f32.mrf.mxu0
  %v4531 = vpop.f32.mrf.mxu0
  %4532 = vdwg.mxu0
  %4533 = vmatprep.subr.bf16.mxu0 %v4459
  %4534 = vmatpush1.bf16.msra.mxu0 %v4458
  %4535 = vmatprep.subr.bf16.mxu0 %v4455
  %4536 = vmatpush1.bf16.msra.mxu0 %v4454
  %4537 = vmatprep.subr.bf16.mxu0 %v4451
  %4538 = vmatpush1.bf16.msra.mxu0 %v4450
  %4539 = vmatprep.subr.bf16.mxu0 %v4447
  %4540 = vmatpush1.bf16.msra.mxu0 %v4446
  %4541 = vmatprep.subr.bf16.mxu0 %v4443
  %4542 = vmatpush1.bf16.msra.mxu0 %v4442
  %4543 = vmatprep.subr.bf16.mxu0 %v4439
  %4544 = vmatpush1.bf16.msra.mxu0 %v4438
  %4545 = vmatprep.subr.bf16.mxu0 %v4435
  %4546 = vmatpush1.bf16.msra.mxu0 %v4434
  %4547 = vmatprep.subr.bf16.mxu0 %v4431
  %4548 = vmatpush1.bf16.msra.mxu0 %v4430
  %4549 = vmatprep.subr.bf16.mxu0 0
  %4550 = vmatpush2.bf16.msra.mxu0 0
  %4551 = vmatprep.subr.bf16.mxu0 0
  %4552 = vmatpush2.bf16.msra.mxu0 0
  %4553 = vmatprep.subr.bf16.mxu0 0
  %4554 = vmatpush2.bf16.msra.mxu0 0
  %4555 = vmatprep.subr.bf16.mxu0 0
  %4556 = vmatpush2.bf16.msra.mxu0 0
  %4557 = vmatprep.subr.bf16.mxu0 0
  %4558 = vmatpush2.bf16.msra.mxu0 0
  %4559 = vmatprep.subr.bf16.mxu0 0
  %4560 = vmatpush2.bf16.msra.mxu0 0
  %4561 = vmatprep.subr.bf16.mxu0 0
  %4562 = vmatpush2.bf16.msra.mxu0 0
  %4563 = vmatprep.subr.bf16.mxu0 0
  %4564 = vmatpush2.bf16.msra.mxu0 0
  %4565 = vmatprep.mubr.bf16.mxu0 0
  %4566 = vmatmul.mubr.bf16.gmra.mxu0 %v4294
  %v4567 = vpop.f32.mrf.mxu0
  %v4568 = vadd.f32 0.0, %v4567
  %v4569 = vpop.f32.mrf.mxu0
  %v4570 = vadd.f32 0.0, %v4569
  %v4571 = vpop.f32.mrf.mxu0
  %v4572 = vpop.f32.mrf.mxu0
  %4573 = vdwg.mxu0
  %v4574 = vadd.f32 %v4296, %v4527
  %v4575 = vadd.f32 %v4297, %v4529
  %v4576 = vadd.f32 %v4298, %v4568
  %v4577 = vadd.f32 %v4299, %v4570
  %v4578 = vxor.u32 %v4574, 2147483648
  %v4579 = vmul.f32 %v4578, 1.442695
  %v4580 = vpow.pop %v4579
  %v4581 = vadd.f32 %v4580, 1.0
  %v4582 = vrcp.pop %v4581
  %v4583 = vmul.f32 1.0, %v4582
  %v4584 = vxor.u32 %v4575, 2147483648
  %v4585 = vmul.f32 %v4584, 1.442695
  %v4586 = vpow.pop %v4585
  %v4587 = vadd.f32 %v4586, 1.0
  %v4588 = vrcp.pop %v4587
  %v4589 = vmul.f32 1.0, %v4588
  %v4590 = vtanh.pop %v4576
  %v4591 = vxor.u32 %v4577, 2147483648
  %v4592 = vmul.f32 %v4591, 1.442695
  %v4593 = vpow.pop %v4592
  %v4594 = vadd.f32 %v4593, 1.0
  %v4595 = vrcp.pop %v4594
  %v4596 = vmul.f32 1.0, %v4595
  %v4597 = vmul.f32 %v4589, %v4291
  %v4598 = vmul.f32 %v4583, %v4590
  %v4599 = vadd.f32 %v4597, %v4598
  %v4600 = vtanh.pop %v4599
  %v4601 = vmul.f32 %v4596, %v4600
  %v4602 = vpack.c.bf16 %v4601, %v4601
  %4603 = vst [vmem:[%s1706] sm:$0xf] %v4602
  %v4604 = vld [vmem:[%s1708] sm:$0xff]
  %v4605 = vld [vmem:[%s1708 + $0x8] sm:$0xff]
  %v4606 = vld [vmem:[%s1708 + $0x10] sm:$0xff]
  %v4607 = vld [vmem:[%s1708 + $0x18] sm:$0xff]
  %v4608 = vld [vmem:[%s5] sm:$0xff]
  %v4609 = vld [vmem:[%s5 + $0x8] sm:$0xff]
  %v4610 = vld [vmem:[%s5 + $0x10] sm:$0xff]
  %v4611 = vld [vmem:[%s5 + $0x18] sm:$0xff]
  %v4612 = vld [vmem:[%s5 + $0x20] sm:$0xff]
  %v4613 = vld [vmem:[%s5 + $0x28] sm:$0xff]
  %v4614 = vld [vmem:[%s5 + $0x30] sm:$0xff]
  %v4615 = vld [vmem:[%s5 + $0x38] sm:$0xff]
  %v4616 = vld [vmem:[%s5 + $0x40] sm:$0xff]
  %v4617 = vld [vmem:[%s5 + $0x48] sm:$0xff]
  %v4618 = vld [vmem:[%s5 + $0x50] sm:$0xff]
  %v4619 = vld [vmem:[%s5 + $0x58] sm:$0xff]
  %v4620 = vld [vmem:[%s5 + $0x60] sm:$0xff]
  %v4621 = vld [vmem:[%s5 + $0x68] sm:$0xff]
  %v4622 = vld [vmem:[%s5 + $0x70] sm:$0xff]
  %v4623 = vld [vmem:[%s5 + $0x78] sm:$0xff]
  %v4624 = vld [vmem:[%s5 + $0x80] sm:$0xff]
  %v4625 = vld [vmem:[%s5 + $0x88] sm:$0xff]
  %v4626 = vld [vmem:[%s5 + $0x90] sm:$0xff]
  %v4627 = vld [vmem:[%s5 + $0x98] sm:$0xff]
  %v4628 = vld [vmem:[%s5 + $0xa0] sm:$0xff]
  %v4629 = vld [vmem:[%s5 + $0xa8] sm:$0xff]
  %v4630 = vld [vmem:[%s5 + $0xb0] sm:$0xff]
  %v4631 = vld [vmem:[%s5 + $0xb8] sm:$0xff]
  %v4632 = vld [vmem:[%s5 + $0xc0] sm:$0xff]
  %v4633 = vld [vmem:[%s5 + $0xc8] sm:$0xff]
  %v4634 = vld [vmem:[%s5 + $0xd0] sm:$0xff]
  %v4635 = vld [vmem:[%s5 + $0xd8] sm:$0xff]
  %v4636 = vld [vmem:[%s5 + $0xe0] sm:$0xff]
  %v4637 = vld [vmem:[%s5 + $0xe8] sm:$0xff]
  %v4638 = vld [vmem:[%s5 + $0xf0] sm:$0xff]
  %v4639 = vld [vmem:[%s5 + $0xf8] sm:$0xff]
  %v4672 = vunpack.c.l.b16 %v4608
  %v4673 = vunpack.c.h.b16 %v4608
  %v4674 = vunpack.c.l.b16 %v4609
  %v4675 = vunpack.c.h.b16 %v4609
  %v4676 = vunpack.c.l.b16 %v4610
  %v4677 = vunpack.c.h.b16 %v4610
  %v4678 = vunpack.c.l.b16 %v4611
  %v4679 = vunpack.c.h.b16 %v4611
  %v4680 = vunpack.c.l.b16 %v4612
  %v4681 = vunpack.c.h.b16 %v4612
  %v4682 = vunpack.c.l.b16 %v4613
  %v4683 = vunpack.c.h.b16 %v4613
  %v4684 = vunpack.c.l.b16 %v4614
  %v4685 = vunpack.c.h.b16 %v4614
  %v4686 = vunpack.c.l.b16 %v4615
  %v4687 = vunpack.c.h.b16 %v4615
  %v4688 = vunpack.c.l.b16 %v4616
  %v4689 = vunpack.c.h.b16 %v4616
  %v4690 = vunpack.c.l.b16 %v4617
  %v4691 = vunpack.c.h.b16 %v4617
  %v4692 = vunpack.c.l.b16 %v4618
  %v4693 = vunpack.c.h.b16 %v4618
  %v4694 = vunpack.c.l.b16 %v4619
  %v4695 = vunpack.c.h.b16 %v4619
  %v4696 = vunpack.c.l.b16 %v4620
  %v4697 = vunpack.c.h.b16 %v4620
  %v4698 = vunpack.c.l.b16 %v4621
  %v4699 = vunpack.c.h.b16 %v4621
  %v4700 = vunpack.c.l.b16 %v4622
  %v4701 = vunpack.c.h.b16 %v4622
  %v4702 = vunpack.c.l.b16 %v4623
  %v4703 = vunpack.c.h.b16 %v4623
  %v4704 = vunpack.c.l.b16 %v4624
  %v4705 = vunpack.c.h.b16 %v4624
  %v4706 = vunpack.c.l.b16 %v4625
  %v4707 = vunpack.c.h.b16 %v4625
  %v4708 = vunpack.c.l.b16 %v4626
  %v4709 = vunpack.c.h.b16 %v4626
  %v4710 = vunpack.c.l.b16 %v4627
  %v4711 = vunpack.c.h.b16 %v4627
  %v4712 = vunpack.c.l.b16 %v4628
  %v4713 = vunpack.c.h.b16 %v4628
  %v4714 = vunpack.c.l.b16 %v4629
  %v4715 = vunpack.c.h.b16 %v4629
  %v4716 = vunpack.c.l.b16 %v4630
  %v4717 = vunpack.c.h.b16 %v4630
  %v4718 = vunpack.c.l.b16 %v4631
  %v4719 = vunpack.c.h.b16 %v4631
  %v4720 = vunpack.c.l.b16 %v4632
  %v4721 = vunpack.c.h.b16 %v4632
  %v4722 = vunpack.c.l.b16 %v4633
  %v4723 = vunpack.c.h.b16 %v4633
  %v4724 = vunpack.c.l.b16 %v4634
  %v4725 = vunpack.c.h.b16 %v4634
  %v4726 = vunpack.c.l.b16 %v4635
  %v4727 = vunpack.c.h.b16 %v4635
  %v4728 = vunpack.c.l.b16 %v4636
  %v4729 = vunpack.c.h.b16 %v4636
  %v4730 = vunpack.c.l.b16 %v4637
  %v4731 = vunpack.c.h.b16 %v4637
  %v4732 = vunpack.c.l.b16 %v4638
  %v4733 = vunpack.c.h.b16 %v4638
  %v4734 = vunpack.c.l.b16 %v4639
  %v4735 = vunpack.c.h.b16 %v4639
  %v4736 = vpack.c.b16 %v4676, %v4672
  %v4737 = vpack.c.b16 %v4677, %v4673
  %v4738 = vpack.c.b16 %v4678, %v4674
  %v4739 = vpack.c.b16 %v4679, %v4675
  %v4740 = vpack.c.b16 %v4684, %v4680
  %v4741 = vpack.c.b16 %v4685, %v4681
  %v4742 = vpack.c.b16 %v4686, %v4682
  %v4743 = vpack.c.b16 %v4687, %v4683
  %v4744 = vpack.c.b16 %v4692, %v4688
  %v4745 = vpack.c.b16 %v4693, %v4689
  %v4746 = vpack.c.b16 %v4694, %v4690
  %v4747 = vpack.c.b16 %v4695, %v4691
  %v4748 = vpack.c.b16 %v4700, %v4696
  %v4749 = vpack.c.b16 %v4701, %v4697
  %v4750 = vpack.c.b16 %v4702, %v4698
  %v4751 = vpack.c.b16 %v4703, %v4699
  %v4752 = vpack.c.b16 %v4708, %v4704
  %v4753 = vpack.c.b16 %v4709, %v4705
  %v4754 = vpack.c.b16 %v4710, %v4706
  %v4755 = vpack.c.b16 %v4711, %v4707
  %v4756 = vpack.c.b16 %v4716, %v4712
  %v4757 = vpack.c.b16 %v4717, %v4713
  %v4758 = vpack.c.b16 %v4718, %v4714
  %v4759 = vpack.c.b16 %v4719, %v4715
  %v4760 = vpack.c.b16 %v4724, %v4720
  %v4761 = vpack.c.b16 %v4725, %v4721
  %v4762 = vpack.c.b16 %v4726, %v4722
  %v4763 = vpack.c.b16 %v4727, %v4723
  %v4764 = vpack.c.b16 %v4732, %v4728
  %v4765 = vpack.c.b16 %v4733, %v4729
  %v4766 = vpack.c.b16 %v4734, %v4730
  %v4767 = vpack.c.b16 %v4735, %v4731
  %4800 = vmatprep.subr.bf16.mxu0 %v4765
  %4801 = vmatpush1.bf16.msra.mxu0 %v4764
  %4802 = vmatprep.subr.bf16.mxu0 %v4761
  %4803 = vmatpush1.bf16.msra.mxu0 %v4760
  %4804 = vmatprep.subr.bf16.mxu0 %v4757
  %4805 = vmatpush1.bf16.msra.mxu0 %v4756
  %4806 = vmatprep.subr.bf16.mxu0 %v4753
  %4807 = vmatpush1.bf16.msra.mxu0 %v4752
  %4808 = vmatprep.subr.bf16.mxu0 %v4749
  %4809 = vmatpush1.bf16.msra.mxu0 %v4748
  %4810 = vmatprep.subr.bf16.mxu0 %v4745
  %4811 = vmatpush1.bf16.msra.mxu0 %v4744
  %4812 = vmatprep.subr.bf16.mxu0 %v4741
  %4813 = vmatpush1.bf16.msra.mxu0 %v4740
  %4814 = vmatprep.subr.bf16.mxu0 %v4737
  %4815 = vmatpush1.bf16.msra.mxu0 %v4736
  %4816 = vmatprep.subr.bf16.mxu0 0
  %4817 = vmatpush2.bf16.msra.mxu0 0
  %4818 = vmatprep.subr.bf16.mxu0 0
  %4819 = vmatpush2.bf16.msra.mxu0 0
  %4820 = vmatprep.subr.bf16.mxu0 0
  %4821 = vmatpush2.bf16.msra.mxu0 0
  %4822 = vmatprep.subr.bf16.mxu0 0
  %4823 = vmatpush2.bf16.msra.mxu0 0
  %4824 = vmatprep.subr.bf16.mxu0 0
  %4825 = vmatpush2.bf16.msra.mxu0 0
  %4826 = vmatprep.subr.bf16.mxu0 0
  %4827 = vmatpush2.bf16.msra.mxu0 0
  %4828 = vmatprep.subr.bf16.mxu0 0
  %4829 = vmatpush2.bf16.msra.mxu0 0
  %4830 = vmatprep.subr.bf16.mxu0 0
  %4831 = vmatpush2.bf16.msra.mxu0 0
  %4832 = vmatprep.mubr.bf16.mxu0 0
  %4833 = vmatmul.mubr.bf16.gmra.mxu0 %v4602
  %v4834 = vpop.f32.mrf.mxu0
  %v4835 = vadd.f32 0.0, %v4834
  %v4836 = vpop.f32.mrf.mxu0
  %v4837 = vadd.f32 0.0, %v4836
  %v4838 = vpop.f32.mrf.mxu0
  %v4839 = vpop.f32.mrf.mxu0
  %4840 = vdwg.mxu0
  %4841 = vmatprep.subr.bf16.mxu0 %v4767
  %4842 = vmatpush1.bf16.msra.mxu0 %v4766
  %4843 = vmatprep.subr.bf16.mxu0 %v4763
  %4844 = vmatpush1.bf16.msra.mxu0 %v4762
  %4845 = vmatprep.subr.bf16.mxu0 %v4759
  %4846 = vmatpush1.bf16.msra.mxu0 %v4758
  %4847 = vmatprep.subr.bf16.mxu0 %v4755
  %4848 = vmatpush1.bf16.msra.mxu0 %v4754
  %4849 = vmatprep.subr.bf16.mxu0 %v4751
  %4850 = vmatpush1.bf16.msra.mxu0 %v4750
  %4851 = vmatprep.subr.bf16.mxu0 %v4747
  %4852 = vmatpush1.bf16.msra.mxu0 %v4746
  %4853 = vmatprep.subr.bf16.mxu0 %v4743
  %4854 = vmatpush1.bf16.msra.mxu0 %v4742
  %4855 = vmatprep.subr.bf16.mxu0 %v4739
  %4856 = vmatpush1.bf16.msra.mxu0 %v4738
  %4857 = vmatprep.subr.bf16.mxu0 0
  %4858 = vmatpush2.bf16.msra.mxu0 0
  %4859 = vmatprep.subr.bf16.mxu0 0
  %4860 = vmatpush2.bf16.msra.mxu0 0
  %4861 = vmatprep.subr.bf16.mxu0 0
  %4862 = vmatpush2.bf16.msra.mxu0 0
  %4863 = vmatprep.subr.bf16.mxu0 0
  %4864 = vmatpush2.bf16.msra.mxu0 0
  %4865 = vmatprep.subr.bf16.mxu0 0
  %4866 = vmatpush2.bf16.msra.mxu0 0
  %4867 = vmatprep.subr.bf16.mxu0 0
  %4868 = vmatpush2.bf16.msra.mxu0 0
  %4869 = vmatprep.subr.bf16.mxu0 0
  %4870 = vmatpush2.bf16.msra.mxu0 0
  %4871 = vmatprep.subr.bf16.mxu0 0
  %4872 = vmatpush2.bf16.msra.mxu0 0
  %4873 = vmatprep.mubr.bf16.mxu0 0
  %4874 = vmatmul.mubr.bf16.gmra.mxu0 %v4602
  %v4875 = vpop.f32.mrf.mxu0
  %v4876 = vadd.f32 0.0, %v4875
  %v4877 = vpop.f32.mrf.mxu0
  %v4878 = vadd.f32 0.0, %v4877
  %v4879 = vpop.f32.mrf.mxu0
  %v4880 = vpop.f32.mrf.mxu0
  %4881 = vdwg.mxu0
  %v4882 = vadd.f32 %v4604, %v4835
  %v4883 = vadd.f32 %v4605, %v4837
  %v4884 = vadd.f32 %v4606, %v4876
  %v4885 = vadd.f32 %v4607, %v4878
  %v4886 = vxor.u32 %v4882, 2147483648
  %v4887 = vmul.f32 %v4886, 1.442695
  %v4888 = vpow.pop %v4887
  %v4889 = vadd.f32 %v4888, 1.0
  %v4890 = vrcp.pop %v4889
  %v4891 = vmul.f32 1.0, %v4890
  %v4892 = vxor.u32 %v4883, 2147483648
  %v4893 = vmul.f32 %v4892, 1.442695
  %v4894 = vpow.pop %v4893
  %v4895 = vadd.f32 %v4894, 1.0
  %v4896 = vrcp.pop %v4895
  %v4897 = vmul.f32 1.0, %v4896
  %v4898 = vtanh.pop %v4884
  %v4899 = vxor.u32 %v4885, 2147483648
  %v4900 = vmul.f32 %v4899, 1.442695
  %v4901 = vpow.pop %v4900
  %v4902 = vadd.f32 %v4901, 1.0
  %v4903 = vrcp.pop %v4902
  %v4904 = vmul.f32 1.0, %v4903
  %v4905 = vmul.f32 %v4897, %v4599
  %v4906 = vmul.f32 %v4891, %v4898
  %v4907 = vadd.f32 %v4905, %v4906
  %v4908 = vtanh.pop %v4907
  %v4909 = vmul.f32 %v4904, %v4908
  %v4910 = vpack.c.bf16 %v4909, %v4909
  %4911 = vst [vmem:[%s2016] sm:$0xf] %v4910
  %v4912 = vld [vmem:[%s2018] sm:$0xff]
  %v4913 = vld [vmem:[%s2018 + $0x8] sm:$0xff]
  %v4914 = vld [vmem:[%s2018 + $0x10] sm:$0xff]
  %v4915 = vld [vmem:[%s2018 + $0x18] sm:$0xff]
  %v4916 = vld [vmem:[%s5] sm:$0xff]
  %v4917 = vld [vmem:[%s5 + $0x8] sm:$0xff]
  %v4918 = vld [vmem:[%s5 + $0x10] sm:$0xff]
  %v4919 = vld [vmem:[%s5 + $0x18] sm:$0xff]
  %v4920 = vld [vmem:[%s5 + $0x20] sm:$0xff]
  %v4921 = vld [vmem:[%s5 + $0x28] sm:$0xff]
  %v4922 = vld [vmem:[%s5 + $0x30] sm:$0xff]
  %v4923 = vld [vmem:[%s5 + $0x38] sm:$0xff]
  %v4924 = vld [vmem:[%s5 + $0x40] sm:$0xff]
  %v4925 = vld [vmem:[%s5 + $0x48] sm:$0xff]
  %v4926 = vld [vmem:[%s5 + $0x50] sm:$0xff]
  %v4927 = vld [vmem:[%s5 + $0x58] sm:$0xff]
  %v4928 = vld [vmem:[%s5 + $0x60] sm:$0xff]
  %v4929 = vld [vmem:[%s5 + $0x68] sm:$0xff]
  %v4930 = vld [vmem:[%s5 + $0x70] sm:$0xff]
  %v4931 = vld [vmem:[%s5 + $0x78] sm:$0xff]
  %v4932 = vld [vmem:[%s5 + $0x80] sm:$0xff]
  %v4933 = vld [vmem:[%s5 + $0x88] sm:$0xff]
  %v4934 = vld [vmem:[%s5 + $0x90] sm:$0xff]
  %v4935 = vld [vmem:[%s5 + $0x98] sm:$0xff]
  %v4936 = vld [vmem:[%s5 + $0xa0] sm:$0xff]
  %v4937 = vld [vmem:[%s5 + $0xa8] sm:$0xff]
  %v4938 = vld [vmem:[%s5 + $0xb0] sm:$0xff]
  %v4939 = vld [vmem:[%s5 + $0xb8] sm:$0xff]
  %v4940 = vld [vmem:[%s5 + $0xc0] sm:$0xff]
  %v4941 = vld [vmem:[%s5 + $0xc8] sm:$0xff]
  %v4942 = vld [vmem:[%s5 + $0xd0] sm:$0xff]
  %v4943 = vld [vmem:[%s5 + $0xd8] sm:$0xff]
  %v4944 = vld [vmem:[%s5 + $0xe0] sm:$0xff]
  %v4945 = vld [vmem:[%s5 + $0xe8] sm:$0xff]
  %v4946 = vld [vmem:[%s5 + $0xf0] sm:$0xff]
  %v4947 = vld [vmem:[%s5 + $0xf8] sm:$0xff]
  %v4980 = vunpack.c.l.b16 %v4916
  %v4981 = vunpack.c.h.b16 %v4916
  %v4982 = vunpack.c.l.b16 %v4917
  %v4983 = vunpack.c.h.b16 %v4917
  %v4984 = vunpack.c.l.b16 %v4918
  %v4985 = vunpack.c.h.b16 %v4918
  %v4986 = vunpack.c.l.b16 %v4919
  %v4987 = vunpack.c.h.b16 %v4919
  %v4988 = vunpack.c.l.b16 %v4920
  %v4989 = vunpack.c.h.b16 %v4920
  %v4990 = vunpack.c.l.b16 %v4921
  %v4991 = vunpack.c.h.b16 %v4921
  %v4992 = vunpack.c.l.b16 %v4922
  %v4993 = vunpack.c.h.b16 %v4922
  %v4994 = vunpack.c.l.b16 %v4923
  %v4995 = vunpack.c.h.b16 %v4923
  %v4996 = vunpack.c.l.b16 %v4924
  %v4997 = vunpack.c.h.b16 %v4924
  %v4998 = vunpack.c.l.b16 %v4925
  %v4999 = vunpack.c.h.b16 %v4925
  %v5000 = vunpack.c.l.b16 %v4926
  %v5001 = vunpack.c.h.b16 %v4926
  %v5002 = vunpack.c.l.b16 %v4927
  %v5003 = vunpack.c.h.b16 %v4927
  %v5004 = vunpack.c.l.b16 %v4928
  %v5005 = vunpack.c.h.b16 %v4928
  %v5006 = vunpack.c.l.b16 %v4929
  %v5007 = vunpack.c.h.b16 %v4929
  %v5008 = vunpack.c.l.b16 %v4930
  %v5009 = vunpack.c.h.b16 %v4930
  %v5010 = vunpack.c.l.b16 %v4931
  %v5011 = vunpack.c.h.b16 %v4931
  %v5012 = vunpack.c.l.b16 %v4932
  %v5013 = vunpack.c.h.b16 %v4932
  %v5014 = vunpack.c.l.b16 %v4933
  %v5015 = vunpack.c.h.b16 %v4933
  %v5016 = vunpack.c.l.b16 %v4934
  %v5017 = vunpack.c.h.b16 %v4934
  %v5018 = vunpack.c.l.b16 %v4935
  %v5019 = vunpack.c.h.b16 %v4935
  %v5020 = vunpack.c.l.b16 %v4936
  %v5021 = vunpack.c.h.b16 %v4936
  %v5022 = vunpack.c.l.b16 %v4937
  %v5023 = vunpack.c.h.b16 %v4937
  %v5024 = vunpack.c.l.b16 %v4938
  %v5025 = vunpack.c.h.b16 %v4938
  %v5026 = vunpack.c.l.b16 %v4939
  %v5027 = vunpack.c.h.b16 %v4939
  %v5028 = vunpack.c.l.b16 %v4940
  %v5029 = vunpack.c.h.b16 %v4940
  %v5030 = vunpack.c.l.b16 %v4941
  %v5031 = vunpack.c.h.b16 %v4941
  %v5032 = vunpack.c.l.b16 %v4942
  %v5033 = vunpack.c.h.b16 %v4942
  %v5034 = vunpack.c.l.b16 %v4943
  %v5035 = vunpack.c.h.b16 %v4943
  %v5036 = vunpack.c.l.b16 %v4944
  %v5037 = vunpack.c.h.b16 %v4944
  %v5038 = vunpack.c.l.b16 %v4945
  %v5039 = vunpack.c.h.b16 %v4945
  %v5040 = vunpack.c.l.b16 %v4946
  %v5041 = vunpack.c.h.b16 %v4946
  %v5042 = vunpack.c.l.b16 %v4947
  %v5043 = vunpack.c.h.b16 %v4947
  %v5044 = vpack.c.b16 %v4984, %v4980
  %v5045 = vpack.c.b16 %v4985, %v4981
  %v5046 = vpack.c.b16 %v4986, %v4982
  %v5047 = vpack.c.b16 %v4987, %v4983
  %v5048 = vpack.c.b16 %v4992, %v4988
  %v5049 = vpack.c.b16 %v4993, %v4989
  %v5050 = vpack.c.b16 %v4994, %v4990
  %v5051 = vpack.c.b16 %v4995, %v4991
  %v5052 = vpack.c.b16 %v5000, %v4996
  %v5053 = vpack.c.b16 %v5001, %v4997
  %v5054 = vpack.c.b16 %v5002, %v4998
  %v5055 = vpack.c.b16 %v5003, %v4999
  %v5056 = vpack.c.b16 %v5008, %v5004
  %v5057 = vpack.c.b16 %v5009, %v5005
  %v5058 = vpack.c.b16 %v5010, %v5006
  %v5059 = vpack.c.b16 %v5011, %v5007
  %v5060 = vpack.c.b16 %v5016, %v5012
  %v5061 = vpack.c.b16 %v5017, %v5013
  %v5062 = vpack.c.b16 %v5018, %v5014
  %v5063 = vpack.c.b16 %v5019, %v5015
  %v5064 = vpack.c.b16 %v5024, %v5020
  %v5065 = vpack.c.b16 %v5025, %v5021
  %v5066 = vpack.c.b16 %v5026, %v5022
  %v5067 = vpack.c.b16 %v5027, %v5023
  %v5068 = vpack.c.b16 %v5032, %v5028
  %v5069 = vpack.c.b16 %v5033, %v5029
  %v5070 = vpack.c.b16 %v5034, %v5030
  %v5071 = vpack.c.b16 %v5035, %v5031
  %v5072 = vpack.c.b16 %v5040, %v5036
  %v5073 = vpack.c.b16 %v5041, %v5037
  %v5074 = vpack.c.b16 %v5042, %v5038
  %v5075 = vpack.c.b16 %v5043, %v5039
  %5108 = vmatprep.subr.bf16.mxu0 %v5073
  %5109 = vmatpush1.bf16.msra.mxu0 %v5072
  %5110 = vmatprep.subr.bf16.mxu0 %v5069
  %5111 = vmatpush1.bf16.msra.mxu0 %v5068
  %5112 = vmatprep.subr.bf16.mxu0 %v5065
  %5113 = vmatpush1.bf16.msra.mxu0 %v5064
  %5114 = vmatprep.subr.bf16.mxu0 %v5061
  %5115 = vmatpush1.bf16.msra.mxu0 %v5060
  %5116 = vmatprep.subr.bf16.mxu0 %v5057
  %5117 = vmatpush1.bf16.msra.mxu0 %v5056
  %5118 = vmatprep.subr.bf16.mxu0 %v5053
  %5119 = vmatpush1.bf16.msra.mxu0 %v5052
  %5120 = vmatprep.subr.bf16.mxu0 %v5049
  %5121 = vmatpush1.bf16.msra.mxu0 %v5048
  %5122 = vmatprep.subr.bf16.mxu0 %v5045
  %5123 = vmatpush1.bf16.msra.mxu0 %v5044
  %5124 = vmatprep.subr.bf16.mxu0 0
  %5125 = vmatpush2.bf16.msra.mxu0 0
  %5126 = vmatprep.subr.bf16.mxu0 0
  %5127 = vmatpush2.bf16.msra.mxu0 0
  %5128 = vmatprep.subr.bf16.mxu0 0
  %5129 = vmatpush2.bf16.msra.mxu0 0
  %5130 = vmatprep.subr.bf16.mxu0 0
  %5131 = vmatpush2.bf16.msra.mxu0 0
  %5132 = vmatprep.subr.bf16.mxu0 0
  %5133 = vmatpush2.bf16.msra.mxu0 0
  %5134 = vmatprep.subr.bf16.mxu0 0
  %5135 = vmatpush2.bf16.msra.mxu0 0
  %5136 = vmatprep.subr.bf16.mxu0 0
  %5137 = vmatpush2.bf16.msra.mxu0 0
  %5138 = vmatprep.subr.bf16.mxu0 0
  %5139 = vmatpush2.bf16.msra.mxu0 0
  %5140 = vmatprep.mubr.bf16.mxu0 0
  %5141 = vmatmul.mubr.bf16.gmra.mxu0 %v4910
  %v5142 = vpop.f32.mrf.mxu0
  %v5143 = vadd.f32 0.0, %v5142
  %v5144 = vpop.f32.mrf.mxu0
  %v5145 = vadd.f32 0.0, %v5144
  %v5146 = vpop.f32.mrf.mxu0
  %v5147 = vpop.f32.mrf.mxu0
  %5148 = vdwg.mxu0
  %5149 = vmatprep.subr.bf16.mxu0 %v5075
  %5150 = vmatpush1.bf16.msra.mxu0 %v5074
  %5151 = vmatprep.subr.bf16.mxu0 %v5071
  %5152 = vmatpush1.bf16.msra.mxu0 %v5070
  %5153 = vmatprep.subr.bf16.mxu0 %v5067
  %5154 = vmatpush1.bf16.msra.mxu0 %v5066
  %5155 = vmatprep.subr.bf16.mxu0 %v5063
  %5156 = vmatpush1.bf16.msra.mxu0 %v5062
  %5157 = vmatprep.subr.bf16.mxu0 %v5059
  %5158 = vmatpush1.bf16.msra.mxu0 %v5058
  %5159 = vmatprep.subr.bf16.mxu0 %v5055
  %5160 = vmatpush1.bf16.msra.mxu0 %v5054
  %5161 = vmatprep.subr.bf16.mxu0 %v5051
  %5162 = vmatpush1.bf16.msra.mxu0 %v5050
  %5163 = vmatprep.subr.bf16.mxu0 %v5047
  %5164 = vmatpush1.bf16.msra.mxu0 %v5046
  %5165 = vmatprep.subr.bf16.mxu0 0
  %5166 = vmatpush2.bf16.msra.mxu0 0
  %5167 = vmatprep.subr.bf16.mxu0 0
  %5168 = vmatpush2.bf16.msra.mxu0 0
  %5169 = vmatprep.subr.bf16.mxu0 0
  %5170 = vmatpush2.bf16.msra.mxu0 0
  %5171 = vmatprep.subr.bf16.mxu0 0
  %5172 = vmatpush2.bf16.msra.mxu0 0
  %5173 = vmatprep.subr.bf16.mxu0 0
  %5174 = vmatpush2.bf16.msra.mxu0 0
  %5175 = vmatprep.subr.bf16.mxu0 0
  %5176 = vmatpush2.bf16.msra.mxu0 0
  %5177 = vmatprep.subr.bf16.mxu0 0
  %5178 = vmatpush2.bf16.msra.mxu0 0
  %5179 = vmatprep.subr.bf16.mxu0 0
  %5180 = vmatpush2.bf16.msra.mxu0 0
  %5181 = vmatprep.mubr.bf16.mxu0 0
  %5182 = vmatmul.mubr.bf16.gmra.mxu0 %v4910
  %v5183 = vpop.f32.mrf.mxu0
  %v5184 = vadd.f32 0.0, %v5183
  %v5185 = vpop.f32.mrf.mxu0
  %v5186 = vadd.f32 0.0, %v5185
  %v5187 = vpop.f32.mrf.mxu0
  %v5188 = vpop.f32.mrf.mxu0
  %5189 = vdwg.mxu0
  %v5190 = vadd.f32 %v4912, %v5143
  %v5191 = vadd.f32 %v4913, %v5145
  %v5192 = vadd.f32 %v4914, %v5184
  %v5193 = vadd.f32 %v4915, %v5186
  %v5194 = vxor.u32 %v5190, 2147483648
  %v5195 = vmul.f32 %v5194, 1.442695
  %v5196 = vpow.pop %v5195
  %v5197 = vadd.f32 %v5196, 1.0
  %v5198 = vrcp.pop %v5197
  %v5199 = vmul.f32 1.0, %v5198
  %v5200 = vxor.u32 %v5191, 2147483648
  %v5201 = vmul.f32 %v5200, 1.442695
  %v5202 = vpow.pop %v5201
  %v5203 = vadd.f32 %v5202, 1.0
  %v5204 = vrcp.pop %v5203
  %v5205 = vmul.f32 1.0, %v5204
  %v5206 = vtanh.pop %v5192
  %v5207 = vxor.u32 %v5193, 2147483648
  %v5208 = vmul.f32 %v5207, 1.442695
  %v5209 = vpow.pop %v5208
  %v5210 = vadd.f32 %v5209, 1.0
  %v5211 = vrcp.pop %v5210
  %v5212 = vmul.f32 1.0, %v5211
  %v5213 = vmul.f32 %v5205, %v4907
  %v5214 = vmul.f32 %v5199, %v5206
  %v5215 = vadd.f32 %v5213, %v5214
  %v5216 = vtanh.pop %v5215
  %v5217 = vmul.f32 %v5212, %v5216
  %v5218 = vpack.c.bf16 %v5217, %v5217
  %5219 = vst [vmem:[%s2326] sm:$0xf] %v5218
  %v5220 = vld [vmem:[%s2328] sm:$0xff]
  %v5221 = vld [vmem:[%s2328 + $0x8] sm:$0xff]
  %v5222 = vld [vmem:[%s2328 + $0x10] sm:$0xff]
  %v5223 = vld [vmem:[%s2328 + $0x18] sm:$0xff]
  %v5224 = vld [vmem:[%s5] sm:$0xff]
  %v5225 = vld [vmem:[%s5 + $0x8] sm:$0xff]
  %v5226 = vld [vmem:[%s5 + $0x10] sm:$0xff]
  %v5227 = vld [vmem:[%s5 + $0x18] sm:$0xff]
  %v5228 = vld [vmem:[%s5 + $0x20] sm:$0xff]
  %v5229 = vld [vmem:[%s5 + $0x28] sm:$0xff]
  %v5230 = vld [vmem:[%s5 + $0x30] sm:$0xff]
  %v5231 = vld [vmem:[%s5 + $0x38] sm:$0xff]
  %v5232 = vld [vmem:[%s5 + $0x40] sm:$0xff]
  %v5233 = vld [vmem:[%s5 + $0x48] sm:$0xff]
  %v5234 = vld [vmem:[%s5 + $0x50] sm:$0xff]
  %v5235 = vld [vmem:[%s5 + $0x58] sm:$0xff]
  %v5236 = vld [vmem:[%s5 + $0x60] sm:$0xff]
  %v5237 = vld [vmem:[%s5 + $0x68] sm:$0xff]
  %v5238 = vld [vmem:[%s5 + $0x70] sm:$0xff]
  %v5239 = vld [vmem:[%s5 + $0x78] sm:$0xff]
  %v5240 = vld [vmem:[%s5 + $0x80] sm:$0xff]
  %v5241 = vld [vmem:[%s5 + $0x88] sm:$0xff]
  %v5242 = vld [vmem:[%s5 + $0x90] sm:$0xff]
  %v5243 = vld [vmem:[%s5 + $0x98] sm:$0xff]
  %v5244 = vld [vmem:[%s5 + $0xa0] sm:$0xff]
  %v5245 = vld [vmem:[%s5 + $0xa8] sm:$0xff]
  %v5246 = vld [vmem:[%s5 + $0xb0] sm:$0xff]
  %v5247 = vld [vmem:[%s5 + $0xb8] sm:$0xff]
  %v5248 = vld [vmem:[%s5 + $0xc0] sm:$0xff]
  %v5249 = vld [vmem:[%s5 + $0xc8] sm:$0xff]
  %v5250 = vld [vmem:[%s5 + $0xd0] sm:$0xff]
  %v5251 = vld [vmem:[%s5 + $0xd8] sm:$0xff]
  %v5252 = vld [vmem:[%s5 + $0xe0] sm:$0xff]
  %v5253 = vld [vmem:[%s5 + $0xe8] sm:$0xff]
  %v5254 = vld [vmem:[%s5 + $0xf0] sm:$0xff]
  %v5255 = vld [vmem:[%s5 + $0xf8] sm:$0xff]
  %v5288 = vunpack.c.l.b16 %v5224
  %v5289 = vunpack.c.h.b16 %v5224
  %v5290 = vunpack.c.l.b16 %v5225
  %v5291 = vunpack.c.h.b16 %v5225
  %v5292 = vunpack.c.l.b16 %v5226
  %v5293 = vunpack.c.h.b16 %v5226
  %v5294 = vunpack.c.l.b16 %v5227
  %v5295 = vunpack.c.h.b16 %v5227
  %v5296 = vunpack.c.l.b16 %v5228
  %v5297 = vunpack.c.h.b16 %v5228
  %v5298 = vunpack.c.l.b16 %v5229
  %v5299 = vunpack.c.h.b16 %v5229
  %v5300 = vunpack.c.l.b16 %v5230
  %v5301 = vunpack.c.h.b16 %v5230
  %v5302 = vunpack.c.l.b16 %v5231
  %v5303 = vunpack.c.h.b16 %v5231
  %v5304 = vunpack.c.l.b16 %v5232
  %v5305 = vunpack.c.h.b16 %v5232
  %v5306 = vunpack.c.l.b16 %v5233
  %v5307 = vunpack.c.h.b16 %v5233
  %v5308 = vunpack.c.l.b16 %v5234
  %v5309 = vunpack.c.h.b16 %v5234
  %v5310 = vunpack.c.l.b16 %v5235
  %v5311 = vunpack.c.h.b16 %v5235
  %v5312 = vunpack.c.l.b16 %v5236
  %v5313 = vunpack.c.h.b16 %v5236
  %v5314 = vunpack.c.l.b16 %v5237
  %v5315 = vunpack.c.h.b16 %v5237
  %v5316 = vunpack.c.l.b16 %v5238
  %v5317 = vunpack.c.h.b16 %v5238
  %v5318 = vunpack.c.l.b16 %v5239
  %v5319 = vunpack.c.h.b16 %v5239
  %v5320 = vunpack.c.l.b16 %v5240
  %v5321 = vunpack.c.h.b16 %v5240
  %v5322 = vunpack.c.l.b16 %v5241
  %v5323 = vunpack.c.h.b16 %v5241
  %v5324 = vunpack.c.l.b16 %v5242
  %v5325 = vunpack.c.h.b16 %v5242
  %v5326 = vunpack.c.l.b16 %v5243
  %v5327 = vunpack.c.h.b16 %v5243
  %v5328 = vunpack.c.l.b16 %v5244
  %v5329 = vunpack.c.h.b16 %v5244
  %v5330 = vunpack.c.l.b16 %v5245
  %v5331 = vunpack.c.h.b16 %v5245
  %v5332 = vunpack.c.l.b16 %v5246
  %v5333 = vunpack.c.h.b16 %v5246
  %v5334 = vunpack.c.l.b16 %v5247
  %v5335 = vunpack.c.h.b16 %v5247
  %v5336 = vunpack.c.l.b16 %v5248
  %v5337 = vunpack.c.h.b16 %v5248
  %v5338 = vunpack.c.l.b16 %v5249
  %v5339 = vunpack.c.h.b16 %v5249
  %v5340 = vunpack.c.l.b16 %v5250
  %v5341 = vunpack.c.h.b16 %v5250
  %v5342 = vunpack.c.l.b16 %v5251
  %v5343 = vunpack.c.h.b16 %v5251
  %v5344 = vunpack.c.l.b16 %v5252
  %v5345 = vunpack.c.h.b16 %v5252
  %v5346 = vunpack.c.l.b16 %v5253
  %v5347 = vunpack.c.h.b16 %v5253
  %v5348 = vunpack.c.l.b16 %v5254
  %v5349 = vunpack.c.h.b16 %v5254
  %v5350 = vunpack.c.l.b16 %v5255
  %v5351 = vunpack.c.h.b16 %v5255
  %v5352 = vpack.c.b16 %v5292, %v5288
  %v5353 = vpack.c.b16 %v5293, %v5289
  %v5354 = vpack.c.b16 %v5294, %v5290
  %v5355 = vpack.c.b16 %v5295, %v5291
  %v5356 = vpack.c.b16 %v5300, %v5296
  %v5357 = vpack.c.b16 %v5301, %v5297
  %v5358 = vpack.c.b16 %v5302, %v5298
  %v5359 = vpack.c.b16 %v5303, %v5299
  %v5360 = vpack.c.b16 %v5308, %v5304
  %v5361 = vpack.c.b16 %v5309, %v5305
  %v5362 = vpack.c.b16 %v5310, %v5306
  %v5363 = vpack.c.b16 %v5311, %v5307
  %v5364 = vpack.c.b16 %v5316, %v5312
  %v5365 = vpack.c.b16 %v5317, %v5313
  %v5366 = vpack.c.b16 %v5318, %v5314
  %v5367 = vpack.c.b16 %v5319, %v5315
  %v5368 = vpack.c.b16 %v5324, %v5320
  %v5369 = vpack.c.b16 %v5325, %v5321
  %v5370 = vpack.c.b16 %v5326, %v5322
  %v5371 = vpack.c.b16 %v5327, %v5323
  %v5372 = vpack.c.b16 %v5332, %v5328
  %v5373 = vpack.c.b16 %v5333, %v5329
  %v5374 = vpack.c.b16 %v5334, %v5330
  %v5375 = vpack.c.b16 %v5335, %v5331
  %v5376 = vpack.c.b16 %v5340, %v5336
  %v5377 = vpack.c.b16 %v5341, %v5337
  %v5378 = vpack.c.b16 %v5342, %v5338
  %v5379 = vpack.c.b16 %v5343, %v5339
  %v5380 = vpack.c.b16 %v5348, %v5344
  %v5381 = vpack.c.b16 %v5349, %v5345
  %v5382 = vpack.c.b16 %v5350, %v5346
  %v5383 = vpack.c.b16 %v5351, %v5347
  %5416 = vmatprep.subr.bf16.mxu0 %v5381
  %5417 = vmatpush1.bf16.msra.mxu0 %v5380
  %5418 = vmatprep.subr.bf16.mxu0 %v5377
  %5419 = vmatpush1.bf16.msra.mxu0 %v5376
  %5420 = vmatprep.subr.bf16.mxu0 %v5373
  %5421 = vmatpush1.bf16.msra.mxu0 %v5372
  %5422 = vmatprep.subr.bf16.mxu0 %v5369
  %5423 = vmatpush1.bf16.msra.mxu0 %v5368
  %5424 = vmatprep.subr.bf16.mxu0 %v5365
  %5425 = vmatpush1.bf16.msra.mxu0 %v5364
  %5426 = vmatprep.subr.bf16.mxu0 %v5361
  %5427 = vmatpush1.bf16.msra.mxu0 %v5360
  %5428 = vmatprep.subr.bf16.mxu0 %v5357
  %5429 = vmatpush1.bf16.msra.mxu0 %v5356
  %5430 = vmatprep.subr.bf16.mxu0 %v5353
  %5431 = vmatpush1.bf16.msra.mxu0 %v5352
  %5432 = vmatprep.subr.bf16.mxu0 0
  %5433 = vmatpush2.bf16.msra.mxu0 0
  %5434 = vmatprep.subr.bf16.mxu0 0
  %5435 = vmatpush2.bf16.msra.mxu0 0
  %5436 = vmatprep.subr.bf16.mxu0 0
  %5437 = vmatpush2.bf16.msra.mxu0 0
  %5438 = vmatprep.subr.bf16.mxu0 0
  %5439 = vmatpush2.bf16.msra.mxu0 0
  %5440 = vmatprep.subr.bf16.mxu0 0
  %5441 = vmatpush2.bf16.msra.mxu0 0
  %5442 = vmatprep.subr.bf16.mxu0 0
  %5443 = vmatpush2.bf16.msra.mxu0 0
  %5444 = vmatprep.subr.bf16.mxu0 0
  %5445 = vmatpush2.bf16.msra.mxu0 0
  %5446 = vmatprep.subr.bf16.mxu0 0
  %5447 = vmatpush2.bf16.msra.mxu0 0
  %5448 = vmatprep.mubr.bf16.mxu0 0
  %5449 = vmatmul.mubr.bf16.gmra.mxu0 %v5218
  %v5450 = vpop.f32.mrf.mxu0
  %v5451 = vadd.f32 0.0, %v5450
  %v5452 = vpop.f32.mrf.mxu0
  %v5453 = vadd.f32 0.0, %v5452
  %v5454 = vpop.f32.mrf.mxu0
  %v5455 = vpop.f32.mrf.mxu0
  %5456 = vdwg.mxu0
  %5457 = vmatprep.subr.bf16.mxu0 %v5383
  %5458 = vmatpush1.bf16.msra.mxu0 %v5382
  %5459 = vmatprep.subr.bf16.mxu0 %v5379
  %5460 = vmatpush1.bf16.msra.mxu0 %v5378
  %5461 = vmatprep.subr.bf16.mxu0 %v5375
  %5462 = vmatpush1.bf16.msra.mxu0 %v5374
  %5463 = vmatprep.subr.bf16.mxu0 %v5371
  %5464 = vmatpush1.bf16.msra.mxu0 %v5370
  %5465 = vmatprep.subr.bf16.mxu0 %v5367
  %5466 = vmatpush1.bf16.msra.mxu0 %v5366
  %5467 = vmatprep.subr.bf16.mxu0 %v5363
  %5468 = vmatpush1.bf16.msra.mxu0 %v5362
  %5469 = vmatprep.subr.bf16.mxu0 %v5359
  %5470 = vmatpush1.bf16.msra.mxu0 %v5358
  %5471 = vmatprep.subr.bf16.mxu0 %v5355
  %5472 = vmatpush1.bf16.msra.mxu0 %v5354
  %5473 = vmatprep.subr.bf16.mxu0 0
  %5474 = vmatpush2.bf16.msra.mxu0 0
  %5475 = vmatprep.subr.bf16.mxu0 0
  %5476 = vmatpush2.bf16.msra.mxu0 0
  %5477 = vmatprep.subr.bf16.mxu0 0
  %5478 = vmatpush2.bf16.msra.mxu0 0
  %5479 = vmatprep.subr.bf16.mxu0 0
  %5480 = vmatpush2.bf16.msra.mxu0 0
  %5481 = vmatprep.subr.bf16.mxu0 0
  %5482 = vmatpush2.bf16.msra.mxu0 0
  %5483 = vmatprep.subr.bf16.mxu0 0
  %5484 = vmatpush2.bf16.msra.mxu0 0
  %5485 = vmatprep.subr.bf16.mxu0 0
  %5486 = vmatpush2.bf16.msra.mxu0 0
  %5487 = vmatprep.subr.bf16.mxu0 0
  %5488 = vmatpush2.bf16.msra.mxu0 0
  %5489 = vmatprep.mubr.bf16.mxu0 0
  %5490 = vmatmul.mubr.bf16.gmra.mxu0 %v5218
  %v5491 = vpop.f32.mrf.mxu0
  %v5492 = vadd.f32 0.0, %v5491
  %v5493 = vpop.f32.mrf.mxu0
  %v5494 = vadd.f32 0.0, %v5493
  %v5495 = vpop.f32.mrf.mxu0
  %v5496 = vpop.f32.mrf.mxu0
  %5497 = vdwg.mxu0
  %v5498 = vadd.f32 %v5220, %v5451
  %v5499 = vadd.f32 %v5221, %v5453
  %v5500 = vadd.f32 %v5222, %v5492
  %v5501 = vadd.f32 %v5223, %v5494
  %v5502 = vxor.u32 %v5498, 2147483648
  %v5503 = vmul.f32 %v5502, 1.442695
  %v5504 = vpow.pop %v5503
  %v5505 = vadd.f32 %v5504, 1.0
  %v5506 = vrcp.pop %v5505
  %v5507 = vmul.f32 1.0, %v5506
  %v5508 = vxor.u32 %v5499, 2147483648
  %v5509 = vmul.f32 %v5508, 1.442695
  %v5510 = vpow.pop %v5509
  %v5511 = vadd.f32 %v5510, 1.0
  %v5512 = vrcp.pop %v5511
  %v5513 = vmul.f32 1.0, %v5512
  %v5514 = vtanh.pop %v5500
  %v5515 = vxor.u32 %v5501, 2147483648
  %v5516 = vmul.f32 %v5515, 1.442695
  %v5517 = vpow.pop %v5516
  %v5518 = vadd.f32 %v5517, 1.0
  %v5519 = vrcp.pop %v5518
  %v5520 = vmul.f32 1.0, %v5519
  %v5521 = vmul.f32 %v5513, %v5215
  %v5522 = vmul.f32 %v5507, %v5514
  %v5523 = vadd.f32 %v5521, %v5522
  %v5524 = vtanh.pop %v5523
  %v5525 = vmul.f32 %v5520, %v5524
  %v5526 = vpack.c.bf16 %v5525, %v5525
  %5527 = vst [vmem:[%s2636] sm:$0xf] %v5526
  %v5528 = vld [vmem:[%s2638] sm:$0xff]
  %v5529 = vld [vmem:[%s2638 + $0x8] sm:$0xff]
  %v5530 = vld [vmem:[%s2638 + $0x10] sm:$0xff]
  %v5531 = vld [vmem:[%s2638 + $0x18] sm:$0xff]
  %v5532 = vld [vmem:[%s5] sm:$0xff]
  %v5533 = vld [vmem:[%s5 + $0x8] sm:$0xff]
  %v5534 = vld [vmem:[%s5 + $0x10] sm:$0xff]
  %v5535 = vld [vmem:[%s5 + $0x18] sm:$0xff]
  %v5536 = vld [vmem:[%s5 + $0x20] sm:$0xff]
  %v5537 = vld [vmem:[%s5 + $0x28] sm:$0xff]
  %v5538 = vld [vmem:[%s5 + $0x30] sm:$0xff]
  %v5539 = vld [vmem:[%s5 + $0x38] sm:$0xff]
  %v5540 = vld [vmem:[%s5 + $0x40] sm:$0xff]
  %v5541 = vld [vmem:[%s5 + $0x48] sm:$0xff]
  %v5542 = vld [vmem:[%s5 + $0x50] sm:$0xff]
  %v5543 = vld [vmem:[%s5 + $0x58] sm:$0xff]
  %v5544 = vld [vmem:[%s5 + $0x60] sm:$0xff]
  %v5545 = vld [vmem:[%s5 + $0x68] sm:$0xff]
  %v5546 = vld [vmem:[%s5 + $0x70] sm:$0xff]
  %v5547 = vld [vmem:[%s5 + $0x78] sm:$0xff]
  %v5548 = vld [vmem:[%s5 + $0x80] sm:$0xff]
  %v5549 = vld [vmem:[%s5 + $0x88] sm:$0xff]
  %v5550 = vld [vmem:[%s5 + $0x90] sm:$0xff]
  %v5551 = vld [vmem:[%s5 + $0x98] sm:$0xff]
  %v5552 = vld [vmem:[%s5 + $0xa0] sm:$0xff]
  %v5553 = vld [vmem:[%s5 + $0xa8] sm:$0xff]
  %v5554 = vld [vmem:[%s5 + $0xb0] sm:$0xff]
  %v5555 = vld [vmem:[%s5 + $0xb8] sm:$0xff]
  %v5556 = vld [vmem:[%s5 + $0xc0] sm:$0xff]
  %v5557 = vld [vmem:[%s5 + $0xc8] sm:$0xff]
  %v5558 = vld [vmem:[%s5 + $0xd0] sm:$0xff]
  %v5559 = vld [vmem:[%s5 + $0xd8] sm:$0xff]
  %v5560 = vld [vmem:[%s5 + $0xe0] sm:$0xff]
  %v5561 = vld [vmem:[%s5 + $0xe8] sm:$0xff]
  %v5562 = vld [vmem:[%s5 + $0xf0] sm:$0xff]
  %v5563 = vld [vmem:[%s5 + $0xf8] sm:$0xff]
  %v5596 = vunpack.c.l.b16 %v5532
  %v5597 = vunpack.c.h.b16 %v5532
  %v5598 = vunpack.c.l.b16 %v5533
  %v5599 = vunpack.c.h.b16 %v5533
  %v5600 = vunpack.c.l.b16 %v5534
  %v5601 = vunpack.c.h.b16 %v5534
  %v5602 = vunpack.c.l.b16 %v5535
  %v5603 = vunpack.c.h.b16 %v5535
  %v5604 = vunpack.c.l.b16 %v5536
  %v5605 = vunpack.c.h.b16 %v5536
  %v5606 = vunpack.c.l.b16 %v5537
  %v5607 = vunpack.c.h.b16 %v5537
  %v5608 = vunpack.c.l.b16 %v5538
  %v5609 = vunpack.c.h.b16 %v5538
  %v5610 = vunpack.c.l.b16 %v5539
  %v5611 = vunpack.c.h.b16 %v5539
  %v5612 = vunpack.c.l.b16 %v5540
  %v5613 = vunpack.c.h.b16 %v5540
  %v5614 = vunpack.c.l.b16 %v5541
  %v5615 = vunpack.c.h.b16 %v5541
  %v5616 = vunpack.c.l.b16 %v5542
  %v5617 = vunpack.c.h.b16 %v5542
  %v5618 = vunpack.c.l.b16 %v5543
  %v5619 = vunpack.c.h.b16 %v5543
  %v5620 = vunpack.c.l.b16 %v5544
  %v5621 = vunpack.c.h.b16 %v5544
  %v5622 = vunpack.c.l.b16 %v5545
  %v5623 = vunpack.c.h.b16 %v5545
  %v5624 = vunpack.c.l.b16 %v5546
  %v5625 = vunpack.c.h.b16 %v5546
  %v5626 = vunpack.c.l.b16 %v5547
  %v5627 = vunpack.c.h.b16 %v5547
  %v5628 = vunpack.c.l.b16 %v5548
  %v5629 = vunpack.c.h.b16 %v5548
  %v5630 = vunpack.c.l.b16 %v5549
  %v5631 = vunpack.c.h.b16 %v5549
  %v5632 = vunpack.c.l.b16 %v5550
  %v5633 = vunpack.c.h.b16 %v5550
  %v5634 = vunpack.c.l.b16 %v5551
  %v5635 = vunpack.c.h.b16 %v5551
  %v5636 = vunpack.c.l.b16 %v5552
  %v5637 = vunpack.c.h.b16 %v5552
  %v5638 = vunpack.c.l.b16 %v5553
  %v5639 = vunpack.c.h.b16 %v5553
  %v5640 = vunpack.c.l.b16 %v5554
  %v5641 = vunpack.c.h.b16 %v5554
  %v5642 = vunpack.c.l.b16 %v5555
  %v5643 = vunpack.c.h.b16 %v5555
  %v5644 = vunpack.c.l.b16 %v5556
  %v5645 = vunpack.c.h.b16 %v5556
  %v5646 = vunpack.c.l.b16 %v5557
  %v5647 = vunpack.c.h.b16 %v5557
  %v5648 = vunpack.c.l.b16 %v5558
  %v5649 = vunpack.c.h.b16 %v5558
  %v5650 = vunpack.c.l.b16 %v5559
  %v5651 = vunpack.c.h.b16 %v5559
  %v5652 = vunpack.c.l.b16 %v5560
  %v5653 = vunpack.c.h.b16 %v5560
  %v5654 = vunpack.c.l.b16 %v5561
  %v5655 = vunpack.c.h.b16 %v5561
  %v5656 = vunpack.c.l.b16 %v5562
  %v5657 = vunpack.c.h.b16 %v5562
  %v5658 = vunpack.c.l.b16 %v5563
  %v5659 = vunpack.c.h.b16 %v5563
  %v5660 = vpack.c.b16 %v5600, %v5596
  %v5661 = vpack.c.b16 %v5601, %v5597
  %v5662 = vpack.c.b16 %v5602, %v5598
  %v5663 = vpack.c.b16 %v5603, %v5599
  %v5664 = vpack.c.b16 %v5608, %v5604
  %v5665 = vpack.c.b16 %v5609, %v5605
  %v5666 = vpack.c.b16 %v5610, %v5606
  %v5667 = vpack.c.b16 %v5611, %v5607
  %v5668 = vpack.c.b16 %v5616, %v5612
  %v5669 = vpack.c.b16 %v5617, %v5613
  %v5670 = vpack.c.b16 %v5618, %v5614
  %v5671 = vpack.c.b16 %v5619, %v5615
  %v5672 = vpack.c.b16 %v5624, %v5620
  %v5673 = vpack.c.b16 %v5625, %v5621
  %v5674 = vpack.c.b16 %v5626, %v5622
  %v5675 = vpack.c.b16 %v5627, %v5623
  %v5676 = vpack.c.b16 %v5632, %v5628
  %v5677 = vpack.c.b16 %v5633, %v5629
  %v5678 = vpack.c.b16 %v5634, %v5630
  %v5679 = vpack.c.b16 %v5635, %v5631
  %v5680 = vpack.c.b16 %v5640, %v5636
  %v5681 = vpack.c.b16 %v5641, %v5637
  %v5682 = vpack.c.b16 %v5642, %v5638
  %v5683 = vpack.c.b16 %v5643, %v5639
  %v5684 = vpack.c.b16 %v5648, %v5644
  %v5685 = vpack.c.b16 %v5649, %v5645
  %v5686 = vpack.c.b16 %v5650, %v5646
  %v5687 = vpack.c.b16 %v5651, %v5647
  %v5688 = vpack.c.b16 %v5656, %v5652
  %v5689 = vpack.c.b16 %v5657, %v5653
  %v5690 = vpack.c.b16 %v5658, %v5654
  %v5691 = vpack.c.b16 %v5659, %v5655
  %5724 = vmatprep.subr.bf16.mxu0 %v5689
  %5725 = vmatpush1.bf16.msra.mxu0 %v5688
  %5726 = vmatprep.subr.bf16.mxu0 %v5685
  %5727 = vmatpush1.bf16.msra.mxu0 %v5684
  %5728 = vmatprep.subr.bf16.mxu0 %v5681
  %5729 = vmatpush1.bf16.msra.mxu0 %v5680
  %5730 = vmatprep.subr.bf16.mxu0 %v5677
  %5731 = vmatpush1.bf16.msra.mxu0 %v5676
  %5732 = vmatprep.subr.bf16.mxu0 %v5673
  %5733 = vmatpush1.bf16.msra.mxu0 %v5672
  %5734 = vmatprep.subr.bf16.mxu0 %v5669
  %5735 = vmatpush1.bf16.msra.mxu0 %v5668
  %5736 = vmatprep.subr.bf16.mxu0 %v5665
  %5737 = vmatpush1.bf16.msra.mxu0 %v5664
  %5738 = vmatprep.subr.bf16.mxu0 %v5661
  %5739 = vmatpush1.bf16.msra.mxu0 %v5660
  %5740 = vmatprep.subr.bf16.mxu0 0
  %5741 = vmatpush2.bf16.msra.mxu0 0
  %5742 = vmatprep.subr.bf16.mxu0 0
  %5743 = vmatpush2.bf16.msra.mxu0 0
  %5744 = vmatprep.subr.bf16.mxu0 0
  %5745 = vmatpush2.bf16.msra.mxu0 0
  %5746 = vmatprep.subr.bf16.mxu0 0
  %5747 = vmatpush2.bf16.msra.mxu0 0
  %5748 = vmatprep.subr.bf16.mxu0 0
  %5749 = vmatpush2.bf16.msra.mxu0 0
  %5750 = vmatprep.subr.bf16.mxu0 0
  %5751 = vmatpush2.bf16.msra.mxu0 0
  %5752 = vmatprep.subr.bf16.mxu0 0
  %5753 = vmatpush2.bf16.msra.mxu0 0
  %5754 = vmatprep.subr.bf16.mxu0 0
  %5755 = vmatpush2.bf16.msra.mxu0 0
  %5756 = vmatprep.mubr.bf16.mxu0 0
  %5757 = vmatmul.mubr.bf16.gmra.mxu0 %v5526
  %v5758 = vpop.f32.mrf.mxu0
  %v5759 = vadd.f32 0.0, %v5758
  %v5760 = vpop.f32.mrf.mxu0
  %v5761 = vadd.f32 0.0, %v5760
  %v5762 = vpop.f32.mrf.mxu0
  %v5763 = vpop.f32.mrf.mxu0
  %5764 = vdwg.mxu0
  %5765 = vmatprep.subr.bf16.mxu0 %v5691
  %5766 = vmatpush1.bf16.msra.mxu0 %v5690
  %5767 = vmatprep.subr.bf16.mxu0 %v5687
  %5768 = vmatpush1.bf16.msra.mxu0 %v5686
  %5769 = vmatprep.subr.bf16.mxu0 %v5683
  %5770 = vmatpush1.bf16.msra.mxu0 %v5682
  %5771 = vmatprep.subr.bf16.mxu0 %v5679
  %5772 = vmatpush1.bf16.msra.mxu0 %v5678
  %5773 = vmatprep.subr.bf16.mxu0 %v5675
  %5774 = vmatpush1.bf16.msra.mxu0 %v5674
  %5775 = vmatprep.subr.bf16.mxu0 %v5671
  %5776 = vmatpush1.bf16.msra.mxu0 %v5670
  %5777 = vmatprep.subr.bf16.mxu0 %v5667
  %5778 = vmatpush1.bf16.msra.mxu0 %v5666
  %5779 = vmatprep.subr.bf16.mxu0 %v5663
  %5780 = vmatpush1.bf16.msra.mxu0 %v5662
  %5781 = vmatprep.subr.bf16.mxu0 0
  %5782 = vmatpush2.bf16.msra.mxu0 0
  %5783 = vmatprep.subr.bf16.mxu0 0
  %5784 = vmatpush2.bf16.msra.mxu0 0
  %5785 = vmatprep.subr.bf16.mxu0 0
  %5786 = vmatpush2.bf16.msra.mxu0 0
  %5787 = vmatprep.subr.bf16.mxu0 0
  %5788 = vmatpush2.bf16.msra.mxu0 0
  %5789 = vmatprep.subr.bf16.mxu0 0
  %5790 = vmatpush2.bf16.msra.mxu0 0
  %5791 = vmatprep.subr.bf16.mxu0 0
  %5792 = vmatpush2.bf16.msra.mxu0 0
  %5793 = vmatprep.subr.bf16.mxu0 0
  %5794 = vmatpush2.bf16.msra.mxu0 0
  %5795 = vmatprep.subr.bf16.mxu0 0
  %5796 = vmatpush2.bf16.msra.mxu0 0
  %5797 = vmatprep.mubr.bf16.mxu0 0
  %5798 = vmatmul.mubr.bf16.gmra.mxu0 %v5526
  %v5799 = vpop.f32.mrf.mxu0
  %v5800 = vadd.f32 0.0, %v5799
  %v5801 = vpop.f32.mrf.mxu0
  %v5802 = vadd.f32 0.0, %v5801
  %v5803 = vpop.f32.mrf.mxu0
  %v5804 = vpop.f32.mrf.mxu0
  %5805 = vdwg.mxu0
  %v5806 = vadd.f32 %v5528, %v5759
  %v5807 = vadd.f32 %v5529, %v5761
  %v5808 = vadd.f32 %v5530, %v5800
  %v5809 = vadd.f32 %v5531, %v5802
  %v5810 = vxor.u32 %v5806, 2147483648
  %v5811 = vmul.f32 %v5810, 1.442695
  %v5812 = vpow.pop %v5811
  %v5813 = vadd.f32 %v5812, 1.0
  %v5814 = vrcp.pop %v5813
  %v5815 = vmul.f32 1.0, %v5814
  %v5816 = vxor.u32 %v5807, 2147483648
  %v5817 = vmul.f32 %v5816, 1.442695
  %v5818 = vpow.pop %v5817
  %v5819 = vadd.f32 %v5818, 1.0
  %v5820 = vrcp.pop %v5819
  %v5821 = vmul.f32 1.0, %v5820
  %v5822 = vtanh.pop %v5808
  %v5823 = vxor.u32 %v5809, 2147483648
  %v5824 = vmul.f32 %v5823, 1.442695
  %v5825 = vpow.pop %v5824
  %v5826 = vadd.f32 %v5825, 1.0
  %v5827 = vrcp.pop %v5826
  %v5828 = vmul.f32 1.0, %v5827
  %v5829 = vmul.f32 %v5821, %v5523
  %v5830 = vmul.f32 %v5815, %v5822
  %v5831 = vadd.f32 %v5829, %v5830
  %v5832 = vtanh.pop %v5831
  %v5833 = vmul.f32 %v5828, %v5832
  %v5834 = vpack.c.bf16 %v5833, %v5833
  %5835 = vst [vmem:[%s2946] sm:$0xf] %v5834
  %v5836 = vld [vmem:[#allocation3] sm:$0xf]
  %v5837 = vld [vmem:[#allocation3 + $0x4] sm:$0xf]
  %v5838 = vld [vmem:[#allocation3 + $0x8] sm:$0xf]
  %v5839 = vld [vmem:[#allocation3 + $0xc] sm:$0xf]
  %v5840 = vld [vmem:[#allocation3 + $0x10] sm:$0xf]
  %v5841 = vld [vmem:[#allocation3 + $0x14] sm:$0xf]
  %v5842 = vld [vmem:[#allocation3 + $0x18] sm:$0xf]
  %v5843 = vld [vmem:[#allocation3 + $0x1c] sm:$0xf]
  %v5844 = vld [vmem:[%s7] sm:$0xff]
  %v5845 = vld [vmem:[%s7 + $0x8] sm:$0xff]
  %v5846 = vld [vmem:[%s7 + $0x10] sm:$0xff]
  %v5847 = vld [vmem:[%s7 + $0x18] sm:$0xff]
  %v5848 = vld [vmem:[%s7 + $0x20] sm:$0xff]
  %v5849 = vld [vmem:[%s7 + $0x28] sm:$0xff]
  %v5850 = vld [vmem:[%s7 + $0x30] sm:$0xff]
  %v5851 = vld [vmem:[%s7 + $0x38] sm:$0xff]
  %v5852 = vld [vmem:[%s7 + $0x40] sm:$0xff]
  %v5853 = vld [vmem:[%s7 + $0x48] sm:$0xff]
  %v5854 = vld [vmem:[%s7 + $0x50] sm:$0xff]
  %v5855 = vld [vmem:[%s7 + $0x58] sm:$0xff]
  %v5856 = vld [vmem:[%s7 + $0x60] sm:$0xff]
  %v5857 = vld [vmem:[%s7 + $0x68] sm:$0xff]
  %v5858 = vld [vmem:[%s7 + $0x70] sm:$0xff]
  %v5859 = vld [vmem:[%s7 + $0x78] sm:$0xff]
  %v5860 = vld [vmem:[%s7 + $0x80] sm:$0xff]
  %v5861 = vld [vmem:[%s7 + $0x88] sm:$0xff]
  %v5862 = vld [vmem:[%s7 + $0x90] sm:$0xff]
  %v5863 = vld [vmem:[%s7 + $0x98] sm:$0xff]
  %v5864 = vld [vmem:[%s7 + $0xa0] sm:$0xff]
  %v5865 = vld [vmem:[%s7 + $0xa8] sm:$0xff]
  %v5866 = vld [vmem:[%s7 + $0xb0] sm:$0xff]
  %v5867 = vld [vmem:[%s7 + $0xb8] sm:$0xff]
  %v5868 = vld [vmem:[%s7 + $0xc0] sm:$0xff]
  %v5869 = vld [vmem:[%s7 + $0xc8] sm:$0xff]
  %v5870 = vld [vmem:[%s7 + $0xd0] sm:$0xff]
  %v5871 = vld [vmem:[%s7 + $0xd8] sm:$0xff]
  %v5872 = vld [vmem:[%s7 + $0xe0] sm:$0xff]
  %v5873 = vld [vmem:[%s7 + $0xe8] sm:$0xff]
  %v5874 = vld [vmem:[%s7 + $0xf0] sm:$0xff]
  %v5875 = vld [vmem:[%s7 + $0xf8] sm:$0xff]
  %v5876 = vld [vmem:[%s9] sm:$0xf]
  %v5878 = vlaneseq
  %v5879 = vshrl.u32 %v5878, 7
  %v5880 = vsub.s32 0, %v5879
  %v5881 = vrot.slane %v5876, %v5880
  %v5882 = vlaneseq
  %v5883 = vshrl.u32 %v5882, 7
  %v5884 = vsub.s32 1, %v5883
  %v5885 = vrot.slane %v5876, %v5884
  %v5886 = vlaneseq
  %v5887 = vshrl.u32 %v5886, 7
  %v5888 = vsub.s32 2, %v5887
  %v5889 = vrot.slane %v5876, %v5888
  %v5890 = vlaneseq
  %v5891 = vshrl.u32 %v5890, 7
  %v5892 = vsub.s32 3, %v5891
  %v5893 = vrot.slane %v5876, %v5892
  %v5906 = vunpack.c.l.b16 %v5836
  %v5907 = vunpack.c.l.b16 %v5837
  %v5908 = vunpack.c.l.b16 %v5838
  %v5909 = vunpack.c.l.b16 %v5839
  %v5910 = vunpack.c.l.b16 %v5840
  %v5911 = vunpack.c.l.b16 %v5841
  %v5912 = vunpack.c.l.b16 %v5842
  %v5913 = vunpack.c.l.b16 %v5843
  %v5914 = vpack.c.b16 %v5907, %v5906
  %v5915 = vpack.c.b16 %v5909, %v5908
  %v5916 = vpack.c.b16 %v5911, %v5910
  %v5917 = vpack.c.b16 %v5913, %v5912
  %v5954 = vunpack.c.l.b16 %v5844
  %v5955 = vunpack.c.h.b16 %v5844
  %v5956 = vunpack.c.l.b16 %v5845
  %v5957 = vunpack.c.h.b16 %v5845
  %v5958 = vunpack.c.l.b16 %v5846
  %v5959 = vunpack.c.h.b16 %v5846
  %v5960 = vunpack.c.l.b16 %v5847
  %v5961 = vunpack.c.h.b16 %v5847
  %v5962 = vunpack.c.l.b16 %v5848
  %v5963 = vunpack.c.h.b16 %v5848
  %v5964 = vunpack.c.l.b16 %v5849
  %v5965 = vunpack.c.h.b16 %v5849
  %v5966 = vunpack.c.l.b16 %v5850
  %v5967 = vunpack.c.h.b16 %v5850
  %v5968 = vunpack.c.l.b16 %v5851
  %v5969 = vunpack.c.h.b16 %v5851
  %v5970 = vunpack.c.l.b16 %v5852
  %v5971 = vunpack.c.h.b16 %v5852
  %v5972 = vunpack.c.l.b16 %v5853
  %v5973 = vunpack.c.h.b16 %v5853
  %v5974 = vunpack.c.l.b16 %v5854
  %v5975 = vunpack.c.h.b16 %v5854
  %v5976 = vunpack.c.l.b16 %v5855
  %v5977 = vunpack.c.h.b16 %v5855
  %v5978 = vunpack.c.l.b16 %v5856
  %v5979 = vunpack.c.h.b16 %v5856
  %v5980 = vunpack.c.l.b16 %v5857
  %v5981 = vunpack.c.h.b16 %v5857
  %v5982 = vunpack.c.l.b16 %v5858
  %v5983 = vunpack.c.h.b16 %v5858
  %v5984 = vunpack.c.l.b16 %v5859
  %v5985 = vunpack.c.h.b16 %v5859
  %v5986 = vunpack.c.l.b16 %v5860
  %v5987 = vunpack.c.h.b16 %v5860
  %v5988 = vunpack.c.l.b16 %v5861
  %v5989 = vunpack.c.h.b16 %v5861
  %v5990 = vunpack.c.l.b16 %v5862
  %v5991 = vunpack.c.h.b16 %v5862
  %v5992 = vunpack.c.l.b16 %v5863
  %v5993 = vunpack.c.h.b16 %v5863
  %v5994 = vunpack.c.l.b16 %v5864
  %v5995 = vunpack.c.h.b16 %v5864
  %v5996 = vunpack.c.l.b16 %v5865
  %v5997 = vunpack.c.h.b16 %v5865
  %v5998 = vunpack.c.l.b16 %v5866
  %v5999 = vunpack.c.h.b16 %v5866
  %v6000 = vunpack.c.l.b16 %v5867
  %v6001 = vunpack.c.h.b16 %v5867
  %v6002 = vunpack.c.l.b16 %v5868
  %v6003 = vunpack.c.h.b16 %v5868
  %v6004 = vunpack.c.l.b16 %v5869
  %v6005 = vunpack.c.h.b16 %v5869
  %v6006 = vunpack.c.l.b16 %v5870
  %v6007 = vunpack.c.h.b16 %v5870
  %v6008 = vunpack.c.l.b16 %v5871
  %v6009 = vunpack.c.h.b16 %v5871
  %v6010 = vunpack.c.l.b16 %v5872
  %v6011 = vunpack.c.h.b16 %v5872
  %v6012 = vunpack.c.l.b16 %v5873
  %v6013 = vunpack.c.h.b16 %v5873
  %v6014 = vunpack.c.l.b16 %v5874
  %v6015 = vunpack.c.h.b16 %v5874
  %v6016 = vunpack.c.l.b16 %v5875
  %v6017 = vunpack.c.h.b16 %v5875
  %v6018 = vpack.c.b16 %v5958, %v5954
  %v6019 = vpack.c.b16 %v5959, %v5955
  %v6020 = vpack.c.b16 %v5960, %v5956
  %v6021 = vpack.c.b16 %v5961, %v5957
  %v6022 = vpack.c.b16 %v5966, %v5962
  %v6023 = vpack.c.b16 %v5967, %v5963
  %v6024 = vpack.c.b16 %v5968, %v5964
  %v6025 = vpack.c.b16 %v5969, %v5965
  %v6026 = vpack.c.b16 %v5974, %v5970
  %v6027 = vpack.c.b16 %v5975, %v5971
  %v6028 = vpack.c.b16 %v5976, %v5972
  %v6029 = vpack.c.b16 %v5977, %v5973
  %v6030 = vpack.c.b16 %v5982, %v5978
  %v6031 = vpack.c.b16 %v5983, %v5979
  %v6032 = vpack.c.b16 %v5984, %v5980
  %v6033 = vpack.c.b16 %v5985, %v5981
  %v6034 = vpack.c.b16 %v5990, %v5986
  %v6035 = vpack.c.b16 %v5991, %v5987
  %v6036 = vpack.c.b16 %v5992, %v5988
  %v6037 = vpack.c.b16 %v5993, %v5989
  %v6038 = vpack.c.b16 %v5998, %v5994
  %v6039 = vpack.c.b16 %v5999, %v5995
  %v6040 = vpack.c.b16 %v6000, %v5996
  %v6041 = vpack.c.b16 %v6001, %v5997
  %v6042 = vpack.c.b16 %v6006, %v6002
  %v6043 = vpack.c.b16 %v6007, %v6003
  %v6044 = vpack.c.b16 %v6008, %v6004
  %v6045 = vpack.c.b16 %v6009, %v6005
  %v6046 = vpack.c.b16 %v6014, %v6010
  %v6047 = vpack.c.b16 %v6015, %v6011
  %v6048 = vpack.c.b16 %v6016, %v6012
  %v6049 = vpack.c.b16 %v6017, %v6013
  %6082 = vmatprep.subr.bf16.mxu0 %v6047
  %6083 = vmatpush1.bf16.msra.mxu0 %v6046
  %6084 = vmatprep.subr.bf16.mxu0 %v6043
  %6085 = vmatpush1.bf16.msra.mxu0 %v6042
  %6086 = vmatprep.subr.bf16.mxu0 %v6039
  %6087 = vmatpush1.bf16.msra.mxu0 %v6038
  %6088 = vmatprep.subr.bf16.mxu0 %v6035
  %6089 = vmatpush1.bf16.msra.mxu0 %v6034
  %6090 = vmatprep.subr.bf16.mxu0 %v6031
  %6091 = vmatpush1.bf16.msra.mxu0 %v6030
  %6092 = vmatprep.subr.bf16.mxu0 %v6027
  %6093 = vmatpush1.bf16.msra.mxu0 %v6026
  %6094 = vmatprep.subr.bf16.mxu0 %v6023
  %6095 = vmatpush1.bf16.msra.mxu0 %v6022
  %6096 = vmatprep.subr.bf16.mxu0 %v6019
  %6097 = vmatpush1.bf16.msra.mxu0 %v6018
  %6098 = vmatprep.subr.bf16.mxu0 0
  %6099 = vmatpush2.bf16.msra.mxu0 0
  %6100 = vmatprep.subr.bf16.mxu0 0
  %6101 = vmatpush2.bf16.msra.mxu0 0
  %6102 = vmatprep.subr.bf16.mxu0 0
  %6103 = vmatpush2.bf16.msra.mxu0 0
  %6104 = vmatprep.subr.bf16.mxu0 0
  %6105 = vmatpush2.bf16.msra.mxu0 0
  %6106 = vmatprep.subr.bf16.mxu0 0
  %6107 = vmatpush2.bf16.msra.mxu0 0
  %6108 = vmatprep.subr.bf16.mxu0 0
  %6109 = vmatpush2.bf16.msra.mxu0 0
  %6110 = vmatprep.subr.bf16.mxu0 0
  %6111 = vmatpush2.bf16.msra.mxu0 0
  %6112 = vmatprep.subr.bf16.mxu0 0
  %6113 = vmatpush2.bf16.msra.mxu0 0
  %6114 = vmatprep.mubr.bf16.mxu0 0
  %6115 = vmatmul.mubr.bf16.gmra.mxu0 %v5914
  %v6116 = vpop.f32.mrf.mxu0
  %v6117 = vadd.f32 %v5881, %v6116
  %v6118 = vpop.f32.mrf.mxu0
  %v6119 = vadd.f32 %v5885, %v6118
  %v6120 = vpop.f32.mrf.mxu0
  %v6121 = vadd.f32 %v5881, %v6120
  %v6122 = vpop.f32.mrf.mxu0
  %v6123 = vadd.f32 %v5885, %v6122
  %6124 = vmatprep.mubr.bf16.mxu0 0
  %6125 = vmatmul.mubr.bf16.gmra.mxu0 %v5915
  %v6126 = vpop.f32.mrf.mxu0
  %v6127 = vadd.f32 %v5881, %v6126
  %v6128 = vpop.f32.mrf.mxu0
  %v6129 = vadd.f32 %v5885, %v6128
  %v6130 = vpop.f32.mrf.mxu0
  %v6131 = vadd.f32 %v5881, %v6130
  %v6132 = vpop.f32.mrf.mxu0
  %v6133 = vadd.f32 %v5885, %v6132
  %6134 = vmatprep.mubr.bf16.mxu0 0
  %6135 = vmatmul.mubr.bf16.gmra.mxu0 %v5916
  %v6136 = vpop.f32.mrf.mxu0
  %v6137 = vadd.f32 %v5881, %v6136
  %v6138 = vpop.f32.mrf.mxu0
  %v6139 = vadd.f32 %v5885, %v6138
  %v6140 = vpop.f32.mrf.mxu0
  %v6141 = vadd.f32 %v5881, %v6140
  %v6142 = vpop.f32.mrf.mxu0
  %v6143 = vadd.f32 %v5885, %v6142
  %6144 = vmatprep.mubr.bf16.mxu0 0
  %6145 = vmatmul.mubr.bf16.gmra.mxu0 %v5917
  %v6146 = vpop.f32.mrf.mxu0
  %v6147 = vadd.f32 %v5881, %v6146
  %v6148 = vpop.f32.mrf.mxu0
  %v6149 = vadd.f32 %v5885, %v6148
  %v6150 = vpop.f32.mrf.mxu0
  %v6151 = vadd.f32 %v5881, %v6150
  %v6152 = vpop.f32.mrf.mxu0
  %v6153 = vadd.f32 %v5885, %v6152
  %6154 = vdwg.mxu0
  %6155 = vmatprep.subr.bf16.mxu0 %v6049
  %6156 = vmatpush1.bf16.msra.mxu0 %v6048
  %6157 = vmatprep.subr.bf16.mxu0 %v6045
  %6158 = vmatpush1.bf16.msra.mxu0 %v6044
  %6159 = vmatprep.subr.bf16.mxu0 %v6041
  %6160 = vmatpush1.bf16.msra.mxu0 %v6040
  %6161 = vmatprep.subr.bf16.mxu0 %v6037
  %6162 = vmatpush1.bf16.msra.mxu0 %v6036
  %6163 = vmatprep.subr.bf16.mxu0 %v6033
  %6164 = vmatpush1.bf16.msra.mxu0 %v6032
  %6165 = vmatprep.subr.bf16.mxu0 %v6029
  %6166 = vmatpush1.bf16.msra.mxu0 %v6028
  %6167 = vmatprep.subr.bf16.mxu0 %v6025
  %6168 = vmatpush1.bf16.msra.mxu0 %v6024
  %6169 = vmatprep.subr.bf16.mxu0 %v6021
  %6170 = vmatpush1.bf16.msra.mxu0 %v6020
  %6171 = vmatprep.subr.bf16.mxu0 0
  %6172 = vmatpush2.bf16.msra.mxu0 0
  %6173 = vmatprep.subr.bf16.mxu0 0
  %6174 = vmatpush2.bf16.msra.mxu0 0
  %6175 = vmatprep.subr.bf16.mxu0 0
  %6176 = vmatpush2.bf16.msra.mxu0 0
  %6177 = vmatprep.subr.bf16.mxu0 0
  %6178 = vmatpush2.bf16.msra.mxu0 0
  %6179 = vmatprep.subr.bf16.mxu0 0
  %6180 = vmatpush2.bf16.msra.mxu0 0
  %6181 = vmatprep.subr.bf16.mxu0 0
  %6182 = vmatpush2.bf16.msra.mxu0 0
  %6183 = vmatprep.subr.bf16.mxu0 0
  %6184 = vmatpush2.bf16.msra.mxu0 0
  %6185 = vmatprep.subr.bf16.mxu0 0
  %6186 = vmatpush2.bf16.msra.mxu0 0
  %6187 = vmatprep.mubr.bf16.mxu0 0
  %6188 = vmatmul.mubr.bf16.gmra.mxu0 %v5914
  %v6189 = vpop.f32.mrf.mxu0
  %v6190 = vadd.f32 %v5889, %v6189
  %v6191 = vpop.f32.mrf.mxu0
  %v6192 = vadd.f32 %v5893, %v6191
  %v6193 = vpop.f32.mrf.mxu0
  %v6194 = vadd.f32 %v5889, %v6193
  %v6195 = vpop.f32.mrf.mxu0
  %v6196 = vadd.f32 %v5893, %v6195
  %6197 = vmatprep.mubr.bf16.mxu0 0
  %6198 = vmatmul.mubr.bf16.gmra.mxu0 %v5915
  %v6199 = vpop.f32.mrf.mxu0
  %v6200 = vadd.f32 %v5889, %v6199
  %v6201 = vpop.f32.mrf.mxu0
  %v6202 = vadd.f32 %v5893, %v6201
  %v6203 = vpop.f32.mrf.mxu0
  %v6204 = vadd.f32 %v5889, %v6203
  %v6205 = vpop.f32.mrf.mxu0
  %v6206 = vadd.f32 %v5893, %v6205
  %6207 = vmatprep.mubr.bf16.mxu0 0
  %6208 = vmatmul.mubr.bf16.gmra.mxu0 %v5916
  %v6209 = vpop.f32.mrf.mxu0
  %v6210 = vadd.f32 %v5889, %v6209
  %v6211 = vpop.f32.mrf.mxu0
  %v6212 = vadd.f32 %v5893, %v6211
  %v6213 = vpop.f32.mrf.mxu0
  %v6214 = vadd.f32 %v5889, %v6213
  %v6215 = vpop.f32.mrf.mxu0
  %v6216 = vadd.f32 %v5893, %v6215
  %6217 = vmatprep.mubr.bf16.mxu0 0
  %6218 = vmatmul.mubr.bf16.gmra.mxu0 %v5917
  %v6219 = vpop.f32.mrf.mxu0
  %v6220 = vadd.f32 %v5889, %v6219
  %v6221 = vpop.f32.mrf.mxu0
  %v6222 = vadd.f32 %v5893, %v6221
  %v6223 = vpop.f32.mrf.mxu0
  %v6224 = vadd.f32 %v5889, %v6223
  %v6225 = vpop.f32.mrf.mxu0
  %v6226 = vadd.f32 %v5893, %v6225
  %6227 = vdwg.mxu0
  %6228 = vst [vmem:[#allocation2] sm:$0xff] %v6117
  %6229 = vst [vmem:[#allocation2 + $0x8] sm:$0xff] %v6119
  %6230 = vst [vmem:[#allocation2 + $0x10] sm:$0xff] %v6190
  %6231 = vst [vmem:[#allocation2 + $0x18] sm:$0xff] %v6192
  %6232 = vst [vmem:[#allocation2 + $0x20] sm:$0xff] %v6121
  %6233 = vst [vmem:[#allocation2 + $0x28] sm:$0xff] %v6123
  %6234 = vst [vmem:[#allocation2 + $0x30] sm:$0xff] %v6194
  %6235 = vst [vmem:[#allocation2 + $0x38] sm:$0xff] %v6196
  %6236 = vst [vmem:[#allocation2 + $0x40] sm:$0xff] %v6127
  %6237 = vst [vmem:[#allocation2 + $0x48] sm:$0xff] %v6129
  %6238 = vst [vmem:[#allocation2 + $0x50] sm:$0xff] %v6200
  %6239 = vst [vmem:[#allocation2 + $0x58] sm:$0xff] %v6202
  %6240 = vst [vmem:[#allocation2 + $0x60] sm:$0xff] %v6131
  %6241 = vst [vmem:[#allocation2 + $0x68] sm:$0xff] %v6133
  %6242 = vst [vmem:[#allocation2 + $0x70] sm:$0xff] %v6204
  %6243 = vst [vmem:[#allocation2 + $0x78] sm:$0xff] %v6206
  %6244 = vst [vmem:[#allocation2 + $0x80] sm:$0xff] %v6137
  %6245 = vst [vmem:[#allocation2 + $0x88] sm:$0xff] %v6139
  %6246 = vst [vmem:[#allocation2 + $0x90] sm:$0xff] %v6210
  %6247 = vst [vmem:[#allocation2 + $0x98] sm:$0xff] %v6212
  %6248 = vst [vmem:[#allocation2 + $0xa0] sm:$0xff] %v6141
  %6249 = vst [vmem:[#allocation2 + $0xa8] sm:$0xff] %v6143
  %6250 = vst [vmem:[#allocation2 + $0xb0] sm:$0xff] %v6214
  %6251 = vst [vmem:[#allocation2 + $0xb8] sm:$0xff] %v6216
  %6252 = vst [vmem:[#allocation2 + $0xc0] sm:$0xff] %v6147
  %6253 = vst [vmem:[#allocation2 + $0xc8] sm:$0xff] %v6149
  %6254 = vst [vmem:[#allocation2 + $0xd0] sm:$0xff] %v6220
  %6255 = vst [vmem:[#allocation2 + $0xd8] sm:$0xff] %v6222
  %6256 = vst [vmem:[#allocation2 + $0xe0] sm:$0xff] %v6151
  %6257 = vst [vmem:[#allocation2 + $0xe8] sm:$0xff] %v6153
  %6258 = vst [vmem:[#allocation2 + $0xf0] sm:$0xff] %v6224
  %6259 = vst [vmem:[#allocation2 + $0xf8] sm:$0xff] %v6226
  %v6260 = vld [vmem:[#allocation2] sm:$0xff]
  %v6261 = vld [vmem:[#allocation2 + $0x8] sm:$0xff]
  %v6262 = vld [vmem:[#allocation2 + $0x10] sm:$0xff]
  %v6263 = vld [vmem:[#allocation2 + $0x18] sm:$0xff]
  %v6264 = vld [vmem:[%s8] sm:$0xff]
  %v6265 = vld [vmem:[%s8 + $0x8] sm:$0xff]
  %v6266 = vld [vmem:[%s8 + $0x10] sm:$0xff]
  %v6267 = vld [vmem:[%s8 + $0x18] sm:$0xff]
  %v6268 = vld [vmem:[%s8 + $0x20] sm:$0xff]
  %v6269 = vld [vmem:[%s8 + $0x28] sm:$0xff]
  %v6270 = vld [vmem:[%s8 + $0x30] sm:$0xff]
  %v6271 = vld [vmem:[%s8 + $0x38] sm:$0xff]
  %v6272 = vld [vmem:[%s8 + $0x40] sm:$0xff]
  %v6273 = vld [vmem:[%s8 + $0x48] sm:$0xff]
  %v6274 = vld [vmem:[%s8 + $0x50] sm:$0xff]
  %v6275 = vld [vmem:[%s8 + $0x58] sm:$0xff]
  %v6276 = vld [vmem:[%s8 + $0x60] sm:$0xff]
  %v6277 = vld [vmem:[%s8 + $0x68] sm:$0xff]
  %v6278 = vld [vmem:[%s8 + $0x70] sm:$0xff]
  %v6279 = vld [vmem:[%s8 + $0x78] sm:$0xff]
  %v6280 = vld [vmem:[%s8 + $0x80] sm:$0xff]
  %v6281 = vld [vmem:[%s8 + $0x88] sm:$0xff]
  %v6282 = vld [vmem:[%s8 + $0x90] sm:$0xff]
  %v6283 = vld [vmem:[%s8 + $0x98] sm:$0xff]
  %v6284 = vld [vmem:[%s8 + $0xa0] sm:$0xff]
  %v6285 = vld [vmem:[%s8 + $0xa8] sm:$0xff]
  %v6286 = vld [vmem:[%s8 + $0xb0] sm:$0xff]
  %v6287 = vld [vmem:[%s8 + $0xb8] sm:$0xff]
  %v6288 = vld [vmem:[%s8 + $0xc0] sm:$0xff]
  %v6289 = vld [vmem:[%s8 + $0xc8] sm:$0xff]
  %v6290 = vld [vmem:[%s8 + $0xd0] sm:$0xff]
  %v6291 = vld [vmem:[%s8 + $0xd8] sm:$0xff]
  %v6292 = vld [vmem:[%s8 + $0xe0] sm:$0xff]
  %v6293 = vld [vmem:[%s8 + $0xe8] sm:$0xff]
  %v6294 = vld [vmem:[%s8 + $0xf0] sm:$0xff]
  %v6295 = vld [vmem:[%s8 + $0xf8] sm:$0xff]
  %v6328 = vunpack.c.l.b16 %v6264
  %v6329 = vunpack.c.h.b16 %v6264
  %v6330 = vunpack.c.l.b16 %v6265
  %v6331 = vunpack.c.h.b16 %v6265
  %v6332 = vunpack.c.l.b16 %v6266
  %v6333 = vunpack.c.h.b16 %v6266
  %v6334 = vunpack.c.l.b16 %v6267
  %v6335 = vunpack.c.h.b16 %v6267
  %v6336 = vunpack.c.l.b16 %v6268
  %v6337 = vunpack.c.h.b16 %v6268
  %v6338 = vunpack.c.l.b16 %v6269
  %v6339 = vunpack.c.h.b16 %v6269
  %v6340 = vunpack.c.l.b16 %v6270
  %v6341 = vunpack.c.h.b16 %v6270
  %v6342 = vunpack.c.l.b16 %v6271
  %v6343 = vunpack.c.h.b16 %v6271
  %v6344 = vunpack.c.l.b16 %v6272
  %v6345 = vunpack.c.h.b16 %v6272
  %v6346 = vunpack.c.l.b16 %v6273
  %v6347 = vunpack.c.h.b16 %v6273
  %v6348 = vunpack.c.l.b16 %v6274
  %v6349 = vunpack.c.h.b16 %v6274
  %v6350 = vunpack.c.l.b16 %v6275
  %v6351 = vunpack.c.h.b16 %v6275
  %v6352 = vunpack.c.l.b16 %v6276
  %v6353 = vunpack.c.h.b16 %v6276
  %v6354 = vunpack.c.l.b16 %v6277
  %v6355 = vunpack.c.h.b16 %v6277
  %v6356 = vunpack.c.l.b16 %v6278
  %v6357 = vunpack.c.h.b16 %v6278
  %v6358 = vunpack.c.l.b16 %v6279
  %v6359 = vunpack.c.h.b16 %v6279
  %v6360 = vunpack.c.l.b16 %v6280
  %v6361 = vunpack.c.h.b16 %v6280
  %v6362 = vunpack.c.l.b16 %v6281
  %v6363 = vunpack.c.h.b16 %v6281
  %v6364 = vunpack.c.l.b16 %v6282
  %v6365 = vunpack.c.h.b16 %v6282
  %v6366 = vunpack.c.l.b16 %v6283
  %v6367 = vunpack.c.h.b16 %v6283
  %v6368 = vunpack.c.l.b16 %v6284
  %v6369 = vunpack.c.h.b16 %v6284
  %v6370 = vunpack.c.l.b16 %v6285
  %v6371 = vunpack.c.h.b16 %v6285
  %v6372 = vunpack.c.l.b16 %v6286
  %v6373 = vunpack.c.h.b16 %v6286
  %v6374 = vunpack.c.l.b16 %v6287
  %v6375 = vunpack.c.h.b16 %v6287
  %v6376 = vunpack.c.l.b16 %v6288
  %v6377 = vunpack.c.h.b16 %v6288
  %v6378 = vunpack.c.l.b16 %v6289
  %v6379 = vunpack.c.h.b16 %v6289
  %v6380 = vunpack.c.l.b16 %v6290
  %v6381 = vunpack.c.h.b16 %v6290
  %v6382 = vunpack.c.l.b16 %v6291
  %v6383 = vunpack.c.h.b16 %v6291
  %v6384 = vunpack.c.l.b16 %v6292
  %v6385 = vunpack.c.h.b16 %v6292
  %v6386 = vunpack.c.l.b16 %v6293
  %v6387 = vunpack.c.h.b16 %v6293
  %v6388 = vunpack.c.l.b16 %v6294
  %v6389 = vunpack.c.h.b16 %v6294
  %v6390 = vunpack.c.l.b16 %v6295
  %v6391 = vunpack.c.h.b16 %v6295
  %v6392 = vpack.c.b16 %v6332, %v6328
  %v6393 = vpack.c.b16 %v6333, %v6329
  %v6394 = vpack.c.b16 %v6334, %v6330
  %v6395 = vpack.c.b16 %v6335, %v6331
  %v6396 = vpack.c.b16 %v6340, %v6336
  %v6397 = vpack.c.b16 %v6341, %v6337
  %v6398 = vpack.c.b16 %v6342, %v6338
  %v6399 = vpack.c.b16 %v6343, %v6339
  %v6400 = vpack.c.b16 %v6348, %v6344
  %v6401 = vpack.c.b16 %v6349, %v6345
  %v6402 = vpack.c.b16 %v6350, %v6346
  %v6403 = vpack.c.b16 %v6351, %v6347
  %v6404 = vpack.c.b16 %v6356, %v6352
  %v6405 = vpack.c.b16 %v6357, %v6353
  %v6406 = vpack.c.b16 %v6358, %v6354
  %v6407 = vpack.c.b16 %v6359, %v6355
  %v6408 = vpack.c.b16 %v6364, %v6360
  %v6409 = vpack.c.b16 %v6365, %v6361
  %v6410 = vpack.c.b16 %v6366, %v6362
  %v6411 = vpack.c.b16 %v6367, %v6363
  %v6412 = vpack.c.b16 %v6372, %v6368
  %v6413 = vpack.c.b16 %v6373, %v6369
  %v6414 = vpack.c.b16 %v6374, %v6370
  %v6415 = vpack.c.b16 %v6375, %v6371
  %v6416 = vpack.c.b16 %v6380, %v6376
  %v6417 = vpack.c.b16 %v6381, %v6377
  %v6418 = vpack.c.b16 %v6382, %v6378
  %v6419 = vpack.c.b16 %v6383, %v6379
  %v6420 = vpack.c.b16 %v6388, %v6384
  %v6421 = vpack.c.b16 %v6389, %v6385
  %v6422 = vpack.c.b16 %v6390, %v6386
  %v6423 = vpack.c.b16 %v6391, %v6387
  %6456 = vmatprep.subr.bf16.mxu0 %v6421
  %6457 = vmatpush1.bf16.msra.mxu0 %v6420
  %6458 = vmatprep.subr.bf16.mxu0 %v6417
  %6459 = vmatpush1.bf16.msra.mxu0 %v6416
  %6460 = vmatprep.subr.bf16.mxu0 %v6413
  %6461 = vmatpush1.bf16.msra.mxu0 %v6412
  %6462 = vmatprep.subr.bf16.mxu0 %v6409
  %6463 = vmatpush1.bf16.msra.mxu0 %v6408
  %6464 = vmatprep.subr.bf16.mxu0 %v6405
  %6465 = vmatpush1.bf16.msra.mxu0 %v6404
  %6466 = vmatprep.subr.bf16.mxu0 %v6401
  %6467 = vmatpush1.bf16.msra.mxu0 %v6400
  %6468 = vmatprep.subr.bf16.mxu0 %v6397
  %6469 = vmatpush1.bf16.msra.mxu0 %v6396
  %6470 = vmatprep.subr.bf16.mxu0 %v6393
  %6471 = vmatpush1.bf16.msra.mxu0 %v6392
  %6472 = vmatprep.subr.bf16.mxu0 0
  %6473 = vmatpush2.bf16.msra.mxu0 0
  %6474 = vmatprep.subr.bf16.mxu0 0
  %6475 = vmatpush2.bf16.msra.mxu0 0
  %6476 = vmatprep.subr.bf16.mxu0 0
  %6477 = vmatpush2.bf16.msra.mxu0 0
  %6478 = vmatprep.subr.bf16.mxu0 0
  %6479 = vmatpush2.bf16.msra.mxu0 0
  %6480 = vmatprep.subr.bf16.mxu0 0
  %6481 = vmatpush2.bf16.msra.mxu0 0
  %6482 = vmatprep.subr.bf16.mxu0 0
  %6483 = vmatpush2.bf16.msra.mxu0 0
  %6484 = vmatprep.subr.bf16.mxu0 0
  %6485 = vmatpush2.bf16.msra.mxu0 0
  %6486 = vmatprep.subr.bf16.mxu0 0
  %6487 = vmatpush2.bf16.msra.mxu0 0
  %6488 = vmatprep.mubr.bf16.mxu0 0
  %6489 = vmatmul.mubr.bf16.gmra.mxu0 0
  %v6490 = vpop.f32.mrf.mxu0
  %v6491 = vadd.f32 0.0, %v6490
  %v6492 = vpop.f32.mrf.mxu0
  %v6493 = vadd.f32 0.0, %v6492
  %v6494 = vpop.f32.mrf.mxu0
  %v6495 = vpop.f32.mrf.mxu0
  %6496 = vdwg.mxu0
  %6497 = vmatprep.subr.bf16.mxu0 %v6423
  %6498 = vmatpush1.bf16.msra.mxu0 %v6422
  %6499 = vmatprep.subr.bf16.mxu0 %v6419
  %6500 = vmatpush1.bf16.msra.mxu0 %v6418
  %6501 = vmatprep.subr.bf16.mxu0 %v6415
  %6502 = vmatpush1.bf16.msra.mxu0 %v6414
  %6503 = vmatprep.subr.bf16.mxu0 %v6411
  %6504 = vmatpush1.bf16.msra.mxu0 %v6410
  %6505 = vmatprep.subr.bf16.mxu0 %v6407
  %6506 = vmatpush1.bf16.msra.mxu0 %v6406
  %6507 = vmatprep.subr.bf16.mxu0 %v6403
  %6508 = vmatpush1.bf16.msra.mxu0 %v6402
  %6509 = vmatprep.subr.bf16.mxu0 %v6399
  %6510 = vmatpush1.bf16.msra.mxu0 %v6398
  %6511 = vmatprep.subr.bf16.mxu0 %v6395
  %6512 = vmatpush1.bf16.msra.mxu0 %v6394
  %6513 = vmatprep.subr.bf16.mxu0 0
  %6514 = vmatpush2.bf16.msra.mxu0 0
  %6515 = vmatprep.subr.bf16.mxu0 0
  %6516 = vmatpush2.bf16.msra.mxu0 0
  %6517 = vmatprep.subr.bf16.mxu0 0
  %6518 = vmatpush2.bf16.msra.mxu0 0
  %6519 = vmatprep.subr.bf16.mxu0 0
  %6520 = vmatpush2.bf16.msra.mxu0 0
  %6521 = vmatprep.subr.bf16.mxu0 0
  %6522 = vmatpush2.bf16.msra.mxu0 0
  %6523 = vmatprep.subr.bf16.mxu0 0
  %6524 = vmatpush2.bf16.msra.mxu0 0
  %6525 = vmatprep.subr.bf16.mxu0 0
  %6526 = vmatpush2.bf16.msra.mxu0 0
  %6527 = vmatprep.subr.bf16.mxu0 0
  %6528 = vmatpush2.bf16.msra.mxu0 0
  %6529 = vmatprep.mubr.bf16.mxu0 0
  %6530 = vmatmul.mubr.bf16.gmra.mxu0 0
  %v6531 = vpop.f32.mrf.mxu0
  %v6532 = vadd.f32 0.0, %v6531
  %v6533 = vpop.f32.mrf.mxu0
  %v6534 = vadd.f32 0.0, %v6533
  %v6535 = vpop.f32.mrf.mxu0
  %v6536 = vpop.f32.mrf.mxu0
  %6537 = vdwg.mxu0
  %v6538 = vadd.f32 %v6260, %v6491
  %v6539 = vadd.f32 %v6261, %v6493
  %v6540 = vadd.f32 %v6262, %v6532
  %v6541 = vadd.f32 %v6263, %v6534
  %v6542 = vxor.u32 %v6538, 2147483648
  %v6543 = vmul.f32 %v6542, 1.442695
  %v6544 = vpow.pop %v6543
  %v6545 = vadd.f32 %v6544, 1.0
  %v6546 = vrcp.pop %v6545
  %v6547 = vmul.f32 1.0, %v6546
  %v6548 = vxor.u32 %v6539, 2147483648
  %v6549 = vmul.f32 %v6548, 1.442695
  %v6550 = vpow.pop %v6549
  %v6551 = vadd.f32 %v6550, 1.0
  %v6552 = vrcp.pop %v6551
  %v6553 = vmul.f32 1.0, %v6552
  %v6554 = vtanh.pop %v6540
  %v6555 = vxor.u32 %v6541, 2147483648
  %v6556 = vmul.f32 %v6555, 1.442695
  %v6557 = vpow.pop %v6556
  %v6558 = vadd.f32 %v6557, 1.0
  %v6559 = vrcp.pop %v6558
  %v6560 = vmul.f32 1.0, %v6559
  %v6561 = vmul.f32 %v6553, 0.0
  %v6562 = vmul.f32 %v6547, %v6554
  %v6563 = vadd.f32 %v6561, %v6562
  %v6564 = vtanh.pop %v6563
  %v6565 = vmul.f32 %v6560, %v6564
  %v6566 = vld [vmem:[%s778] sm:$0xff]
  %v6567 = vld [vmem:[%s778 + $0x8] sm:$0xff]
  %v6568 = vld [vmem:[%s778 + $0x10] sm:$0xff]
  %v6569 = vld [vmem:[%s778 + $0x18] sm:$0xff]
  %v6570 = vpack.c.bf16 %v6565, %v6565
  %6571 = vmatprep.subr.bf16.mxu0 %v6421
  %6572 = vmatpush1.bf16.msra.mxu0 %v6420
  %6573 = vmatprep.subr.bf16.mxu0 %v6417
  %6574 = vmatpush1.bf16.msra.mxu0 %v6416
  %6575 = vmatprep.subr.bf16.mxu0 %v6413
  %6576 = vmatpush1.bf16.msra.mxu0 %v6412
  %6577 = vmatprep.subr.bf16.mxu0 %v6409
  %6578 = vmatpush1.bf16.msra.mxu0 %v6408
  %6579 = vmatprep.subr.bf16.mxu0 %v6405
  %6580 = vmatpush1.bf16.msra.mxu0 %v6404
  %6581 = vmatprep.subr.bf16.mxu0 %v6401
  %6582 = vmatpush1.bf16.msra.mxu0 %v6400
  %6583 = vmatprep.subr.bf16.mxu0 %v6397
  %6584 = vmatpush1.bf16.msra.mxu0 %v6396
  %6585 = vmatprep.subr.bf16.mxu0 %v6393
  %6586 = vmatpush1.bf16.msra.mxu0 %v6392
  %6587 = vmatprep.subr.bf16.mxu0 0
  %6588 = vmatpush2.bf16.msra.mxu0 0
  %6589 = vmatprep.subr.bf16.mxu0 0
  %6590 = vmatpush2.bf16.msra.mxu0 0
  %6591 = vmatprep.subr.bf16.mxu0 0
  %6592 = vmatpush2.bf16.msra.mxu0 0
  %6593 = vmatprep.subr.bf16.mxu0 0
  %6594 = vmatpush2.bf16.msra.mxu0 0
  %6595 = vmatprep.subr.bf16.mxu0 0
  %6596 = vmatpush2.bf16.msra.mxu0 0
  %6597 = vmatprep.subr.bf16.mxu0 0
  %6598 = vmatpush2.bf16.msra.mxu0 0
  %6599 = vmatprep.subr.bf16.mxu0 0
  %6600 = vmatpush2.bf16.msra.mxu0 0
  %6601 = vmatprep.subr.bf16.mxu0 0
  %6602 = vmatpush2.bf16.msra.mxu0 0
  %6603 = vmatprep.mubr.bf16.mxu0 0
  %6604 = vmatmul.mubr.bf16.gmra.mxu0 %v6570
  %v6605 = vpop.f32.mrf.mxu0
  %v6606 = vadd.f32 0.0, %v6605
  %v6607 = vpop.f32.mrf.mxu0
  %v6608 = vadd.f32 0.0, %v6607
  %v6609 = vpop.f32.mrf.mxu0
  %v6610 = vpop.f32.mrf.mxu0
  %6611 = vdwg.mxu0
  %6612 = vmatprep.subr.bf16.mxu0 %v6423
  %6613 = vmatpush1.bf16.msra.mxu0 %v6422
  %6614 = vmatprep.subr.bf16.mxu0 %v6419
  %6615 = vmatpush1.bf16.msra.mxu0 %v6418
  %6616 = vmatprep.subr.bf16.mxu0 %v6415
  %6617 = vmatpush1.bf16.msra.mxu0 %v6414
  %6618 = vmatprep.subr.bf16.mxu0 %v6411
  %6619 = vmatpush1.bf16.msra.mxu0 %v6410
  %6620 = vmatprep.subr.bf16.mxu0 %v6407
  %6621 = vmatpush1.bf16.msra.mxu0 %v6406
  %6622 = vmatprep.subr.bf16.mxu0 %v6403
  %6623 = vmatpush1.bf16.msra.mxu0 %v6402
  %6624 = vmatprep.subr.bf16.mxu0 %v6399
  %6625 = vmatpush1.bf16.msra.mxu0 %v6398
  %6626 = vmatprep.subr.bf16.mxu0 %v6395
  %6627 = vmatpush1.bf16.msra.mxu0 %v6394
  %6628 = vmatprep.subr.bf16.mxu0 0
  %6629 = vmatpush2.bf16.msra.mxu0 0
  %6630 = vmatprep.subr.bf16.mxu0 0
  %6631 = vmatpush2.bf16.msra.mxu0 0
  %6632 = vmatprep.subr.bf16.mxu0 0
  %6633 = vmatpush2.bf16.msra.mxu0 0
  %6634 = vmatprep.subr.bf16.mxu0 0
  %6635 = vmatpush2.bf16.msra.mxu0 0
  %6636 = vmatprep.subr.bf16.mxu0 0
  %6637 = vmatpush2.bf16.msra.mxu0 0
  %6638 = vmatprep.subr.bf16.mxu0 0
  %6639 = vmatpush2.bf16.msra.mxu0 0
  %6640 = vmatprep.subr.bf16.mxu0 0
  %6641 = vmatpush2.bf16.msra.mxu0 0
  %6642 = vmatprep.subr.bf16.mxu0 0
  %6643 = vmatpush2.bf16.msra.mxu0 0
  %6644 = vmatprep.mubr.bf16.mxu0 0
  %6645 = vmatmul.mubr.bf16.gmra.mxu0 %v6570
  %v6646 = vpop.f32.mrf.mxu0
  %v6647 = vadd.f32 0.0, %v6646
  %v6648 = vpop.f32.mrf.mxu0
  %v6649 = vadd.f32 0.0, %v6648
  %v6650 = vpop.f32.mrf.mxu0
  %v6651 = vpop.f32.mrf.mxu0
  %6652 = vdwg.mxu0
  %v6653 = vadd.f32 %v6566, %v6606
  %v6654 = vadd.f32 %v6567, %v6608
  %v6655 = vadd.f32 %v6568, %v6647
  %v6656 = vadd.f32 %v6569, %v6649
  %v6657 = vxor.u32 %v6653, 2147483648
  %v6658 = vmul.f32 %v6657, 1.442695
  %v6659 = vpow.pop %v6658
  %v6660 = vadd.f32 %v6659, 1.0
  %v6661 = vrcp.pop %v6660
  %v6662 = vmul.f32 1.0, %v6661
  %v6663 = vxor.u32 %v6654, 2147483648
  %v6664 = vmul.f32 %v6663, 1.442695
  %v6665 = vpow.pop %v6664
  %v6666 = vadd.f32 %v6665, 1.0
  %v6667 = vrcp.pop %v6666
  %v6668 = vmul.f32 1.0, %v6667
  %v6669 = vtanh.pop %v6655
  %v6670 = vxor.u32 %v6656, 2147483648
  %v6671 = vmul.f32 %v6670, 1.442695
  %v6672 = vpow.pop %v6671
  %v6673 = vadd.f32 %v6672, 1.0
  %v6674 = vrcp.pop %v6673
  %v6675 = vmul.f32 1.0, %v6674
  %v6676 = vmul.f32 %v6668, %v6563
  %v6677 = vmul.f32 %v6662, %v6669
  %v6678 = vadd.f32 %v6676, %v6677
  %v6679 = vtanh.pop %v6678
  %v6680 = vmul.f32 %v6675, %v6679
  %v6681 = vld [vmem:[%s1088] sm:$0xff]
  %v6682 = vld [vmem:[%s1088 + $0x8] sm:$0xff]
  %v6683 = vld [vmem:[%s1088 + $0x10] sm:$0xff]
  %v6684 = vld [vmem:[%s1088 + $0x18] sm:$0xff]
  %v6685 = vpack.c.bf16 %v6680, %v6680
  %6686 = vmatprep.subr.bf16.mxu0 %v6421
  %6687 = vmatpush1.bf16.msra.mxu0 %v6420
  %6688 = vmatprep.subr.bf16.mxu0 %v6417
  %6689 = vmatpush1.bf16.msra.mxu0 %v6416
  %6690 = vmatprep.subr.bf16.mxu0 %v6413
  %6691 = vmatpush1.bf16.msra.mxu0 %v6412
  %6692 = vmatprep.subr.bf16.mxu0 %v6409
  %6693 = vmatpush1.bf16.msra.mxu0 %v6408
  %6694 = vmatprep.subr.bf16.mxu0 %v6405
  %6695 = vmatpush1.bf16.msra.mxu0 %v6404
  %6696 = vmatprep.subr.bf16.mxu0 %v6401
  %6697 = vmatpush1.bf16.msra.mxu0 %v6400
  %6698 = vmatprep.subr.bf16.mxu0 %v6397
  %6699 = vmatpush1.bf16.msra.mxu0 %v6396
  %6700 = vmatprep.subr.bf16.mxu0 %v6393
  %6701 = vmatpush1.bf16.msra.mxu0 %v6392
  %6702 = vmatprep.subr.bf16.mxu0 0
  %6703 = vmatpush2.bf16.msra.mxu0 0
  %6704 = vmatprep.subr.bf16.mxu0 0
  %6705 = vmatpush2.bf16.msra.mxu0 0
  %6706 = vmatprep.subr.bf16.mxu0 0
  %6707 = vmatpush2.bf16.msra.mxu0 0
  %6708 = vmatprep.subr.bf16.mxu0 0
  %6709 = vmatpush2.bf16.msra.mxu0 0
  %6710 = vmatprep.subr.bf16.mxu0 0
  %6711 = vmatpush2.bf16.msra.mxu0 0
  %6712 = vmatprep.subr.bf16.mxu0 0
  %6713 = vmatpush2.bf16.msra.mxu0 0
  %6714 = vmatprep.subr.bf16.mxu0 0
  %6715 = vmatpush2.bf16.msra.mxu0 0
  %6716 = vmatprep.subr.bf16.mxu0 0
  %6717 = vmatpush2.bf16.msra.mxu0 0
  %6718 = vmatprep.mubr.bf16.mxu0 0
  %6719 = vmatmul.mubr.bf16.gmra.mxu0 %v6685
  %v6720 = vpop.f32.mrf.mxu0
  %v6721 = vadd.f32 0.0, %v6720
  %v6722 = vpop.f32.mrf.mxu0
  %v6723 = vadd.f32 0.0, %v6722
  %v6724 = vpop.f32.mrf.mxu0
  %v6725 = vpop.f32.mrf.mxu0
  %6726 = vdwg.mxu0
  %6727 = vmatprep.subr.bf16.mxu0 %v6423
  %6728 = vmatpush1.bf16.msra.mxu0 %v6422
  %6729 = vmatprep.subr.bf16.mxu0 %v6419
  %6730 = vmatpush1.bf16.msra.mxu0 %v6418
  %6731 = vmatprep.subr.bf16.mxu0 %v6415
  %6732 = vmatpush1.bf16.msra.mxu0 %v6414
  %6733 = vmatprep.subr.bf16.mxu0 %v6411
  %6734 = vmatpush1.bf16.msra.mxu0 %v6410
  %6735 = vmatprep.subr.bf16.mxu0 %v6407
  %6736 = vmatpush1.bf16.msra.mxu0 %v6406
  %6737 = vmatprep.subr.bf16.mxu0 %v6403
  %6738 = vmatpush1.bf16.msra.mxu0 %v6402
  %6739 = vmatprep.subr.bf16.mxu0 %v6399
  %6740 = vmatpush1.bf16.msra.mxu0 %v6398
  %6741 = vmatprep.subr.bf16.mxu0 %v6395
  %6742 = vmatpush1.bf16.msra.mxu0 %v6394
  %6743 = vmatprep.subr.bf16.mxu0 0
  %6744 = vmatpush2.bf16.msra.mxu0 0
  %6745 = vmatprep.subr.bf16.mxu0 0
  %6746 = vmatpush2.bf16.msra.mxu0 0
  %6747 = vmatprep.subr.bf16.mxu0 0
  %6748 = vmatpush2.bf16.msra.mxu0 0
  %6749 = vmatprep.subr.bf16.mxu0 0
  %6750 = vmatpush2.bf16.msra.mxu0 0
  %6751 = vmatprep.subr.bf16.mxu0 0
  %6752 = vmatpush2.bf16.msra.mxu0 0
  %6753 = vmatprep.subr.bf16.mxu0 0
  %6754 = vmatpush2.bf16.msra.mxu0 0
  %6755 = vmatprep.subr.bf16.mxu0 0
  %6756 = vmatpush2.bf16.msra.mxu0 0
  %6757 = vmatprep.subr.bf16.mxu0 0
  %6758 = vmatpush2.bf16.msra.mxu0 0
  %6759 = vmatprep.mubr.bf16.mxu0 0
  %6760 = vmatmul.mubr.bf16.gmra.mxu0 %v6685
  %v6761 = vpop.f32.mrf.mxu0
  %v6762 = vadd.f32 0.0, %v6761
  %v6763 = vpop.f32.mrf.mxu0
  %v6764 = vadd.f32 0.0, %v6763
  %v6765 = vpop.f32.mrf.mxu0
  %v6766 = vpop.f32.mrf.mxu0
  %6767 = vdwg.mxu0
  %v6768 = vadd.f32 %v6681, %v6721
  %v6769 = vadd.f32 %v6682, %v6723
  %v6770 = vadd.f32 %v6683, %v6762
  %v6771 = vadd.f32 %v6684, %v6764
  %v6772 = vxor.u32 %v6768, 2147483648
  %v6773 = vmul.f32 %v6772, 1.442695
  %v6774 = vpow.pop %v6773
  %v6775 = vadd.f32 %v6774, 1.0
  %v6776 = vrcp.pop %v6775
  %v6777 = vmul.f32 1.0, %v6776
  %v6778 = vxor.u32 %v6769, 2147483648
  %v6779 = vmul.f32 %v6778, 1.442695
  %v6780 = vpow.pop %v6779
  %v6781 = vadd.f32 %v6780, 1.0
  %v6782 = vrcp.pop %v6781
  %v6783 = vmul.f32 1.0, %v6782
  %v6784 = vtanh.pop %v6770
  %v6785 = vxor.u32 %v6771, 2147483648
  %v6786 = vmul.f32 %v6785, 1.442695
  %v6787 = vpow.pop %v6786
  %v6788 = vadd.f32 %v6787, 1.0
  %v6789 = vrcp.pop %v6788
  %v6790 = vmul.f32 1.0, %v6789
  %v6791 = vmul.f32 %v6783, %v6678
  %v6792 = vmul.f32 %v6777, %v6784
  %v6793 = vadd.f32 %v6791, %v6792
  %v6794 = vtanh.pop %v6793
  %v6795 = vmul.f32 %v6790, %v6794
  %v6796 = vld [vmem:[%s1398] sm:$0xff]
  %v6797 = vld [vmem:[%s1398 + $0x8] sm:$0xff]
  %v6798 = vld [vmem:[%s1398 + $0x10] sm:$0xff]
  %v6799 = vld [vmem:[%s1398 + $0x18] sm:$0xff]
  %v6800 = vpack.c.bf16 %v6795, %v6795
  %6801 = vmatprep.subr.bf16.mxu0 %v6421
  %6802 = vmatpush1.bf16.msra.mxu0 %v6420
  %6803 = vmatprep.subr.bf16.mxu0 %v6417
  %6804 = vmatpush1.bf16.msra.mxu0 %v6416
  %6805 = vmatprep.subr.bf16.mxu0 %v6413
  %6806 = vmatpush1.bf16.msra.mxu0 %v6412
  %6807 = vmatprep.subr.bf16.mxu0 %v6409
  %6808 = vmatpush1.bf16.msra.mxu0 %v6408
  %6809 = vmatprep.subr.bf16.mxu0 %v6405
  %6810 = vmatpush1.bf16.msra.mxu0 %v6404
  %6811 = vmatprep.subr.bf16.mxu0 %v6401
  %6812 = vmatpush1.bf16.msra.mxu0 %v6400
  %6813 = vmatprep.subr.bf16.mxu0 %v6397
  %6814 = vmatpush1.bf16.msra.mxu0 %v6396
  %6815 = vmatprep.subr.bf16.mxu0 %v6393
  %6816 = vmatpush1.bf16.msra.mxu0 %v6392
  %6817 = vmatprep.subr.bf16.mxu0 0
  %6818 = vmatpush2.bf16.msra.mxu0 0
  %6819 = vmatprep.subr.bf16.mxu0 0
  %6820 = vmatpush2.bf16.msra.mxu0 0
  %6821 = vmatprep.subr.bf16.mxu0 0
  %6822 = vmatpush2.bf16.msra.mxu0 0
  %6823 = vmatprep.subr.bf16.mxu0 0
  %6824 = vmatpush2.bf16.msra.mxu0 0
  %6825 = vmatprep.subr.bf16.mxu0 0
  %6826 = vmatpush2.bf16.msra.mxu0 0
  %6827 = vmatprep.subr.bf16.mxu0 0
  %6828 = vmatpush2.bf16.msra.mxu0 0
  %6829 = vmatprep.subr.bf16.mxu0 0
  %6830 = vmatpush2.bf16.msra.mxu0 0
  %6831 = vmatprep.subr.bf16.mxu0 0
  %6832 = vmatpush2.bf16.msra.mxu0 0
  %6833 = vmatprep.mubr.bf16.mxu0 0
  %6834 = vmatmul.mubr.bf16.gmra.mxu0 %v6800
  %v6835 = vpop.f32.mrf.mxu0
  %v6836 = vadd.f32 0.0, %v6835
  %v6837 = vpop.f32.mrf.mxu0
  %v6838 = vadd.f32 0.0, %v6837
  %v6839 = vpop.f32.mrf.mxu0
  %v6840 = vpop.f32.mrf.mxu0
  %6841 = vdwg.mxu0
  %6842 = vmatprep.subr.bf16.mxu0 %v6423
  %6843 = vmatpush1.bf16.msra.mxu0 %v6422
  %6844 = vmatprep.subr.bf16.mxu0 %v6419
  %6845 = vmatpush1.bf16.msra.mxu0 %v6418
  %6846 = vmatprep.subr.bf16.mxu0 %v6415
  %6847 = vmatpush1.bf16.msra.mxu0 %v6414
  %6848 = vmatprep.subr.bf16.mxu0 %v6411
  %6849 = vmatpush1.bf16.msra.mxu0 %v6410
  %6850 = vmatprep.subr.bf16.mxu0 %v6407
  %6851 = vmatpush1.bf16.msra.mxu0 %v6406
  %6852 = vmatprep.subr.bf16.mxu0 %v6403
  %6853 = vmatpush1.bf16.msra.mxu0 %v6402
  %6854 = vmatprep.subr.bf16.mxu0 %v6399
  %6855 = vmatpush1.bf16.msra.mxu0 %v6398
  %6856 = vmatprep.subr.bf16.mxu0 %v6395
  %6857 = vmatpush1.bf16.msra.mxu0 %v6394
  %6858 = vmatprep.subr.bf16.mxu0 0
  %6859 = vmatpush2.bf16.msra.mxu0 0
  %6860 = vmatprep.subr.bf16.mxu0 0
  %6861 = vmatpush2.bf16.msra.mxu0 0
  %6862 = vmatprep.subr.bf16.mxu0 0
  %6863 = vmatpush2.bf16.msra.mxu0 0
  %6864 = vmatprep.subr.bf16.mxu0 0
  %6865 = vmatpush2.bf16.msra.mxu0 0
  %6866 = vmatprep.subr.bf16.mxu0 0
  %6867 = vmatpush2.bf16.msra.mxu0 0
  %6868 = vmatprep.subr.bf16.mxu0 0
  %6869 = vmatpush2.bf16.msra.mxu0 0
  %6870 = vmatprep.subr.bf16.mxu0 0
  %6871 = vmatpush2.bf16.msra.mxu0 0
  %6872 = vmatprep.subr.bf16.mxu0 0
  %6873 = vmatpush2.bf16.msra.mxu0 0
  %6874 = vmatprep.mubr.bf16.mxu0 0
  %6875 = vmatmul.mubr.bf16.gmra.mxu0 %v6800
  %v6876 = vpop.f32.mrf.mxu0
  %v6877 = vadd.f32 0.0, %v6876
  %v6878 = vpop.f32.mrf.mxu0
  %v6879 = vadd.f32 0.0, %v6878
  %v6880 = vpop.f32.mrf.mxu0
  %v6881 = vpop.f32.mrf.mxu0
  %6882 = vdwg.mxu0
  %v6883 = vadd.f32 %v6796, %v6836
  %v6884 = vadd.f32 %v6797, %v6838
  %v6885 = vadd.f32 %v6798, %v6877
  %v6886 = vadd.f32 %v6799, %v6879
  %v6887 = vxor.u32 %v6883, 2147483648
  %v6888 = vmul.f32 %v6887, 1.442695
  %v6889 = vpow.pop %v6888
  %v6890 = vadd.f32 %v6889, 1.0
  %v6891 = vrcp.pop %v6890
  %v6892 = vmul.f32 1.0, %v6891
  %v6893 = vxor.u32 %v6884, 2147483648
  %v6894 = vmul.f32 %v6893, 1.442695
  %v6895 = vpow.pop %v6894
  %v6896 = vadd.f32 %v6895, 1.0
  %v6897 = vrcp.pop %v6896
  %v6898 = vmul.f32 1.0, %v6897
  %v6899 = vtanh.pop %v6885
  %v6900 = vxor.u32 %v6886, 2147483648
  %v6901 = vmul.f32 %v6900, 1.442695
  %v6902 = vpow.pop %v6901
  %v6903 = vadd.f32 %v6902, 1.0
  %v6904 = vrcp.pop %v6903
  %v6905 = vmul.f32 1.0, %v6904
  %v6906 = vmul.f32 %v6898, %v6793
  %v6907 = vmul.f32 %v6892, %v6899
  %v6908 = vadd.f32 %v6906, %v6907
  %v6909 = vtanh.pop %v6908
  %v6910 = vmul.f32 %v6905, %v6909
  %v6911 = vld [vmem:[%s1708] sm:$0xff]
  %v6912 = vld [vmem:[%s1708 + $0x8] sm:$0xff]
  %v6913 = vld [vmem:[%s1708 + $0x10] sm:$0xff]
  %v6914 = vld [vmem:[%s1708 + $0x18] sm:$0xff]
  %v6915 = vpack.c.bf16 %v6910, %v6910
  %6916 = vmatprep.subr.bf16.mxu0 %v6421
  %6917 = vmatpush1.bf16.msra.mxu0 %v6420
  %6918 = vmatprep.subr.bf16.mxu0 %v6417
  %6919 = vmatpush1.bf16.msra.mxu0 %v6416
  %6920 = vmatprep.subr.bf16.mxu0 %v6413
  %6921 = vmatpush1.bf16.msra.mxu0 %v6412
  %6922 = vmatprep.subr.bf16.mxu0 %v6409
  %6923 = vmatpush1.bf16.msra.mxu0 %v6408
  %6924 = vmatprep.subr.bf16.mxu0 %v6405
  %6925 = vmatpush1.bf16.msra.mxu0 %v6404
  %6926 = vmatprep.subr.bf16.mxu0 %v6401
  %6927 = vmatpush1.bf16.msra.mxu0 %v6400
  %6928 = vmatprep.subr.bf16.mxu0 %v6397
  %6929 = vmatpush1.bf16.msra.mxu0 %v6396
  %6930 = vmatprep.subr.bf16.mxu0 %v6393
  %6931 = vmatpush1.bf16.msra.mxu0 %v6392
  %6932 = vmatprep.subr.bf16.mxu0 0
  %6933 = vmatpush2.bf16.msra.mxu0 0
  %6934 = vmatprep.subr.bf16.mxu0 0
  %6935 = vmatpush2.bf16.msra.mxu0 0
  %6936 = vmatprep.subr.bf16.mxu0 0
  %6937 = vmatpush2.bf16.msra.mxu0 0
  %6938 = vmatprep.subr.bf16.mxu0 0
  %6939 = vmatpush2.bf16.msra.mxu0 0
  %6940 = vmatprep.subr.bf16.mxu0 0
  %6941 = vmatpush2.bf16.msra.mxu0 0
  %6942 = vmatprep.subr.bf16.mxu0 0
  %6943 = vmatpush2.bf16.msra.mxu0 0
  %6944 = vmatprep.subr.bf16.mxu0 0
  %6945 = vmatpush2.bf16.msra.mxu0 0
  %6946 = vmatprep.subr.bf16.mxu0 0
  %6947 = vmatpush2.bf16.msra.mxu0 0
  %6948 = vmatprep.mubr.bf16.mxu0 0
  %6949 = vmatmul.mubr.bf16.gmra.mxu0 %v6915
  %v6950 = vpop.f32.mrf.mxu0
  %v6951 = vadd.f32 0.0, %v6950
  %v6952 = vpop.f32.mrf.mxu0
  %v6953 = vadd.f32 0.0, %v6952
  %v6954 = vpop.f32.mrf.mxu0
  %v6955 = vpop.f32.mrf.mxu0
  %6956 = vdwg.mxu0
  %6957 = vmatprep.subr.bf16.mxu0 %v6423
  %6958 = vmatpush1.bf16.msra.mxu0 %v6422
  %6959 = vmatprep.subr.bf16.mxu0 %v6419
  %6960 = vmatpush1.bf16.msra.mxu0 %v6418
  %6961 = vmatprep.subr.bf16.mxu0 %v6415
  %6962 = vmatpush1.bf16.msra.mxu0 %v6414
  %6963 = vmatprep.subr.bf16.mxu0 %v6411
  %6964 = vmatpush1.bf16.msra.mxu0 %v6410
  %6965 = vmatprep.subr.bf16.mxu0 %v6407
  %6966 = vmatpush1.bf16.msra.mxu0 %v6406
  %6967 = vmatprep.subr.bf16.mxu0 %v6403
  %6968 = vmatpush1.bf16.msra.mxu0 %v6402
  %6969 = vmatprep.subr.bf16.mxu0 %v6399
  %6970 = vmatpush1.bf16.msra.mxu0 %v6398
  %6971 = vmatprep.subr.bf16.mxu0 %v6395
  %6972 = vmatpush1.bf16.msra.mxu0 %v6394
  %6973 = vmatprep.subr.bf16.mxu0 0
  %6974 = vmatpush2.bf16.msra.mxu0 0
  %6975 = vmatprep.subr.bf16.mxu0 0
  %6976 = vmatpush2.bf16.msra.mxu0 0
  %6977 = vmatprep.subr.bf16.mxu0 0
  %6978 = vmatpush2.bf16.msra.mxu0 0
  %6979 = vmatprep.subr.bf16.mxu0 0
  %6980 = vmatpush2.bf16.msra.mxu0 0
  %6981 = vmatprep.subr.bf16.mxu0 0
  %6982 = vmatpush2.bf16.msra.mxu0 0
  %6983 = vmatprep.subr.bf16.mxu0 0
  %6984 = vmatpush2.bf16.msra.mxu0 0
  %6985 = vmatprep.subr.bf16.mxu0 0
  %6986 = vmatpush2.bf16.msra.mxu0 0
  %6987 = vmatprep.subr.bf16.mxu0 0
  %6988 = vmatpush2.bf16.msra.mxu0 0
  %6989 = vmatprep.mubr.bf16.mxu0 0
  %6990 = vmatmul.mubr.bf16.gmra.mxu0 %v6915
  %v6991 = vpop.f32.mrf.mxu0
  %v6992 = vadd.f32 0.0, %v6991
  %v6993 = vpop.f32.mrf.mxu0
  %v6994 = vadd.f32 0.0, %v6993
  %v6995 = vpop.f32.mrf.mxu0
  %v6996 = vpop.f32.mrf.mxu0
  %6997 = vdwg.mxu0
  %v6998 = vadd.f32 %v6911, %v6951
  %v6999 = vadd.f32 %v6912, %v6953
  %v7000 = vadd.f32 %v6913, %v6992
  %v7001 = vadd.f32 %v6914, %v6994
  %v7002 = vxor.u32 %v6998, 2147483648
  %v7003 = vmul.f32 %v7002, 1.442695
  %v7004 = vpow.pop %v7003
  %v7005 = vadd.f32 %v7004, 1.0
  %v7006 = vrcp.pop %v7005
  %v7007 = vmul.f32 1.0, %v7006
  %v7008 = vxor.u32 %v6999, 2147483648
  %v7009 = vmul.f32 %v7008, 1.442695
  %v7010 = vpow.pop %v7009
  %v7011 = vadd.f32 %v7010, 1.0
  %v7012 = vrcp.pop %v7011
  %v7013 = vmul.f32 1.0, %v7012
  %v7014 = vtanh.pop %v7000
  %v7015 = vxor.u32 %v7001, 2147483648
  %v7016 = vmul.f32 %v7015, 1.442695
  %v7017 = vpow.pop %v7016
  %v7018 = vadd.f32 %v7017, 1.0
  %v7019 = vrcp.pop %v7018
  %v7020 = vmul.f32 1.0, %v7019
  %v7021 = vmul.f32 %v7013, %v6908
  %v7022 = vmul.f32 %v7007, %v7014
  %v7023 = vadd.f32 %v7021, %v7022
  %v7024 = vtanh.pop %v7023
  %v7025 = vmul.f32 %v7020, %v7024
  %v7026 = vld [vmem:[%s2018] sm:$0xff]
  %v7027 = vld [vmem:[%s2018 + $0x8] sm:$0xff]
  %v7028 = vld [vmem:[%s2018 + $0x10] sm:$0xff]
  %v7029 = vld [vmem:[%s2018 + $0x18] sm:$0xff]
  %v7030 = vpack.c.bf16 %v7025, %v7025
  %7031 = vmatprep.subr.bf16.mxu0 %v6421
  %7032 = vmatpush1.bf16.msra.mxu0 %v6420
  %7033 = vmatprep.subr.bf16.mxu0 %v6417
  %7034 = vmatpush1.bf16.msra.mxu0 %v6416
  %7035 = vmatprep.subr.bf16.mxu0 %v6413
  %7036 = vmatpush1.bf16.msra.mxu0 %v6412
  %7037 = vmatprep.subr.bf16.mxu0 %v6409
  %7038 = vmatpush1.bf16.msra.mxu0 %v6408
  %7039 = vmatprep.subr.bf16.mxu0 %v6405
  %7040 = vmatpush1.bf16.msra.mxu0 %v6404
  %7041 = vmatprep.subr.bf16.mxu0 %v6401
  %7042 = vmatpush1.bf16.msra.mxu0 %v6400
  %7043 = vmatprep.subr.bf16.mxu0 %v6397
  %7044 = vmatpush1.bf16.msra.mxu0 %v6396
  %7045 = vmatprep.subr.bf16.mxu0 %v6393
  %7046 = vmatpush1.bf16.msra.mxu0 %v6392
  %7047 = vmatprep.subr.bf16.mxu0 0
  %7048 = vmatpush2.bf16.msra.mxu0 0
  %7049 = vmatprep.subr.bf16.mxu0 0
  %7050 = vmatpush2.bf16.msra.mxu0 0
  %7051 = vmatprep.subr.bf16.mxu0 0
  %7052 = vmatpush2.bf16.msra.mxu0 0
  %7053 = vmatprep.subr.bf16.mxu0 0
  %7054 = vmatpush2.bf16.msra.mxu0 0
  %7055 = vmatprep.subr.bf16.mxu0 0
  %7056 = vmatpush2.bf16.msra.mxu0 0
  %7057 = vmatprep.subr.bf16.mxu0 0
  %7058 = vmatpush2.bf16.msra.mxu0 0
  %7059 = vmatprep.subr.bf16.mxu0 0
  %7060 = vmatpush2.bf16.msra.mxu0 0
  %7061 = vmatprep.subr.bf16.mxu0 0
  %7062 = vmatpush2.bf16.msra.mxu0 0
  %7063 = vmatprep.mubr.bf16.mxu0 0
  %7064 = vmatmul.mubr.bf16.gmra.mxu0 %v7030
  %v7065 = vpop.f32.mrf.mxu0
  %v7066 = vadd.f32 0.0, %v7065
  %v7067 = vpop.f32.mrf.mxu0
  %v7068 = vadd.f32 0.0, %v7067
  %v7069 = vpop.f32.mrf.mxu0
  %v7070 = vpop.f32.mrf.mxu0
  %7071 = vdwg.mxu0
  %7072 = vmatprep.subr.bf16.mxu0 %v6423
  %7073 = vmatpush1.bf16.msra.mxu0 %v6422
  %7074 = vmatprep.subr.bf16.mxu0 %v6419
  %7075 = vmatpush1.bf16.msra.mxu0 %v6418
  %7076 = vmatprep.subr.bf16.mxu0 %v6415
  %7077 = vmatpush1.bf16.msra.mxu0 %v6414
  %7078 = vmatprep.subr.bf16.mxu0 %v6411
  %7079 = vmatpush1.bf16.msra.mxu0 %v6410
  %7080 = vmatprep.subr.bf16.mxu0 %v6407
  %7081 = vmatpush1.bf16.msra.mxu0 %v6406
  %7082 = vmatprep.subr.bf16.mxu0 %v6403
  %7083 = vmatpush1.bf16.msra.mxu0 %v6402
  %7084 = vmatprep.subr.bf16.mxu0 %v6399
  %7085 = vmatpush1.bf16.msra.mxu0 %v6398
  %7086 = vmatprep.subr.bf16.mxu0 %v6395
  %7087 = vmatpush1.bf16.msra.mxu0 %v6394
  %7088 = vmatprep.subr.bf16.mxu0 0
  %7089 = vmatpush2.bf16.msra.mxu0 0
  %7090 = vmatprep.subr.bf16.mxu0 0
  %7091 = vmatpush2.bf16.msra.mxu0 0
  %7092 = vmatprep.subr.bf16.mxu0 0
  %7093 = vmatpush2.bf16.msra.mxu0 0
  %7094 = vmatprep.subr.bf16.mxu0 0
  %7095 = vmatpush2.bf16.msra.mxu0 0
  %7096 = vmatprep.subr.bf16.mxu0 0
  %7097 = vmatpush2.bf16.msra.mxu0 0
  %7098 = vmatprep.subr.bf16.mxu0 0
  %7099 = vmatpush2.bf16.msra.mxu0 0
  %7100 = vmatprep.subr.bf16.mxu0 0
  %7101 = vmatpush2.bf16.msra.mxu0 0
  %7102 = vmatprep.subr.bf16.mxu0 0
  %7103 = vmatpush2.bf16.msra.mxu0 0
  %7104 = vmatprep.mubr.bf16.mxu0 0
  %7105 = vmatmul.mubr.bf16.gmra.mxu0 %v7030
  %v7106 = vpop.f32.mrf.mxu0
  %v7107 = vadd.f32 0.0, %v7106
  %v7108 = vpop.f32.mrf.mxu0
  %v7109 = vadd.f32 0.0, %v7108
  %v7110 = vpop.f32.mrf.mxu0
  %v7111 = vpop.f32.mrf.mxu0
  %7112 = vdwg.mxu0
  %v7113 = vadd.f32 %v7026, %v7066
  %v7114 = vadd.f32 %v7027, %v7068
  %v7115 = vadd.f32 %v7028, %v7107
  %v7116 = vadd.f32 %v7029, %v7109
  %v7117 = vxor.u32 %v7113, 2147483648
  %v7118 = vmul.f32 %v7117, 1.442695
  %v7119 = vpow.pop %v7118
  %v7120 = vadd.f32 %v7119, 1.0
  %v7121 = vrcp.pop %v7120
  %v7122 = vmul.f32 1.0, %v7121
  %v7123 = vxor.u32 %v7114, 2147483648
  %v7124 = vmul.f32 %v7123, 1.442695
  %v7125 = vpow.pop %v7124
  %v7126 = vadd.f32 %v7125, 1.0
  %v7127 = vrcp.pop %v7126
  %v7128 = vmul.f32 1.0, %v7127
  %v7129 = vtanh.pop %v7115
  %v7130 = vxor.u32 %v7116, 2147483648
  %v7131 = vmul.f32 %v7130, 1.442695
  %v7132 = vpow.pop %v7131
  %v7133 = vadd.f32 %v7132, 1.0
  %v7134 = vrcp.pop %v7133
  %v7135 = vmul.f32 1.0, %v7134
  %v7136 = vmul.f32 %v7128, %v7023
  %v7137 = vmul.f32 %v7122, %v7129
  %v7138 = vadd.f32 %v7136, %v7137
  %v7139 = vtanh.pop %v7138
  %v7140 = vmul.f32 %v7135, %v7139
  %v7141 = vld [vmem:[%s2328] sm:$0xff]
  %v7142 = vld [vmem:[%s2328 + $0x8] sm:$0xff]
  %v7143 = vld [vmem:[%s2328 + $0x10] sm:$0xff]
  %v7144 = vld [vmem:[%s2328 + $0x18] sm:$0xff]
  %v7145 = vpack.c.bf16 %v7140, %v7140
  %7146 = vmatprep.subr.bf16.mxu0 %v6421
  %7147 = vmatpush1.bf16.msra.mxu0 %v6420
  %7148 = vmatprep.subr.bf16.mxu0 %v6417
  %7149 = vmatpush1.bf16.msra.mxu0 %v6416
  %7150 = vmatprep.subr.bf16.mxu0 %v6413
  %7151 = vmatpush1.bf16.msra.mxu0 %v6412
  %7152 = vmatprep.subr.bf16.mxu0 %v6409
  %7153 = vmatpush1.bf16.msra.mxu0 %v6408
  %7154 = vmatprep.subr.bf16.mxu0 %v6405
  %7155 = vmatpush1.bf16.msra.mxu0 %v6404
  %7156 = vmatprep.subr.bf16.mxu0 %v6401
  %7157 = vmatpush1.bf16.msra.mxu0 %v6400
  %7158 = vmatprep.subr.bf16.mxu0 %v6397
  %7159 = vmatpush1.bf16.msra.mxu0 %v6396
  %7160 = vmatprep.subr.bf16.mxu0 %v6393
  %7161 = vmatpush1.bf16.msra.mxu0 %v6392
  %7162 = vmatprep.subr.bf16.mxu0 0
  %7163 = vmatpush2.bf16.msra.mxu0 0
  %7164 = vmatprep.subr.bf16.mxu0 0
  %7165 = vmatpush2.bf16.msra.mxu0 0
  %7166 = vmatprep.subr.bf16.mxu0 0
  %7167 = vmatpush2.bf16.msra.mxu0 0
  %7168 = vmatprep.subr.bf16.mxu0 0
  %7169 = vmatpush2.bf16.msra.mxu0 0
  %7170 = vmatprep.subr.bf16.mxu0 0
  %7171 = vmatpush2.bf16.msra.mxu0 0
  %7172 = vmatprep.subr.bf16.mxu0 0
  %7173 = vmatpush2.bf16.msra.mxu0 0
  %7174 = vmatprep.subr.bf16.mxu0 0
  %7175 = vmatpush2.bf16.msra.mxu0 0
  %7176 = vmatprep.subr.bf16.mxu0 0
  %7177 = vmatpush2.bf16.msra.mxu0 0
  %7178 = vmatprep.mubr.bf16.mxu0 0
  %7179 = vmatmul.mubr.bf16.gmra.mxu0 %v7145
  %v7180 = vpop.f32.mrf.mxu0
  %v7181 = vadd.f32 0.0, %v7180
  %v7182 = vpop.f32.mrf.mxu0
  %v7183 = vadd.f32 0.0, %v7182
  %v7184 = vpop.f32.mrf.mxu0
  %v7185 = vpop.f32.mrf.mxu0
  %7186 = vdwg.mxu0
  %7187 = vmatprep.subr.bf16.mxu0 %v6423
  %7188 = vmatpush1.bf16.msra.mxu0 %v6422
  %7189 = vmatprep.subr.bf16.mxu0 %v6419
  %7190 = vmatpush1.bf16.msra.mxu0 %v6418
  %7191 = vmatprep.subr.bf16.mxu0 %v6415
  %7192 = vmatpush1.bf16.msra.mxu0 %v6414
  %7193 = vmatprep.subr.bf16.mxu0 %v6411
  %7194 = vmatpush1.bf16.msra.mxu0 %v6410
  %7195 = vmatprep.subr.bf16.mxu0 %v6407
  %7196 = vmatpush1.bf16.msra.mxu0 %v6406
  %7197 = vmatprep.subr.bf16.mxu0 %v6403
  %7198 = vmatpush1.bf16.msra.mxu0 %v6402
  %7199 = vmatprep.subr.bf16.mxu0 %v6399
  %7200 = vmatpush1.bf16.msra.mxu0 %v6398
  %7201 = vmatprep.subr.bf16.mxu0 %v6395
  %7202 = vmatpush1.bf16.msra.mxu0 %v6394
  %7203 = vmatprep.subr.bf16.mxu0 0
  %7204 = vmatpush2.bf16.msra.mxu0 0
  %7205 = vmatprep.subr.bf16.mxu0 0
  %7206 = vmatpush2.bf16.msra.mxu0 0
  %7207 = vmatprep.subr.bf16.mxu0 0
  %7208 = vmatpush2.bf16.msra.mxu0 0
  %7209 = vmatprep.subr.bf16.mxu0 0
  %7210 = vmatpush2.bf16.msra.mxu0 0
  %7211 = vmatprep.subr.bf16.mxu0 0
  %7212 = vmatpush2.bf16.msra.mxu0 0
  %7213 = vmatprep.subr.bf16.mxu0 0
  %7214 = vmatpush2.bf16.msra.mxu0 0
  %7215 = vmatprep.subr.bf16.mxu0 0
  %7216 = vmatpush2.bf16.msra.mxu0 0
  %7217 = vmatprep.subr.bf16.mxu0 0
  %7218 = vmatpush2.bf16.msra.mxu0 0
  %7219 = vmatprep.mubr.bf16.mxu0 0
  %7220 = vmatmul.mubr.bf16.gmra.mxu0 %v7145
  %v7221 = vpop.f32.mrf.mxu0
  %v7222 = vadd.f32 0.0, %v7221
  %v7223 = vpop.f32.mrf.mxu0
  %v7224 = vadd.f32 0.0, %v7223
  %v7225 = vpop.f32.mrf.mxu0
  %v7226 = vpop.f32.mrf.mxu0
  %7227 = vdwg.mxu0
  %v7228 = vadd.f32 %v7141, %v7181
  %v7229 = vadd.f32 %v7142, %v7183
  %v7230 = vadd.f32 %v7143, %v7222
  %v7231 = vadd.f32 %v7144, %v7224
  %v7232 = vxor.u32 %v7228, 2147483648
  %v7233 = vmul.f32 %v7232, 1.442695
  %v7234 = vpow.pop %v7233
  %v7235 = vadd.f32 %v7234, 1.0
  %v7236 = vrcp.pop %v7235
  %v7237 = vmul.f32 1.0, %v7236
  %v7238 = vxor.u32 %v7229, 2147483648
  %v7239 = vmul.f32 %v7238, 1.442695
  %v7240 = vpow.pop %v7239
  %v7241 = vadd.f32 %v7240, 1.0
  %v7242 = vrcp.pop %v7241
  %v7243 = vmul.f32 1.0, %v7242
  %v7244 = vtanh.pop %v7230
  %v7245 = vxor.u32 %v7231, 2147483648
  %v7246 = vmul.f32 %v7245, 1.442695
  %v7247 = vpow.pop %v7246
  %v7248 = vadd.f32 %v7247, 1.0
  %v7249 = vrcp.pop %v7248
  %v7250 = vmul.f32 1.0, %v7249
  %v7251 = vmul.f32 %v7243, %v7138
  %v7252 = vmul.f32 %v7237, %v7244
  %v7253 = vadd.f32 %v7251, %v7252
  %v7254 = vtanh.pop %v7253
  %v7255 = vmul.f32 %v7250, %v7254
  %v7256 = vld [vmem:[%s2638] sm:$0xff]
  %v7257 = vld [vmem:[%s2638 + $0x8] sm:$0xff]
  %v7258 = vld [vmem:[%s2638 + $0x10] sm:$0xff]
  %v7259 = vld [vmem:[%s2638 + $0x18] sm:$0xff]
  %v7260 = vpack.c.bf16 %v7255, %v7255
  %7261 = vmatprep.subr.bf16.mxu0 %v6421
  %7262 = vmatpush1.bf16.msra.mxu0 %v6420
  %7263 = vmatprep.subr.bf16.mxu0 %v6417
  %7264 = vmatpush1.bf16.msra.mxu0 %v6416
  %7265 = vmatprep.subr.bf16.mxu0 %v6413
  %7266 = vmatpush1.bf16.msra.mxu0 %v6412
  %7267 = vmatprep.subr.bf16.mxu0 %v6409
  %7268 = vmatpush1.bf16.msra.mxu0 %v6408
  %7269 = vmatprep.subr.bf16.mxu0 %v6405
  %7270 = vmatpush1.bf16.msra.mxu0 %v6404
  %7271 = vmatprep.subr.bf16.mxu0 %v6401
  %7272 = vmatpush1.bf16.msra.mxu0 %v6400
  %7273 = vmatprep.subr.bf16.mxu0 %v6397
  %7274 = vmatpush1.bf16.msra.mxu0 %v6396
  %7275 = vmatprep.subr.bf16.mxu0 %v6393
  %7276 = vmatpush1.bf16.msra.mxu0 %v6392
  %7277 = vmatprep.subr.bf16.mxu0 0
  %7278 = vmatpush2.bf16.msra.mxu0 0
  %7279 = vmatprep.subr.bf16.mxu0 0
  %7280 = vmatpush2.bf16.msra.mxu0 0
  %7281 = vmatprep.subr.bf16.mxu0 0
  %7282 = vmatpush2.bf16.msra.mxu0 0
  %7283 = vmatprep.subr.bf16.mxu0 0
  %7284 = vmatpush2.bf16.msra.mxu0 0
  %7285 = vmatprep.subr.bf16.mxu0 0
  %7286 = vmatpush2.bf16.msra.mxu0 0
  %7287 = vmatprep.subr.bf16.mxu0 0
  %7288 = vmatpush2.bf16.msra.mxu0 0
  %7289 = vmatprep.subr.bf16.mxu0 0
  %7290 = vmatpush2.bf16.msra.mxu0 0
  %7291 = vmatprep.subr.bf16.mxu0 0
  %7292 = vmatpush2.bf16.msra.mxu0 0
  %7293 = vmatprep.mubr.bf16.mxu0 0
  %7294 = vmatmul.mubr.bf16.gmra.mxu0 %v7260
  %v7295 = vpop.f32.mrf.mxu0
  %v7296 = vadd.f32 0.0, %v7295
  %v7297 = vpop.f32.mrf.mxu0
  %v7298 = vadd.f32 0.0, %v7297
  %v7299 = vpop.f32.mrf.mxu0
  %v7300 = vpop.f32.mrf.mxu0
  %7301 = vdwg.mxu0
  %7302 = vmatprep.subr.bf16.mxu0 %v6423
  %7303 = vmatpush1.bf16.msra.mxu0 %v6422
  %7304 = vmatprep.subr.bf16.mxu0 %v6419
  %7305 = vmatpush1.bf16.msra.mxu0 %v6418
  %7306 = vmatprep.subr.bf16.mxu0 %v6415
  %7307 = vmatpush1.bf16.msra.mxu0 %v6414
  %7308 = vmatprep.subr.bf16.mxu0 %v6411
  %7309 = vmatpush1.bf16.msra.mxu0 %v6410
  %7310 = vmatprep.subr.bf16.mxu0 %v6407
  %7311 = vmatpush1.bf16.msra.mxu0 %v6406
  %7312 = vmatprep.subr.bf16.mxu0 %v6403
  %7313 = vmatpush1.bf16.msra.mxu0 %v6402
  %7314 = vmatprep.subr.bf16.mxu0 %v6399
  %7315 = vmatpush1.bf16.msra.mxu0 %v6398
  %7316 = vmatprep.subr.bf16.mxu0 %v6395
  %7317 = vmatpush1.bf16.msra.mxu0 %v6394
  %7318 = vmatprep.subr.bf16.mxu0 0
  %7319 = vmatpush2.bf16.msra.mxu0 0
  %7320 = vmatprep.subr.bf16.mxu0 0
  %7321 = vmatpush2.bf16.msra.mxu0 0
  %7322 = vmatprep.subr.bf16.mxu0 0
  %7323 = vmatpush2.bf16.msra.mxu0 0
  %7324 = vmatprep.subr.bf16.mxu0 0
  %7325 = vmatpush2.bf16.msra.mxu0 0
  %7326 = vmatprep.subr.bf16.mxu0 0
  %7327 = vmatpush2.bf16.msra.mxu0 0
  %7328 = vmatprep.subr.bf16.mxu0 0
  %7329 = vmatpush2.bf16.msra.mxu0 0
  %7330 = vmatprep.subr.bf16.mxu0 0
  %7331 = vmatpush2.bf16.msra.mxu0 0
  %7332 = vmatprep.subr.bf16.mxu0 0
  %7333 = vmatpush2.bf16.msra.mxu0 0
  %7334 = vmatprep.mubr.bf16.mxu0 0
  %7335 = vmatmul.mubr.bf16.gmra.mxu0 %v7260
  %v7336 = vpop.f32.mrf.mxu0
  %v7337 = vadd.f32 0.0, %v7336
  %v7338 = vpop.f32.mrf.mxu0
  %v7339 = vadd.f32 0.0, %v7338
  %v7340 = vpop.f32.mrf.mxu0
  %v7341 = vpop.f32.mrf.mxu0
  %7342 = vdwg.mxu0
  %v7343 = vadd.f32 %v7256, %v7296
  %v7344 = vadd.f32 %v7257, %v7298
  %v7345 = vadd.f32 %v7258, %v7337
  %v7346 = vadd.f32 %v7259, %v7339
  %v7347 = vxor.u32 %v7343, 2147483648
  %v7348 = vmul.f32 %v7347, 1.442695
  %v7349 = vpow.pop %v7348
  %v7350 = vadd.f32 %v7349, 1.0
  %v7351 = vrcp.pop %v7350
  %v7352 = vmul.f32 1.0, %v7351
  %v7353 = vxor.u32 %v7344, 2147483648
  %v7354 = vmul.f32 %v7353, 1.442695
  %v7355 = vpow.pop %v7354
  %v7356 = vadd.f32 %v7355, 1.0
  %v7357 = vrcp.pop %v7356
  %v7358 = vmul.f32 1.0, %v7357
  %v7359 = vtanh.pop %v7345
  %v7360 = vxor.u32 %v7346, 2147483648
  %v7361 = vmul.f32 %v7360, 1.442695
  %v7362 = vpow.pop %v7361
  %v7363 = vadd.f32 %v7362, 1.0
  %v7364 = vrcp.pop %v7363
  %v7365 = vmul.f32 1.0, %v7364
  %v7366 = vmul.f32 %v7358, %v7253
  %v7367 = vmul.f32 %v7352, %v7359
  %v7368 = vadd.f32 %v7366, %v7367
  %v7369 = vtanh.pop %v7368
  %v7370 = vmul.f32 %v7365, %v7369
  %7371 = vst [vmem:[%s10] sm:$0xff] %v7370
  %7372 = vst [vmem:[%s11] sm:$0xff] %v7368
  // Predicated region
  $region42: #{lstm_encoder_forward.1} parent=0 // pred_check
    _
  $region43: #{lstm_encoder_forward.1} parent=0 // pred_check_branch
    %7374 = sbr.rel (0) target = $region45
  $region44: #{lstm_encoder_forward.1} parent=0 // pred_region
    _
  $region45: #{lstm_encoder_forward.1} parent=0 // pred_fallthru
    _
  // Predicated region
  $region46: #{lstm_encoder_forward.1} parent=0 // pred_check
    _
  $region47: #{lstm_encoder_forward.1} parent=0 // pred_check_branch
    %7376 = sbr.rel (0) target = $region49
  $region48: #{lstm_encoder_forward.1} parent=0 // pred_region
    _
  $region49: #{lstm_encoder_forward.1} parent=0 // pred_fallthru
    _
  // Predicated region
  $region50: #{lstm_encoder_forward.1} parent=0 // pred_check
    _
  $region51: #{lstm_encoder_forward.1} parent=0 // pred_check_branch
    %7378 = sbr.rel (0) target = $region53
  $region52: #{lstm_encoder_forward.1} parent=0 // pred_region
    _
  $region53: #{lstm_encoder_forward.1} parent=0 // pred_fallthru
    _
  // Predicated region
  $region54: #{lstm_encoder_forward.1} parent=0 // pred_check
    _
  $region55: #{lstm_encoder_forward.1} parent=0 // pred_check_branch
    %7380 = sbr.rel (0) target = $region57
  $region56: #{lstm_encoder_forward.1} parent=0 // pred_region
    _
  $region57: #{lstm_encoder_forward.1} parent=0 // pred_fallthru
    _

</llo_original>
